<compile_context>
chip_gen: v7x
topology: tpu7x:2x2x1
jax: 0.10.0
libtpu: 0.0.40
codegen_flags: <defaults>
</compile_context>

<pallas_src>
import math
import functools

import numpy as np
import jax
import jax.numpy as jnp
from jax.experimental import pallas as pl
from jax.experimental.pallas import tpu as pltpu

LEAKY_SLOPE = 0.02
LEAKY_GAIN = math.sqrt(2.0 / (1.0 + LEAKY_SLOPE ** 2))


def _fused_disc_kernel(mask_ref, x_ref, w_ref, out_ref, act_ref, *,
                       layer_dims, ks, row_offs, pad, Wp, Lpad, margin,
                       cmax, slope):
    """Fused per-sample hyper-conv stack.

    mask_ref: (1, Lpad)        column-validity mask (0 on row-wrap + padded tail)
    x_ref   : (1, C, Lpad)     padded+flattened input span
    w_ref   : (1, Rtot, Cw)    packed weights: col 0 = bias, cols 1.. = taps
    out_ref : (1, clast, Lpad)
    act_ref : (cmax, margin + Lpad + margin) VMEM scratch — channels on
              sublanes, the contiguous interior span on lanes, flanked by
              lane-aligned zero margins that stand in for the padding rows.
    """
    n_layers = len(layer_dims)

    # Zero only the margins (never written afterwards); the interior rows that
    # are read are fully overwritten every sample / layer.  Done per grid step
    # (cheap) so megacore-parallel batch splitting stays correct.
    act_ref[:, 0:margin] = jnp.zeros((cmax, margin), jnp.float32)
    act_ref[:, margin + Lpad:margin + Lpad + margin] = jnp.zeros(
        (cmax, margin), jnp.float32)

    # Drop the (padded, flattened) input span into the activation scratch.
    cin0 = layer_dims[0][0]
    act_ref[0:cin0, margin:margin + Lpad] = x_ref[0]

    # Broadcast the column mask once (JAX does not CSE broadcast_in_dim).
    mask_b = jnp.broadcast_to(mask_ref[...], (cmax, Lpad))

    for li, (cin, cout) in enumerate(layer_dims):
        k = ks[li]
        r0 = row_offs[li]

        # Per-tap accumulation: k*k tiny MXU matmuls straight from the scratch
        # (no im2col patch matrix, no hoisted whole-row activation load).
        acc = None
        for kh in range(k):
            for kw in range(k):
                t = kh * k + kw
                s = margin + (kh - pad) * Wp + (kw - pad)
                w_tap = w_ref[0, r0:r0 + cout, 1 + t * cin:1 + (t + 1) * cin]
                a_tap = act_ref[0:cin, s:s + Lpad]
                part = jnp.dot(w_tap, a_tap, preferred_element_type=jnp.float32)
                acc = part if acc is None else acc + part

        bias = w_ref[0, r0:r0 + cout, 0:1]                 # (cout, 1)
        if li < n_layers - 1:
            z = acc + bias
            # bias + leaky-relu + padding-ring mask fused in one expression.
            y = jnp.where(z >= 0, z, z * slope) * mask_b[0:cout, :]
            act_ref[0:cout, margin:margin + Lpad] = y
        else:
            # Tail: no activation, no mask (wrapper crop drops wrap/tail cols).
            out_ref[0] = (acc + bias).astype(out_ref.dtype)


def discriminator_forward(x_nchw, hyper_weights, *, num_layers, padding, stride,
                          head_shape, body_shape, tail_shape):
    """Pallas version of DiscriminatorTemplate.forward (x is NCHW, like PyTorch)."""
    B, C, H, W = x_nchw.shape
    shapes = [tuple(head_shape)] + [tuple(body_shape)] * num_layers + [tuple(tail_shape)]
    gains = [LEAKY_GAIN] * (num_layers + 1) + [1.0]
    n_layers = len(shapes)

    # Fused lane-dense kernel assumes "same"-size convolutions (how this
    # discriminator is instantiated: stride 1, k == 2*padding + 1).
    # TODO(synk): strided / size-changing layers need a per-layer row-pitch repack.
    for (oc, ic, k1, k2) in shapes:
        if stride != 1 or k1 != k2 or k1 != 2 * padding + 1:
            raise NotImplementedError(
                "fused Pallas kernel supports stride=1 and square k == 2*padding+1")

    layer_dims = tuple((ic, oc) for (oc, ic, k1, k2) in shapes)
    ks = tuple(k1 for (oc, ic, k1, k2) in shapes)
    assert layer_dims[0][0] == C
    for l in range(1, n_layers):
        assert layer_dims[l][0] == layer_dims[l - 1][1]

    pad = padding
    Hp, Wp = H + 2 * pad, W + 2 * pad
    Npad = Hp * Wp
    L = (H - 1) * Wp + W                           # contiguous interior span
    Lpad = -(-L // 128) * 128                      # lane-dense span width
    base = pad * Wp + pad                          # flat index of first interior pixel
    margin = -(-base // 128) * 128                 # lane-aligned zero margin (>= pad*Wp+pad)
    cmax = max(max(ci, co) for (ci, co) in layer_dims)
    clast = layer_dims[-1][1]

    # One-time pad + flatten of the input (NCHW row-major == channels x flat
    # spatial), zero-extended to Lpad lanes.
    xp = jnp.pad(x_nchw.astype(jnp.float32),
                 ((0, 0), (0, 0), (pad, pad), (pad, pad)))
    x_span = xp.reshape(B, C, Npad)[:, :, base:base + L]
    x_span = jnp.pad(x_span, ((0, 0), (0, 0), (0, Lpad - L)))

    # Column-validity mask over the Lpad span (zero on row-wrap lanes and on
    # the 128-padded tail, so the padding ring stays exactly zero every layer).
    col = (base + jnp.arange(L)) % Wp
    mask = ((col >= pad) & (col < pad + W)).astype(jnp.float32)
    mask = jnp.pad(mask, (0, Lpad - L)).reshape(1, Lpad)

    # Normalize + pack ALL hyper weights/biases into one (B, Rtot, Cw) array:
    # rows [row_off_l, row_off_l + oc) hold layer l; col 0 = scaled bias,
    # cols [1 + t*ic, 1 + (t+1)*ic) = tap t = (kh, kw), channel-minor.
    row_offs, r = [], 0
    for (oc, ic, k1, k2) in shapes:
        row_offs.append(r)
        r += oc
    Rtot = r
    Cw = 1 + max(k1 * k2 * ic for (oc, ic, k1, k2) in shapes)

    blocks = []
    for l, ((oc, ic, k1, k2), gain) in enumerate(zip(shapes, gains)):
        w = hyper_weights[2 * l].reshape(B, oc, ic, k1, k2).astype(jnp.float32)
        w = w * (gain / math.sqrt(ic * k1 * k2))
        # (B,oc,ic,kh,kw) -> (B,oc,kh,kw,ic) -> (B,oc,k*k*ic): tap-major, channel-minor.
        w = jnp.transpose(w, (0, 1, 3, 4, 2)).reshape(B, oc, k1 * k2 * ic)
        b = hyper_weights[2 * l + 1].reshape(B, oc, 1).astype(jnp.float32) / math.sqrt(ic)
        blk = jnp.concatenate([b, w], axis=2)
        blk = jnp.pad(blk, ((0, 0), (0, 0), (0, Cw - blk.shape[2])))
        blocks.append(blk)
    w_packed = jnp.concatenate(blocks, axis=1)     # (B, Rtot, Cw)

    kernel = functools.partial(
        _fused_disc_kernel, layer_dims=layer_dims, ks=ks, row_offs=tuple(row_offs),
        pad=pad, Wp=Wp, Lpad=Lpad, margin=margin, cmax=cmax, slope=LEAKY_SLOPE)

    out_span = pl.pallas_call(
        kernel,
        out_shape=jax.ShapeDtypeStruct((B, clast, Lpad), jnp.float32),
        grid=(B,),
        in_specs=[
            pl.BlockSpec((1, Lpad), lambda i: (0, 0)),          # mask (fetched once)
            pl.BlockSpec((1, C, Lpad), lambda i: (i, 0, 0)),    # input span
            pl.BlockSpec((1, Rtot, Cw), lambda i: (i, 0, 0)),   # packed weights+biases
        ],
        out_specs=pl.BlockSpec((1, clast, Lpad), lambda i: (i, 0, 0)),
        scratch_shapes=[pltpu.VMEM((cmax, 2 * margin + Lpad), jnp.float32)],
        compiler_params=pltpu.CompilerParams(dimension_semantics=("parallel",)),
    )(mask, x_span, w_packed)

    # Scatter the span back onto the (Hp, Wp) grid and crop the valid interior.
    out_flat = jnp.pad(out_span[:, :, :L], ((0, 0), (0, 0), (base, Npad - base - L)))
    out = out_flat.reshape(B, clast, Hp, Wp)[:, :, pad:pad + H, pad:pad + W]
    return out.reshape(B, 1, H, W).astype(x_nchw.dtype)


def reference_forward(x, hyper_weights, *, num_layers, padding, stride,
                      head_shape, body_shape, tail_shape):
    """Pure-JAX mirror of the PyTorch forward (grouped conv via feature_group_count)."""
    B = x.shape[0]
    out = x.reshape(1, -1, x.shape[2], x.shape[3])

    def conv(o, w_raw, b_raw, shape, gain, relu):
        oc, ic, k1, k2 = shape
        w = w_raw.reshape(B * oc, ic, k1, k2) / math.sqrt(ic * k1 * k2) * gain
        bb = b_raw.reshape(-1) / math.sqrt(ic)
        y = jax.lax.conv_general_dilated(
            o, w, window_strides=(stride, stride),
            padding=[(padding, padding), (padding, padding)],
            feature_group_count=B,
            dimension_numbers=('NCHW', 'OIHW', 'NCHW'))
        y = y + bb[None, :, None, None]
        if relu:
            y = jnp.where(y >= 0, y, LEAKY_SLOPE * y)
        return y

    out = conv(out, hyper_weights[0], hyper_weights[1], head_shape, LEAKY_GAIN, True)
    for i in range(1, num_layers + 1):
        out = conv(out, hyper_weights[2 * i], hyper_weights[2 * i + 1],
                   body_shape, LEAKY_GAIN, True)
    out = conv(out, hyper_weights[-2], hyper_weights[-1], tail_shape, 1.0, False)
    return out.reshape(B, 1, out.shape[2], out.shape[3])


if __name__ == "__main__":
    key = jax.random.PRNGKey(0)

    # Small, self-consistent configuration (N is unused by forward in the reference module).
    B, C, H, W = 2, 4, 16, 16
    num_layers = 2
    padding, stride = 1, 1
    head_shape = (8, 4, 3, 3)   # (out_c_per_group, in_c_per_group, k, k)
    body_shape = (8, 8, 3, 3)
    tail_shape = (1, 8, 3, 3)

    shapes = [head_shape] + [body_shape] * num_layers + [tail_shape]
    keys = jax.random.split(key, 1 + 2 * len(shapes))
    x = jax.random.normal(keys[0], (B, C, H, W), jnp.float32)

    hyper_weights = []
    ki = 1
    for s in shapes:
        oc, ic, k1, k2 = s
        hyper_weights.append(jax.random.normal(keys[ki], (B, oc, ic, k1, k2), jnp.float32))
        hyper_weights.append(jax.random.normal(keys[ki + 1], (B, oc), jnp.float32))
        ki += 2

    fwd = jax.jit(functools.partial(
        discriminator_forward, num_layers=num_layers, padding=padding, stride=stride,
        head_shape=head_shape, body_shape=body_shape, tail_shape=tail_shape))
    out = jax.block_until_ready(fwd(x, hyper_weights))

    ref = reference_forward(
        x, hyper_weights, num_layers=num_layers, padding=padding, stride=stride,
        head_shape=head_shape, body_shape=body_shape, tail_shape=tail_shape)
    ref = jax.block_until_ready(ref)

    assert out.shape == (B, 1, H, W), out.shape
    np.testing.assert_allclose(np.asarray(out), np.asarray(ref), rtol=2e-4, atol=2e-4)
    print("KERNEL_OK")
</pallas_src>

<mosaic_0001>
module attributes {stable_mosaic.version = 11 : i64} {
  func.func @_fused_disc_kernel(%arg0: i32, %arg1: memref<1x384xf32, #tpu.memory_space<vmem>>, %arg2: memref<1x4x384xf32, #tpu.memory_space<vmem>>, %arg3: memref<1x25x73xf32, #tpu.memory_space<vmem>>, %arg4: memref<1x1x384xf32, #tpu.memory_space<vmem>>, %arg5: memref<8x640xf32, #tpu.memory_space<vmem>>) attributes {dimension_semantics = [#tpu.dimension_semantics<parallel>], iteration_bounds = array<i64: 2>, scalar_prefetch = 0 : i64, scratch_operands = 1 : i64, tpu.core_type = #tpu.core_type<tc>, window_params = [{pipeline_mode = #tpu.pipeline_mode<synchronous>, transform_indices = @transform_0, window_bounds = array<i64: 1, 384>}, {transform_indices = @transform_1, window_bounds = array<i64: 1, 4, 384>}, {transform_indices = @transform_2, window_bounds = array<i64: 1, 25, 73>}, {transform_indices = @transform_3, window_bounds = array<i64: 1, 1, 384>}]} {
    %cst = arith.constant 0.000000e+00 : f32
    %0 = vector.broadcast %cst : f32 to vector<8x128xf32>
    %c0 = arith.constant 0 : index
    %c0_0 = arith.constant 0 : index
    %1 = vector.load %arg5[%c0, %c0_0] : memref<8x640xf32, #tpu.memory_space<vmem>>, vector<8x128xf32>
    tpu.vector_store %arg5[%c0, %c0_0], %0 {strides = array<i32>} : memref<8x640xf32, #tpu.memory_space<vmem>>, vector<8x128xf32>,
    %cst_1 = arith.constant 0.000000e+00 : f32
    %2 = vector.broadcast %cst_1 : f32 to vector<8x128xf32>
    %c0_2 = arith.constant 0 : index
    %c512 = arith.constant 512 : index
    %3 = vector.load %arg5[%c0_2, %c512] : memref<8x640xf32, #tpu.memory_space<vmem>>, vector<8x128xf32>
    tpu.vector_store %arg5[%c0_2, %c512], %2 {strides = array<i32>} : memref<8x640xf32, #tpu.memory_space<vmem>>, vector<8x128xf32>,
    %c0_3 = arith.constant 0 : index
    %c0_4 = arith.constant 0 : index
    %c0_5 = arith.constant 0 : index
    %4 = vector.load %arg2[%c0_3, %c0_4, %c0_5] : memref<1x4x384xf32, #tpu.memory_space<vmem>>, vector<1x4x384xf32>
    %5 = vector.shape_cast %4 : vector<1x4x384xf32> to vector<4x384xf32>
    %c0_6 = arith.constant 0 : index
    %c128 = arith.constant 128 : index
    %6 = vector.load %arg5[%c0_6, %c128] : memref<8x640xf32, #tpu.memory_space<vmem>>, vector<4x384xf32>
    tpu.vector_store %arg5[%c0_6, %c128], %5 {strides = array<i32>} : memref<8x640xf32, #tpu.memory_space<vmem>>, vector<4x384xf32>,
    %c0_7 = arith.constant 0 : index
    %c0_8 = arith.constant 0 : index
    %7 = vector.load %arg1[%c0_7, %c0_8] : memref<1x384xf32, #tpu.memory_space<vmem>>, vector<1x384xf32>
    %8 = vector.shape_cast %7 : vector<1x384xf32> to vector<1x384xf32>
    %9 = vector.broadcast %8 : vector<1x384xf32> to vector<8x384xf32>
    %c0_9 = arith.constant 0 : index
    %c0_10 = arith.constant 0 : index
    %c1 = arith.constant 1 : index
    %10 = vector.load %arg3[%c0_9, %c0_10, %c1] : memref<1x25x73xf32, #tpu.memory_space<vmem>>, vector<1x8x4xf32>
    %11 = vector.shape_cast %10 : vector<1x8x4xf32> to vector<8x4xf32>
    %c0_11 = arith.constant 0 : index
    %c109 = arith.constant 109 : index
    %12 = vector.load %arg5[%c0_11, %c109] : memref<8x640xf32, #tpu.memory_space<vmem>>, vector<4x384xf32>
    %cst_12 = arith.constant dense<0.000000e+00> : vector<8x384xf32>
    %13 = tpu.matmul %11, %12, %cst_12 {dimension_numbers = #tpu.dot_dimension_numbers<[1], [0], [0], [1], [0, 0, 1, 1], [], []>} : vector<8x4xf32>, vector<4x384xf32>, vector<8x384xf32> -> vector<8x384xf32>
    %c0_13 = arith.constant 0 : index
    %c0_14 = arith.constant 0 : index
    %c5 = arith.constant 5 : index
    %14 = vector.load %arg3[%c0_13, %c0_14, %c5] : memref<1x25x73xf32, #tpu.memory_space<vmem>>, vector<1x8x4xf32>
    %15 = vector.shape_cast %14 : vector<1x8x4xf32> to vector<8x4xf32>
    %c0_15 = arith.constant 0 : index
    %c110 = arith.constant 110 : index
    %16 = vector.load %arg5[%c0_15, %c110] : memref<8x640xf32, #tpu.memory_space<vmem>>, vector<4x384xf32>
    %cst_16 = arith.constant dense<0.000000e+00> : vector<8x384xf32>
    %17 = tpu.matmul %15, %16, %cst_16 {dimension_numbers = #tpu.dot_dimension_numbers<[1], [0], [0], [1], [0, 0, 1, 1], [], []>} : vector<8x4xf32>, vector<4x384xf32>, vector<8x384xf32> -> vector<8x384xf32>
    %18 = arith.addf %13, %17 : vector<8x384xf32>
    %c0_17 = arith.constant 0 : index
    %c0_18 = arith.constant 0 : index
    %c9 = arith.constant 9 : index
    %19 = vector.load %arg3[%c0_17, %c0_18, %c9] : memref<1x25x73xf32, #tpu.memory_space<vmem>>, vector<1x8x4xf32>
    %20 = vector.shape_cast %19 : vector<1x8x4xf32> to vector<8x4xf32>
    %c0_19 = arith.constant 0 : index
    %c111 = arith.constant 111 : index
    %21 = vector.load %arg5[%c0_19, %c111] : memref<8x640xf32, #tpu.memory_space<vmem>>, vector<4x384xf32>
    %cst_20 = arith.constant dense<0.000000e+00> : vector<8x384xf32>
    %22 = tpu.matmul %20, %21, %cst_20 {dimension_numbers = #tpu.dot_dimension_numbers<[1], [0], [0], [1], [0, 0, 1, 1], [], []>} : vector<8x4xf32>, vector<4x384xf32>, vector<8x384xf32> -> vector<8x384xf32>
    %23 = arith.addf %18, %22 : vector<8x384xf32>
    %c0_21 = arith.constant 0 : index
    %c0_22 = arith.constant 0 : index
    %c13 = arith.constant 13 : index
    %24 = vector.load %arg3[%c0_21, %c0_22, %c13] : memref<1x25x73xf32, #tpu.memory_space<vmem>>, vector<1x8x4xf32>
    %25 = vector.shape_cast %24 : vector<1x8x4xf32> to vector<8x4xf32>
    %c0_23 = arith.constant 0 : index
    %c127 = arith.constant 127 : index
    %26 = vector.load %arg5[%c0_23, %c127] : memref<8x640xf32, #tpu.memory_space<vmem>>, vector<4x384xf32>
    %cst_24 = arith.constant dense<0.000000e+00> : vector<8x384xf32>
    %27 = tpu.matmul %25, %26, %cst_24 {dimension_numbers = #tpu.dot_dimension_numbers<[1], [0], [0], [1], [0, 0, 1, 1], [], []>} : vector<8x4xf32>, vector<4x384xf32>, vector<8x384xf32> -> vector<8x384xf32>
    %28 = arith.addf %23, %27 : vector<8x384xf32>
    %c0_25 = arith.constant 0 : index
    %c0_26 = arith.constant 0 : index
    %c17 = arith.constant 17 : index
    %29 = vector.load %arg3[%c0_25, %c0_26, %c17] : memref<1x25x73xf32, #tpu.memory_space<vmem>>, vector<1x8x4xf32>
    %30 = vector.shape_cast %29 : vector<1x8x4xf32> to vector<8x4xf32>
    %c0_27 = arith.constant 0 : index
    %c128_28 = arith.constant 128 : index
    %31 = vector.load %arg5[%c0_27, %c128_28] : memref<8x640xf32, #tpu.memory_space<vmem>>, vector<4x384xf32>
    %cst_29 = arith.constant dense<0.000000e+00> : vector<8x384xf32>
    %32 = tpu.matmul %30, %31, %cst_29 {dimension_numbers = #tpu.dot_dimension_numbers<[1], [0], [0], [1], [0, 0, 1, 1], [], []>} : vector<8x4xf32>, vector<4x384xf32>, vector<8x384xf32> -> vector<8x384xf32>
    %33 = arith.addf %28, %32 : vector<8x384xf32>
    %c0_30 = arith.constant 0 : index
    %c0_31 = arith.constant 0 : index
    %c21 = arith.constant 21 : index
    %34 = vector.load %arg3[%c0_30, %c0_31, %c21] : memref<1x25x73xf32, #tpu.memory_space<vmem>>, vector<1x8x4xf32>
    %35 = vector.shape_cast %34 : vector<1x8x4xf32> to vector<8x4xf32>
    %c0_32 = arith.constant 0 : index
    %c129 = arith.constant 129 : index
    %36 = vector.load %arg5[%c0_32, %c129] : memref<8x640xf32, #tpu.memory_space<vmem>>, vector<4x384xf32>
    %cst_33 = arith.constant dense<0.000000e+00> : vector<8x384xf32>
    %37 = tpu.matmul %35, %36, %cst_33 {dimension_numbers = #tpu.dot_dimension_numbers<[1], [0], [0], [1], [0, 0, 1, 1], [], []>} : vector<8x4xf32>, vector<4x384xf32>, vector<8x384xf32> -> vector<8x384xf32>
    %38 = arith.addf %33, %37 : vector<8x384xf32>
    %c0_34 = arith.constant 0 : index
    %c0_35 = arith.constant 0 : index
    %c25 = arith.constant 25 : index
    %39 = vector.load %arg3[%c0_34, %c0_35, %c25] : memref<1x25x73xf32, #tpu.memory_space<vmem>>, vector<1x8x4xf32>
    %40 = vector.shape_cast %39 : vector<1x8x4xf32> to vector<8x4xf32>
    %c0_36 = arith.constant 0 : index
    %c145 = arith.constant 145 : index
    %41 = vector.load %arg5[%c0_36, %c145] : memref<8x640xf32, #tpu.memory_space<vmem>>, vector<4x384xf32>
    %cst_37 = arith.constant dense<0.000000e+00> : vector<8x384xf32>
    %42 = tpu.matmul %40, %41, %cst_37 {dimension_numbers = #tpu.dot_dimension_numbers<[1], [0], [0], [1], [0, 0, 1, 1], [], []>} : vector<8x4xf32>, vector<4x384xf32>, vector<8x384xf32> -> vector<8x384xf32>
    %43 = arith.addf %38, %42 : vector<8x384xf32>
    %c0_38 = arith.constant 0 : index
    %c0_39 = arith.constant 0 : index
    %c29 = arith.constant 29 : index
    %44 = vector.load %arg3[%c0_38, %c0_39, %c29] : memref<1x25x73xf32, #tpu.memory_space<vmem>>, vector<1x8x4xf32>
    %45 = vector.shape_cast %44 : vector<1x8x4xf32> to vector<8x4xf32>
    %c0_40 = arith.constant 0 : index
    %c146 = arith.constant 146 : index
    %46 = vector.load %arg5[%c0_40, %c146] : memref<8x640xf32, #tpu.memory_space<vmem>>, vector<4x384xf32>
    %cst_41 = arith.constant dense<0.000000e+00> : vector<8x384xf32>
    %47 = tpu.matmul %45, %46, %cst_41 {dimension_numbers = #tpu.dot_dimension_numbers<[1], [0], [0], [1], [0, 0, 1, 1], [], []>} : vector<8x4xf32>, vector<4x384xf32>, vector<8x384xf32> -> vector<8x384xf32>
    %48 = arith.addf %43, %47 : vector<8x384xf32>
    %c0_42 = arith.constant 0 : index
    %c0_43 = arith.constant 0 : index
    %c33 = arith.constant 33 : index
    %49 = vector.load %arg3[%c0_42, %c0_43, %c33] : memref<1x25x73xf32, #tpu.memory_space<vmem>>, vector<1x8x4xf32>
    %50 = vector.shape_cast %49 : vector<1x8x4xf32> to vector<8x4xf32>
    %c0_44 = arith.constant 0 : index
    %c147 = arith.constant 147 : index
    %51 = vector.load %arg5[%c0_44, %c147] : memref<8x640xf32, #tpu.memory_space<vmem>>, vector<4x384xf32>
    %cst_45 = arith.constant dense<0.000000e+00> : vector<8x384xf32>
    %52 = tpu.matmul %50, %51, %cst_45 {dimension_numbers = #tpu.dot_dimension_numbers<[1], [0], [0], [1], [0, 0, 1, 1], [], []>} : vector<8x4xf32>, vector<4x384xf32>, vector<8x384xf32> -> vector<8x384xf32>
    %53 = arith.addf %48, %52 : vector<8x384xf32>
    %c0_46 = arith.constant 0 : index
    %c0_47 = arith.constant 0 : index
    %c0_48 = arith.constant 0 : index
    %54 = vector.load %arg3[%c0_46, %c0_47, %c0_48] : memref<1x25x73xf32, #tpu.memory_space<vmem>>, vector<1x8x1xf32>
    %55 = vector.shape_cast %54 : vector<1x8x1xf32> to vector<8x1xf32>
    %56 = vector.broadcast %55 : vector<8x1xf32> to vector<8x384xf32>
    %57 = arith.addf %53, %56 : vector<8x384xf32>
    %cst_49 = arith.constant 0.000000e+00 : f32
    %58 = vector.broadcast %cst_49 : f32 to vector<8x384xf32>
    %59 = arith.cmpf oge, %57, %58 : vector<8x384xf32>
    %cst_50 = arith.constant 2.000000e-02 : f32
    %60 = vector.broadcast %cst_50 : f32 to vector<8x384xf32>
    %61 = arith.mulf %57, %60 : vector<8x384xf32>
    %62 = arith.select %59, %57, %61 : vector<8x384xi1>, vector<8x384xf32>
    %63 = arith.mulf %62, %9 : vector<8x384xf32>
    %c0_51 = arith.constant 0 : index
    %c128_52 = arith.constant 128 : index
    %64 = vector.load %arg5[%c0_51, %c128_52] : memref<8x640xf32, #tpu.memory_space<vmem>>, vector<8x384xf32>
    tpu.vector_store %arg5[%c0_51, %c128_52], %63 {strides = array<i32>} : memref<8x640xf32, #tpu.memory_space<vmem>>, vector<8x384xf32>,
    %c0_53 = arith.constant 0 : index
    %c8 = arith.constant 8 : index
    %c1_54 = arith.constant 1 : index
    %65 = vector.load %arg3[%c0_53, %c8, %c1_54] : memref<1x25x73xf32, #tpu.memory_space<vmem>>, vector<1x8x8xf32>
    %66 = vector.shape_cast %65 : vector<1x8x8xf32> to vector<8x8xf32>
    %c0_55 = arith.constant 0 : index
    %c109_56 = arith.constant 109 : index
    %67 = vector.load %arg5[%c0_55, %c109_56] : memref<8x640xf32, #tpu.memory_space<vmem>>, vector<8x384xf32>
    %cst_57 = arith.constant dense<0.000000e+00> : vector<8x384xf32>
    %68 = tpu.matmul %66, %67, %cst_57 {dimension_numbers = #tpu.dot_dimension_numbers<[1], [0], [0], [1], [0, 0, 1, 1], [], []>} : vector<8x8xf32>, vector<8x384xf32>, vector<8x384xf32> -> vector<8x384xf32>
    %c0_58 = arith.constant 0 : index
    %c8_59 = arith.constant 8 : index
    %c9_60 = arith.constant 9 : index
    %69 = vector.load %arg3[%c0_58, %c8_59, %c9_60] : memref<1x25x73xf32, #tpu.memory_space<vmem>>, vector<1x8x8xf32>
    %70 = vector.shape_cast %69 : vector<1x8x8xf32> to vector<8x8xf32>
    %c0_61 = arith.constant 0 : index
    %c110_62 = arith.constant 110 : index
    %71 = vector.load %arg5[%c0_61, %c110_62] : memref<8x640xf32, #tpu.memory_space<vmem>>, vector<8x384xf32>
    %cst_63 = arith.constant dense<0.000000e+00> : vector<8x384xf32>
    %72 = tpu.matmul %70, %71, %cst_63 {dimension_numbers = #tpu.dot_dimension_numbers<[1], [0], [0], [1], [0, 0, 1, 1], [], []>} : vector<8x8xf32>, vector<8x384xf32>, vector<8x384xf32> -> vector<8x384xf32>
    %73 = arith.addf %68, %72 : vector<8x384xf32>
    %c0_64 = arith.constant 0 : index
    %c8_65 = arith.constant 8 : index
    %c17_66 = arith.constant 17 : index
    %74 = vector.load %arg3[%c0_64, %c8_65, %c17_66] : memref<1x25x73xf32, #tpu.memory_space<vmem>>, vector<1x8x8xf32>
    %75 = vector.shape_cast %74 : vector<1x8x8xf32> to vector<8x8xf32>
    %c0_67 = arith.constant 0 : index
    %c111_68 = arith.constant 111 : index
    %76 = vector.load %arg5[%c0_67, %c111_68] : memref<8x640xf32, #tpu.memory_space<vmem>>, vector<8x384xf32>
    %cst_69 = arith.constant dense<0.000000e+00> : vector<8x384xf32>
    %77 = tpu.matmul %75, %76, %cst_69 {dimension_numbers = #tpu.dot_dimension_numbers<[1], [0], [0], [1], [0, 0, 1, 1], [], []>} : vector<8x8xf32>, vector<8x384xf32>, vector<8x384xf32> -> vector<8x384xf32>
    %78 = arith.addf %73, %77 : vector<8x384xf32>
    %c0_70 = arith.constant 0 : index
    %c8_71 = arith.constant 8 : index
    %c25_72 = arith.constant 25 : index
    %79 = vector.load %arg3[%c0_70, %c8_71, %c25_72] : memref<1x25x73xf32, #tpu.memory_space<vmem>>, vector<1x8x8xf32>
    %80 = vector.shape_cast %79 : vector<1x8x8xf32> to vector<8x8xf32>
    %c0_73 = arith.constant 0 : index
    %c127_74 = arith.constant 127 : index
    %81 = vector.load %arg5[%c0_73, %c127_74] : memref<8x640xf32, #tpu.memory_space<vmem>>, vector<8x384xf32>
    %cst_75 = arith.constant dense<0.000000e+00> : vector<8x384xf32>
    %82 = tpu.matmul %80, %81, %cst_75 {dimension_numbers = #tpu.dot_dimension_numbers<[1], [0], [0], [1], [0, 0, 1, 1], [], []>} : vector<8x8xf32>, vector<8x384xf32>, vector<8x384xf32> -> vector<8x384xf32>
    %83 = arith.addf %78, %82 : vector<8x384xf32>
    %c0_76 = arith.constant 0 : index
    %c8_77 = arith.constant 8 : index
    %c33_78 = arith.constant 33 : index
    %84 = vector.load %arg3[%c0_76, %c8_77, %c33_78] : memref<1x25x73xf32, #tpu.memory_space<vmem>>, vector<1x8x8xf32>
    %85 = vector.shape_cast %84 : vector<1x8x8xf32> to vector<8x8xf32>
    %c0_79 = arith.constant 0 : index
    %c128_80 = arith.constant 128 : index
    %86 = vector.load %arg5[%c0_79, %c128_80] : memref<8x640xf32, #tpu.memory_space<vmem>>, vector<8x384xf32>
    %cst_81 = arith.constant dense<0.000000e+00> : vector<8x384xf32>
    %87 = tpu.matmul %85, %86, %cst_81 {dimension_numbers = #tpu.dot_dimension_numbers<[1], [0], [0], [1], [0, 0, 1, 1], [], []>} : vector<8x8xf32>, vector<8x384xf32>, vector<8x384xf32> -> vector<8x384xf32>
    %88 = arith.addf %83, %87 : vector<8x384xf32>
    %c0_82 = arith.constant 0 : index
    %c8_83 = arith.constant 8 : index
    %c41 = arith.constant 41 : index
    %89 = vector.load %arg3[%c0_82, %c8_83, %c41] : memref<1x25x73xf32, #tpu.memory_space<vmem>>, vector<1x8x8xf32>
    %90 = vector.shape_cast %89 : vector<1x8x8xf32> to vector<8x8xf32>
    %c0_84 = arith.constant 0 : index
    %c129_85 = arith.constant 129 : index
    %91 = vector.load %arg5[%c0_84, %c129_85] : memref<8x640xf32, #tpu.memory_space<vmem>>, vector<8x384xf32>
    %cst_86 = arith.constant dense<0.000000e+00> : vector<8x384xf32>
    %92 = tpu.matmul %90, %91, %cst_86 {dimension_numbers = #tpu.dot_dimension_numbers<[1], [0], [0], [1], [0, 0, 1, 1], [], []>} : vector<8x8xf32>, vector<8x384xf32>, vector<8x384xf32> -> vector<8x384xf32>
    %93 = arith.addf %88, %92 : vector<8x384xf32>
    %c0_87 = arith.constant 0 : index
    %c8_88 = arith.constant 8 : index
    %c49 = arith.constant 49 : index
    %94 = vector.load %arg3[%c0_87, %c8_88, %c49] : memref<1x25x73xf32, #tpu.memory_space<vmem>>, vector<1x8x8xf32>
    %95 = vector.shape_cast %94 : vector<1x8x8xf32> to vector<8x8xf32>
    %c0_89 = arith.constant 0 : index
    %c145_90 = arith.constant 145 : index
    %96 = vector.load %arg5[%c0_89, %c145_90] : memref<8x640xf32, #tpu.memory_space<vmem>>, vector<8x384xf32>
    %cst_91 = arith.constant dense<0.000000e+00> : vector<8x384xf32>
    %97 = tpu.matmul %95, %96, %cst_91 {dimension_numbers = #tpu.dot_dimension_numbers<[1], [0], [0], [1], [0, 0, 1, 1], [], []>} : vector<8x8xf32>, vector<8x384xf32>, vector<8x384xf32> -> vector<8x384xf32>
    %98 = arith.addf %93, %97 : vector<8x384xf32>
    %c0_92 = arith.constant 0 : index
    %c8_93 = arith.constant 8 : index
    %c57 = arith.constant 57 : index
    %99 = vector.load %arg3[%c0_92, %c8_93, %c57] : memref<1x25x73xf32, #tpu.memory_space<vmem>>, vector<1x8x8xf32>
    %100 = vector.shape_cast %99 : vector<1x8x8xf32> to vector<8x8xf32>
    %c0_94 = arith.constant 0 : index
    %c146_95 = arith.constant 146 : index
    %101 = vector.load %arg5[%c0_94, %c146_95] : memref<8x640xf32, #tpu.memory_space<vmem>>, vector<8x384xf32>
    %cst_96 = arith.constant dense<0.000000e+00> : vector<8x384xf32>
    %102 = tpu.matmul %100, %101, %cst_96 {dimension_numbers = #tpu.dot_dimension_numbers<[1], [0], [0], [1], [0, 0, 1, 1], [], []>} : vector<8x8xf32>, vector<8x384xf32>, vector<8x384xf32> -> vector<8x384xf32>
    %103 = arith.addf %98, %102 : vector<8x384xf32>
    %c0_97 = arith.constant 0 : index
    %c8_98 = arith.constant 8 : index
    %c65 = arith.constant 65 : index
    %104 = vector.load %arg3[%c0_97, %c8_98, %c65] : memref<1x25x73xf32, #tpu.memory_space<vmem>>, vector<1x8x8xf32>
    %105 = vector.shape_cast %104 : vector<1x8x8xf32> to vector<8x8xf32>
    %c0_99 = arith.constant 0 : index
    %c147_100 = arith.constant 147 : index
    %106 = vector.load %arg5[%c0_99, %c147_100] : memref<8x640xf32, #tpu.memory_space<vmem>>, vector<8x384xf32>
    %cst_101 = arith.constant dense<0.000000e+00> : vector<8x384xf32>
    %107 = tpu.matmul %105, %106, %cst_101 {dimension_numbers = #tpu.dot_dimension_numbers<[1], [0], [0], [1], [0, 0, 1, 1], [], []>} : vector<8x8xf32>, vector<8x384xf32>, vector<8x384xf32> -> vector<8x384xf32>
    %108 = arith.addf %103, %107 : vector<8x384xf32>
    %c0_102 = arith.constant 0 : index
    %c8_103 = arith.constant 8 : index
    %c0_104 = arith.constant 0 : index
    %109 = vector.load %arg3[%c0_102, %c8_103, %c0_104] : memref<1x25x73xf32, #tpu.memory_space<vmem>>, vector<1x8x1xf32>
    %110 = vector.shape_cast %109 : vector<1x8x1xf32> to vector<8x1xf32>
    %111 = vector.broadcast %110 : vector<8x1xf32> to vector<8x384xf32>
    %112 = arith.addf %108, %111 : vector<8x384xf32>
    %cst_105 = arith.constant 0.000000e+00 : f32
    %113 = vector.broadcast %cst_105 : f32 to vector<8x384xf32>
    %114 = arith.cmpf oge, %112, %113 : vector<8x384xf32>
    %cst_106 = arith.constant 2.000000e-02 : f32
    %115 = vector.broadcast %cst_106 : f32 to vector<8x384xf32>
    %116 = arith.mulf %112, %115 : vector<8x384xf32>
    %117 = arith.select %114, %112, %116 : vector<8x384xi1>, vector<8x384xf32>
    %118 = arith.mulf %117, %9 : vector<8x384xf32>
    %c0_107 = arith.constant 0 : index
    %c128_108 = arith.constant 128 : index
    %119 = vector.load %arg5[%c0_107, %c128_108] : memref<8x640xf32, #tpu.memory_space<vmem>>, vector<8x384xf32>
    tpu.vector_store %arg5[%c0_107, %c128_108], %118 {strides = array<i32>} : memref<8x640xf32, #tpu.memory_space<vmem>>, vector<8x384xf32>,
    %c0_109 = arith.constant 0 : index
    %c16 = arith.constant 16 : index
    %c1_110 = arith.constant 1 : index
    %120 = vector.load %arg3[%c0_109, %c16, %c1_110] : memref<1x25x73xf32, #tpu.memory_space<vmem>>, vector<1x8x8xf32>
    %121 = vector.shape_cast %120 : vector<1x8x8xf32> to vector<8x8xf32>
    %c0_111 = arith.constant 0 : index
    %c109_112 = arith.constant 109 : index
    %122 = vector.load %arg5[%c0_111, %c109_112] : memref<8x640xf32, #tpu.memory_space<vmem>>, vector<8x384xf32>
    %cst_113 = arith.constant dense<0.000000e+00> : vector<8x384xf32>
    %123 = tpu.matmul %121, %122, %cst_113 {dimension_numbers = #tpu.dot_dimension_numbers<[1], [0], [0], [1], [0, 0, 1, 1], [], []>} : vector<8x8xf32>, vector<8x384xf32>, vector<8x384xf32> -> vector<8x384xf32>
    %c0_114 = arith.constant 0 : index
    %c16_115 = arith.constant 16 : index
    %c9_116 = arith.constant 9 : index
    %124 = vector.load %arg3[%c0_114, %c16_115, %c9_116] : memref<1x25x73xf32, #tpu.memory_space<vmem>>, vector<1x8x8xf32>
    %125 = vector.shape_cast %124 : vector<1x8x8xf32> to vector<8x8xf32>
    %c0_117 = arith.constant 0 : index
    %c110_118 = arith.constant 110 : index
    %126 = vector.load %arg5[%c0_117, %c110_118] : memref<8x640xf32, #tpu.memory_space<vmem>>, vector<8x384xf32>
    %cst_119 = arith.constant dense<0.000000e+00> : vector<8x384xf32>
    %127 = tpu.matmul %125, %126, %cst_119 {dimension_numbers = #tpu.dot_dimension_numbers<[1], [0], [0], [1], [0, 0, 1, 1], [], []>} : vector<8x8xf32>, vector<8x384xf32>, vector<8x384xf32> -> vector<8x384xf32>
    %128 = arith.addf %123, %127 : vector<8x384xf32>
    %c0_120 = arith.constant 0 : index
    %c16_121 = arith.constant 16 : index
    %c17_122 = arith.constant 17 : index
    %129 = vector.load %arg3[%c0_120, %c16_121, %c17_122] : memref<1x25x73xf32, #tpu.memory_space<vmem>>, vector<1x8x8xf32>
    %130 = vector.shape_cast %129 : vector<1x8x8xf32> to vector<8x8xf32>
    %c0_123 = arith.constant 0 : index
    %c111_124 = arith.constant 111 : index
    %131 = vector.load %arg5[%c0_123, %c111_124] : memref<8x640xf32, #tpu.memory_space<vmem>>, vector<8x384xf32>
    %cst_125 = arith.constant dense<0.000000e+00> : vector<8x384xf32>
    %132 = tpu.matmul %130, %131, %cst_125 {dimension_numbers = #tpu.dot_dimension_numbers<[1], [0], [0], [1], [0, 0, 1, 1], [], []>} : vector<8x8xf32>, vector<8x384xf32>, vector<8x384xf32> -> vector<8x384xf32>
    %133 = arith.addf %128, %132 : vector<8x384xf32>
    %c0_126 = arith.constant 0 : index
    %c16_127 = arith.constant 16 : index
    %c25_128 = arith.constant 25 : index
    %134 = vector.load %arg3[%c0_126, %c16_127, %c25_128] : memref<1x25x73xf32, #tpu.memory_space<vmem>>, vector<1x8x8xf32>
    %135 = vector.shape_cast %134 : vector<1x8x8xf32> to vector<8x8xf32>
    %c0_129 = arith.constant 0 : index
    %c127_130 = arith.constant 127 : index
    %136 = vector.load %arg5[%c0_129, %c127_130] : memref<8x640xf32, #tpu.memory_space<vmem>>, vector<8x384xf32>
    %cst_131 = arith.constant dense<0.000000e+00> : vector<8x384xf32>
    %137 = tpu.matmul %135, %136, %cst_131 {dimension_numbers = #tpu.dot_dimension_numbers<[1], [0], [0], [1], [0, 0, 1, 1], [], []>} : vector<8x8xf32>, vector<8x384xf32>, vector<8x384xf32> -> vector<8x384xf32>
    %138 = arith.addf %133, %137 : vector<8x384xf32>
    %c0_132 = arith.constant 0 : index
    %c16_133 = arith.constant 16 : index
    %c33_134 = arith.constant 33 : index
    %139 = vector.load %arg3[%c0_132, %c16_133, %c33_134] : memref<1x25x73xf32, #tpu.memory_space<vmem>>, vector<1x8x8xf32>
    %140 = vector.shape_cast %139 : vector<1x8x8xf32> to vector<8x8xf32>
    %c0_135 = arith.constant 0 : index
    %c128_136 = arith.constant 128 : index
    %141 = vector.load %arg5[%c0_135, %c128_136] : memref<8x640xf32, #tpu.memory_space<vmem>>, vector<8x384xf32>
    %cst_137 = arith.constant dense<0.000000e+00> : vector<8x384xf32>
    %142 = tpu.matmul %140, %141, %cst_137 {dimension_numbers = #tpu.dot_dimension_numbers<[1], [0], [0], [1], [0, 0, 1, 1], [], []>} : vector<8x8xf32>, vector<8x384xf32>, vector<8x384xf32> -> vector<8x384xf32>
    %143 = arith.addf %138, %142 : vector<8x384xf32>
    %c0_138 = arith.constant 0 : index
    %c16_139 = arith.constant 16 : index
    %c41_140 = arith.constant 41 : index
    %144 = vector.load %arg3[%c0_138, %c16_139, %c41_140] : memref<1x25x73xf32, #tpu.memory_space<vmem>>, vector<1x8x8xf32>
    %145 = vector.shape_cast %144 : vector<1x8x8xf32> to vector<8x8xf32>
    %c0_141 = arith.constant 0 : index
    %c129_142 = arith.constant 129 : index
    %146 = vector.load %arg5[%c0_141, %c129_142] : memref<8x640xf32, #tpu.memory_space<vmem>>, vector<8x384xf32>
    %cst_143 = arith.constant dense<0.000000e+00> : vector<8x384xf32>
    %147 = tpu.matmul %145, %146, %cst_143 {dimension_numbers = #tpu.dot_dimension_numbers<[1], [0], [0], [1], [0, 0, 1, 1], [], []>} : vector<8x8xf32>, vector<8x384xf32>, vector<8x384xf32> -> vector<8x384xf32>
    %148 = arith.addf %143, %147 : vector<8x384xf32>
    %c0_144 = arith.constant 0 : index
    %c16_145 = arith.constant 16 : index
    %c49_146 = arith.constant 49 : index
    %149 = vector.load %arg3[%c0_144, %c16_145, %c49_146] : memref<1x25x73xf32, #tpu.memory_space<vmem>>, vector<1x8x8xf32>
    %150 = vector.shape_cast %149 : vector<1x8x8xf32> to vector<8x8xf32>
    %c0_147 = arith.constant 0 : index
    %c145_148 = arith.constant 145 : index
    %151 = vector.load %arg5[%c0_147, %c145_148] : memref<8x640xf32, #tpu.memory_space<vmem>>, vector<8x384xf32>
    %cst_149 = arith.constant dense<0.000000e+00> : vector<8x384xf32>
    %152 = tpu.matmul %150, %151, %cst_149 {dimension_numbers = #tpu.dot_dimension_numbers<[1], [0], [0], [1], [0, 0, 1, 1], [], []>} : vector<8x8xf32>, vector<8x384xf32>, vector<8x384xf32> -> vector<8x384xf32>
    %153 = arith.addf %148, %152 : vector<8x384xf32>
    %c0_150 = arith.constant 0 : index
    %c16_151 = arith.constant 16 : index
    %c57_152 = arith.constant 57 : index
    %154 = vector.load %arg3[%c0_150, %c16_151, %c57_152] : memref<1x25x73xf32, #tpu.memory_space<vmem>>, vector<1x8x8xf32>
    %155 = vector.shape_cast %154 : vector<1x8x8xf32> to vector<8x8xf32>
    %c0_153 = arith.constant 0 : index
    %c146_154 = arith.constant 146 : index
    %156 = vector.load %arg5[%c0_153, %c146_154] : memref<8x640xf32, #tpu.memory_space<vmem>>, vector<8x384xf32>
    %cst_155 = arith.constant dense<0.000000e+00> : vector<8x384xf32>
    %157 = tpu.matmul %155, %156, %cst_155 {dimension_numbers = #tpu.dot_dimension_numbers<[1], [0], [0], [1], [0, 0, 1, 1], [], []>} : vector<8x8xf32>, vector<8x384xf32>, vector<8x384xf32> -> vector<8x384xf32>
    %158 = arith.addf %153, %157 : vector<8x384xf32>
    %c0_156 = arith.constant 0 : index
    %c16_157 = arith.constant 16 : index
    %c65_158 = arith.constant 65 : index
    %159 = vector.load %arg3[%c0_156, %c16_157, %c65_158] : memref<1x25x73xf32, #tpu.memory_space<vmem>>, vector<1x8x8xf32>
    %160 = vector.shape_cast %159 : vector<1x8x8xf32> to vector<8x8xf32>
    %c0_159 = arith.constant 0 : index
    %c147_160 = arith.constant 147 : index
    %161 = vector.load %arg5[%c0_159, %c147_160] : memref<8x640xf32, #tpu.memory_space<vmem>>, vector<8x384xf32>
    %cst_161 = arith.constant dense<0.000000e+00> : vector<8x384xf32>
    %162 = tpu.matmul %160, %161, %cst_161 {dimension_numbers = #tpu.dot_dimension_numbers<[1], [0], [0], [1], [0, 0, 1, 1], [], []>} : vector<8x8xf32>, vector<8x384xf32>, vector<8x384xf32> -> vector<8x384xf32>
    %163 = arith.addf %158, %162 : vector<8x384xf32>
    %c0_162 = arith.constant 0 : index
    %c16_163 = arith.constant 16 : index
    %c0_164 = arith.constant 0 : index
    %164 = vector.load %arg3[%c0_162, %c16_163, %c0_164] : memref<1x25x73xf32, #tpu.memory_space<vmem>>, vector<1x8x1xf32>
    %165 = vector.shape_cast %164 : vector<1x8x1xf32> to vector<8x1xf32>
    %166 = vector.broadcast %165 : vector<8x1xf32> to vector<8x384xf32>
    %167 = arith.addf %163, %166 : vector<8x384xf32>
    %cst_165 = arith.constant 0.000000e+00 : f32
    %168 = vector.broadcast %cst_165 : f32 to vector<8x384xf32>
    %169 = arith.cmpf oge, %167, %168 : vector<8x384xf32>
    %cst_166 = arith.constant 2.000000e-02 : f32
    %170 = vector.broadcast %cst_166 : f32 to vector<8x384xf32>
    %171 = arith.mulf %167, %170 : vector<8x384xf32>
    %172 = arith.select %169, %167, %171 : vector<8x384xi1>, vector<8x384xf32>
    %173 = arith.mulf %172, %9 : vector<8x384xf32>
    %c0_167 = arith.constant 0 : index
    %c128_168 = arith.constant 128 : index
    %174 = vector.load %arg5[%c0_167, %c128_168] : memref<8x640xf32, #tpu.memory_space<vmem>>, vector<8x384xf32>
    tpu.vector_store %arg5[%c0_167, %c128_168], %173 {strides = array<i32>} : memref<8x640xf32, #tpu.memory_space<vmem>>, vector<8x384xf32>,
    %c0_169 = arith.constant 0 : index
    %c24 = arith.constant 24 : index
    %c1_170 = arith.constant 1 : index
    %175 = vector.load %arg3[%c0_169, %c24, %c1_170] : memref<1x25x73xf32, #tpu.memory_space<vmem>>, vector<1x1x8xf32>
    %176 = vector.shape_cast %175 : vector<1x1x8xf32> to vector<1x8xf32>
    %c0_171 = arith.constant 0 : index
    %c109_172 = arith.constant 109 : index
    %177 = vector.load %arg5[%c0_171, %c109_172] : memref<8x640xf32, #tpu.memory_space<vmem>>, vector<8x384xf32>
    %cst_173 = arith.constant dense<0.000000e+00> : vector<1x384xf32>
    %178 = tpu.matmul %176, %177, %cst_173 {dimension_numbers = #tpu.dot_dimension_numbers<[1], [0], [0], [1], [0, 0, 1, 1], [], []>} : vector<1x8xf32>, vector<8x384xf32>, vector<1x384xf32> -> vector<1x384xf32>
    %c0_174 = arith.constant 0 : index
    %c24_175 = arith.constant 24 : index
    %c9_176 = arith.constant 9 : index
    %179 = vector.load %arg3[%c0_174, %c24_175, %c9_176] : memref<1x25x73xf32, #tpu.memory_space<vmem>>, vector<1x1x8xf32>
    %180 = vector.shape_cast %179 : vector<1x1x8xf32> to vector<1x8xf32>
    %c0_177 = arith.constant 0 : index
    %c110_178 = arith.constant 110 : index
    %181 = vector.load %arg5[%c0_177, %c110_178] : memref<8x640xf32, #tpu.memory_space<vmem>>, vector<8x384xf32>
    %cst_179 = arith.constant dense<0.000000e+00> : vector<1x384xf32>
    %182 = tpu.matmul %180, %181, %cst_179 {dimension_numbers = #tpu.dot_dimension_numbers<[1], [0], [0], [1], [0, 0, 1, 1], [], []>} : vector<1x8xf32>, vector<8x384xf32>, vector<1x384xf32> -> vector<1x384xf32>
    %183 = arith.addf %178, %182 : vector<1x384xf32>
    %c0_180 = arith.constant 0 : index
    %c24_181 = arith.constant 24 : index
    %c17_182 = arith.constant 17 : index
    %184 = vector.load %arg3[%c0_180, %c24_181, %c17_182] : memref<1x25x73xf32, #tpu.memory_space<vmem>>, vector<1x1x8xf32>
    %185 = vector.shape_cast %184 : vector<1x1x8xf32> to vector<1x8xf32>
    %c0_183 = arith.constant 0 : index
    %c111_184 = arith.constant 111 : index
    %186 = vector.load %arg5[%c0_183, %c111_184] : memref<8x640xf32, #tpu.memory_space<vmem>>, vector<8x384xf32>
    %cst_185 = arith.constant dense<0.000000e+00> : vector<1x384xf32>
    %187 = tpu.matmul %185, %186, %cst_185 {dimension_numbers = #tpu.dot_dimension_numbers<[1], [0], [0], [1], [0, 0, 1, 1], [], []>} : vector<1x8xf32>, vector<8x384xf32>, vector<1x384xf32> -> vector<1x384xf32>
    %188 = arith.addf %183, %187 : vector<1x384xf32>
    %c0_186 = arith.constant 0 : index
    %c24_187 = arith.constant 24 : index
    %c25_188 = arith.constant 25 : index
    %189 = vector.load %arg3[%c0_186, %c24_187, %c25_188] : memref<1x25x73xf32, #tpu.memory_space<vmem>>, vector<1x1x8xf32>
    %190 = vector.shape_cast %189 : vector<1x1x8xf32> to vector<1x8xf32>
    %c0_189 = arith.constant 0 : index
    %c127_190 = arith.constant 127 : index
    %191 = vector.load %arg5[%c0_189, %c127_190] : memref<8x640xf32, #tpu.memory_space<vmem>>, vector<8x384xf32>
    %cst_191 = arith.constant dense<0.000000e+00> : vector<1x384xf32>
    %192 = tpu.matmul %190, %191, %cst_191 {dimension_numbers = #tpu.dot_dimension_numbers<[1], [0], [0], [1], [0, 0, 1, 1], [], []>} : vector<1x8xf32>, vector<8x384xf32>, vector<1x384xf32> -> vector<1x384xf32>
    %193 = arith.addf %188, %192 : vector<1x384xf32>
    %c0_192 = arith.constant 0 : index
    %c24_193 = arith.constant 24 : index
    %c33_194 = arith.constant 33 : index
    %194 = vector.load %arg3[%c0_192, %c24_193, %c33_194] : memref<1x25x73xf32, #tpu.memory_space<vmem>>, vector<1x1x8xf32>
    %195 = vector.shape_cast %194 : vector<1x1x8xf32> to vector<1x8xf32>
    %c0_195 = arith.constant 0 : index
    %c128_196 = arith.constant 128 : index
    %196 = vector.load %arg5[%c0_195, %c128_196] : memref<8x640xf32, #tpu.memory_space<vmem>>, vector<8x384xf32>
    %cst_197 = arith.constant dense<0.000000e+00> : vector<1x384xf32>
    %197 = tpu.matmul %195, %196, %cst_197 {dimension_numbers = #tpu.dot_dimension_numbers<[1], [0], [0], [1], [0, 0, 1, 1], [], []>} : vector<1x8xf32>, vector<8x384xf32>, vector<1x384xf32> -> vector<1x384xf32>
    %198 = arith.addf %193, %197 : vector<1x384xf32>
    %c0_198 = arith.constant 0 : index
    %c24_199 = arith.constant 24 : index
    %c41_200 = arith.constant 41 : index
    %199 = vector.load %arg3[%c0_198, %c24_199, %c41_200] : memref<1x25x73xf32, #tpu.memory_space<vmem>>, vector<1x1x8xf32>
    %200 = vector.shape_cast %199 : vector<1x1x8xf32> to vector<1x8xf32>
    %c0_201 = arith.constant 0 : index
    %c129_202 = arith.constant 129 : index
    %201 = vector.load %arg5[%c0_201, %c129_202] : memref<8x640xf32, #tpu.memory_space<vmem>>, vector<8x384xf32>
    %cst_203 = arith.constant dense<0.000000e+00> : vector<1x384xf32>
    %202 = tpu.matmul %200, %201, %cst_203 {dimension_numbers = #tpu.dot_dimension_numbers<[1], [0], [0], [1], [0, 0, 1, 1], [], []>} : vector<1x8xf32>, vector<8x384xf32>, vector<1x384xf32> -> vector<1x384xf32>
    %203 = arith.addf %198, %202 : vector<1x384xf32>
    %c0_204 = arith.constant 0 : index
    %c24_205 = arith.constant 24 : index
    %c49_206 = arith.constant 49 : index
    %204 = vector.load %arg3[%c0_204, %c24_205, %c49_206] : memref<1x25x73xf32, #tpu.memory_space<vmem>>, vector<1x1x8xf32>
    %205 = vector.shape_cast %204 : vector<1x1x8xf32> to vector<1x8xf32>
    %c0_207 = arith.constant 0 : index
    %c145_208 = arith.constant 145 : index
    %206 = vector.load %arg5[%c0_207, %c145_208] : memref<8x640xf32, #tpu.memory_space<vmem>>, vector<8x384xf32>
    %cst_209 = arith.constant dense<0.000000e+00> : vector<1x384xf32>
    %207 = tpu.matmul %205, %206, %cst_209 {dimension_numbers = #tpu.dot_dimension_numbers<[1], [0], [0], [1], [0, 0, 1, 1], [], []>} : vector<1x8xf32>, vector<8x384xf32>, vector<1x384xf32> -> vector<1x384xf32>
    %208 = arith.addf %203, %207 : vector<1x384xf32>
    %c0_210 = arith.constant 0 : index
    %c24_211 = arith.constant 24 : index
    %c57_212 = arith.constant 57 : index
    %209 = vector.load %arg3[%c0_210, %c24_211, %c57_212] : memref<1x25x73xf32, #tpu.memory_space<vmem>>, vector<1x1x8xf32>
    %210 = vector.shape_cast %209 : vector<1x1x8xf32> to vector<1x8xf32>
    %c0_213 = arith.constant 0 : index
    %c146_214 = arith.constant 146 : index
    %211 = vector.load %arg5[%c0_213, %c146_214] : memref<8x640xf32, #tpu.memory_space<vmem>>, vector<8x384xf32>
    %cst_215 = arith.constant dense<0.000000e+00> : vector<1x384xf32>
    %212 = tpu.matmul %210, %211, %cst_215 {dimension_numbers = #tpu.dot_dimension_numbers<[1], [0], [0], [1], [0, 0, 1, 1], [], []>} : vector<1x8xf32>, vector<8x384xf32>, vector<1x384xf32> -> vector<1x384xf32>
    %213 = arith.addf %208, %212 : vector<1x384xf32>
    %c0_216 = arith.constant 0 : index
    %c24_217 = arith.constant 24 : index
    %c65_218 = arith.constant 65 : index
    %214 = vector.load %arg3[%c0_216, %c24_217, %c65_218] : memref<1x25x73xf32, #tpu.memory_space<vmem>>, vector<1x1x8xf32>
    %215 = vector.shape_cast %214 : vector<1x1x8xf32> to vector<1x8xf32>
    %c0_219 = arith.constant 0 : index
    %c147_220 = arith.constant 147 : index
    %216 = vector.load %arg5[%c0_219, %c147_220] : memref<8x640xf32, #tpu.memory_space<vmem>>, vector<8x384xf32>
    %cst_221 = arith.constant dense<0.000000e+00> : vector<1x384xf32>
    %217 = tpu.matmul %215, %216, %cst_221 {dimension_numbers = #tpu.dot_dimension_numbers<[1], [0], [0], [1], [0, 0, 1, 1], [], []>} : vector<1x8xf32>, vector<8x384xf32>, vector<1x384xf32> -> vector<1x384xf32>
    %218 = arith.addf %213, %217 : vector<1x384xf32>
    %c0_222 = arith.constant 0 : index
    %c24_223 = arith.constant 24 : index
    %c0_224 = arith.constant 0 : index
    %219 = vector.load %arg3[%c0_222, %c24_223, %c0_224] : memref<1x25x73xf32, #tpu.memory_space<vmem>>, vector<1x1x1xf32>
    %220 = vector.shape_cast %219 : vector<1x1x1xf32> to vector<1x1xf32>
    %221 = vector.broadcast %220 : vector<1x1xf32> to vector<1x384xf32>
    %222 = arith.addf %218, %221 : vector<1x384xf32>
    %c0_225 = arith.constant 0 : index
    %c0_226 = arith.constant 0 : index
    %c0_227 = arith.constant 0 : index
    %223 = vector.load %arg4[%c0_225, %c0_226, %c0_227] : memref<1x1x384xf32, #tpu.memory_space<vmem>>, vector<1x1x384xf32>
    %224 = vector.shape_cast %223 : vector<1x1x384xf32> to vector<1x384xf32>
    %225 = vector.shape_cast %222 : vector<1x384xf32> to vector<1x1x384xf32>
    tpu.vector_store %arg4[%c0_225, %c0_226, %c0_227], %225 {strides = array<i32>} : memref<1x1x384xf32, #tpu.memory_space<vmem>>, vector<1x1x384xf32>,
    return
  }
  func.func @transform_0(%arg0: i32) -> (i32, i32) {
    %c0_i32 = arith.constant 0 : i32
    %c0_i32_0 = arith.constant 0 : i32
    %c0_i32_1 = arith.constant 0 : i32
    return %c0_i32, %c0_i32_0 : i32, i32
  }
  func.func @transform_1(%arg0: i32) -> (i32, i32, i32) {
    %c0_i32 = arith.constant 0 : i32
    %c0_i32_0 = arith.constant 0 : i32
    %c0_i32_1 = arith.constant 0 : i32
    return %arg0, %c0_i32, %c0_i32_0 : i32, i32, i32
  }
  func.func @transform_2(%arg0: i32) -> (i32, i32, i32) {
    %c0_i32 = arith.constant 0 : i32
    %c0_i32_0 = arith.constant 0 : i32
    %c0_i32_1 = arith.constant 0 : i32
    return %arg0, %c0_i32, %c0_i32_0 : i32, i32, i32
  }
  func.func @transform_3(%arg0: i32) -> (i32, i32, i32) {
    %c0_i32 = arith.constant 0 : i32
    %c0_i32_0 = arith.constant 0 : i32
    %c0_i32_1 = arith.constant 0 : i32
    return %arg0, %c0_i32, %c0_i32_0 : i32, i32, i32
  }
}

</mosaic_0001>

<llo_original>
// kernel: discriminator_forward.1
$region0: #{discriminator_forward.1}
  #allocation0 [shape = 'u32[]', space=smem, size = 0x4, offset = 0x4, fixed_abs, tag = 'smem constant byte address 0x4 - core index']
  #allocation1 [shape = 'u32[144,128]{1,0:T(1,128)}', space=vmem, size = 0x12000, scoped, tag = 'internal scratch']
  #allocation2 [shape = 'f32[8,640]{1,0:T(8,128)}', space=vmem, size = 0x5000, scoped, tag = 'scratch operand']
  %s0 = inlined_call_operand.vmem [shape: f32[1,384], index: 0, kind: input, shape index: {}]
  %s1 = inlined_call_operand.vmem [shape: f32[2,4,384], index: 1, kind: input, shape index: {}]
  %s2 = inlined_call_operand.vmem [shape: f32[2,25,73], index: 2, kind: input, shape index: {}]
  %s3 = inlined_call_operand.vmem [shape: f32[2,1,384], index: 3, kind: output, shape index: {}]
  %s4 = sld [smem:[#allocation0]]
  $region45: #{discriminator_forward.1} parent=0
    _
  %s6 = ssub.s32 1, %s4
  %s7 = scalar_select 0, %s6, %s4
  loop: start=0, step=1, limit=4
  $region2: #{discriminator_forward.1} parent=0 // loop_pre_header
    _
  $region3: #{discriminator_forward.1} parent=0 // loop_header
    %s9 = sphi 0, %s13
    %p10 = scmp.ge.s32.totalorder %s9, 4
    %s17 = sphi 0, %s17
    %s19 = sphi 0, %s17
    %s20 = sphi 0, %s19
    %s34 = sphi 0, %s20
    %s40 = sphi 0, %s42
    %s43 = sphi 0, %s40
    %s44 = sphi 0, %s43
    %s60 = sphi 0, %s44
    %s66 = sphi 0, %s68
    %s69 = sphi 0, %s66
    %s70 = sphi 0, %s69
    %s86 = sphi 0, %s70
    %s92 = sphi 0, %s94
    %s95 = sphi 0, %s92
    %s96 = sphi 0, %s95
    %s112 = sphi 0, %s96
  $region4: #{discriminator_forward.1} parent=0 // loop_header_branch
    %12 = sbr.rel (%p10) target = $region8
  $region5: #{discriminator_forward.1} parent=0 // loop_body
    %s14 = ssub.s32 %s9, 1
    %s15 = ssub.s32 %s9, 2
    %s16 = sadd.s32 %s9, 1
    %s18 = sadd.s32 %s17, 1
    %p21 = scmp.eq.s32.totalorder %s9, 1
    %p22 = scmp.ne.s32.totalorder %s17, %s19
    %p23 = scmp.eq.s32.totalorder %s9, 0
    %p24 = por %p22, %p23
    %p25 = scmp.ne.s32.totalorder %s17, %s19
    %p26 = scmp.eq.s32.totalorder %s14, 1
    %p27 = por %p25, %p26
    %p28 = scmp.ne.s32.totalorder %s19, %s20
    %p29 = scmp.eq.s32.totalorder %s14, 0
    %p30 = por %p28, %p29
    %p31 = scmp.ne.s32.totalorder %s19, %s20
    %p32 = scmp.eq.s32.totalorder %s15, 1
    %p33 = por %p31, %p32
    %p35 = scmp.ne.s32.totalorder %s20, %s34
    %p36 = scmp.eq.s32.totalorder %s15, 0
    %p37 = por %p35, %p36
    %s38 = ssub.s32 %s9, %s16
    %p39 = scmp.eq.s32.totalorder %s38, 0
    %s41 = sadd.s32 %s40, 1
    %s42 = scalar_select %p39, %s40, %s41
    %p45 = pneg %p39
    %p46 = scmp.eq.s32.totalorder %s9, 1
    %p47 = por %p45, %p46
    %p48 = scmp.ne.s32.totalorder %s40, %s43
    %p49 = scmp.eq.s32.totalorder %s9, 0
    %p50 = por %p48, %p49
    %p51 = scmp.ne.s32.totalorder %s40, %s43
    %p52 = scmp.eq.s32.totalorder %s14, 1
    %p53 = por %p51, %p52
    %p54 = scmp.ne.s32.totalorder %s43, %s44
    %p55 = scmp.eq.s32.totalorder %s14, 0
    %p56 = por %p54, %p55
    %p57 = scmp.ne.s32.totalorder %s43, %s44
    %p58 = scmp.eq.s32.totalorder %s15, 1
    %p59 = por %p57, %p58
    %p61 = scmp.ne.s32.totalorder %s44, %s60
    %p62 = scmp.eq.s32.totalorder %s15, 0
    %p63 = por %p61, %p62
    %s64 = ssub.s32 %s9, %s16
    %p65 = scmp.eq.s32.totalorder %s64, 0
    %s67 = sadd.s32 %s66, 1
    %s68 = scalar_select %p65, %s66, %s67
    %p71 = pneg %p65
    %p72 = scmp.eq.s32.totalorder %s9, 1
    %p73 = por %p71, %p72
    %p74 = scmp.ne.s32.totalorder %s66, %s69
    %p75 = scmp.eq.s32.totalorder %s9, 0
    %p76 = por %p74, %p75
    %p77 = scmp.ne.s32.totalorder %s66, %s69
    %p78 = scmp.eq.s32.totalorder %s14, 1
    %p79 = por %p77, %p78
    %p80 = scmp.ne.s32.totalorder %s69, %s70
    %p81 = scmp.eq.s32.totalorder %s14, 0
    %p82 = por %p80, %p81
    %p83 = scmp.ne.s32.totalorder %s69, %s70
    %p84 = scmp.eq.s32.totalorder %s15, 1
    %p85 = por %p83, %p84
    %p87 = scmp.ne.s32.totalorder %s70, %s86
    %p88 = scmp.eq.s32.totalorder %s15, 0
    %p89 = por %p87, %p88
    %s90 = ssub.s32 %s9, %s16
    %p91 = scmp.eq.s32.totalorder %s90, 0
    %s93 = sadd.s32 %s92, 1
    %s94 = scalar_select %p91, %s92, %s93
    %p97 = pneg %p91
    %p98 = scmp.eq.s32.totalorder %s9, 1
    %p99 = por %p97, %p98
    %p100 = scmp.ne.s32.totalorder %s92, %s95
    %p101 = scmp.eq.s32.totalorder %s9, 0
    %p102 = por %p100, %p101
    %p103 = scmp.ne.s32.totalorder %s92, %s95
    %p104 = scmp.eq.s32.totalorder %s14, 1
    %p105 = por %p103, %p104
    %p106 = scmp.ne.s32.totalorder %s95, %s96
    %p107 = scmp.eq.s32.totalorder %s14, 0
    %p108 = por %p106, %p107
    %p109 = scmp.ne.s32.totalorder %s95, %s96
    %p110 = scmp.eq.s32.totalorder %s15, 1
    %p111 = por %p109, %p110
    %p113 = scmp.ne.s32.totalorder %s96, %s112
    %p114 = scmp.eq.s32.totalorder %s15, 0
    %p115 = por %p113, %p114
    %p116 = scmp.le.s32.totalorder 1, %s9
    %p117 = scmp.lt.s32.totalorder %s9, 3
    %p118 = pnand %p116, %p117
    %p119 = pneg %p118
    // Predicated region
    $region9: #{discriminator_forward.1} parent=5 // pred_check
      _
    $region10: #{discriminator_forward.1} parent=5 // pred_check_branch
      %121 = sbr.rel (%p118) target = $region12
    $region11: #{discriminator_forward.1} parent=5 // pred_region
      %s122 = ssub.s32 %s9, 1
      // Predicated region
      $region13: #{discriminator_forward.1} parent=11 // pred_check
        %p123 = pneg %p30
      $region14: #{discriminator_forward.1} parent=11 // pred_check_branch
        %125 = sbr.rel (%p123) target = $region16
      $region15: #{discriminator_forward.1} parent=11 // pred_region
        _
      $region16: #{discriminator_forward.1} parent=11 // pred_fallthru
        _
    $region12: #{discriminator_forward.1} parent=5 // pred_fallthru
      _
    %p126 = scmp.lt.s32.totalorder %s9, 2
    // Predicated region
    $region17: #{discriminator_forward.1} parent=5 // pred_check
      %p127 = pneg %p126
    $region18: #{discriminator_forward.1} parent=5 // pred_check_branch
      %129 = sbr.rel (%p127) target = $region20
    $region19: #{discriminator_forward.1} parent=5 // pred_region
      // Predicated region
      $region21: #{discriminator_forward.1} parent=19 // pred_check
        %p130 = pneg %p50
      $region22: #{discriminator_forward.1} parent=19 // pred_check_branch
        %132 = sbr.rel (%p130) target = $region24
      $region23: #{discriminator_forward.1} parent=19 // pred_region
        %p133 = scmp.lt.s32.totalorder %s9, 1
        %s134 = scalar_select %p133, %s9, 1
        %s135 = smul.addr %s134, 3
        %s136 = smul.addr %s135, 4
        %s137 = scalar_lea.vmem %s1, %s136
      $region24: #{discriminator_forward.1} parent=19 // pred_fallthru
        _
      // Predicated region
      $region25: #{discriminator_forward.1} parent=19 // pred_check
        %p138 = pneg %p76
      $region26: #{discriminator_forward.1} parent=19 // pred_check_branch
        %140 = sbr.rel (%p138) target = $region28
      $region27: #{discriminator_forward.1} parent=19 // pred_region
        %p141 = scmp.lt.s32.totalorder %s9, 1
        %s142 = scalar_select %p141, %s9, 1
        %s143 = smul.addr %s142, 4
        %s144 = smul.addr %s143, 8
        %s145 = scalar_lea.vmem %s2, %s144
      $region28: #{discriminator_forward.1} parent=19 // pred_fallthru
        _
    $region20: #{discriminator_forward.1} parent=5 // pred_fallthru
      _
    %p146 = scmp.le.s32.totalorder 1, %s9
    %p147 = scmp.lt.s32.totalorder %s9, 3
    %p148 = pnand %p146, %p147
    %p149 = pneg %p148
    // Predicated region
    $region29: #{discriminator_forward.1} parent=5 // pred_check
      _
    $region30: #{discriminator_forward.1} parent=5 // pred_check_branch
      %151 = sbr.rel (%p148) target = $region32
    $region31: #{discriminator_forward.1} parent=5 // pred_region
      %s152 = ssub.s32 %s9, 1
      %p153 = pneg %p30
      %p154 = pneg %p27
      %p155 = scmp.lt.s32.totalorder %s14, 1
      %s156 = scalar_select %p155, %s14, 1
      %s157 = smul.addr %s156, 3
      %s158 = smul.addr %s157, 4
      %s159 = scalar_lea.vmem %s1, %s158
      %p160 = pneg %p56
      %p161 = pneg %p53
      %p162 = scmp.lt.s32.totalorder %s14, 1
      %s163 = scalar_select %p162, %s14, 1
      %s164 = smul.addr %s163, 4
      %s165 = smul.addr %s164, 8
      %s166 = scalar_lea.vmem %s2, %s165
      %p167 = pneg %p82
      %p168 = pneg %p79
      %p169 = pneg %p108
      %p170 = pneg %p105
      %p171 = scmp.lt.s32.totalorder %s14, 1
      %s172 = scalar_select %p171, %s14, 1
      %s173 = smul.addr %s172, 3
      %s174 = scalar_lea.vmem %s3, %s173
      %p175 = scmp.lt.s32.totalorder %s14, 1
      %s176 = scalar_select %p175, %s14, 1
      %s177 = smul.addr %s176, 3
      %s178 = smul.addr %s177, 4
      %s179 = scalar_lea.vmem %s1, %s178
      %p180 = scmp.lt.s32.totalorder %s14, 1
      %s181 = scalar_select %p180, %s14, 1
      %s182 = smul.addr %s181, 4
      %s183 = smul.addr %s182, 8
      %s184 = scalar_lea.vmem %s2, %s183
      %p185 = scmp.lt.s32.totalorder %s14, 1
      %s186 = scalar_select %p185, %s14, 1
      %s187 = smul.addr %s186, 3
      %s188 = scalar_lea.vmem %s3, %s187
      %189 = vst [vmem:[#allocation2] sm:$0xff] 0.0
      %190 = vst [vmem:[#allocation2 + $0x20] sm:$0xff] 0.0
      %v191 = vld [vmem:[%s179] sm:$0xff]
      %v192 = vld [vmem:[%s179 + $0x8] sm:$0xf]
      %v194 = vcombine.high %v191, %v191
      %196 = vst [vmem:[#allocation2 + $0x8] sm:$0xf] %v191
      %197 = vst [vmem:[#allocation2 + $0x10] sm:$0xf] %v194
      %198 = vst [vmem:[#allocation2 + $0x18] sm:$0xf] %v192
      %v199 = vld [vmem:[%s0] sm:$0x7]
      %v201 = vlaneseq
      %v202 = vshrl.u32 %v201, 7
      %v203 = vsub.s32 0, %v202
      %v204 = vrot.slane %v199, %v203
      %v205 = vlaneseq
      %v206 = vshrl.u32 %v205, 7
      %v207 = vsub.s32 1, %v206
      %v208 = vrot.slane %v199, %v207
      %v209 = vlaneseq
      %v210 = vshrl.u32 %v209, 7
      %v211 = vsub.s32 2, %v210
      %v212 = vrot.slane %v199, %v211
      %v216 = vld [vmem:[%s184] sm:$0xff]
      %v217 = vld [vmem:[#allocation2] sm:$0xf]
      %v218 = vld [vmem:[#allocation2 + $0x8] sm:$0xf]
      %v219 = vld [vmem:[#allocation2 + $0x10] sm:$0xf]
      %v220 = vld [vmem:[#allocation2 + $0x18] sm:$0xf]
      %222 = vrot.lane.b32.xlu0 %v216, 123
      %v223 = vpop.permute.xlu0 %222
      %228 = vrot.lane.b32.xlu0 %v217, 18
      %v229 = vpop.permute.xlu0 %228
      %230 = vrot.lane.b32.xlu0 %v218, 18
      %v231 = vpop.permute.xlu0 %230
      %232 = vrot.lane.b32.xlu0 %v219, 18
      %v233 = vpop.permute.xlu0 %232
      %234 = vrot.lane.b32.xlu0 %v220, 18
      %v235 = vpop.permute.xlu0 %234
      %vm236 = vcmask 146432
      %v237 = vsel %vm236, %v229, %v231
      %v238 = vsel %vm236, %v231, %v233
      %v239 = vsel %vm236, %v233, %v235
      %vm240 = vcmask 31744
      %v241 = vsel %vm240, %v223, 0
      %vm243 = vcmask 1043456
      %v244 = vsel %vm243, %v237, 0
      %v246 = vsel %vm243, %v238, 0
      %v248 = vsel %vm243, %v239, 0
      %250 = vmatprep.subr.mxu0 %v246
      %251 = vmatpush1.msra.mxu0 %v244
      %252 = vmatprep.subr.mxu0 0.0
      %253 = vmatpush1.msra.mxu0 0.0
      %254 = vmatprep.subr.mxu0 0.0
      %255 = vmatpush1.msra.mxu0 0.0
      %256 = vmatprep.subr.mxu0 0.0
      %257 = vmatpush1.msra.mxu0 0.0
      %258 = vmatprep.subr.mxu0 0.0
      %259 = vmatpush1.msra.mxu0 0.0
      %260 = vmatprep.subr.mxu0 0.0
      %261 = vmatpush1.msra.mxu0 0.0
      %262 = vmatprep.subr.mxu0 0.0
      %263 = vmatpush1.msra.mxu0 0.0
      %264 = vmatprep.subr.mxu0 0.0
      %265 = vmatpush1.msra.mxu0 0.0
      %266 = vmatprep.subr.mxu0 0.0
      %267 = vmatpush1.msra.mxu0 0.0
      %268 = vmatprep.subr.mxu0 0.0
      %269 = vmatpush1.msra.mxu0 0.0
      %270 = vmatprep.subr.mxu0 0.0
      %271 = vmatpush1.msra.mxu0 0.0
      %272 = vmatprep.subr.mxu0 0.0
      %273 = vmatpush1.msra.mxu0 0.0
      %274 = vmatprep.subr.mxu0 0.0
      %275 = vmatpush1.msra.mxu0 0.0
      %276 = vmatprep.subr.mxu0 0.0
      %277 = vmatpush1.msra.mxu0 0.0
      %278 = vmatprep.subr.mxu0 0.0
      %279 = vmatpush1.msra.mxu0 0.0
      %280 = vmatprep.subr.mxu0 0.0
      %281 = vmatpush1.msra.mxu0 0.0
      %282 = vmatprep.subr.mxu0 0.0
      %283 = vmatpush1.msra.mxu0 0.0
      %284 = vmatprep.subr.mxu0 0.0
      %285 = vmatpush1.msra.mxu0 0.0
      %286 = vmatprep.subr.mxu0 0.0
      %287 = vmatpush1.msra.mxu0 0.0
      %288 = vmatprep.subr.mxu0 0.0
      %289 = vmatpush1.msra.mxu0 0.0
      %290 = vmatprep.subr.mxu0 0.0
      %291 = vmatpush1.msra.mxu0 0.0
      %292 = vmatprep.subr.mxu0 0.0
      %293 = vmatpush1.msra.mxu0 0.0
      %294 = vmatprep.subr.mxu0 0.0
      %295 = vmatpush1.msra.mxu0 0.0
      %296 = vmatprep.subr.mxu0 0.0
      %297 = vmatpush1.msra.mxu0 0.0
      %298 = vmatprep.subr.mxu0 0.0
      %299 = vmatpush1.msra.mxu0 0.0
      %300 = vmatprep.subr.mxu0 0.0
      %301 = vmatpush1.msra.mxu0 0.0
      %302 = vmatprep.subr.mxu0 0.0
      %303 = vmatpush1.msra.mxu0 0.0
      %304 = vmatprep.subr.mxu0 0.0
      %305 = vmatpush1.msra.mxu0 0.0
      %306 = vmatprep.subr.mxu0 0.0
      %307 = vmatpush1.msra.mxu0 0.0
      %308 = vmatprep.subr.mxu0 0.0
      %309 = vmatpush1.msra.mxu0 0.0
      %310 = vmatprep.subr.mxu0 0.0
      %311 = vmatpush1.msra.mxu0 0.0
      %312 = vmatprep.subr.mxu0 0.0
      %313 = vmatpush1.msra.mxu0 0.0
      %314 = vmatprep.mubr.f32.mxu0 0.0
      %315 = vmatmul.mubr.f32.gmra.mrb[0].mxu0 %v241
      %v316 = vpop.f32.mrb[0].mxu0
      %v317 = vadd.f32 0.0, %v316
      %v318 = vpop.f32.mrb[0].mxu0
      %v319 = vadd.f32 0.0, %v318
      %320 = vdwg.mxu0
      %321 = vmatprep.subr.mxu0 0.0
      %322 = vmatpush1.msra.mxu0 %v248
      %323 = vmatprep.subr.mxu0 0.0
      %324 = vmatpush1.msra.mxu0 0.0
      %325 = vmatprep.subr.mxu0 0.0
      %326 = vmatpush1.msra.mxu0 0.0
      %327 = vmatprep.subr.mxu0 0.0
      %328 = vmatpush1.msra.mxu0 0.0
      %329 = vmatprep.subr.mxu0 0.0
      %330 = vmatpush1.msra.mxu0 0.0
      %331 = vmatprep.subr.mxu0 0.0
      %332 = vmatpush1.msra.mxu0 0.0
      %333 = vmatprep.subr.mxu0 0.0
      %334 = vmatpush1.msra.mxu0 0.0
      %335 = vmatprep.subr.mxu0 0.0
      %336 = vmatpush1.msra.mxu0 0.0
      %337 = vmatprep.subr.mxu0 0.0
      %338 = vmatpush1.msra.mxu0 0.0
      %339 = vmatprep.subr.mxu0 0.0
      %340 = vmatpush1.msra.mxu0 0.0
      %341 = vmatprep.subr.mxu0 0.0
      %342 = vmatpush1.msra.mxu0 0.0
      %343 = vmatprep.subr.mxu0 0.0
      %344 = vmatpush1.msra.mxu0 0.0
      %345 = vmatprep.subr.mxu0 0.0
      %346 = vmatpush1.msra.mxu0 0.0
      %347 = vmatprep.subr.mxu0 0.0
      %348 = vmatpush1.msra.mxu0 0.0
      %349 = vmatprep.subr.mxu0 0.0
      %350 = vmatpush1.msra.mxu0 0.0
      %351 = vmatprep.subr.mxu0 0.0
      %352 = vmatpush1.msra.mxu0 0.0
      %353 = vmatprep.subr.mxu0 0.0
      %354 = vmatpush1.msra.mxu0 0.0
      %355 = vmatprep.subr.mxu0 0.0
      %356 = vmatpush1.msra.mxu0 0.0
      %357 = vmatprep.subr.mxu0 0.0
      %358 = vmatpush1.msra.mxu0 0.0
      %359 = vmatprep.subr.mxu0 0.0
      %360 = vmatpush1.msra.mxu0 0.0
      %361 = vmatprep.subr.mxu0 0.0
      %362 = vmatpush1.msra.mxu0 0.0
      %363 = vmatprep.subr.mxu0 0.0
      %364 = vmatpush1.msra.mxu0 0.0
      %365 = vmatprep.subr.mxu0 0.0
      %366 = vmatpush1.msra.mxu0 0.0
      %367 = vmatprep.subr.mxu0 0.0
      %368 = vmatpush1.msra.mxu0 0.0
      %369 = vmatprep.subr.mxu0 0.0
      %370 = vmatpush1.msra.mxu0 0.0
      %371 = vmatprep.subr.mxu0 0.0
      %372 = vmatpush1.msra.mxu0 0.0
      %373 = vmatprep.subr.mxu0 0.0
      %374 = vmatpush1.msra.mxu0 0.0
      %375 = vmatprep.subr.mxu0 0.0
      %376 = vmatpush1.msra.mxu0 0.0
      %377 = vmatprep.subr.mxu0 0.0
      %378 = vmatpush1.msra.mxu0 0.0
      %379 = vmatprep.subr.mxu0 0.0
      %380 = vmatpush1.msra.mxu0 0.0
      %381 = vmatprep.subr.mxu0 0.0
      %382 = vmatpush1.msra.mxu0 0.0
      %383 = vmatprep.subr.mxu0 0.0
      %384 = vmatpush1.msra.mxu0 0.0
      %385 = vmatprep.mubr.f32.mxu0 0.0
      %386 = vmatmul.mubr.f32.gmra.mrb[0].mxu0 %v241
      %v387 = vpop.f32.mrb[0].mxu0
      %v388 = vadd.f32 0.0, %v387
      %v389 = vpop.f32.mrb[0].mxu0
      %390 = vdwg.mxu0
      %391 = vrot.lane.b32.xlu0 %v216, 127
      %v392 = vpop.permute.xlu0 %391
      %393 = vrot.lane.b32.xlu0 %v217, 19
      %v394 = vpop.permute.xlu0 %393
      %395 = vrot.lane.b32.xlu0 %v218, 19
      %v396 = vpop.permute.xlu0 %395
      %397 = vrot.lane.b32.xlu0 %v219, 19
      %v398 = vpop.permute.xlu0 %397
      %399 = vrot.lane.b32.xlu0 %v220, 19
      %v400 = vpop.permute.xlu0 %399
      %vm401 = vcmask 154624
      %v402 = vsel %vm401, %v394, %v396
      %v403 = vsel %vm401, %v396, %v398
      %v404 = vsel %vm401, %v398, %v400
      %v405 = vsel %vm240, %v392, 0
      %v407 = vsel %vm243, %v402, 0
      %v409 = vsel %vm243, %v403, 0
      %v411 = vsel %vm243, %v404, 0
      %413 = vmatprep.subr.mxu0 %v409
      %414 = vmatpush1.msra.mxu0 %v407
      %415 = vmatprep.subr.mxu0 0.0
      %416 = vmatpush1.msra.mxu0 0.0
      %417 = vmatprep.subr.mxu0 0.0
      %418 = vmatpush1.msra.mxu0 0.0
      %419 = vmatprep.subr.mxu0 0.0
      %420 = vmatpush1.msra.mxu0 0.0
      %421 = vmatprep.subr.mxu0 0.0
      %422 = vmatpush1.msra.mxu0 0.0
      %423 = vmatprep.subr.mxu0 0.0
      %424 = vmatpush1.msra.mxu0 0.0
      %425 = vmatprep.subr.mxu0 0.0
      %426 = vmatpush1.msra.mxu0 0.0
      %427 = vmatprep.subr.mxu0 0.0
      %428 = vmatpush1.msra.mxu0 0.0
      %429 = vmatprep.subr.mxu0 0.0
      %430 = vmatpush1.msra.mxu0 0.0
      %431 = vmatprep.subr.mxu0 0.0
      %432 = vmatpush1.msra.mxu0 0.0
      %433 = vmatprep.subr.mxu0 0.0
      %434 = vmatpush1.msra.mxu0 0.0
      %435 = vmatprep.subr.mxu0 0.0
      %436 = vmatpush1.msra.mxu0 0.0
      %437 = vmatprep.subr.mxu0 0.0
      %438 = vmatpush1.msra.mxu0 0.0
      %439 = vmatprep.subr.mxu0 0.0
      %440 = vmatpush1.msra.mxu0 0.0
      %441 = vmatprep.subr.mxu0 0.0
      %442 = vmatpush1.msra.mxu0 0.0
      %443 = vmatprep.subr.mxu0 0.0
      %444 = vmatpush1.msra.mxu0 0.0
      %445 = vmatprep.subr.mxu0 0.0
      %446 = vmatpush1.msra.mxu0 0.0
      %447 = vmatprep.subr.mxu0 0.0
      %448 = vmatpush1.msra.mxu0 0.0
      %449 = vmatprep.subr.mxu0 0.0
      %450 = vmatpush1.msra.mxu0 0.0
      %451 = vmatprep.subr.mxu0 0.0
      %452 = vmatpush1.msra.mxu0 0.0
      %453 = vmatprep.subr.mxu0 0.0
      %454 = vmatpush1.msra.mxu0 0.0
      %455 = vmatprep.subr.mxu0 0.0
      %456 = vmatpush1.msra.mxu0 0.0
      %457 = vmatprep.subr.mxu0 0.0
      %458 = vmatpush1.msra.mxu0 0.0
      %459 = vmatprep.subr.mxu0 0.0
      %460 = vmatpush1.msra.mxu0 0.0
      %461 = vmatprep.subr.mxu0 0.0
      %462 = vmatpush1.msra.mxu0 0.0
      %463 = vmatprep.subr.mxu0 0.0
      %464 = vmatpush1.msra.mxu0 0.0
      %465 = vmatprep.subr.mxu0 0.0
      %466 = vmatpush1.msra.mxu0 0.0
      %467 = vmatprep.subr.mxu0 0.0
      %468 = vmatpush1.msra.mxu0 0.0
      %469 = vmatprep.subr.mxu0 0.0
      %470 = vmatpush1.msra.mxu0 0.0
      %471 = vmatprep.subr.mxu0 0.0
      %472 = vmatpush1.msra.mxu0 0.0
      %473 = vmatprep.subr.mxu0 0.0
      %474 = vmatpush1.msra.mxu0 0.0
      %475 = vmatprep.subr.mxu0 0.0
      %476 = vmatpush1.msra.mxu0 0.0
      %477 = vmatprep.mubr.f32.mxu0 0.0
      %478 = vmatmul.mubr.f32.gmra.mrb[0].mxu0 %v405
      %v479 = vpop.f32.mrb[0].mxu0
      %v480 = vadd.f32 %v317, %v479
      %v481 = vpop.f32.mrb[0].mxu0
      %v482 = vadd.f32 %v319, %v481
      %483 = vdwg.mxu0
      %484 = vmatprep.subr.mxu0 0.0
      %485 = vmatpush1.msra.mxu0 %v411
      %486 = vmatprep.subr.mxu0 0.0
      %487 = vmatpush1.msra.mxu0 0.0
      %488 = vmatprep.subr.mxu0 0.0
      %489 = vmatpush1.msra.mxu0 0.0
      %490 = vmatprep.subr.mxu0 0.0
      %491 = vmatpush1.msra.mxu0 0.0
      %492 = vmatprep.subr.mxu0 0.0
      %493 = vmatpush1.msra.mxu0 0.0
      %494 = vmatprep.subr.mxu0 0.0
      %495 = vmatpush1.msra.mxu0 0.0
      %496 = vmatprep.subr.mxu0 0.0
      %497 = vmatpush1.msra.mxu0 0.0
      %498 = vmatprep.subr.mxu0 0.0
      %499 = vmatpush1.msra.mxu0 0.0
      %500 = vmatprep.subr.mxu0 0.0
      %501 = vmatpush1.msra.mxu0 0.0
      %502 = vmatprep.subr.mxu0 0.0
      %503 = vmatpush1.msra.mxu0 0.0
      %504 = vmatprep.subr.mxu0 0.0
      %505 = vmatpush1.msra.mxu0 0.0
      %506 = vmatprep.subr.mxu0 0.0
      %507 = vmatpush1.msra.mxu0 0.0
      %508 = vmatprep.subr.mxu0 0.0
      %509 = vmatpush1.msra.mxu0 0.0
      %510 = vmatprep.subr.mxu0 0.0
      %511 = vmatpush1.msra.mxu0 0.0
      %512 = vmatprep.subr.mxu0 0.0
      %513 = vmatpush1.msra.mxu0 0.0
      %514 = vmatprep.subr.mxu0 0.0
      %515 = vmatpush1.msra.mxu0 0.0
      %516 = vmatprep.subr.mxu0 0.0
      %517 = vmatpush1.msra.mxu0 0.0
      %518 = vmatprep.subr.mxu0 0.0
      %519 = vmatpush1.msra.mxu0 0.0
      %520 = vmatprep.subr.mxu0 0.0
      %521 = vmatpush1.msra.mxu0 0.0
      %522 = vmatprep.subr.mxu0 0.0
      %523 = vmatpush1.msra.mxu0 0.0
      %524 = vmatprep.subr.mxu0 0.0
      %525 = vmatpush1.msra.mxu0 0.0
      %526 = vmatprep.subr.mxu0 0.0
      %527 = vmatpush1.msra.mxu0 0.0
      %528 = vmatprep.subr.mxu0 0.0
      %529 = vmatpush1.msra.mxu0 0.0
      %530 = vmatprep.subr.mxu0 0.0
      %531 = vmatpush1.msra.mxu0 0.0
      %532 = vmatprep.subr.mxu0 0.0
      %533 = vmatpush1.msra.mxu0 0.0
      %534 = vmatprep.subr.mxu0 0.0
      %535 = vmatpush1.msra.mxu0 0.0
      %536 = vmatprep.subr.mxu0 0.0
      %537 = vmatpush1.msra.mxu0 0.0
      %538 = vmatprep.subr.mxu0 0.0
      %539 = vmatpush1.msra.mxu0 0.0
      %540 = vmatprep.subr.mxu0 0.0
      %541 = vmatpush1.msra.mxu0 0.0
      %542 = vmatprep.subr.mxu0 0.0
      %543 = vmatpush1.msra.mxu0 0.0
      %544 = vmatprep.subr.mxu0 0.0
      %545 = vmatpush1.msra.mxu0 0.0
      %546 = vmatprep.subr.mxu0 0.0
      %547 = vmatpush1.msra.mxu0 0.0
      %548 = vmatprep.mubr.f32.mxu0 0.0
      %549 = vmatmul.mubr.f32.gmra.mrb[0].mxu0 %v405
      %v550 = vpop.f32.mrb[0].mxu0
      %v551 = vadd.f32 %v388, %v550
      %v552 = vpop.f32.mrb[0].mxu0
      %553 = vdwg.mxu0
      %554 = vrot.lane.b32.xlu0 %v216, 119
      %v555 = vpop.permute.xlu0 %554
      %556 = vrot.lane.b32.xlu0 %v217, 17
      %v557 = vpop.permute.xlu0 %556
      %558 = vrot.lane.b32.xlu0 %v218, 17
      %v559 = vpop.permute.xlu0 %558
      %560 = vrot.lane.b32.xlu0 %v219, 17
      %v561 = vpop.permute.xlu0 %560
      %562 = vrot.lane.b32.xlu0 %v220, 17
      %v563 = vpop.permute.xlu0 %562
      %vm564 = vcmask 138240
      %v565 = vsel %vm564, %v557, %v559
      %v566 = vsel %vm564, %v559, %v561
      %v567 = vsel %vm564, %v561, %v563
      %v568 = vsel %vm240, %v555, 0
      %v570 = vsel %vm243, %v565, 0
      %v572 = vsel %vm243, %v566, 0
      %v574 = vsel %vm243, %v567, 0
      %576 = vmatprep.subr.mxu0 %v572
      %577 = vmatpush1.msra.mxu0 %v570
      %578 = vmatprep.subr.mxu0 0.0
      %579 = vmatpush1.msra.mxu0 0.0
      %580 = vmatprep.subr.mxu0 0.0
      %581 = vmatpush1.msra.mxu0 0.0
      %582 = vmatprep.subr.mxu0 0.0
      %583 = vmatpush1.msra.mxu0 0.0
      %584 = vmatprep.subr.mxu0 0.0
      %585 = vmatpush1.msra.mxu0 0.0
      %586 = vmatprep.subr.mxu0 0.0
      %587 = vmatpush1.msra.mxu0 0.0
      %588 = vmatprep.subr.mxu0 0.0
      %589 = vmatpush1.msra.mxu0 0.0
      %590 = vmatprep.subr.mxu0 0.0
      %591 = vmatpush1.msra.mxu0 0.0
      %592 = vmatprep.subr.mxu0 0.0
      %593 = vmatpush1.msra.mxu0 0.0
      %594 = vmatprep.subr.mxu0 0.0
      %595 = vmatpush1.msra.mxu0 0.0
      %596 = vmatprep.subr.mxu0 0.0
      %597 = vmatpush1.msra.mxu0 0.0
      %598 = vmatprep.subr.mxu0 0.0
      %599 = vmatpush1.msra.mxu0 0.0
      %600 = vmatprep.subr.mxu0 0.0
      %601 = vmatpush1.msra.mxu0 0.0
      %602 = vmatprep.subr.mxu0 0.0
      %603 = vmatpush1.msra.mxu0 0.0
      %604 = vmatprep.subr.mxu0 0.0
      %605 = vmatpush1.msra.mxu0 0.0
      %606 = vmatprep.subr.mxu0 0.0
      %607 = vmatpush1.msra.mxu0 0.0
      %608 = vmatprep.subr.mxu0 0.0
      %609 = vmatpush1.msra.mxu0 0.0
      %610 = vmatprep.subr.mxu0 0.0
      %611 = vmatpush1.msra.mxu0 0.0
      %612 = vmatprep.subr.mxu0 0.0
      %613 = vmatpush1.msra.mxu0 0.0
      %614 = vmatprep.subr.mxu0 0.0
      %615 = vmatpush1.msra.mxu0 0.0
      %616 = vmatprep.subr.mxu0 0.0
      %617 = vmatpush1.msra.mxu0 0.0
      %618 = vmatprep.subr.mxu0 0.0
      %619 = vmatpush1.msra.mxu0 0.0
      %620 = vmatprep.subr.mxu0 0.0
      %621 = vmatpush1.msra.mxu0 0.0
      %622 = vmatprep.subr.mxu0 0.0
      %623 = vmatpush1.msra.mxu0 0.0
      %624 = vmatprep.subr.mxu0 0.0
      %625 = vmatpush1.msra.mxu0 0.0
      %626 = vmatprep.subr.mxu0 0.0
      %627 = vmatpush1.msra.mxu0 0.0
      %628 = vmatprep.subr.mxu0 0.0
      %629 = vmatpush1.msra.mxu0 0.0
      %630 = vmatprep.subr.mxu0 0.0
      %631 = vmatpush1.msra.mxu0 0.0
      %632 = vmatprep.subr.mxu0 0.0
      %633 = vmatpush1.msra.mxu0 0.0
      %634 = vmatprep.subr.mxu0 0.0
      %635 = vmatpush1.msra.mxu0 0.0
      %636 = vmatprep.subr.mxu0 0.0
      %637 = vmatpush1.msra.mxu0 0.0
      %638 = vmatprep.subr.mxu0 0.0
      %639 = vmatpush1.msra.mxu0 0.0
      %640 = vmatprep.mubr.f32.mxu0 0.0
      %641 = vmatmul.mubr.f32.gmra.mrb[0].mxu0 %v568
      %v642 = vpop.f32.mrb[0].mxu0
      %v643 = vadd.f32 0.0, %v642
      %v644 = vpop.f32.mrb[0].mxu0
      %v645 = vadd.f32 0.0, %v644
      %646 = vdwg.mxu0
      %647 = vmatprep.subr.mxu0 0.0
      %648 = vmatpush1.msra.mxu0 %v574
      %649 = vmatprep.subr.mxu0 0.0
      %650 = vmatpush1.msra.mxu0 0.0
      %651 = vmatprep.subr.mxu0 0.0
      %652 = vmatpush1.msra.mxu0 0.0
      %653 = vmatprep.subr.mxu0 0.0
      %654 = vmatpush1.msra.mxu0 0.0
      %655 = vmatprep.subr.mxu0 0.0
      %656 = vmatpush1.msra.mxu0 0.0
      %657 = vmatprep.subr.mxu0 0.0
      %658 = vmatpush1.msra.mxu0 0.0
      %659 = vmatprep.subr.mxu0 0.0
      %660 = vmatpush1.msra.mxu0 0.0
      %661 = vmatprep.subr.mxu0 0.0
      %662 = vmatpush1.msra.mxu0 0.0
      %663 = vmatprep.subr.mxu0 0.0
      %664 = vmatpush1.msra.mxu0 0.0
      %665 = vmatprep.subr.mxu0 0.0
      %666 = vmatpush1.msra.mxu0 0.0
      %667 = vmatprep.subr.mxu0 0.0
      %668 = vmatpush1.msra.mxu0 0.0
      %669 = vmatprep.subr.mxu0 0.0
      %670 = vmatpush1.msra.mxu0 0.0
      %671 = vmatprep.subr.mxu0 0.0
      %672 = vmatpush1.msra.mxu0 0.0
      %673 = vmatprep.subr.mxu0 0.0
      %674 = vmatpush1.msra.mxu0 0.0
      %675 = vmatprep.subr.mxu0 0.0
      %676 = vmatpush1.msra.mxu0 0.0
      %677 = vmatprep.subr.mxu0 0.0
      %678 = vmatpush1.msra.mxu0 0.0
      %679 = vmatprep.subr.mxu0 0.0
      %680 = vmatpush1.msra.mxu0 0.0
      %681 = vmatprep.subr.mxu0 0.0
      %682 = vmatpush1.msra.mxu0 0.0
      %683 = vmatprep.subr.mxu0 0.0
      %684 = vmatpush1.msra.mxu0 0.0
      %685 = vmatprep.subr.mxu0 0.0
      %686 = vmatpush1.msra.mxu0 0.0
      %687 = vmatprep.subr.mxu0 0.0
      %688 = vmatpush1.msra.mxu0 0.0
      %689 = vmatprep.subr.mxu0 0.0
      %690 = vmatpush1.msra.mxu0 0.0
      %691 = vmatprep.subr.mxu0 0.0
      %692 = vmatpush1.msra.mxu0 0.0
      %693 = vmatprep.subr.mxu0 0.0
      %694 = vmatpush1.msra.mxu0 0.0
      %695 = vmatprep.subr.mxu0 0.0
      %696 = vmatpush1.msra.mxu0 0.0
      %697 = vmatprep.subr.mxu0 0.0
      %698 = vmatpush1.msra.mxu0 0.0
      %699 = vmatprep.subr.mxu0 0.0
      %700 = vmatpush1.msra.mxu0 0.0
      %701 = vmatprep.subr.mxu0 0.0
      %702 = vmatpush1.msra.mxu0 0.0
      %703 = vmatprep.subr.mxu0 0.0
      %704 = vmatpush1.msra.mxu0 0.0
      %705 = vmatprep.subr.mxu0 0.0
      %706 = vmatpush1.msra.mxu0 0.0
      %707 = vmatprep.subr.mxu0 0.0
      %708 = vmatpush1.msra.mxu0 0.0
      %709 = vmatprep.subr.mxu0 0.0
      %710 = vmatpush1.msra.mxu0 0.0
      %711 = vmatprep.mubr.f32.mxu0 0.0
      %712 = vmatmul.mubr.f32.gmra.mrb[0].mxu0 %v568
      %v713 = vpop.f32.mrb[0].mxu0
      %v714 = vadd.f32 0.0, %v713
      %v715 = vpop.f32.mrb[0].mxu0
      %716 = vdwg.mxu0
      %v717 = vadd.f32 %v480, %v643
      %v718 = vadd.f32 %v482, %v645
      %v719 = vadd.f32 %v551, %v714
      %720 = vrot.lane.b32.xlu0 %v216, 115
      %v721 = vpop.permute.xlu0 %720
      %722 = vrot.lane.b32.xlu0 %v217, 1
      %v723 = vpop.permute.xlu0 %722
      %724 = vrot.lane.b32.xlu0 %v218, 1
      %v725 = vpop.permute.xlu0 %724
      %726 = vrot.lane.b32.xlu0 %v219, 1
      %v727 = vpop.permute.xlu0 %726
      %728 = vrot.lane.b32.xlu0 %v220, 1
      %v729 = vpop.permute.xlu0 %728
      %vm730 = vcmask 7168
      %v731 = vsel %vm730, %v723, %v725
      %v732 = vsel %vm730, %v725, %v727
      %v733 = vsel %vm730, %v727, %v729
      %v734 = vsel %vm240, %v721, 0
      %v736 = vsel %vm243, %v731, 0
      %v738 = vsel %vm243, %v732, 0
      %v740 = vsel %vm243, %v733, 0
      %742 = vmatprep.subr.mxu0 %v738
      %743 = vmatpush1.msra.mxu0 %v736
      %744 = vmatprep.subr.mxu0 0.0
      %745 = vmatpush1.msra.mxu0 0.0
      %746 = vmatprep.subr.mxu0 0.0
      %747 = vmatpush1.msra.mxu0 0.0
      %748 = vmatprep.subr.mxu0 0.0
      %749 = vmatpush1.msra.mxu0 0.0
      %750 = vmatprep.subr.mxu0 0.0
      %751 = vmatpush1.msra.mxu0 0.0
      %752 = vmatprep.subr.mxu0 0.0
      %753 = vmatpush1.msra.mxu0 0.0
      %754 = vmatprep.subr.mxu0 0.0
      %755 = vmatpush1.msra.mxu0 0.0
      %756 = vmatprep.subr.mxu0 0.0
      %757 = vmatpush1.msra.mxu0 0.0
      %758 = vmatprep.subr.mxu0 0.0
      %759 = vmatpush1.msra.mxu0 0.0
      %760 = vmatprep.subr.mxu0 0.0
      %761 = vmatpush1.msra.mxu0 0.0
      %762 = vmatprep.subr.mxu0 0.0
      %763 = vmatpush1.msra.mxu0 0.0
      %764 = vmatprep.subr.mxu0 0.0
      %765 = vmatpush1.msra.mxu0 0.0
      %766 = vmatprep.subr.mxu0 0.0
      %767 = vmatpush1.msra.mxu0 0.0
      %768 = vmatprep.subr.mxu0 0.0
      %769 = vmatpush1.msra.mxu0 0.0
      %770 = vmatprep.subr.mxu0 0.0
      %771 = vmatpush1.msra.mxu0 0.0
      %772 = vmatprep.subr.mxu0 0.0
      %773 = vmatpush1.msra.mxu0 0.0
      %774 = vmatprep.subr.mxu0 0.0
      %775 = vmatpush1.msra.mxu0 0.0
      %776 = vmatprep.subr.mxu0 0.0
      %777 = vmatpush1.msra.mxu0 0.0
      %778 = vmatprep.subr.mxu0 0.0
      %779 = vmatpush1.msra.mxu0 0.0
      %780 = vmatprep.subr.mxu0 0.0
      %781 = vmatpush1.msra.mxu0 0.0
      %782 = vmatprep.subr.mxu0 0.0
      %783 = vmatpush1.msra.mxu0 0.0
      %784 = vmatprep.subr.mxu0 0.0
      %785 = vmatpush1.msra.mxu0 0.0
      %786 = vmatprep.subr.mxu0 0.0
      %787 = vmatpush1.msra.mxu0 0.0
      %788 = vmatprep.subr.mxu0 0.0
      %789 = vmatpush1.msra.mxu0 0.0
      %790 = vmatprep.subr.mxu0 0.0
      %791 = vmatpush1.msra.mxu0 0.0
      %792 = vmatprep.subr.mxu0 0.0
      %793 = vmatpush1.msra.mxu0 0.0
      %794 = vmatprep.subr.mxu0 0.0
      %795 = vmatpush1.msra.mxu0 0.0
      %796 = vmatprep.subr.mxu0 0.0
      %797 = vmatpush1.msra.mxu0 0.0
      %798 = vmatprep.subr.mxu0 0.0
      %799 = vmatpush1.msra.mxu0 0.0
      %800 = vmatprep.subr.mxu0 0.0
      %801 = vmatpush1.msra.mxu0 0.0
      %802 = vmatprep.subr.mxu0 0.0
      %803 = vmatpush1.msra.mxu0 0.0
      %804 = vmatprep.subr.mxu0 0.0
      %805 = vmatpush1.msra.mxu0 0.0
      %806 = vmatprep.mubr.f32.mxu0 0.0
      %807 = vmatmul.mubr.f32.gmra.mrb[0].mxu0 %v734
      %v808 = vpop.f32.mrb[0].mxu0
      %v809 = vadd.f32 0.0, %v808
      %v810 = vpop.f32.mrb[0].mxu0
      %v811 = vadd.f32 0.0, %v810
      %812 = vdwg.mxu0
      %813 = vmatprep.subr.mxu0 0.0
      %814 = vmatpush1.msra.mxu0 %v740
      %815 = vmatprep.subr.mxu0 0.0
      %816 = vmatpush1.msra.mxu0 0.0
      %817 = vmatprep.subr.mxu0 0.0
      %818 = vmatpush1.msra.mxu0 0.0
      %819 = vmatprep.subr.mxu0 0.0
      %820 = vmatpush1.msra.mxu0 0.0
      %821 = vmatprep.subr.mxu0 0.0
      %822 = vmatpush1.msra.mxu0 0.0
      %823 = vmatprep.subr.mxu0 0.0
      %824 = vmatpush1.msra.mxu0 0.0
      %825 = vmatprep.subr.mxu0 0.0
      %826 = vmatpush1.msra.mxu0 0.0
      %827 = vmatprep.subr.mxu0 0.0
      %828 = vmatpush1.msra.mxu0 0.0
      %829 = vmatprep.subr.mxu0 0.0
      %830 = vmatpush1.msra.mxu0 0.0
      %831 = vmatprep.subr.mxu0 0.0
      %832 = vmatpush1.msra.mxu0 0.0
      %833 = vmatprep.subr.mxu0 0.0
      %834 = vmatpush1.msra.mxu0 0.0
      %835 = vmatprep.subr.mxu0 0.0
      %836 = vmatpush1.msra.mxu0 0.0
      %837 = vmatprep.subr.mxu0 0.0
      %838 = vmatpush1.msra.mxu0 0.0
      %839 = vmatprep.subr.mxu0 0.0
      %840 = vmatpush1.msra.mxu0 0.0
      %841 = vmatprep.subr.mxu0 0.0
      %842 = vmatpush1.msra.mxu0 0.0
      %843 = vmatprep.subr.mxu0 0.0
      %844 = vmatpush1.msra.mxu0 0.0
      %845 = vmatprep.subr.mxu0 0.0
      %846 = vmatpush1.msra.mxu0 0.0
      %847 = vmatprep.subr.mxu0 0.0
      %848 = vmatpush1.msra.mxu0 0.0
      %849 = vmatprep.subr.mxu0 0.0
      %850 = vmatpush1.msra.mxu0 0.0
      %851 = vmatprep.subr.mxu0 0.0
      %852 = vmatpush1.msra.mxu0 0.0
      %853 = vmatprep.subr.mxu0 0.0
      %854 = vmatpush1.msra.mxu0 0.0
      %855 = vmatprep.subr.mxu0 0.0
      %856 = vmatpush1.msra.mxu0 0.0
      %857 = vmatprep.subr.mxu0 0.0
      %858 = vmatpush1.msra.mxu0 0.0
      %859 = vmatprep.subr.mxu0 0.0
      %860 = vmatpush1.msra.mxu0 0.0
      %861 = vmatprep.subr.mxu0 0.0
      %862 = vmatpush1.msra.mxu0 0.0
      %863 = vmatprep.subr.mxu0 0.0
      %864 = vmatpush1.msra.mxu0 0.0
      %865 = vmatprep.subr.mxu0 0.0
      %866 = vmatpush1.msra.mxu0 0.0
      %867 = vmatprep.subr.mxu0 0.0
      %868 = vmatpush1.msra.mxu0 0.0
      %869 = vmatprep.subr.mxu0 0.0
      %870 = vmatpush1.msra.mxu0 0.0
      %871 = vmatprep.subr.mxu0 0.0
      %872 = vmatpush1.msra.mxu0 0.0
      %873 = vmatprep.subr.mxu0 0.0
      %874 = vmatpush1.msra.mxu0 0.0
      %875 = vmatprep.subr.mxu0 0.0
      %876 = vmatpush1.msra.mxu0 0.0
      %877 = vmatprep.mubr.f32.mxu0 0.0
      %878 = vmatmul.mubr.f32.gmra.mrb[0].mxu0 %v734
      %v879 = vpop.f32.mrb[0].mxu0
      %v880 = vadd.f32 0.0, %v879
      %v881 = vpop.f32.mrb[0].mxu0
      %882 = vdwg.mxu0
      %v883 = vadd.f32 %v717, %v809
      %v884 = vadd.f32 %v718, %v811
      %v885 = vadd.f32 %v719, %v880
      %886 = vrot.lane.b32.xlu0 %v216, 111
      %v887 = vpop.permute.xlu0 %886
      %v888 = vsel %vm240, %v887, 0
      %v890 = vsel %vm243, %v218, 0
      %v892 = vsel %vm243, %v219, 0
      %v894 = vsel %vm243, %v220, 0
      %896 = vmatprep.subr.mxu0 %v892
      %897 = vmatpush1.msra.mxu0 %v890
      %898 = vmatprep.subr.mxu0 0.0
      %899 = vmatpush1.msra.mxu0 0.0
      %900 = vmatprep.subr.mxu0 0.0
      %901 = vmatpush1.msra.mxu0 0.0
      %902 = vmatprep.subr.mxu0 0.0
      %903 = vmatpush1.msra.mxu0 0.0
      %904 = vmatprep.subr.mxu0 0.0
      %905 = vmatpush1.msra.mxu0 0.0
      %906 = vmatprep.subr.mxu0 0.0
      %907 = vmatpush1.msra.mxu0 0.0
      %908 = vmatprep.subr.mxu0 0.0
      %909 = vmatpush1.msra.mxu0 0.0
      %910 = vmatprep.subr.mxu0 0.0
      %911 = vmatpush1.msra.mxu0 0.0
      %912 = vmatprep.subr.mxu0 0.0
      %913 = vmatpush1.msra.mxu0 0.0
      %914 = vmatprep.subr.mxu0 0.0
      %915 = vmatpush1.msra.mxu0 0.0
      %916 = vmatprep.subr.mxu0 0.0
      %917 = vmatpush1.msra.mxu0 0.0
      %918 = vmatprep.subr.mxu0 0.0
      %919 = vmatpush1.msra.mxu0 0.0
      %920 = vmatprep.subr.mxu0 0.0
      %921 = vmatpush1.msra.mxu0 0.0
      %922 = vmatprep.subr.mxu0 0.0
      %923 = vmatpush1.msra.mxu0 0.0
      %924 = vmatprep.subr.mxu0 0.0
      %925 = vmatpush1.msra.mxu0 0.0
      %926 = vmatprep.subr.mxu0 0.0
      %927 = vmatpush1.msra.mxu0 0.0
      %928 = vmatprep.subr.mxu0 0.0
      %929 = vmatpush1.msra.mxu0 0.0
      %930 = vmatprep.subr.mxu0 0.0
      %931 = vmatpush1.msra.mxu0 0.0
      %932 = vmatprep.subr.mxu0 0.0
      %933 = vmatpush1.msra.mxu0 0.0
      %934 = vmatprep.subr.mxu0 0.0
      %935 = vmatpush1.msra.mxu0 0.0
      %936 = vmatprep.subr.mxu0 0.0
      %937 = vmatpush1.msra.mxu0 0.0
      %938 = vmatprep.subr.mxu0 0.0
      %939 = vmatpush1.msra.mxu0 0.0
      %940 = vmatprep.subr.mxu0 0.0
      %941 = vmatpush1.msra.mxu0 0.0
      %942 = vmatprep.subr.mxu0 0.0
      %943 = vmatpush1.msra.mxu0 0.0
      %944 = vmatprep.subr.mxu0 0.0
      %945 = vmatpush1.msra.mxu0 0.0
      %946 = vmatprep.subr.mxu0 0.0
      %947 = vmatpush1.msra.mxu0 0.0
      %948 = vmatprep.subr.mxu0 0.0
      %949 = vmatpush1.msra.mxu0 0.0
      %950 = vmatprep.subr.mxu0 0.0
      %951 = vmatpush1.msra.mxu0 0.0
      %952 = vmatprep.subr.mxu0 0.0
      %953 = vmatpush1.msra.mxu0 0.0
      %954 = vmatprep.subr.mxu0 0.0
      %955 = vmatpush1.msra.mxu0 0.0
      %956 = vmatprep.subr.mxu0 0.0
      %957 = vmatpush1.msra.mxu0 0.0
      %958 = vmatprep.subr.mxu0 0.0
      %959 = vmatpush1.msra.mxu0 0.0
      %960 = vmatprep.mubr.f32.mxu0 0.0
      %961 = vmatmul.mubr.f32.gmra.mrb[0].mxu0 %v888
      %v962 = vpop.f32.mrb[0].mxu0
      %v963 = vadd.f32 0.0, %v962
      %v964 = vpop.f32.mrb[0].mxu0
      %v965 = vadd.f32 0.0, %v964
      %966 = vdwg.mxu0
      %967 = vmatprep.subr.mxu0 0.0
      %968 = vmatpush1.msra.mxu0 %v894
      %969 = vmatprep.subr.mxu0 0.0
      %970 = vmatpush1.msra.mxu0 0.0
      %971 = vmatprep.subr.mxu0 0.0
      %972 = vmatpush1.msra.mxu0 0.0
      %973 = vmatprep.subr.mxu0 0.0
      %974 = vmatpush1.msra.mxu0 0.0
      %975 = vmatprep.subr.mxu0 0.0
      %976 = vmatpush1.msra.mxu0 0.0
      %977 = vmatprep.subr.mxu0 0.0
      %978 = vmatpush1.msra.mxu0 0.0
      %979 = vmatprep.subr.mxu0 0.0
      %980 = vmatpush1.msra.mxu0 0.0
      %981 = vmatprep.subr.mxu0 0.0
      %982 = vmatpush1.msra.mxu0 0.0
      %983 = vmatprep.subr.mxu0 0.0
      %984 = vmatpush1.msra.mxu0 0.0
      %985 = vmatprep.subr.mxu0 0.0
      %986 = vmatpush1.msra.mxu0 0.0
      %987 = vmatprep.subr.mxu0 0.0
      %988 = vmatpush1.msra.mxu0 0.0
      %989 = vmatprep.subr.mxu0 0.0
      %990 = vmatpush1.msra.mxu0 0.0
      %991 = vmatprep.subr.mxu0 0.0
      %992 = vmatpush1.msra.mxu0 0.0
      %993 = vmatprep.subr.mxu0 0.0
      %994 = vmatpush1.msra.mxu0 0.0
      %995 = vmatprep.subr.mxu0 0.0
      %996 = vmatpush1.msra.mxu0 0.0
      %997 = vmatprep.subr.mxu0 0.0
      %998 = vmatpush1.msra.mxu0 0.0
      %999 = vmatprep.subr.mxu0 0.0
      %1000 = vmatpush1.msra.mxu0 0.0
      %1001 = vmatprep.subr.mxu0 0.0
      %1002 = vmatpush1.msra.mxu0 0.0
      %1003 = vmatprep.subr.mxu0 0.0
      %1004 = vmatpush1.msra.mxu0 0.0
      %1005 = vmatprep.subr.mxu0 0.0
      %1006 = vmatpush1.msra.mxu0 0.0
      %1007 = vmatprep.subr.mxu0 0.0
      %1008 = vmatpush1.msra.mxu0 0.0
      %1009 = vmatprep.subr.mxu0 0.0
      %1010 = vmatpush1.msra.mxu0 0.0
      %1011 = vmatprep.subr.mxu0 0.0
      %1012 = vmatpush1.msra.mxu0 0.0
      %1013 = vmatprep.subr.mxu0 0.0
      %1014 = vmatpush1.msra.mxu0 0.0
      %1015 = vmatprep.subr.mxu0 0.0
      %1016 = vmatpush1.msra.mxu0 0.0
      %1017 = vmatprep.subr.mxu0 0.0
      %1018 = vmatpush1.msra.mxu0 0.0
      %1019 = vmatprep.subr.mxu0 0.0
      %1020 = vmatpush1.msra.mxu0 0.0
      %1021 = vmatprep.subr.mxu0 0.0
      %1022 = vmatpush1.msra.mxu0 0.0
      %1023 = vmatprep.subr.mxu0 0.0
      %1024 = vmatpush1.msra.mxu0 0.0
      %1025 = vmatprep.subr.mxu0 0.0
      %1026 = vmatpush1.msra.mxu0 0.0
      %1027 = vmatprep.subr.mxu0 0.0
      %1028 = vmatpush1.msra.mxu0 0.0
      %1029 = vmatprep.subr.mxu0 0.0
      %1030 = vmatpush1.msra.mxu0 0.0
      %1031 = vmatprep.mubr.f32.mxu0 0.0
      %1032 = vmatmul.mubr.f32.gmra.mrb[0].mxu0 %v888
      %v1033 = vpop.f32.mrb[0].mxu0
      %v1034 = vadd.f32 0.0, %v1033
      %v1035 = vpop.f32.mrb[0].mxu0
      %1036 = vdwg.mxu0
      %v1037 = vadd.f32 %v883, %v963
      %v1038 = vadd.f32 %v884, %v965
      %v1039 = vadd.f32 %v885, %v1034
      %v1040 = vld [vmem:[#allocation2 + $0x8] sm:$0xf]
      %v1041 = vld [vmem:[#allocation2 + $0x10] sm:$0xf]
      %v1042 = vld [vmem:[#allocation2 + $0x18] sm:$0xf]
      %v1043 = vld [vmem:[#allocation2 + $0x20] sm:$0xf]
      %1044 = vrot.lane.b32.xlu0 %v216, 107
      %v1045 = vpop.permute.xlu0 %1044
      %1050 = vrot.lane.b32.xlu0 %v1040, 127
      %v1051 = vpop.permute.xlu0 %1050
      %1052 = vrot.lane.b32.xlu0 %v1041, 127
      %v1053 = vpop.permute.xlu0 %1052
      %1054 = vrot.lane.b32.xlu0 %v1042, 127
      %v1055 = vpop.permute.xlu0 %1054
      %1056 = vrot.lane.b32.xlu0 %v1043, 127
      %v1057 = vpop.permute.xlu0 %1056
      %vm1058 = vcmask 1039360
      %v1059 = vsel %vm1058, %v1051, %v1053
      %v1060 = vsel %vm1058, %v1053, %v1055
      %v1061 = vsel %vm1058, %v1055, %v1057
      %v1062 = vsel %vm240, %v1045, 0
      %v1064 = vsel %vm243, %v1059, 0
      %v1066 = vsel %vm243, %v1060, 0
      %v1068 = vsel %vm243, %v1061, 0
      %1070 = vmatprep.subr.mxu0 %v1066
      %1071 = vmatpush1.msra.mxu0 %v1064
      %1072 = vmatprep.subr.mxu0 0.0
      %1073 = vmatpush1.msra.mxu0 0.0
      %1074 = vmatprep.subr.mxu0 0.0
      %1075 = vmatpush1.msra.mxu0 0.0
      %1076 = vmatprep.subr.mxu0 0.0
      %1077 = vmatpush1.msra.mxu0 0.0
      %1078 = vmatprep.subr.mxu0 0.0
      %1079 = vmatpush1.msra.mxu0 0.0
      %1080 = vmatprep.subr.mxu0 0.0
      %1081 = vmatpush1.msra.mxu0 0.0
      %1082 = vmatprep.subr.mxu0 0.0
      %1083 = vmatpush1.msra.mxu0 0.0
      %1084 = vmatprep.subr.mxu0 0.0
      %1085 = vmatpush1.msra.mxu0 0.0
      %1086 = vmatprep.subr.mxu0 0.0
      %1087 = vmatpush1.msra.mxu0 0.0
      %1088 = vmatprep.subr.mxu0 0.0
      %1089 = vmatpush1.msra.mxu0 0.0
      %1090 = vmatprep.subr.mxu0 0.0
      %1091 = vmatpush1.msra.mxu0 0.0
      %1092 = vmatprep.subr.mxu0 0.0
      %1093 = vmatpush1.msra.mxu0 0.0
      %1094 = vmatprep.subr.mxu0 0.0
      %1095 = vmatpush1.msra.mxu0 0.0
      %1096 = vmatprep.subr.mxu0 0.0
      %1097 = vmatpush1.msra.mxu0 0.0
      %1098 = vmatprep.subr.mxu0 0.0
      %1099 = vmatpush1.msra.mxu0 0.0
      %1100 = vmatprep.subr.mxu0 0.0
      %1101 = vmatpush1.msra.mxu0 0.0
      %1102 = vmatprep.subr.mxu0 0.0
      %1103 = vmatpush1.msra.mxu0 0.0
      %1104 = vmatprep.subr.mxu0 0.0
      %1105 = vmatpush1.msra.mxu0 0.0
      %1106 = vmatprep.subr.mxu0 0.0
      %1107 = vmatpush1.msra.mxu0 0.0
      %1108 = vmatprep.subr.mxu0 0.0
      %1109 = vmatpush1.msra.mxu0 0.0
      %1110 = vmatprep.subr.mxu0 0.0
      %1111 = vmatpush1.msra.mxu0 0.0
      %1112 = vmatprep.subr.mxu0 0.0
      %1113 = vmatpush1.msra.mxu0 0.0
      %1114 = vmatprep.subr.mxu0 0.0
      %1115 = vmatpush1.msra.mxu0 0.0
      %1116 = vmatprep.subr.mxu0 0.0
      %1117 = vmatpush1.msra.mxu0 0.0
      %1118 = vmatprep.subr.mxu0 0.0
      %1119 = vmatpush1.msra.mxu0 0.0
      %1120 = vmatprep.subr.mxu0 0.0
      %1121 = vmatpush1.msra.mxu0 0.0
      %1122 = vmatprep.subr.mxu0 0.0
      %1123 = vmatpush1.msra.mxu0 0.0
      %1124 = vmatprep.subr.mxu0 0.0
      %1125 = vmatpush1.msra.mxu0 0.0
      %1126 = vmatprep.subr.mxu0 0.0
      %1127 = vmatpush1.msra.mxu0 0.0
      %1128 = vmatprep.subr.mxu0 0.0
      %1129 = vmatpush1.msra.mxu0 0.0
      %1130 = vmatprep.subr.mxu0 0.0
      %1131 = vmatpush1.msra.mxu0 0.0
      %1132 = vmatprep.subr.mxu0 0.0
      %1133 = vmatpush1.msra.mxu0 0.0
      %1134 = vmatprep.mubr.f32.mxu0 0.0
      %1135 = vmatmul.mubr.f32.gmra.mrb[0].mxu0 %v1062
      %v1136 = vpop.f32.mrb[0].mxu0
      %v1137 = vadd.f32 0.0, %v1136
      %v1138 = vpop.f32.mrb[0].mxu0
      %v1139 = vadd.f32 0.0, %v1138
      %1140 = vdwg.mxu0
      %1141 = vmatprep.subr.mxu0 0.0
      %1142 = vmatpush1.msra.mxu0 %v1068
      %1143 = vmatprep.subr.mxu0 0.0
      %1144 = vmatpush1.msra.mxu0 0.0
      %1145 = vmatprep.subr.mxu0 0.0
      %1146 = vmatpush1.msra.mxu0 0.0
      %1147 = vmatprep.subr.mxu0 0.0
      %1148 = vmatpush1.msra.mxu0 0.0
      %1149 = vmatprep.subr.mxu0 0.0
      %1150 = vmatpush1.msra.mxu0 0.0
      %1151 = vmatprep.subr.mxu0 0.0
      %1152 = vmatpush1.msra.mxu0 0.0
      %1153 = vmatprep.subr.mxu0 0.0
      %1154 = vmatpush1.msra.mxu0 0.0
      %1155 = vmatprep.subr.mxu0 0.0
      %1156 = vmatpush1.msra.mxu0 0.0
      %1157 = vmatprep.subr.mxu0 0.0
      %1158 = vmatpush1.msra.mxu0 0.0
      %1159 = vmatprep.subr.mxu0 0.0
      %1160 = vmatpush1.msra.mxu0 0.0
      %1161 = vmatprep.subr.mxu0 0.0
      %1162 = vmatpush1.msra.mxu0 0.0
      %1163 = vmatprep.subr.mxu0 0.0
      %1164 = vmatpush1.msra.mxu0 0.0
      %1165 = vmatprep.subr.mxu0 0.0
      %1166 = vmatpush1.msra.mxu0 0.0
      %1167 = vmatprep.subr.mxu0 0.0
      %1168 = vmatpush1.msra.mxu0 0.0
      %1169 = vmatprep.subr.mxu0 0.0
      %1170 = vmatpush1.msra.mxu0 0.0
      %1171 = vmatprep.subr.mxu0 0.0
      %1172 = vmatpush1.msra.mxu0 0.0
      %1173 = vmatprep.subr.mxu0 0.0
      %1174 = vmatpush1.msra.mxu0 0.0
      %1175 = vmatprep.subr.mxu0 0.0
      %1176 = vmatpush1.msra.mxu0 0.0
      %1177 = vmatprep.subr.mxu0 0.0
      %1178 = vmatpush1.msra.mxu0 0.0
      %1179 = vmatprep.subr.mxu0 0.0
      %1180 = vmatpush1.msra.mxu0 0.0
      %1181 = vmatprep.subr.mxu0 0.0
      %1182 = vmatpush1.msra.mxu0 0.0
      %1183 = vmatprep.subr.mxu0 0.0
      %1184 = vmatpush1.msra.mxu0 0.0
      %1185 = vmatprep.subr.mxu0 0.0
      %1186 = vmatpush1.msra.mxu0 0.0
      %1187 = vmatprep.subr.mxu0 0.0
      %1188 = vmatpush1.msra.mxu0 0.0
      %1189 = vmatprep.subr.mxu0 0.0
      %1190 = vmatpush1.msra.mxu0 0.0
      %1191 = vmatprep.subr.mxu0 0.0
      %1192 = vmatpush1.msra.mxu0 0.0
      %1193 = vmatprep.subr.mxu0 0.0
      %1194 = vmatpush1.msra.mxu0 0.0
      %1195 = vmatprep.subr.mxu0 0.0
      %1196 = vmatpush1.msra.mxu0 0.0
      %1197 = vmatprep.subr.mxu0 0.0
      %1198 = vmatpush1.msra.mxu0 0.0
      %1199 = vmatprep.subr.mxu0 0.0
      %1200 = vmatpush1.msra.mxu0 0.0
      %1201 = vmatprep.subr.mxu0 0.0
      %1202 = vmatpush1.msra.mxu0 0.0
      %1203 = vmatprep.subr.mxu0 0.0
      %1204 = vmatpush1.msra.mxu0 0.0
      %1205 = vmatprep.mubr.f32.mxu0 0.0
      %1206 = vmatmul.mubr.f32.gmra.mrb[0].mxu0 %v1062
      %v1207 = vpop.f32.mrb[0].mxu0
      %v1208 = vadd.f32 0.0, %v1207
      %v1209 = vpop.f32.mrb[0].mxu0
      %1210 = vdwg.mxu0
      %v1211 = vadd.f32 %v1037, %v1137
      %v1212 = vadd.f32 %v1038, %v1139
      %v1213 = vadd.f32 %v1039, %v1208
      %1214 = vrot.lane.b32.xlu0 %v216, 103
      %v1215 = vpop.permute.xlu0 %1214
      %1216 = vrot.lane.b32.xlu0 %v1040, 111
      %v1217 = vpop.permute.xlu0 %1216
      %1218 = vrot.lane.b32.xlu0 %v1041, 111
      %v1219 = vpop.permute.xlu0 %1218
      %1220 = vrot.lane.b32.xlu0 %v1042, 111
      %v1221 = vpop.permute.xlu0 %1220
      %1222 = vrot.lane.b32.xlu0 %v1043, 111
      %v1223 = vpop.permute.xlu0 %1222
      %vm1224 = vcmask 908288
      %v1225 = vsel %vm1224, %v1217, %v1219
      %v1226 = vsel %vm1224, %v1219, %v1221
      %v1227 = vsel %vm1224, %v1221, %v1223
      %v1228 = vsel %vm240, %v1215, 0
      %v1230 = vsel %vm243, %v1225, 0
      %v1232 = vsel %vm243, %v1226, 0
      %v1234 = vsel %vm243, %v1227, 0
      %1236 = vmatprep.subr.mxu0 %v1232
      %1237 = vmatpush1.msra.mxu0 %v1230
      %1238 = vmatprep.subr.mxu0 0.0
      %1239 = vmatpush1.msra.mxu0 0.0
      %1240 = vmatprep.subr.mxu0 0.0
      %1241 = vmatpush1.msra.mxu0 0.0
      %1242 = vmatprep.subr.mxu0 0.0
      %1243 = vmatpush1.msra.mxu0 0.0
      %1244 = vmatprep.subr.mxu0 0.0
      %1245 = vmatpush1.msra.mxu0 0.0
      %1246 = vmatprep.subr.mxu0 0.0
      %1247 = vmatpush1.msra.mxu0 0.0
      %1248 = vmatprep.subr.mxu0 0.0
      %1249 = vmatpush1.msra.mxu0 0.0
      %1250 = vmatprep.subr.mxu0 0.0
      %1251 = vmatpush1.msra.mxu0 0.0
      %1252 = vmatprep.subr.mxu0 0.0
      %1253 = vmatpush1.msra.mxu0 0.0
      %1254 = vmatprep.subr.mxu0 0.0
      %1255 = vmatpush1.msra.mxu0 0.0
      %1256 = vmatprep.subr.mxu0 0.0
      %1257 = vmatpush1.msra.mxu0 0.0
      %1258 = vmatprep.subr.mxu0 0.0
      %1259 = vmatpush1.msra.mxu0 0.0
      %1260 = vmatprep.subr.mxu0 0.0
      %1261 = vmatpush1.msra.mxu0 0.0
      %1262 = vmatprep.subr.mxu0 0.0
      %1263 = vmatpush1.msra.mxu0 0.0
      %1264 = vmatprep.subr.mxu0 0.0
      %1265 = vmatpush1.msra.mxu0 0.0
      %1266 = vmatprep.subr.mxu0 0.0
      %1267 = vmatpush1.msra.mxu0 0.0
      %1268 = vmatprep.subr.mxu0 0.0
      %1269 = vmatpush1.msra.mxu0 0.0
      %1270 = vmatprep.subr.mxu0 0.0
      %1271 = vmatpush1.msra.mxu0 0.0
      %1272 = vmatprep.subr.mxu0 0.0
      %1273 = vmatpush1.msra.mxu0 0.0
      %1274 = vmatprep.subr.mxu0 0.0
      %1275 = vmatpush1.msra.mxu0 0.0
      %1276 = vmatprep.subr.mxu0 0.0
      %1277 = vmatpush1.msra.mxu0 0.0
      %1278 = vmatprep.subr.mxu0 0.0
      %1279 = vmatpush1.msra.mxu0 0.0
      %1280 = vmatprep.subr.mxu0 0.0
      %1281 = vmatpush1.msra.mxu0 0.0
      %1282 = vmatprep.subr.mxu0 0.0
      %1283 = vmatpush1.msra.mxu0 0.0
      %1284 = vmatprep.subr.mxu0 0.0
      %1285 = vmatpush1.msra.mxu0 0.0
      %1286 = vmatprep.subr.mxu0 0.0
      %1287 = vmatpush1.msra.mxu0 0.0
      %1288 = vmatprep.subr.mxu0 0.0
      %1289 = vmatpush1.msra.mxu0 0.0
      %1290 = vmatprep.subr.mxu0 0.0
      %1291 = vmatpush1.msra.mxu0 0.0
      %1292 = vmatprep.subr.mxu0 0.0
      %1293 = vmatpush1.msra.mxu0 0.0
      %1294 = vmatprep.subr.mxu0 0.0
      %1295 = vmatpush1.msra.mxu0 0.0
      %1296 = vmatprep.subr.mxu0 0.0
      %1297 = vmatpush1.msra.mxu0 0.0
      %1298 = vmatprep.subr.mxu0 0.0
      %1299 = vmatpush1.msra.mxu0 0.0
      %1300 = vmatprep.mubr.f32.mxu0 0.0
      %1301 = vmatmul.mubr.f32.gmra.mrb[0].mxu0 %v1228
      %v1302 = vpop.f32.mrb[0].mxu0
      %v1303 = vadd.f32 0.0, %v1302
      %v1304 = vpop.f32.mrb[0].mxu0
      %v1305 = vadd.f32 0.0, %v1304
      %1306 = vdwg.mxu0
      %1307 = vmatprep.subr.mxu0 0.0
      %1308 = vmatpush1.msra.mxu0 %v1234
      %1309 = vmatprep.subr.mxu0 0.0
      %1310 = vmatpush1.msra.mxu0 0.0
      %1311 = vmatprep.subr.mxu0 0.0
      %1312 = vmatpush1.msra.mxu0 0.0
      %1313 = vmatprep.subr.mxu0 0.0
      %1314 = vmatpush1.msra.mxu0 0.0
      %1315 = vmatprep.subr.mxu0 0.0
      %1316 = vmatpush1.msra.mxu0 0.0
      %1317 = vmatprep.subr.mxu0 0.0
      %1318 = vmatpush1.msra.mxu0 0.0
      %1319 = vmatprep.subr.mxu0 0.0
      %1320 = vmatpush1.msra.mxu0 0.0
      %1321 = vmatprep.subr.mxu0 0.0
      %1322 = vmatpush1.msra.mxu0 0.0
      %1323 = vmatprep.subr.mxu0 0.0
      %1324 = vmatpush1.msra.mxu0 0.0
      %1325 = vmatprep.subr.mxu0 0.0
      %1326 = vmatpush1.msra.mxu0 0.0
      %1327 = vmatprep.subr.mxu0 0.0
      %1328 = vmatpush1.msra.mxu0 0.0
      %1329 = vmatprep.subr.mxu0 0.0
      %1330 = vmatpush1.msra.mxu0 0.0
      %1331 = vmatprep.subr.mxu0 0.0
      %1332 = vmatpush1.msra.mxu0 0.0
      %1333 = vmatprep.subr.mxu0 0.0
      %1334 = vmatpush1.msra.mxu0 0.0
      %1335 = vmatprep.subr.mxu0 0.0
      %1336 = vmatpush1.msra.mxu0 0.0
      %1337 = vmatprep.subr.mxu0 0.0
      %1338 = vmatpush1.msra.mxu0 0.0
      %1339 = vmatprep.subr.mxu0 0.0
      %1340 = vmatpush1.msra.mxu0 0.0
      %1341 = vmatprep.subr.mxu0 0.0
      %1342 = vmatpush1.msra.mxu0 0.0
      %1343 = vmatprep.subr.mxu0 0.0
      %1344 = vmatpush1.msra.mxu0 0.0
      %1345 = vmatprep.subr.mxu0 0.0
      %1346 = vmatpush1.msra.mxu0 0.0
      %1347 = vmatprep.subr.mxu0 0.0
      %1348 = vmatpush1.msra.mxu0 0.0
      %1349 = vmatprep.subr.mxu0 0.0
      %1350 = vmatpush1.msra.mxu0 0.0
      %1351 = vmatprep.subr.mxu0 0.0
      %1352 = vmatpush1.msra.mxu0 0.0
      %1353 = vmatprep.subr.mxu0 0.0
      %1354 = vmatpush1.msra.mxu0 0.0
      %1355 = vmatprep.subr.mxu0 0.0
      %1356 = vmatpush1.msra.mxu0 0.0
      %1357 = vmatprep.subr.mxu0 0.0
      %1358 = vmatpush1.msra.mxu0 0.0
      %1359 = vmatprep.subr.mxu0 0.0
      %1360 = vmatpush1.msra.mxu0 0.0
      %1361 = vmatprep.subr.mxu0 0.0
      %1362 = vmatpush1.msra.mxu0 0.0
      %1363 = vmatprep.subr.mxu0 0.0
      %1364 = vmatpush1.msra.mxu0 0.0
      %1365 = vmatprep.subr.mxu0 0.0
      %1366 = vmatpush1.msra.mxu0 0.0
      %1367 = vmatprep.subr.mxu0 0.0
      %1368 = vmatpush1.msra.mxu0 0.0
      %1369 = vmatprep.subr.mxu0 0.0
      %1370 = vmatpush1.msra.mxu0 0.0
      %1371 = vmatprep.mubr.f32.mxu0 0.0
      %1372 = vmatmul.mubr.f32.gmra.mrb[0].mxu0 %v1228
      %v1373 = vpop.f32.mrb[0].mxu0
      %v1374 = vadd.f32 0.0, %v1373
      %v1375 = vpop.f32.mrb[0].mxu0
      %1376 = vdwg.mxu0
      %v1377 = vadd.f32 %v1211, %v1303
      %v1378 = vadd.f32 %v1212, %v1305
      %v1379 = vadd.f32 %v1213, %v1374
      %1380 = vrot.lane.b32.xlu0 %v216, 99
      %v1381 = vpop.permute.xlu0 %1380
      %1382 = vrot.lane.b32.xlu0 %v1040, 110
      %v1383 = vpop.permute.xlu0 %1382
      %1384 = vrot.lane.b32.xlu0 %v1041, 110
      %v1385 = vpop.permute.xlu0 %1384
      %1386 = vrot.lane.b32.xlu0 %v1042, 110
      %v1387 = vpop.permute.xlu0 %1386
      %1388 = vrot.lane.b32.xlu0 %v1043, 110
      %v1389 = vpop.permute.xlu0 %1388
      %vm1390 = vcmask 900096
      %v1391 = vsel %vm1390, %v1383, %v1385
      %v1392 = vsel %vm1390, %v1385, %v1387
      %v1393 = vsel %vm1390, %v1387, %v1389
      %v1394 = vsel %vm240, %v1381, 0
      %v1396 = vsel %vm243, %v1391, 0
      %v1398 = vsel %vm243, %v1392, 0
      %v1400 = vsel %vm243, %v1393, 0
      %1402 = vmatprep.subr.mxu0 %v1398
      %1403 = vmatpush1.msra.mxu0 %v1396
      %1404 = vmatprep.subr.mxu0 0.0
      %1405 = vmatpush1.msra.mxu0 0.0
      %1406 = vmatprep.subr.mxu0 0.0
      %1407 = vmatpush1.msra.mxu0 0.0
      %1408 = vmatprep.subr.mxu0 0.0
      %1409 = vmatpush1.msra.mxu0 0.0
      %1410 = vmatprep.subr.mxu0 0.0
      %1411 = vmatpush1.msra.mxu0 0.0
      %1412 = vmatprep.subr.mxu0 0.0
      %1413 = vmatpush1.msra.mxu0 0.0
      %1414 = vmatprep.subr.mxu0 0.0
      %1415 = vmatpush1.msra.mxu0 0.0
      %1416 = vmatprep.subr.mxu0 0.0
      %1417 = vmatpush1.msra.mxu0 0.0
      %1418 = vmatprep.subr.mxu0 0.0
      %1419 = vmatpush1.msra.mxu0 0.0
      %1420 = vmatprep.subr.mxu0 0.0
      %1421 = vmatpush1.msra.mxu0 0.0
      %1422 = vmatprep.subr.mxu0 0.0
      %1423 = vmatpush1.msra.mxu0 0.0
      %1424 = vmatprep.subr.mxu0 0.0
      %1425 = vmatpush1.msra.mxu0 0.0
      %1426 = vmatprep.subr.mxu0 0.0
      %1427 = vmatpush1.msra.mxu0 0.0
      %1428 = vmatprep.subr.mxu0 0.0
      %1429 = vmatpush1.msra.mxu0 0.0
      %1430 = vmatprep.subr.mxu0 0.0
      %1431 = vmatpush1.msra.mxu0 0.0
      %1432 = vmatprep.subr.mxu0 0.0
      %1433 = vmatpush1.msra.mxu0 0.0
      %1434 = vmatprep.subr.mxu0 0.0
      %1435 = vmatpush1.msra.mxu0 0.0
      %1436 = vmatprep.subr.mxu0 0.0
      %1437 = vmatpush1.msra.mxu0 0.0
      %1438 = vmatprep.subr.mxu0 0.0
      %1439 = vmatpush1.msra.mxu0 0.0
      %1440 = vmatprep.subr.mxu0 0.0
      %1441 = vmatpush1.msra.mxu0 0.0
      %1442 = vmatprep.subr.mxu0 0.0
      %1443 = vmatpush1.msra.mxu0 0.0
      %1444 = vmatprep.subr.mxu0 0.0
      %1445 = vmatpush1.msra.mxu0 0.0
      %1446 = vmatprep.subr.mxu0 0.0
      %1447 = vmatpush1.msra.mxu0 0.0
      %1448 = vmatprep.subr.mxu0 0.0
      %1449 = vmatpush1.msra.mxu0 0.0
      %1450 = vmatprep.subr.mxu0 0.0
      %1451 = vmatpush1.msra.mxu0 0.0
      %1452 = vmatprep.subr.mxu0 0.0
      %1453 = vmatpush1.msra.mxu0 0.0
      %1454 = vmatprep.subr.mxu0 0.0
      %1455 = vmatpush1.msra.mxu0 0.0
      %1456 = vmatprep.subr.mxu0 0.0
      %1457 = vmatpush1.msra.mxu0 0.0
      %1458 = vmatprep.subr.mxu0 0.0
      %1459 = vmatpush1.msra.mxu0 0.0
      %1460 = vmatprep.subr.mxu0 0.0
      %1461 = vmatpush1.msra.mxu0 0.0
      %1462 = vmatprep.subr.mxu0 0.0
      %1463 = vmatpush1.msra.mxu0 0.0
      %1464 = vmatprep.subr.mxu0 0.0
      %1465 = vmatpush1.msra.mxu0 0.0
      %1466 = vmatprep.mubr.f32.mxu0 0.0
      %1467 = vmatmul.mubr.f32.gmra.mrb[0].mxu0 %v1394
      %v1468 = vpop.f32.mrb[0].mxu0
      %v1469 = vadd.f32 0.0, %v1468
      %v1470 = vpop.f32.mrb[0].mxu0
      %v1471 = vadd.f32 0.0, %v1470
      %1472 = vdwg.mxu0
      %1473 = vmatprep.subr.mxu0 0.0
      %1474 = vmatpush1.msra.mxu0 %v1400
      %1475 = vmatprep.subr.mxu0 0.0
      %1476 = vmatpush1.msra.mxu0 0.0
      %1477 = vmatprep.subr.mxu0 0.0
      %1478 = vmatpush1.msra.mxu0 0.0
      %1479 = vmatprep.subr.mxu0 0.0
      %1480 = vmatpush1.msra.mxu0 0.0
      %1481 = vmatprep.subr.mxu0 0.0
      %1482 = vmatpush1.msra.mxu0 0.0
      %1483 = vmatprep.subr.mxu0 0.0
      %1484 = vmatpush1.msra.mxu0 0.0
      %1485 = vmatprep.subr.mxu0 0.0
      %1486 = vmatpush1.msra.mxu0 0.0
      %1487 = vmatprep.subr.mxu0 0.0
      %1488 = vmatpush1.msra.mxu0 0.0
      %1489 = vmatprep.subr.mxu0 0.0
      %1490 = vmatpush1.msra.mxu0 0.0
      %1491 = vmatprep.subr.mxu0 0.0
      %1492 = vmatpush1.msra.mxu0 0.0
      %1493 = vmatprep.subr.mxu0 0.0
      %1494 = vmatpush1.msra.mxu0 0.0
      %1495 = vmatprep.subr.mxu0 0.0
      %1496 = vmatpush1.msra.mxu0 0.0
      %1497 = vmatprep.subr.mxu0 0.0
      %1498 = vmatpush1.msra.mxu0 0.0
      %1499 = vmatprep.subr.mxu0 0.0
      %1500 = vmatpush1.msra.mxu0 0.0
      %1501 = vmatprep.subr.mxu0 0.0
      %1502 = vmatpush1.msra.mxu0 0.0
      %1503 = vmatprep.subr.mxu0 0.0
      %1504 = vmatpush1.msra.mxu0 0.0
      %1505 = vmatprep.subr.mxu0 0.0
      %1506 = vmatpush1.msra.mxu0 0.0
      %1507 = vmatprep.subr.mxu0 0.0
      %1508 = vmatpush1.msra.mxu0 0.0
      %1509 = vmatprep.subr.mxu0 0.0
      %1510 = vmatpush1.msra.mxu0 0.0
      %1511 = vmatprep.subr.mxu0 0.0
      %1512 = vmatpush1.msra.mxu0 0.0
      %1513 = vmatprep.subr.mxu0 0.0
      %1514 = vmatpush1.msra.mxu0 0.0
      %1515 = vmatprep.subr.mxu0 0.0
      %1516 = vmatpush1.msra.mxu0 0.0
      %1517 = vmatprep.subr.mxu0 0.0
      %1518 = vmatpush1.msra.mxu0 0.0
      %1519 = vmatprep.subr.mxu0 0.0
      %1520 = vmatpush1.msra.mxu0 0.0
      %1521 = vmatprep.subr.mxu0 0.0
      %1522 = vmatpush1.msra.mxu0 0.0
      %1523 = vmatprep.subr.mxu0 0.0
      %1524 = vmatpush1.msra.mxu0 0.0
      %1525 = vmatprep.subr.mxu0 0.0
      %1526 = vmatpush1.msra.mxu0 0.0
      %1527 = vmatprep.subr.mxu0 0.0
      %1528 = vmatpush1.msra.mxu0 0.0
      %1529 = vmatprep.subr.mxu0 0.0
      %1530 = vmatpush1.msra.mxu0 0.0
      %1531 = vmatprep.subr.mxu0 0.0
      %1532 = vmatpush1.msra.mxu0 0.0
      %1533 = vmatprep.subr.mxu0 0.0
      %1534 = vmatpush1.msra.mxu0 0.0
      %1535 = vmatprep.subr.mxu0 0.0
      %1536 = vmatpush1.msra.mxu0 0.0
      %1537 = vmatprep.mubr.f32.mxu0 0.0
      %1538 = vmatmul.mubr.f32.gmra.mrb[0].mxu0 %v1394
      %v1539 = vpop.f32.mrb[0].mxu0
      %v1540 = vadd.f32 0.0, %v1539
      %v1541 = vpop.f32.mrb[0].mxu0
      %1542 = vdwg.mxu0
      %v1543 = vadd.f32 %v1377, %v1469
      %v1544 = vadd.f32 %v1378, %v1471
      %v1545 = vadd.f32 %v1379, %v1540
      %1546 = vrot.lane.b32.xlu0 %v216, 95
      %v1547 = vpop.permute.xlu0 %1546
      %1548 = vrot.lane.b32.xlu0 %v1040, 109
      %v1549 = vpop.permute.xlu0 %1548
      %1550 = vrot.lane.b32.xlu0 %v1041, 109
      %v1551 = vpop.permute.xlu0 %1550
      %1552 = vrot.lane.b32.xlu0 %v1042, 109
      %v1553 = vpop.permute.xlu0 %1552
      %1554 = vrot.lane.b32.xlu0 %v1043, 109
      %v1555 = vpop.permute.xlu0 %1554
      %vm1556 = vcmask 891904
      %v1557 = vsel %vm1556, %v1549, %v1551
      %v1558 = vsel %vm1556, %v1551, %v1553
      %v1559 = vsel %vm1556, %v1553, %v1555
      %v1560 = vsel %vm240, %v1547, 0
      %v1562 = vsel %vm243, %v1557, 0
      %v1564 = vsel %vm243, %v1558, 0
      %v1566 = vsel %vm243, %v1559, 0
      %1568 = vmatprep.subr.mxu0 %v1564
      %1569 = vmatpush1.msra.mxu0 %v1562
      %1570 = vmatprep.subr.mxu0 0.0
      %1571 = vmatpush1.msra.mxu0 0.0
      %1572 = vmatprep.subr.mxu0 0.0
      %1573 = vmatpush1.msra.mxu0 0.0
      %1574 = vmatprep.subr.mxu0 0.0
      %1575 = vmatpush1.msra.mxu0 0.0
      %1576 = vmatprep.subr.mxu0 0.0
      %1577 = vmatpush1.msra.mxu0 0.0
      %1578 = vmatprep.subr.mxu0 0.0
      %1579 = vmatpush1.msra.mxu0 0.0
      %1580 = vmatprep.subr.mxu0 0.0
      %1581 = vmatpush1.msra.mxu0 0.0
      %1582 = vmatprep.subr.mxu0 0.0
      %1583 = vmatpush1.msra.mxu0 0.0
      %1584 = vmatprep.subr.mxu0 0.0
      %1585 = vmatpush1.msra.mxu0 0.0
      %1586 = vmatprep.subr.mxu0 0.0
      %1587 = vmatpush1.msra.mxu0 0.0
      %1588 = vmatprep.subr.mxu0 0.0
      %1589 = vmatpush1.msra.mxu0 0.0
      %1590 = vmatprep.subr.mxu0 0.0
      %1591 = vmatpush1.msra.mxu0 0.0
      %1592 = vmatprep.subr.mxu0 0.0
      %1593 = vmatpush1.msra.mxu0 0.0
      %1594 = vmatprep.subr.mxu0 0.0
      %1595 = vmatpush1.msra.mxu0 0.0
      %1596 = vmatprep.subr.mxu0 0.0
      %1597 = vmatpush1.msra.mxu0 0.0
      %1598 = vmatprep.subr.mxu0 0.0
      %1599 = vmatpush1.msra.mxu0 0.0
      %1600 = vmatprep.subr.mxu0 0.0
      %1601 = vmatpush1.msra.mxu0 0.0
      %1602 = vmatprep.subr.mxu0 0.0
      %1603 = vmatpush1.msra.mxu0 0.0
      %1604 = vmatprep.subr.mxu0 0.0
      %1605 = vmatpush1.msra.mxu0 0.0
      %1606 = vmatprep.subr.mxu0 0.0
      %1607 = vmatpush1.msra.mxu0 0.0
      %1608 = vmatprep.subr.mxu0 0.0
      %1609 = vmatpush1.msra.mxu0 0.0
      %1610 = vmatprep.subr.mxu0 0.0
      %1611 = vmatpush1.msra.mxu0 0.0
      %1612 = vmatprep.subr.mxu0 0.0
      %1613 = vmatpush1.msra.mxu0 0.0
      %1614 = vmatprep.subr.mxu0 0.0
      %1615 = vmatpush1.msra.mxu0 0.0
      %1616 = vmatprep.subr.mxu0 0.0
      %1617 = vmatpush1.msra.mxu0 0.0
      %1618 = vmatprep.subr.mxu0 0.0
      %1619 = vmatpush1.msra.mxu0 0.0
      %1620 = vmatprep.subr.mxu0 0.0
      %1621 = vmatpush1.msra.mxu0 0.0
      %1622 = vmatprep.subr.mxu0 0.0
      %1623 = vmatpush1.msra.mxu0 0.0
      %1624 = vmatprep.subr.mxu0 0.0
      %1625 = vmatpush1.msra.mxu0 0.0
      %1626 = vmatprep.subr.mxu0 0.0
      %1627 = vmatpush1.msra.mxu0 0.0
      %1628 = vmatprep.subr.mxu0 0.0
      %1629 = vmatpush1.msra.mxu0 0.0
      %1630 = vmatprep.subr.mxu0 0.0
      %1631 = vmatpush1.msra.mxu0 0.0
      %1632 = vmatprep.mubr.f32.mxu0 0.0
      %1633 = vmatmul.mubr.f32.gmra.mrb[0].mxu0 %v1560
      %v1634 = vpop.f32.mrb[0].mxu0
      %v1635 = vadd.f32 0.0, %v1634
      %v1636 = vpop.f32.mrb[0].mxu0
      %v1637 = vadd.f32 0.0, %v1636
      %1638 = vdwg.mxu0
      %1639 = vmatprep.subr.mxu0 0.0
      %1640 = vmatpush1.msra.mxu0 %v1566
      %1641 = vmatprep.subr.mxu0 0.0
      %1642 = vmatpush1.msra.mxu0 0.0
      %1643 = vmatprep.subr.mxu0 0.0
      %1644 = vmatpush1.msra.mxu0 0.0
      %1645 = vmatprep.subr.mxu0 0.0
      %1646 = vmatpush1.msra.mxu0 0.0
      %1647 = vmatprep.subr.mxu0 0.0
      %1648 = vmatpush1.msra.mxu0 0.0
      %1649 = vmatprep.subr.mxu0 0.0
      %1650 = vmatpush1.msra.mxu0 0.0
      %1651 = vmatprep.subr.mxu0 0.0
      %1652 = vmatpush1.msra.mxu0 0.0
      %1653 = vmatprep.subr.mxu0 0.0
      %1654 = vmatpush1.msra.mxu0 0.0
      %1655 = vmatprep.subr.mxu0 0.0
      %1656 = vmatpush1.msra.mxu0 0.0
      %1657 = vmatprep.subr.mxu0 0.0
      %1658 = vmatpush1.msra.mxu0 0.0
      %1659 = vmatprep.subr.mxu0 0.0
      %1660 = vmatpush1.msra.mxu0 0.0
      %1661 = vmatprep.subr.mxu0 0.0
      %1662 = vmatpush1.msra.mxu0 0.0
      %1663 = vmatprep.subr.mxu0 0.0
      %1664 = vmatpush1.msra.mxu0 0.0
      %1665 = vmatprep.subr.mxu0 0.0
      %1666 = vmatpush1.msra.mxu0 0.0
      %1667 = vmatprep.subr.mxu0 0.0
      %1668 = vmatpush1.msra.mxu0 0.0
      %1669 = vmatprep.subr.mxu0 0.0
      %1670 = vmatpush1.msra.mxu0 0.0
      %1671 = vmatprep.subr.mxu0 0.0
      %1672 = vmatpush1.msra.mxu0 0.0
      %1673 = vmatprep.subr.mxu0 0.0
      %1674 = vmatpush1.msra.mxu0 0.0
      %1675 = vmatprep.subr.mxu0 0.0
      %1676 = vmatpush1.msra.mxu0 0.0
      %1677 = vmatprep.subr.mxu0 0.0
      %1678 = vmatpush1.msra.mxu0 0.0
      %1679 = vmatprep.subr.mxu0 0.0
      %1680 = vmatpush1.msra.mxu0 0.0
      %1681 = vmatprep.subr.mxu0 0.0
      %1682 = vmatpush1.msra.mxu0 0.0
      %1683 = vmatprep.subr.mxu0 0.0
      %1684 = vmatpush1.msra.mxu0 0.0
      %1685 = vmatprep.subr.mxu0 0.0
      %1686 = vmatpush1.msra.mxu0 0.0
      %1687 = vmatprep.subr.mxu0 0.0
      %1688 = vmatpush1.msra.mxu0 0.0
      %1689 = vmatprep.subr.mxu0 0.0
      %1690 = vmatpush1.msra.mxu0 0.0
      %1691 = vmatprep.subr.mxu0 0.0
      %1692 = vmatpush1.msra.mxu0 0.0
      %1693 = vmatprep.subr.mxu0 0.0
      %1694 = vmatpush1.msra.mxu0 0.0
      %1695 = vmatprep.subr.mxu0 0.0
      %1696 = vmatpush1.msra.mxu0 0.0
      %1697 = vmatprep.subr.mxu0 0.0
      %1698 = vmatpush1.msra.mxu0 0.0
      %1699 = vmatprep.subr.mxu0 0.0
      %1700 = vmatpush1.msra.mxu0 0.0
      %1701 = vmatprep.subr.mxu0 0.0
      %1702 = vmatpush1.msra.mxu0 0.0
      %1703 = vmatprep.mubr.f32.mxu0 0.0
      %1704 = vmatmul.mubr.f32.gmra.mrb[0].mxu0 %v1560
      %v1705 = vpop.f32.mrb[0].mxu0
      %v1706 = vadd.f32 0.0, %v1705
      %v1707 = vpop.f32.mrb[0].mxu0
      %1708 = vdwg.mxu0
      %v1709 = vadd.f32 %v1543, %v1635
      %v1710 = vadd.f32 %v1544, %v1637
      %v1711 = vadd.f32 %v1545, %v1706
      %1712 = vset.pattern.permute.xlu0 0
      %1713 = vperm.xlu0 %1712, %v216
      %v1714 = vpop.permute.xlu0 %1713
      %v1716 = vadd.f32 %v1709, %v1714
      %v1717 = vadd.f32 %v1710, %v1714
      %v1718 = vadd.f32 %v1711, %v1714
      %vm1719 = vcmp.ge.f32.partialorder %v1716, 0.0
      %vm1720 = vcmp.ge.f32.partialorder %v1717, 0.0
      %vm1721 = vcmp.ge.f32.partialorder %v1718, 0.0
      %v1722 = vmul.f32 %v1716, 0.02
      %v1723 = vmul.f32 %v1717, 0.02
      %v1724 = vmul.f32 %v1718, 0.02
      %v1725 = vsel %vm1719, %v1716, %v1722
      %v1726 = vsel %vm1720, %v1717, %v1723
      %v1727 = vsel %vm1721, %v1718, %v1724
      %v1728 = vmul.f32 %v1725, %v204
      %v1729 = vmul.f32 %v1726, %v208
      %v1730 = vmul.f32 %v1727, %v212
      %1731 = vst [vmem:[#allocation2 + $0x8] sm:$0xff] %v1728
      %1732 = vst [vmem:[#allocation2 + $0x10] sm:$0xff] %v1729
      %1733 = vst [vmem:[#allocation2 + $0x18] sm:$0xff] %v1730
      %v1734 = vld [vmem:[%s184 + $0x8] sm:$0xff]
      %v1735 = vld [vmem:[#allocation2] sm:$0xff]
      %v1736 = vld [vmem:[#allocation2 + $0x8] sm:$0xff]
      %v1737 = vld [vmem:[#allocation2 + $0x10] sm:$0xff]
      %v1738 = vld [vmem:[#allocation2 + $0x18] sm:$0xff]
      %1740 = vrot.lane.b32.xlu0 %v1734, 119
      %v1741 = vpop.permute.xlu0 %1740
      %1746 = vrot.lane.b32.xlu0 %v1735, 18
      %v1747 = vpop.permute.xlu0 %1746
      %1748 = vrot.lane.b32.xlu0 %v1736, 18
      %v1749 = vpop.permute.xlu0 %1748
      %1750 = vrot.lane.b32.xlu0 %v1737, 18
      %v1751 = vpop.permute.xlu0 %1750
      %1752 = vrot.lane.b32.xlu0 %v1738, 18
      %v1753 = vpop.permute.xlu0 %1752
      %v1754 = vsel %vm236, %v1747, %v1749
      %v1755 = vsel %vm236, %v1749, %v1751
      %v1756 = vsel %vm236, %v1751, %v1753
      %vm1760 = vcmask 64512
      %v1761 = vsel %vm1760, %v1741, 0
      %1763 = vmatprep.subr.mxu0 %v1755
      %1764 = vmatpush1.msra.mxu0 %v1754
      %1765 = vmatprep.subr.mxu0 0.0
      %1766 = vmatpush1.msra.mxu0 0.0
      %1767 = vmatprep.subr.mxu0 0.0
      %1768 = vmatpush1.msra.mxu0 0.0
      %1769 = vmatprep.subr.mxu0 0.0
      %1770 = vmatpush1.msra.mxu0 0.0
      %1771 = vmatprep.subr.mxu0 0.0
      %1772 = vmatpush1.msra.mxu0 0.0
      %1773 = vmatprep.subr.mxu0 0.0
      %1774 = vmatpush1.msra.mxu0 0.0
      %1775 = vmatprep.subr.mxu0 0.0
      %1776 = vmatpush1.msra.mxu0 0.0
      %1777 = vmatprep.subr.mxu0 0.0
      %1778 = vmatpush1.msra.mxu0 0.0
      %1779 = vmatprep.subr.mxu0 0.0
      %1780 = vmatpush1.msra.mxu0 0.0
      %1781 = vmatprep.subr.mxu0 0.0
      %1782 = vmatpush1.msra.mxu0 0.0
      %1783 = vmatprep.subr.mxu0 0.0
      %1784 = vmatpush1.msra.mxu0 0.0
      %1785 = vmatprep.subr.mxu0 0.0
      %1786 = vmatpush1.msra.mxu0 0.0
      %1787 = vmatprep.subr.mxu0 0.0
      %1788 = vmatpush1.msra.mxu0 0.0
      %1789 = vmatprep.subr.mxu0 0.0
      %1790 = vmatpush1.msra.mxu0 0.0
      %1791 = vmatprep.subr.mxu0 0.0
      %1792 = vmatpush1.msra.mxu0 0.0
      %1793 = vmatprep.subr.mxu0 0.0
      %1794 = vmatpush1.msra.mxu0 0.0
      %1795 = vmatprep.subr.mxu0 0.0
      %1796 = vmatpush1.msra.mxu0 0.0
      %1797 = vmatprep.subr.mxu0 0.0
      %1798 = vmatpush1.msra.mxu0 0.0
      %1799 = vmatprep.subr.mxu0 0.0
      %1800 = vmatpush1.msra.mxu0 0.0
      %1801 = vmatprep.subr.mxu0 0.0
      %1802 = vmatpush1.msra.mxu0 0.0
      %1803 = vmatprep.subr.mxu0 0.0
      %1804 = vmatpush1.msra.mxu0 0.0
      %1805 = vmatprep.subr.mxu0 0.0
      %1806 = vmatpush1.msra.mxu0 0.0
      %1807 = vmatprep.subr.mxu0 0.0
      %1808 = vmatpush1.msra.mxu0 0.0
      %1809 = vmatprep.subr.mxu0 0.0
      %1810 = vmatpush1.msra.mxu0 0.0
      %1811 = vmatprep.subr.mxu0 0.0
      %1812 = vmatpush1.msra.mxu0 0.0
      %1813 = vmatprep.subr.mxu0 0.0
      %1814 = vmatpush1.msra.mxu0 0.0
      %1815 = vmatprep.subr.mxu0 0.0
      %1816 = vmatpush1.msra.mxu0 0.0
      %1817 = vmatprep.subr.mxu0 0.0
      %1818 = vmatpush1.msra.mxu0 0.0
      %1819 = vmatprep.subr.mxu0 0.0
      %1820 = vmatpush1.msra.mxu0 0.0
      %1821 = vmatprep.subr.mxu0 0.0
      %1822 = vmatpush1.msra.mxu0 0.0
      %1823 = vmatprep.subr.mxu0 0.0
      %1824 = vmatpush1.msra.mxu0 0.0
      %1825 = vmatprep.subr.mxu0 0.0
      %1826 = vmatpush1.msra.mxu0 0.0
      %1827 = vmatprep.mubr.f32.mxu0 0.0
      %1828 = vmatmul.mubr.f32.gmra.mrb[0].mxu0 %v1761
      %v1829 = vpop.f32.mrb[0].mxu0
      %v1830 = vadd.f32 0.0, %v1829
      %v1831 = vpop.f32.mrb[0].mxu0
      %v1832 = vadd.f32 0.0, %v1831
      %1833 = vdwg.mxu0
      %1834 = vmatprep.subr.mxu0 0.0
      %1835 = vmatpush1.msra.mxu0 %v1756
      %1836 = vmatprep.subr.mxu0 0.0
      %1837 = vmatpush1.msra.mxu0 0.0
      %1838 = vmatprep.subr.mxu0 0.0
      %1839 = vmatpush1.msra.mxu0 0.0
      %1840 = vmatprep.subr.mxu0 0.0
      %1841 = vmatpush1.msra.mxu0 0.0
      %1842 = vmatprep.subr.mxu0 0.0
      %1843 = vmatpush1.msra.mxu0 0.0
      %1844 = vmatprep.subr.mxu0 0.0
      %1845 = vmatpush1.msra.mxu0 0.0
      %1846 = vmatprep.subr.mxu0 0.0
      %1847 = vmatpush1.msra.mxu0 0.0
      %1848 = vmatprep.subr.mxu0 0.0
      %1849 = vmatpush1.msra.mxu0 0.0
      %1850 = vmatprep.subr.mxu0 0.0
      %1851 = vmatpush1.msra.mxu0 0.0
      %1852 = vmatprep.subr.mxu0 0.0
      %1853 = vmatpush1.msra.mxu0 0.0
      %1854 = vmatprep.subr.mxu0 0.0
      %1855 = vmatpush1.msra.mxu0 0.0
      %1856 = vmatprep.subr.mxu0 0.0
      %1857 = vmatpush1.msra.mxu0 0.0
      %1858 = vmatprep.subr.mxu0 0.0
      %1859 = vmatpush1.msra.mxu0 0.0
      %1860 = vmatprep.subr.mxu0 0.0
      %1861 = vmatpush1.msra.mxu0 0.0
      %1862 = vmatprep.subr.mxu0 0.0
      %1863 = vmatpush1.msra.mxu0 0.0
      %1864 = vmatprep.subr.mxu0 0.0
      %1865 = vmatpush1.msra.mxu0 0.0
      %1866 = vmatprep.subr.mxu0 0.0
      %1867 = vmatpush1.msra.mxu0 0.0
      %1868 = vmatprep.subr.mxu0 0.0
      %1869 = vmatpush1.msra.mxu0 0.0
      %1870 = vmatprep.subr.mxu0 0.0
      %1871 = vmatpush1.msra.mxu0 0.0
      %1872 = vmatprep.subr.mxu0 0.0
      %1873 = vmatpush1.msra.mxu0 0.0
      %1874 = vmatprep.subr.mxu0 0.0
      %1875 = vmatpush1.msra.mxu0 0.0
      %1876 = vmatprep.subr.mxu0 0.0
      %1877 = vmatpush1.msra.mxu0 0.0
      %1878 = vmatprep.subr.mxu0 0.0
      %1879 = vmatpush1.msra.mxu0 0.0
      %1880 = vmatprep.subr.mxu0 0.0
      %1881 = vmatpush1.msra.mxu0 0.0
      %1882 = vmatprep.subr.mxu0 0.0
      %1883 = vmatpush1.msra.mxu0 0.0
      %1884 = vmatprep.subr.mxu0 0.0
      %1885 = vmatpush1.msra.mxu0 0.0
      %1886 = vmatprep.subr.mxu0 0.0
      %1887 = vmatpush1.msra.mxu0 0.0
      %1888 = vmatprep.subr.mxu0 0.0
      %1889 = vmatpush1.msra.mxu0 0.0
      %1890 = vmatprep.subr.mxu0 0.0
      %1891 = vmatpush1.msra.mxu0 0.0
      %1892 = vmatprep.subr.mxu0 0.0
      %1893 = vmatpush1.msra.mxu0 0.0
      %1894 = vmatprep.subr.mxu0 0.0
      %1895 = vmatpush1.msra.mxu0 0.0
      %1896 = vmatprep.subr.mxu0 0.0
      %1897 = vmatpush1.msra.mxu0 0.0
      %1898 = vmatprep.mubr.f32.mxu0 0.0
      %1899 = vmatmul.mubr.f32.gmra.mrb[0].mxu0 %v1761
      %v1900 = vpop.f32.mrb[0].mxu0
      %v1901 = vadd.f32 0.0, %v1900
      %v1902 = vpop.f32.mrb[0].mxu0
      %1903 = vdwg.mxu0
      %1904 = vrot.lane.b32.xlu0 %v1734, 127
      %v1905 = vpop.permute.xlu0 %1904
      %1906 = vrot.lane.b32.xlu0 %v1735, 19
      %v1907 = vpop.permute.xlu0 %1906
      %1908 = vrot.lane.b32.xlu0 %v1736, 19
      %v1909 = vpop.permute.xlu0 %1908
      %1910 = vrot.lane.b32.xlu0 %v1737, 19
      %v1911 = vpop.permute.xlu0 %1910
      %1912 = vrot.lane.b32.xlu0 %v1738, 19
      %v1913 = vpop.permute.xlu0 %1912
      %v1914 = vsel %vm401, %v1907, %v1909
      %v1915 = vsel %vm401, %v1909, %v1911
      %v1916 = vsel %vm401, %v1911, %v1913
      %v1920 = vsel %vm1760, %v1905, 0
      %1922 = vmatprep.subr.mxu0 %v1915
      %1923 = vmatpush1.msra.mxu0 %v1914
      %1924 = vmatprep.subr.mxu0 0.0
      %1925 = vmatpush1.msra.mxu0 0.0
      %1926 = vmatprep.subr.mxu0 0.0
      %1927 = vmatpush1.msra.mxu0 0.0
      %1928 = vmatprep.subr.mxu0 0.0
      %1929 = vmatpush1.msra.mxu0 0.0
      %1930 = vmatprep.subr.mxu0 0.0
      %1931 = vmatpush1.msra.mxu0 0.0
      %1932 = vmatprep.subr.mxu0 0.0
      %1933 = vmatpush1.msra.mxu0 0.0
      %1934 = vmatprep.subr.mxu0 0.0
      %1935 = vmatpush1.msra.mxu0 0.0
      %1936 = vmatprep.subr.mxu0 0.0
      %1937 = vmatpush1.msra.mxu0 0.0
      %1938 = vmatprep.subr.mxu0 0.0
      %1939 = vmatpush1.msra.mxu0 0.0
      %1940 = vmatprep.subr.mxu0 0.0
      %1941 = vmatpush1.msra.mxu0 0.0
      %1942 = vmatprep.subr.mxu0 0.0
      %1943 = vmatpush1.msra.mxu0 0.0
      %1944 = vmatprep.subr.mxu0 0.0
      %1945 = vmatpush1.msra.mxu0 0.0
      %1946 = vmatprep.subr.mxu0 0.0
      %1947 = vmatpush1.msra.mxu0 0.0
      %1948 = vmatprep.subr.mxu0 0.0
      %1949 = vmatpush1.msra.mxu0 0.0
      %1950 = vmatprep.subr.mxu0 0.0
      %1951 = vmatpush1.msra.mxu0 0.0
      %1952 = vmatprep.subr.mxu0 0.0
      %1953 = vmatpush1.msra.mxu0 0.0
      %1954 = vmatprep.subr.mxu0 0.0
      %1955 = vmatpush1.msra.mxu0 0.0
      %1956 = vmatprep.subr.mxu0 0.0
      %1957 = vmatpush1.msra.mxu0 0.0
      %1958 = vmatprep.subr.mxu0 0.0
      %1959 = vmatpush1.msra.mxu0 0.0
      %1960 = vmatprep.subr.mxu0 0.0
      %1961 = vmatpush1.msra.mxu0 0.0
      %1962 = vmatprep.subr.mxu0 0.0
      %1963 = vmatpush1.msra.mxu0 0.0
      %1964 = vmatprep.subr.mxu0 0.0
      %1965 = vmatpush1.msra.mxu0 0.0
      %1966 = vmatprep.subr.mxu0 0.0
      %1967 = vmatpush1.msra.mxu0 0.0
      %1968 = vmatprep.subr.mxu0 0.0
      %1969 = vmatpush1.msra.mxu0 0.0
      %1970 = vmatprep.subr.mxu0 0.0
      %1971 = vmatpush1.msra.mxu0 0.0
      %1972 = vmatprep.subr.mxu0 0.0
      %1973 = vmatpush1.msra.mxu0 0.0
      %1974 = vmatprep.subr.mxu0 0.0
      %1975 = vmatpush1.msra.mxu0 0.0
      %1976 = vmatprep.subr.mxu0 0.0
      %1977 = vmatpush1.msra.mxu0 0.0
      %1978 = vmatprep.subr.mxu0 0.0
      %1979 = vmatpush1.msra.mxu0 0.0
      %1980 = vmatprep.subr.mxu0 0.0
      %1981 = vmatpush1.msra.mxu0 0.0
      %1982 = vmatprep.subr.mxu0 0.0
      %1983 = vmatpush1.msra.mxu0 0.0
      %1984 = vmatprep.subr.mxu0 0.0
      %1985 = vmatpush1.msra.mxu0 0.0
      %1986 = vmatprep.mubr.f32.mxu0 0.0
      %1987 = vmatmul.mubr.f32.gmra.mrb[0].mxu0 %v1920
      %v1988 = vpop.f32.mrb[0].mxu0
      %v1989 = vadd.f32 %v1830, %v1988
      %v1990 = vpop.f32.mrb[0].mxu0
      %v1991 = vadd.f32 %v1832, %v1990
      %1992 = vdwg.mxu0
      %1993 = vmatprep.subr.mxu0 0.0
      %1994 = vmatpush1.msra.mxu0 %v1916
      %1995 = vmatprep.subr.mxu0 0.0
      %1996 = vmatpush1.msra.mxu0 0.0
      %1997 = vmatprep.subr.mxu0 0.0
      %1998 = vmatpush1.msra.mxu0 0.0
      %1999 = vmatprep.subr.mxu0 0.0
      %2000 = vmatpush1.msra.mxu0 0.0
      %2001 = vmatprep.subr.mxu0 0.0
      %2002 = vmatpush1.msra.mxu0 0.0
      %2003 = vmatprep.subr.mxu0 0.0
      %2004 = vmatpush1.msra.mxu0 0.0
      %2005 = vmatprep.subr.mxu0 0.0
      %2006 = vmatpush1.msra.mxu0 0.0
      %2007 = vmatprep.subr.mxu0 0.0
      %2008 = vmatpush1.msra.mxu0 0.0
      %2009 = vmatprep.subr.mxu0 0.0
      %2010 = vmatpush1.msra.mxu0 0.0
      %2011 = vmatprep.subr.mxu0 0.0
      %2012 = vmatpush1.msra.mxu0 0.0
      %2013 = vmatprep.subr.mxu0 0.0
      %2014 = vmatpush1.msra.mxu0 0.0
      %2015 = vmatprep.subr.mxu0 0.0
      %2016 = vmatpush1.msra.mxu0 0.0
      %2017 = vmatprep.subr.mxu0 0.0
      %2018 = vmatpush1.msra.mxu0 0.0
      %2019 = vmatprep.subr.mxu0 0.0
      %2020 = vmatpush1.msra.mxu0 0.0
      %2021 = vmatprep.subr.mxu0 0.0
      %2022 = vmatpush1.msra.mxu0 0.0
      %2023 = vmatprep.subr.mxu0 0.0
      %2024 = vmatpush1.msra.mxu0 0.0
      %2025 = vmatprep.subr.mxu0 0.0
      %2026 = vmatpush1.msra.mxu0 0.0
      %2027 = vmatprep.subr.mxu0 0.0
      %2028 = vmatpush1.msra.mxu0 0.0
      %2029 = vmatprep.subr.mxu0 0.0
      %2030 = vmatpush1.msra.mxu0 0.0
      %2031 = vmatprep.subr.mxu0 0.0
      %2032 = vmatpush1.msra.mxu0 0.0
      %2033 = vmatprep.subr.mxu0 0.0
      %2034 = vmatpush1.msra.mxu0 0.0
      %2035 = vmatprep.subr.mxu0 0.0
      %2036 = vmatpush1.msra.mxu0 0.0
      %2037 = vmatprep.subr.mxu0 0.0
      %2038 = vmatpush1.msra.mxu0 0.0
      %2039 = vmatprep.subr.mxu0 0.0
      %2040 = vmatpush1.msra.mxu0 0.0
      %2041 = vmatprep.subr.mxu0 0.0
      %2042 = vmatpush1.msra.mxu0 0.0
      %2043 = vmatprep.subr.mxu0 0.0
      %2044 = vmatpush1.msra.mxu0 0.0
      %2045 = vmatprep.subr.mxu0 0.0
      %2046 = vmatpush1.msra.mxu0 0.0
      %2047 = vmatprep.subr.mxu0 0.0
      %2048 = vmatpush1.msra.mxu0 0.0
      %2049 = vmatprep.subr.mxu0 0.0
      %2050 = vmatpush1.msra.mxu0 0.0
      %2051 = vmatprep.subr.mxu0 0.0
      %2052 = vmatpush1.msra.mxu0 0.0
      %2053 = vmatprep.subr.mxu0 0.0
      %2054 = vmatpush1.msra.mxu0 0.0
      %2055 = vmatprep.subr.mxu0 0.0
      %2056 = vmatpush1.msra.mxu0 0.0
      %2057 = vmatprep.mubr.f32.mxu0 0.0
      %2058 = vmatmul.mubr.f32.gmra.mrb[0].mxu0 %v1920
      %v2059 = vpop.f32.mrb[0].mxu0
      %v2060 = vadd.f32 %v1901, %v2059
      %v2061 = vpop.f32.mrb[0].mxu0
      %2062 = vdwg.mxu0
      %2063 = vrot.lane.b32.xlu0 %v1734, 111
      %v2064 = vpop.permute.xlu0 %2063
      %2065 = vrot.lane.b32.xlu0 %v1735, 17
      %v2066 = vpop.permute.xlu0 %2065
      %2067 = vrot.lane.b32.xlu0 %v1736, 17
      %v2068 = vpop.permute.xlu0 %2067
      %2069 = vrot.lane.b32.xlu0 %v1737, 17
      %v2070 = vpop.permute.xlu0 %2069
      %2071 = vrot.lane.b32.xlu0 %v1738, 17
      %v2072 = vpop.permute.xlu0 %2071
      %v2073 = vsel %vm564, %v2066, %v2068
      %v2074 = vsel %vm564, %v2068, %v2070
      %v2075 = vsel %vm564, %v2070, %v2072
      %v2079 = vsel %vm1760, %v2064, 0
      %2081 = vmatprep.subr.mxu0 %v2074
      %2082 = vmatpush1.msra.mxu0 %v2073
      %2083 = vmatprep.subr.mxu0 0.0
      %2084 = vmatpush1.msra.mxu0 0.0
      %2085 = vmatprep.subr.mxu0 0.0
      %2086 = vmatpush1.msra.mxu0 0.0
      %2087 = vmatprep.subr.mxu0 0.0
      %2088 = vmatpush1.msra.mxu0 0.0
      %2089 = vmatprep.subr.mxu0 0.0
      %2090 = vmatpush1.msra.mxu0 0.0
      %2091 = vmatprep.subr.mxu0 0.0
      %2092 = vmatpush1.msra.mxu0 0.0
      %2093 = vmatprep.subr.mxu0 0.0
      %2094 = vmatpush1.msra.mxu0 0.0
      %2095 = vmatprep.subr.mxu0 0.0
      %2096 = vmatpush1.msra.mxu0 0.0
      %2097 = vmatprep.subr.mxu0 0.0
      %2098 = vmatpush1.msra.mxu0 0.0
      %2099 = vmatprep.subr.mxu0 0.0
      %2100 = vmatpush1.msra.mxu0 0.0
      %2101 = vmatprep.subr.mxu0 0.0
      %2102 = vmatpush1.msra.mxu0 0.0
      %2103 = vmatprep.subr.mxu0 0.0
      %2104 = vmatpush1.msra.mxu0 0.0
      %2105 = vmatprep.subr.mxu0 0.0
      %2106 = vmatpush1.msra.mxu0 0.0
      %2107 = vmatprep.subr.mxu0 0.0
      %2108 = vmatpush1.msra.mxu0 0.0
      %2109 = vmatprep.subr.mxu0 0.0
      %2110 = vmatpush1.msra.mxu0 0.0
      %2111 = vmatprep.subr.mxu0 0.0
      %2112 = vmatpush1.msra.mxu0 0.0
      %2113 = vmatprep.subr.mxu0 0.0
      %2114 = vmatpush1.msra.mxu0 0.0
      %2115 = vmatprep.subr.mxu0 0.0
      %2116 = vmatpush1.msra.mxu0 0.0
      %2117 = vmatprep.subr.mxu0 0.0
      %2118 = vmatpush1.msra.mxu0 0.0
      %2119 = vmatprep.subr.mxu0 0.0
      %2120 = vmatpush1.msra.mxu0 0.0
      %2121 = vmatprep.subr.mxu0 0.0
      %2122 = vmatpush1.msra.mxu0 0.0
      %2123 = vmatprep.subr.mxu0 0.0
      %2124 = vmatpush1.msra.mxu0 0.0
      %2125 = vmatprep.subr.mxu0 0.0
      %2126 = vmatpush1.msra.mxu0 0.0
      %2127 = vmatprep.subr.mxu0 0.0
      %2128 = vmatpush1.msra.mxu0 0.0
      %2129 = vmatprep.subr.mxu0 0.0
      %2130 = vmatpush1.msra.mxu0 0.0
      %2131 = vmatprep.subr.mxu0 0.0
      %2132 = vmatpush1.msra.mxu0 0.0
      %2133 = vmatprep.subr.mxu0 0.0
      %2134 = vmatpush1.msra.mxu0 0.0
      %2135 = vmatprep.subr.mxu0 0.0
      %2136 = vmatpush1.msra.mxu0 0.0
      %2137 = vmatprep.subr.mxu0 0.0
      %2138 = vmatpush1.msra.mxu0 0.0
      %2139 = vmatprep.subr.mxu0 0.0
      %2140 = vmatpush1.msra.mxu0 0.0
      %2141 = vmatprep.subr.mxu0 0.0
      %2142 = vmatpush1.msra.mxu0 0.0
      %2143 = vmatprep.subr.mxu0 0.0
      %2144 = vmatpush1.msra.mxu0 0.0
      %2145 = vmatprep.mubr.f32.mxu0 0.0
      %2146 = vmatmul.mubr.f32.gmra.mrb[0].mxu0 %v2079
      %v2147 = vpop.f32.mrb[0].mxu0
      %v2148 = vadd.f32 0.0, %v2147
      %v2149 = vpop.f32.mrb[0].mxu0
      %v2150 = vadd.f32 0.0, %v2149
      %2151 = vdwg.mxu0
      %2152 = vmatprep.subr.mxu0 0.0
      %2153 = vmatpush1.msra.mxu0 %v2075
      %2154 = vmatprep.subr.mxu0 0.0
      %2155 = vmatpush1.msra.mxu0 0.0
      %2156 = vmatprep.subr.mxu0 0.0
      %2157 = vmatpush1.msra.mxu0 0.0
      %2158 = vmatprep.subr.mxu0 0.0
      %2159 = vmatpush1.msra.mxu0 0.0
      %2160 = vmatprep.subr.mxu0 0.0
      %2161 = vmatpush1.msra.mxu0 0.0
      %2162 = vmatprep.subr.mxu0 0.0
      %2163 = vmatpush1.msra.mxu0 0.0
      %2164 = vmatprep.subr.mxu0 0.0
      %2165 = vmatpush1.msra.mxu0 0.0
      %2166 = vmatprep.subr.mxu0 0.0
      %2167 = vmatpush1.msra.mxu0 0.0
      %2168 = vmatprep.subr.mxu0 0.0
      %2169 = vmatpush1.msra.mxu0 0.0
      %2170 = vmatprep.subr.mxu0 0.0
      %2171 = vmatpush1.msra.mxu0 0.0
      %2172 = vmatprep.subr.mxu0 0.0
      %2173 = vmatpush1.msra.mxu0 0.0
      %2174 = vmatprep.subr.mxu0 0.0
      %2175 = vmatpush1.msra.mxu0 0.0
      %2176 = vmatprep.subr.mxu0 0.0
      %2177 = vmatpush1.msra.mxu0 0.0
      %2178 = vmatprep.subr.mxu0 0.0
      %2179 = vmatpush1.msra.mxu0 0.0
      %2180 = vmatprep.subr.mxu0 0.0
      %2181 = vmatpush1.msra.mxu0 0.0
      %2182 = vmatprep.subr.mxu0 0.0
      %2183 = vmatpush1.msra.mxu0 0.0
      %2184 = vmatprep.subr.mxu0 0.0
      %2185 = vmatpush1.msra.mxu0 0.0
      %2186 = vmatprep.subr.mxu0 0.0
      %2187 = vmatpush1.msra.mxu0 0.0
      %2188 = vmatprep.subr.mxu0 0.0
      %2189 = vmatpush1.msra.mxu0 0.0
      %2190 = vmatprep.subr.mxu0 0.0
      %2191 = vmatpush1.msra.mxu0 0.0
      %2192 = vmatprep.subr.mxu0 0.0
      %2193 = vmatpush1.msra.mxu0 0.0
      %2194 = vmatprep.subr.mxu0 0.0
      %2195 = vmatpush1.msra.mxu0 0.0
      %2196 = vmatprep.subr.mxu0 0.0
      %2197 = vmatpush1.msra.mxu0 0.0
      %2198 = vmatprep.subr.mxu0 0.0
      %2199 = vmatpush1.msra.mxu0 0.0
      %2200 = vmatprep.subr.mxu0 0.0
      %2201 = vmatpush1.msra.mxu0 0.0
      %2202 = vmatprep.subr.mxu0 0.0
      %2203 = vmatpush1.msra.mxu0 0.0
      %2204 = vmatprep.subr.mxu0 0.0
      %2205 = vmatpush1.msra.mxu0 0.0
      %2206 = vmatprep.subr.mxu0 0.0
      %2207 = vmatpush1.msra.mxu0 0.0
      %2208 = vmatprep.subr.mxu0 0.0
      %2209 = vmatpush1.msra.mxu0 0.0
      %2210 = vmatprep.subr.mxu0 0.0
      %2211 = vmatpush1.msra.mxu0 0.0
      %2212 = vmatprep.subr.mxu0 0.0
      %2213 = vmatpush1.msra.mxu0 0.0
      %2214 = vmatprep.subr.mxu0 0.0
      %2215 = vmatpush1.msra.mxu0 0.0
      %2216 = vmatprep.mubr.f32.mxu0 0.0
      %2217 = vmatmul.mubr.f32.gmra.mrb[0].mxu0 %v2079
      %v2218 = vpop.f32.mrb[0].mxu0
      %v2219 = vadd.f32 0.0, %v2218
      %v2220 = vpop.f32.mrb[0].mxu0
      %2221 = vdwg.mxu0
      %v2222 = vadd.f32 %v1989, %v2148
      %v2223 = vadd.f32 %v1991, %v2150
      %v2224 = vadd.f32 %v2060, %v2219
      %2225 = vrot.lane.b32.xlu0 %v1734, 103
      %v2226 = vpop.permute.xlu0 %2225
      %2227 = vrot.lane.b32.xlu0 %v1735, 1
      %v2228 = vpop.permute.xlu0 %2227
      %2229 = vrot.lane.b32.xlu0 %v1736, 1
      %v2230 = vpop.permute.xlu0 %2229
      %2231 = vrot.lane.b32.xlu0 %v1737, 1
      %v2232 = vpop.permute.xlu0 %2231
      %2233 = vrot.lane.b32.xlu0 %v1738, 1
      %v2234 = vpop.permute.xlu0 %2233
      %v2235 = vsel %vm730, %v2228, %v2230
      %v2236 = vsel %vm730, %v2230, %v2232
      %v2237 = vsel %vm730, %v2232, %v2234
      %v2241 = vsel %vm1760, %v2226, 0
      %2243 = vmatprep.subr.mxu0 %v2236
      %2244 = vmatpush1.msra.mxu0 %v2235
      %2245 = vmatprep.subr.mxu0 0.0
      %2246 = vmatpush1.msra.mxu0 0.0
      %2247 = vmatprep.subr.mxu0 0.0
      %2248 = vmatpush1.msra.mxu0 0.0
      %2249 = vmatprep.subr.mxu0 0.0
      %2250 = vmatpush1.msra.mxu0 0.0
      %2251 = vmatprep.subr.mxu0 0.0
      %2252 = vmatpush1.msra.mxu0 0.0
      %2253 = vmatprep.subr.mxu0 0.0
      %2254 = vmatpush1.msra.mxu0 0.0
      %2255 = vmatprep.subr.mxu0 0.0
      %2256 = vmatpush1.msra.mxu0 0.0
      %2257 = vmatprep.subr.mxu0 0.0
      %2258 = vmatpush1.msra.mxu0 0.0
      %2259 = vmatprep.subr.mxu0 0.0
      %2260 = vmatpush1.msra.mxu0 0.0
      %2261 = vmatprep.subr.mxu0 0.0
      %2262 = vmatpush1.msra.mxu0 0.0
      %2263 = vmatprep.subr.mxu0 0.0
      %2264 = vmatpush1.msra.mxu0 0.0
      %2265 = vmatprep.subr.mxu0 0.0
      %2266 = vmatpush1.msra.mxu0 0.0
      %2267 = vmatprep.subr.mxu0 0.0
      %2268 = vmatpush1.msra.mxu0 0.0
      %2269 = vmatprep.subr.mxu0 0.0
      %2270 = vmatpush1.msra.mxu0 0.0
      %2271 = vmatprep.subr.mxu0 0.0
      %2272 = vmatpush1.msra.mxu0 0.0
      %2273 = vmatprep.subr.mxu0 0.0
      %2274 = vmatpush1.msra.mxu0 0.0
      %2275 = vmatprep.subr.mxu0 0.0
      %2276 = vmatpush1.msra.mxu0 0.0
      %2277 = vmatprep.subr.mxu0 0.0
      %2278 = vmatpush1.msra.mxu0 0.0
      %2279 = vmatprep.subr.mxu0 0.0
      %2280 = vmatpush1.msra.mxu0 0.0
      %2281 = vmatprep.subr.mxu0 0.0
      %2282 = vmatpush1.msra.mxu0 0.0
      %2283 = vmatprep.subr.mxu0 0.0
      %2284 = vmatpush1.msra.mxu0 0.0
      %2285 = vmatprep.subr.mxu0 0.0
      %2286 = vmatpush1.msra.mxu0 0.0
      %2287 = vmatprep.subr.mxu0 0.0
      %2288 = vmatpush1.msra.mxu0 0.0
      %2289 = vmatprep.subr.mxu0 0.0
      %2290 = vmatpush1.msra.mxu0 0.0
      %2291 = vmatprep.subr.mxu0 0.0
      %2292 = vmatpush1.msra.mxu0 0.0
      %2293 = vmatprep.subr.mxu0 0.0
      %2294 = vmatpush1.msra.mxu0 0.0
      %2295 = vmatprep.subr.mxu0 0.0
      %2296 = vmatpush1.msra.mxu0 0.0
      %2297 = vmatprep.subr.mxu0 0.0
      %2298 = vmatpush1.msra.mxu0 0.0
      %2299 = vmatprep.subr.mxu0 0.0
      %2300 = vmatpush1.msra.mxu0 0.0
      %2301 = vmatprep.subr.mxu0 0.0
      %2302 = vmatpush1.msra.mxu0 0.0
      %2303 = vmatprep.subr.mxu0 0.0
      %2304 = vmatpush1.msra.mxu0 0.0
      %2305 = vmatprep.subr.mxu0 0.0
      %2306 = vmatpush1.msra.mxu0 0.0
      %2307 = vmatprep.mubr.f32.mxu0 0.0
      %2308 = vmatmul.mubr.f32.gmra.mrb[0].mxu0 %v2241
      %v2309 = vpop.f32.mrb[0].mxu0
      %v2310 = vadd.f32 0.0, %v2309
      %v2311 = vpop.f32.mrb[0].mxu0
      %v2312 = vadd.f32 0.0, %v2311
      %2313 = vdwg.mxu0
      %2314 = vmatprep.subr.mxu0 0.0
      %2315 = vmatpush1.msra.mxu0 %v2237
      %2316 = vmatprep.subr.mxu0 0.0
      %2317 = vmatpush1.msra.mxu0 0.0
      %2318 = vmatprep.subr.mxu0 0.0
      %2319 = vmatpush1.msra.mxu0 0.0
      %2320 = vmatprep.subr.mxu0 0.0
      %2321 = vmatpush1.msra.mxu0 0.0
      %2322 = vmatprep.subr.mxu0 0.0
      %2323 = vmatpush1.msra.mxu0 0.0
      %2324 = vmatprep.subr.mxu0 0.0
      %2325 = vmatpush1.msra.mxu0 0.0
      %2326 = vmatprep.subr.mxu0 0.0
      %2327 = vmatpush1.msra.mxu0 0.0
      %2328 = vmatprep.subr.mxu0 0.0
      %2329 = vmatpush1.msra.mxu0 0.0
      %2330 = vmatprep.subr.mxu0 0.0
      %2331 = vmatpush1.msra.mxu0 0.0
      %2332 = vmatprep.subr.mxu0 0.0
      %2333 = vmatpush1.msra.mxu0 0.0
      %2334 = vmatprep.subr.mxu0 0.0
      %2335 = vmatpush1.msra.mxu0 0.0
      %2336 = vmatprep.subr.mxu0 0.0
      %2337 = vmatpush1.msra.mxu0 0.0
      %2338 = vmatprep.subr.mxu0 0.0
      %2339 = vmatpush1.msra.mxu0 0.0
      %2340 = vmatprep.subr.mxu0 0.0
      %2341 = vmatpush1.msra.mxu0 0.0
      %2342 = vmatprep.subr.mxu0 0.0
      %2343 = vmatpush1.msra.mxu0 0.0
      %2344 = vmatprep.subr.mxu0 0.0
      %2345 = vmatpush1.msra.mxu0 0.0
      %2346 = vmatprep.subr.mxu0 0.0
      %2347 = vmatpush1.msra.mxu0 0.0
      %2348 = vmatprep.subr.mxu0 0.0
      %2349 = vmatpush1.msra.mxu0 0.0
      %2350 = vmatprep.subr.mxu0 0.0
      %2351 = vmatpush1.msra.mxu0 0.0
      %2352 = vmatprep.subr.mxu0 0.0
      %2353 = vmatpush1.msra.mxu0 0.0
      %2354 = vmatprep.subr.mxu0 0.0
      %2355 = vmatpush1.msra.mxu0 0.0
      %2356 = vmatprep.subr.mxu0 0.0
      %2357 = vmatpush1.msra.mxu0 0.0
      %2358 = vmatprep.subr.mxu0 0.0
      %2359 = vmatpush1.msra.mxu0 0.0
      %2360 = vmatprep.subr.mxu0 0.0
      %2361 = vmatpush1.msra.mxu0 0.0
      %2362 = vmatprep.subr.mxu0 0.0
      %2363 = vmatpush1.msra.mxu0 0.0
      %2364 = vmatprep.subr.mxu0 0.0
      %2365 = vmatpush1.msra.mxu0 0.0
      %2366 = vmatprep.subr.mxu0 0.0
      %2367 = vmatpush1.msra.mxu0 0.0
      %2368 = vmatprep.subr.mxu0 0.0
      %2369 = vmatpush1.msra.mxu0 0.0
      %2370 = vmatprep.subr.mxu0 0.0
      %2371 = vmatpush1.msra.mxu0 0.0
      %2372 = vmatprep.subr.mxu0 0.0
      %2373 = vmatpush1.msra.mxu0 0.0
      %2374 = vmatprep.subr.mxu0 0.0
      %2375 = vmatpush1.msra.mxu0 0.0
      %2376 = vmatprep.subr.mxu0 0.0
      %2377 = vmatpush1.msra.mxu0 0.0
      %2378 = vmatprep.mubr.f32.mxu0 0.0
      %2379 = vmatmul.mubr.f32.gmra.mrb[0].mxu0 %v2241
      %v2380 = vpop.f32.mrb[0].mxu0
      %v2381 = vadd.f32 0.0, %v2380
      %v2382 = vpop.f32.mrb[0].mxu0
      %2383 = vdwg.mxu0
      %v2384 = vadd.f32 %v2222, %v2310
      %v2385 = vadd.f32 %v2223, %v2312
      %v2386 = vadd.f32 %v2224, %v2381
      %2387 = vrot.lane.b32.xlu0 %v1734, 95
      %v2388 = vpop.permute.xlu0 %2387
      %v2389 = vsel %vm1760, %v2388, 0
      %2391 = vmatprep.subr.mxu0 %v1737
      %2392 = vmatpush1.msra.mxu0 %v1736
      %2393 = vmatprep.subr.mxu0 0.0
      %2394 = vmatpush1.msra.mxu0 0.0
      %2395 = vmatprep.subr.mxu0 0.0
      %2396 = vmatpush1.msra.mxu0 0.0
      %2397 = vmatprep.subr.mxu0 0.0
      %2398 = vmatpush1.msra.mxu0 0.0
      %2399 = vmatprep.subr.mxu0 0.0
      %2400 = vmatpush1.msra.mxu0 0.0
      %2401 = vmatprep.subr.mxu0 0.0
      %2402 = vmatpush1.msra.mxu0 0.0
      %2403 = vmatprep.subr.mxu0 0.0
      %2404 = vmatpush1.msra.mxu0 0.0
      %2405 = vmatprep.subr.mxu0 0.0
      %2406 = vmatpush1.msra.mxu0 0.0
      %2407 = vmatprep.subr.mxu0 0.0
      %2408 = vmatpush1.msra.mxu0 0.0
      %2409 = vmatprep.subr.mxu0 0.0
      %2410 = vmatpush1.msra.mxu0 0.0
      %2411 = vmatprep.subr.mxu0 0.0
      %2412 = vmatpush1.msra.mxu0 0.0
      %2413 = vmatprep.subr.mxu0 0.0
      %2414 = vmatpush1.msra.mxu0 0.0
      %2415 = vmatprep.subr.mxu0 0.0
      %2416 = vmatpush1.msra.mxu0 0.0
      %2417 = vmatprep.subr.mxu0 0.0
      %2418 = vmatpush1.msra.mxu0 0.0
      %2419 = vmatprep.subr.mxu0 0.0
      %2420 = vmatpush1.msra.mxu0 0.0
      %2421 = vmatprep.subr.mxu0 0.0
      %2422 = vmatpush1.msra.mxu0 0.0
      %2423 = vmatprep.subr.mxu0 0.0
      %2424 = vmatpush1.msra.mxu0 0.0
      %2425 = vmatprep.subr.mxu0 0.0
      %2426 = vmatpush1.msra.mxu0 0.0
      %2427 = vmatprep.subr.mxu0 0.0
      %2428 = vmatpush1.msra.mxu0 0.0
      %2429 = vmatprep.subr.mxu0 0.0
      %2430 = vmatpush1.msra.mxu0 0.0
      %2431 = vmatprep.subr.mxu0 0.0
      %2432 = vmatpush1.msra.mxu0 0.0
      %2433 = vmatprep.subr.mxu0 0.0
      %2434 = vmatpush1.msra.mxu0 0.0
      %2435 = vmatprep.subr.mxu0 0.0
      %2436 = vmatpush1.msra.mxu0 0.0
      %2437 = vmatprep.subr.mxu0 0.0
      %2438 = vmatpush1.msra.mxu0 0.0
      %2439 = vmatprep.subr.mxu0 0.0
      %2440 = vmatpush1.msra.mxu0 0.0
      %2441 = vmatprep.subr.mxu0 0.0
      %2442 = vmatpush1.msra.mxu0 0.0
      %2443 = vmatprep.subr.mxu0 0.0
      %2444 = vmatpush1.msra.mxu0 0.0
      %2445 = vmatprep.subr.mxu0 0.0
      %2446 = vmatpush1.msra.mxu0 0.0
      %2447 = vmatprep.subr.mxu0 0.0
      %2448 = vmatpush1.msra.mxu0 0.0
      %2449 = vmatprep.subr.mxu0 0.0
      %2450 = vmatpush1.msra.mxu0 0.0
      %2451 = vmatprep.subr.mxu0 0.0
      %2452 = vmatpush1.msra.mxu0 0.0
      %2453 = vmatprep.subr.mxu0 0.0
      %2454 = vmatpush1.msra.mxu0 0.0
      %2455 = vmatprep.mubr.f32.mxu0 0.0
      %2456 = vmatmul.mubr.f32.gmra.mrb[0].mxu0 %v2389
      %v2457 = vpop.f32.mrb[0].mxu0
      %v2458 = vadd.f32 0.0, %v2457
      %v2459 = vpop.f32.mrb[0].mxu0
      %v2460 = vadd.f32 0.0, %v2459
      %2461 = vdwg.mxu0
      %2462 = vmatprep.subr.mxu0 0.0
      %2463 = vmatpush1.msra.mxu0 %v1738
      %2464 = vmatprep.subr.mxu0 0.0
      %2465 = vmatpush1.msra.mxu0 0.0
      %2466 = vmatprep.subr.mxu0 0.0
      %2467 = vmatpush1.msra.mxu0 0.0
      %2468 = vmatprep.subr.mxu0 0.0
      %2469 = vmatpush1.msra.mxu0 0.0
      %2470 = vmatprep.subr.mxu0 0.0
      %2471 = vmatpush1.msra.mxu0 0.0
      %2472 = vmatprep.subr.mxu0 0.0
      %2473 = vmatpush1.msra.mxu0 0.0
      %2474 = vmatprep.subr.mxu0 0.0
      %2475 = vmatpush1.msra.mxu0 0.0
      %2476 = vmatprep.subr.mxu0 0.0
      %2477 = vmatpush1.msra.mxu0 0.0
      %2478 = vmatprep.subr.mxu0 0.0
      %2479 = vmatpush1.msra.mxu0 0.0
      %2480 = vmatprep.subr.mxu0 0.0
      %2481 = vmatpush1.msra.mxu0 0.0
      %2482 = vmatprep.subr.mxu0 0.0
      %2483 = vmatpush1.msra.mxu0 0.0
      %2484 = vmatprep.subr.mxu0 0.0
      %2485 = vmatpush1.msra.mxu0 0.0
      %2486 = vmatprep.subr.mxu0 0.0
      %2487 = vmatpush1.msra.mxu0 0.0
      %2488 = vmatprep.subr.mxu0 0.0
      %2489 = vmatpush1.msra.mxu0 0.0
      %2490 = vmatprep.subr.mxu0 0.0
      %2491 = vmatpush1.msra.mxu0 0.0
      %2492 = vmatprep.subr.mxu0 0.0
      %2493 = vmatpush1.msra.mxu0 0.0
      %2494 = vmatprep.subr.mxu0 0.0
      %2495 = vmatpush1.msra.mxu0 0.0
      %2496 = vmatprep.subr.mxu0 0.0
      %2497 = vmatpush1.msra.mxu0 0.0
      %2498 = vmatprep.subr.mxu0 0.0
      %2499 = vmatpush1.msra.mxu0 0.0
      %2500 = vmatprep.subr.mxu0 0.0
      %2501 = vmatpush1.msra.mxu0 0.0
      %2502 = vmatprep.subr.mxu0 0.0
      %2503 = vmatpush1.msra.mxu0 0.0
      %2504 = vmatprep.subr.mxu0 0.0
      %2505 = vmatpush1.msra.mxu0 0.0
      %2506 = vmatprep.subr.mxu0 0.0
      %2507 = vmatpush1.msra.mxu0 0.0
      %2508 = vmatprep.subr.mxu0 0.0
      %2509 = vmatpush1.msra.mxu0 0.0
      %2510 = vmatprep.subr.mxu0 0.0
      %2511 = vmatpush1.msra.mxu0 0.0
      %2512 = vmatprep.subr.mxu0 0.0
      %2513 = vmatpush1.msra.mxu0 0.0
      %2514 = vmatprep.subr.mxu0 0.0
      %2515 = vmatpush1.msra.mxu0 0.0
      %2516 = vmatprep.subr.mxu0 0.0
      %2517 = vmatpush1.msra.mxu0 0.0
      %2518 = vmatprep.subr.mxu0 0.0
      %2519 = vmatpush1.msra.mxu0 0.0
      %2520 = vmatprep.subr.mxu0 0.0
      %2521 = vmatpush1.msra.mxu0 0.0
      %2522 = vmatprep.subr.mxu0 0.0
      %2523 = vmatpush1.msra.mxu0 0.0
      %2524 = vmatprep.subr.mxu0 0.0
      %2525 = vmatpush1.msra.mxu0 0.0
      %2526 = vmatprep.mubr.f32.mxu0 0.0
      %2527 = vmatmul.mubr.f32.gmra.mrb[0].mxu0 %v2389
      %v2528 = vpop.f32.mrb[0].mxu0
      %v2529 = vadd.f32 0.0, %v2528
      %v2530 = vpop.f32.mrb[0].mxu0
      %2531 = vdwg.mxu0
      %v2532 = vadd.f32 %v2384, %v2458
      %v2533 = vadd.f32 %v2385, %v2460
      %v2534 = vadd.f32 %v2386, %v2529
      %v2535 = vld [vmem:[#allocation2 + $0x8] sm:$0xff]
      %v2536 = vld [vmem:[#allocation2 + $0x10] sm:$0xff]
      %v2537 = vld [vmem:[#allocation2 + $0x18] sm:$0xff]
      %v2538 = vld [vmem:[#allocation2 + $0x20] sm:$0xff]
      %2539 = vrot.lane.b32.xlu0 %v1734, 87
      %v2540 = vpop.permute.xlu0 %2539
      %2545 = vrot.lane.b32.xlu0 %v2535, 127
      %v2546 = vpop.permute.xlu0 %2545
      %2547 = vrot.lane.b32.xlu0 %v2536, 127
      %v2548 = vpop.permute.xlu0 %2547
      %2549 = vrot.lane.b32.xlu0 %v2537, 127
      %v2550 = vpop.permute.xlu0 %2549
      %2551 = vrot.lane.b32.xlu0 %v2538, 127
      %v2552 = vpop.permute.xlu0 %2551
      %v2553 = vsel %vm1058, %v2546, %v2548
      %v2554 = vsel %vm1058, %v2548, %v2550
      %v2555 = vsel %vm1058, %v2550, %v2552
      %v2559 = vsel %vm1760, %v2540, 0
      %2561 = vmatprep.subr.mxu0 %v2554
      %2562 = vmatpush1.msra.mxu0 %v2553
      %2563 = vmatprep.subr.mxu0 0.0
      %2564 = vmatpush1.msra.mxu0 0.0
      %2565 = vmatprep.subr.mxu0 0.0
      %2566 = vmatpush1.msra.mxu0 0.0
      %2567 = vmatprep.subr.mxu0 0.0
      %2568 = vmatpush1.msra.mxu0 0.0
      %2569 = vmatprep.subr.mxu0 0.0
      %2570 = vmatpush1.msra.mxu0 0.0
      %2571 = vmatprep.subr.mxu0 0.0
      %2572 = vmatpush1.msra.mxu0 0.0
      %2573 = vmatprep.subr.mxu0 0.0
      %2574 = vmatpush1.msra.mxu0 0.0
      %2575 = vmatprep.subr.mxu0 0.0
      %2576 = vmatpush1.msra.mxu0 0.0
      %2577 = vmatprep.subr.mxu0 0.0
      %2578 = vmatpush1.msra.mxu0 0.0
      %2579 = vmatprep.subr.mxu0 0.0
      %2580 = vmatpush1.msra.mxu0 0.0
      %2581 = vmatprep.subr.mxu0 0.0
      %2582 = vmatpush1.msra.mxu0 0.0
      %2583 = vmatprep.subr.mxu0 0.0
      %2584 = vmatpush1.msra.mxu0 0.0
      %2585 = vmatprep.subr.mxu0 0.0
      %2586 = vmatpush1.msra.mxu0 0.0
      %2587 = vmatprep.subr.mxu0 0.0
      %2588 = vmatpush1.msra.mxu0 0.0
      %2589 = vmatprep.subr.mxu0 0.0
      %2590 = vmatpush1.msra.mxu0 0.0
      %2591 = vmatprep.subr.mxu0 0.0
      %2592 = vmatpush1.msra.mxu0 0.0
      %2593 = vmatprep.subr.mxu0 0.0
      %2594 = vmatpush1.msra.mxu0 0.0
      %2595 = vmatprep.subr.mxu0 0.0
      %2596 = vmatpush1.msra.mxu0 0.0
      %2597 = vmatprep.subr.mxu0 0.0
      %2598 = vmatpush1.msra.mxu0 0.0
      %2599 = vmatprep.subr.mxu0 0.0
      %2600 = vmatpush1.msra.mxu0 0.0
      %2601 = vmatprep.subr.mxu0 0.0
      %2602 = vmatpush1.msra.mxu0 0.0
      %2603 = vmatprep.subr.mxu0 0.0
      %2604 = vmatpush1.msra.mxu0 0.0
      %2605 = vmatprep.subr.mxu0 0.0
      %2606 = vmatpush1.msra.mxu0 0.0
      %2607 = vmatprep.subr.mxu0 0.0
      %2608 = vmatpush1.msra.mxu0 0.0
      %2609 = vmatprep.subr.mxu0 0.0
      %2610 = vmatpush1.msra.mxu0 0.0
      %2611 = vmatprep.subr.mxu0 0.0
      %2612 = vmatpush1.msra.mxu0 0.0
      %2613 = vmatprep.subr.mxu0 0.0
      %2614 = vmatpush1.msra.mxu0 0.0
      %2615 = vmatprep.subr.mxu0 0.0
      %2616 = vmatpush1.msra.mxu0 0.0
      %2617 = vmatprep.subr.mxu0 0.0
      %2618 = vmatpush1.msra.mxu0 0.0
      %2619 = vmatprep.subr.mxu0 0.0
      %2620 = vmatpush1.msra.mxu0 0.0
      %2621 = vmatprep.subr.mxu0 0.0
      %2622 = vmatpush1.msra.mxu0 0.0
      %2623 = vmatprep.subr.mxu0 0.0
      %2624 = vmatpush1.msra.mxu0 0.0
      %2625 = vmatprep.mubr.f32.mxu0 0.0
      %2626 = vmatmul.mubr.f32.gmra.mrb[0].mxu0 %v2559
      %v2627 = vpop.f32.mrb[0].mxu0
      %v2628 = vadd.f32 0.0, %v2627
      %v2629 = vpop.f32.mrb[0].mxu0
      %v2630 = vadd.f32 0.0, %v2629
      %2631 = vdwg.mxu0
      %2632 = vmatprep.subr.mxu0 0.0
      %2633 = vmatpush1.msra.mxu0 %v2555
      %2634 = vmatprep.subr.mxu0 0.0
      %2635 = vmatpush1.msra.mxu0 0.0
      %2636 = vmatprep.subr.mxu0 0.0
      %2637 = vmatpush1.msra.mxu0 0.0
      %2638 = vmatprep.subr.mxu0 0.0
      %2639 = vmatpush1.msra.mxu0 0.0
      %2640 = vmatprep.subr.mxu0 0.0
      %2641 = vmatpush1.msra.mxu0 0.0
      %2642 = vmatprep.subr.mxu0 0.0
      %2643 = vmatpush1.msra.mxu0 0.0
      %2644 = vmatprep.subr.mxu0 0.0
      %2645 = vmatpush1.msra.mxu0 0.0
      %2646 = vmatprep.subr.mxu0 0.0
      %2647 = vmatpush1.msra.mxu0 0.0
      %2648 = vmatprep.subr.mxu0 0.0
      %2649 = vmatpush1.msra.mxu0 0.0
      %2650 = vmatprep.subr.mxu0 0.0
      %2651 = vmatpush1.msra.mxu0 0.0
      %2652 = vmatprep.subr.mxu0 0.0
      %2653 = vmatpush1.msra.mxu0 0.0
      %2654 = vmatprep.subr.mxu0 0.0
      %2655 = vmatpush1.msra.mxu0 0.0
      %2656 = vmatprep.subr.mxu0 0.0
      %2657 = vmatpush1.msra.mxu0 0.0
      %2658 = vmatprep.subr.mxu0 0.0
      %2659 = vmatpush1.msra.mxu0 0.0
      %2660 = vmatprep.subr.mxu0 0.0
      %2661 = vmatpush1.msra.mxu0 0.0
      %2662 = vmatprep.subr.mxu0 0.0
      %2663 = vmatpush1.msra.mxu0 0.0
      %2664 = vmatprep.subr.mxu0 0.0
      %2665 = vmatpush1.msra.mxu0 0.0
      %2666 = vmatprep.subr.mxu0 0.0
      %2667 = vmatpush1.msra.mxu0 0.0
      %2668 = vmatprep.subr.mxu0 0.0
      %2669 = vmatpush1.msra.mxu0 0.0
      %2670 = vmatprep.subr.mxu0 0.0
      %2671 = vmatpush1.msra.mxu0 0.0
      %2672 = vmatprep.subr.mxu0 0.0
      %2673 = vmatpush1.msra.mxu0 0.0
      %2674 = vmatprep.subr.mxu0 0.0
      %2675 = vmatpush1.msra.mxu0 0.0
      %2676 = vmatprep.subr.mxu0 0.0
      %2677 = vmatpush1.msra.mxu0 0.0
      %2678 = vmatprep.subr.mxu0 0.0
      %2679 = vmatpush1.msra.mxu0 0.0
      %2680 = vmatprep.subr.mxu0 0.0
      %2681 = vmatpush1.msra.mxu0 0.0
      %2682 = vmatprep.subr.mxu0 0.0
      %2683 = vmatpush1.msra.mxu0 0.0
      %2684 = vmatprep.subr.mxu0 0.0
      %2685 = vmatpush1.msra.mxu0 0.0
      %2686 = vmatprep.subr.mxu0 0.0
      %2687 = vmatpush1.msra.mxu0 0.0
      %2688 = vmatprep.subr.mxu0 0.0
      %2689 = vmatpush1.msra.mxu0 0.0
      %2690 = vmatprep.subr.mxu0 0.0
      %2691 = vmatpush1.msra.mxu0 0.0
      %2692 = vmatprep.subr.mxu0 0.0
      %2693 = vmatpush1.msra.mxu0 0.0
      %2694 = vmatprep.subr.mxu0 0.0
      %2695 = vmatpush1.msra.mxu0 0.0
      %2696 = vmatprep.mubr.f32.mxu0 0.0
      %2697 = vmatmul.mubr.f32.gmra.mrb[0].mxu0 %v2559
      %v2698 = vpop.f32.mrb[0].mxu0
      %v2699 = vadd.f32 0.0, %v2698
      %v2700 = vpop.f32.mrb[0].mxu0
      %2701 = vdwg.mxu0
      %v2702 = vadd.f32 %v2532, %v2628
      %v2703 = vadd.f32 %v2533, %v2630
      %v2704 = vadd.f32 %v2534, %v2699
      %2705 = vrot.lane.b32.xlu0 %v1734, 79
      %v2706 = vpop.permute.xlu0 %2705
      %2707 = vrot.lane.b32.xlu0 %v2535, 111
      %v2708 = vpop.permute.xlu0 %2707
      %2709 = vrot.lane.b32.xlu0 %v2536, 111
      %v2710 = vpop.permute.xlu0 %2709
      %2711 = vrot.lane.b32.xlu0 %v2537, 111
      %v2712 = vpop.permute.xlu0 %2711
      %2713 = vrot.lane.b32.xlu0 %v2538, 111
      %v2714 = vpop.permute.xlu0 %2713
      %v2715 = vsel %vm1224, %v2708, %v2710
      %v2716 = vsel %vm1224, %v2710, %v2712
      %v2717 = vsel %vm1224, %v2712, %v2714
      %v2721 = vsel %vm1760, %v2706, 0
      %2723 = vmatprep.subr.mxu0 %v2716
      %2724 = vmatpush1.msra.mxu0 %v2715
      %2725 = vmatprep.subr.mxu0 0.0
      %2726 = vmatpush1.msra.mxu0 0.0
      %2727 = vmatprep.subr.mxu0 0.0
      %2728 = vmatpush1.msra.mxu0 0.0
      %2729 = vmatprep.subr.mxu0 0.0
      %2730 = vmatpush1.msra.mxu0 0.0
      %2731 = vmatprep.subr.mxu0 0.0
      %2732 = vmatpush1.msra.mxu0 0.0
      %2733 = vmatprep.subr.mxu0 0.0
      %2734 = vmatpush1.msra.mxu0 0.0
      %2735 = vmatprep.subr.mxu0 0.0
      %2736 = vmatpush1.msra.mxu0 0.0
      %2737 = vmatprep.subr.mxu0 0.0
      %2738 = vmatpush1.msra.mxu0 0.0
      %2739 = vmatprep.subr.mxu0 0.0
      %2740 = vmatpush1.msra.mxu0 0.0
      %2741 = vmatprep.subr.mxu0 0.0
      %2742 = vmatpush1.msra.mxu0 0.0
      %2743 = vmatprep.subr.mxu0 0.0
      %2744 = vmatpush1.msra.mxu0 0.0
      %2745 = vmatprep.subr.mxu0 0.0
      %2746 = vmatpush1.msra.mxu0 0.0
      %2747 = vmatprep.subr.mxu0 0.0
      %2748 = vmatpush1.msra.mxu0 0.0
      %2749 = vmatprep.subr.mxu0 0.0
      %2750 = vmatpush1.msra.mxu0 0.0
      %2751 = vmatprep.subr.mxu0 0.0
      %2752 = vmatpush1.msra.mxu0 0.0
      %2753 = vmatprep.subr.mxu0 0.0
      %2754 = vmatpush1.msra.mxu0 0.0
      %2755 = vmatprep.subr.mxu0 0.0
      %2756 = vmatpush1.msra.mxu0 0.0
      %2757 = vmatprep.subr.mxu0 0.0
      %2758 = vmatpush1.msra.mxu0 0.0
      %2759 = vmatprep.subr.mxu0 0.0
      %2760 = vmatpush1.msra.mxu0 0.0
      %2761 = vmatprep.subr.mxu0 0.0
      %2762 = vmatpush1.msra.mxu0 0.0
      %2763 = vmatprep.subr.mxu0 0.0
      %2764 = vmatpush1.msra.mxu0 0.0
      %2765 = vmatprep.subr.mxu0 0.0
      %2766 = vmatpush1.msra.mxu0 0.0
      %2767 = vmatprep.subr.mxu0 0.0
      %2768 = vmatpush1.msra.mxu0 0.0
      %2769 = vmatprep.subr.mxu0 0.0
      %2770 = vmatpush1.msra.mxu0 0.0
      %2771 = vmatprep.subr.mxu0 0.0
      %2772 = vmatpush1.msra.mxu0 0.0
      %2773 = vmatprep.subr.mxu0 0.0
      %2774 = vmatpush1.msra.mxu0 0.0
      %2775 = vmatprep.subr.mxu0 0.0
      %2776 = vmatpush1.msra.mxu0 0.0
      %2777 = vmatprep.subr.mxu0 0.0
      %2778 = vmatpush1.msra.mxu0 0.0
      %2779 = vmatprep.subr.mxu0 0.0
      %2780 = vmatpush1.msra.mxu0 0.0
      %2781 = vmatprep.subr.mxu0 0.0
      %2782 = vmatpush1.msra.mxu0 0.0
      %2783 = vmatprep.subr.mxu0 0.0
      %2784 = vmatpush1.msra.mxu0 0.0
      %2785 = vmatprep.subr.mxu0 0.0
      %2786 = vmatpush1.msra.mxu0 0.0
      %2787 = vmatprep.mubr.f32.mxu0 0.0
      %2788 = vmatmul.mubr.f32.gmra.mrb[0].mxu0 %v2721
      %v2789 = vpop.f32.mrb[0].mxu0
      %v2790 = vadd.f32 0.0, %v2789
      %v2791 = vpop.f32.mrb[0].mxu0
      %v2792 = vadd.f32 0.0, %v2791
      %2793 = vdwg.mxu0
      %2794 = vmatprep.subr.mxu0 0.0
      %2795 = vmatpush1.msra.mxu0 %v2717
      %2796 = vmatprep.subr.mxu0 0.0
      %2797 = vmatpush1.msra.mxu0 0.0
      %2798 = vmatprep.subr.mxu0 0.0
      %2799 = vmatpush1.msra.mxu0 0.0
      %2800 = vmatprep.subr.mxu0 0.0
      %2801 = vmatpush1.msra.mxu0 0.0
      %2802 = vmatprep.subr.mxu0 0.0
      %2803 = vmatpush1.msra.mxu0 0.0
      %2804 = vmatprep.subr.mxu0 0.0
      %2805 = vmatpush1.msra.mxu0 0.0
      %2806 = vmatprep.subr.mxu0 0.0
      %2807 = vmatpush1.msra.mxu0 0.0
      %2808 = vmatprep.subr.mxu0 0.0
      %2809 = vmatpush1.msra.mxu0 0.0
      %2810 = vmatprep.subr.mxu0 0.0
      %2811 = vmatpush1.msra.mxu0 0.0
      %2812 = vmatprep.subr.mxu0 0.0
      %2813 = vmatpush1.msra.mxu0 0.0
      %2814 = vmatprep.subr.mxu0 0.0
      %2815 = vmatpush1.msra.mxu0 0.0
      %2816 = vmatprep.subr.mxu0 0.0
      %2817 = vmatpush1.msra.mxu0 0.0
      %2818 = vmatprep.subr.mxu0 0.0
      %2819 = vmatpush1.msra.mxu0 0.0
      %2820 = vmatprep.subr.mxu0 0.0
      %2821 = vmatpush1.msra.mxu0 0.0
      %2822 = vmatprep.subr.mxu0 0.0
      %2823 = vmatpush1.msra.mxu0 0.0
      %2824 = vmatprep.subr.mxu0 0.0
      %2825 = vmatpush1.msra.mxu0 0.0
      %2826 = vmatprep.subr.mxu0 0.0
      %2827 = vmatpush1.msra.mxu0 0.0
      %2828 = vmatprep.subr.mxu0 0.0
      %2829 = vmatpush1.msra.mxu0 0.0
      %2830 = vmatprep.subr.mxu0 0.0
      %2831 = vmatpush1.msra.mxu0 0.0
      %2832 = vmatprep.subr.mxu0 0.0
      %2833 = vmatpush1.msra.mxu0 0.0
      %2834 = vmatprep.subr.mxu0 0.0
      %2835 = vmatpush1.msra.mxu0 0.0
      %2836 = vmatprep.subr.mxu0 0.0
      %2837 = vmatpush1.msra.mxu0 0.0
      %2838 = vmatprep.subr.mxu0 0.0
      %2839 = vmatpush1.msra.mxu0 0.0
      %2840 = vmatprep.subr.mxu0 0.0
      %2841 = vmatpush1.msra.mxu0 0.0
      %2842 = vmatprep.subr.mxu0 0.0
      %2843 = vmatpush1.msra.mxu0 0.0
      %2844 = vmatprep.subr.mxu0 0.0
      %2845 = vmatpush1.msra.mxu0 0.0
      %2846 = vmatprep.subr.mxu0 0.0
      %2847 = vmatpush1.msra.mxu0 0.0
      %2848 = vmatprep.subr.mxu0 0.0
      %2849 = vmatpush1.msra.mxu0 0.0
      %2850 = vmatprep.subr.mxu0 0.0
      %2851 = vmatpush1.msra.mxu0 0.0
      %2852 = vmatprep.subr.mxu0 0.0
      %2853 = vmatpush1.msra.mxu0 0.0
      %2854 = vmatprep.subr.mxu0 0.0
      %2855 = vmatpush1.msra.mxu0 0.0
      %2856 = vmatprep.subr.mxu0 0.0
      %2857 = vmatpush1.msra.mxu0 0.0
      %2858 = vmatprep.mubr.f32.mxu0 0.0
      %2859 = vmatmul.mubr.f32.gmra.mrb[0].mxu0 %v2721
      %v2860 = vpop.f32.mrb[0].mxu0
      %v2861 = vadd.f32 0.0, %v2860
      %v2862 = vpop.f32.mrb[0].mxu0
      %2863 = vdwg.mxu0
      %v2864 = vadd.f32 %v2702, %v2790
      %v2865 = vadd.f32 %v2703, %v2792
      %v2866 = vadd.f32 %v2704, %v2861
      %2867 = vrot.lane.b32.xlu0 %v1734, 71
      %v2868 = vpop.permute.xlu0 %2867
      %2869 = vrot.lane.b32.xlu0 %v2535, 110
      %v2870 = vpop.permute.xlu0 %2869
      %2871 = vrot.lane.b32.xlu0 %v2536, 110
      %v2872 = vpop.permute.xlu0 %2871
      %2873 = vrot.lane.b32.xlu0 %v2537, 110
      %v2874 = vpop.permute.xlu0 %2873
      %2875 = vrot.lane.b32.xlu0 %v2538, 110
      %v2876 = vpop.permute.xlu0 %2875
      %v2877 = vsel %vm1390, %v2870, %v2872
      %v2878 = vsel %vm1390, %v2872, %v2874
      %v2879 = vsel %vm1390, %v2874, %v2876
      %v2883 = vsel %vm1760, %v2868, 0
      %2885 = vmatprep.subr.mxu0 %v2878
      %2886 = vmatpush1.msra.mxu0 %v2877
      %2887 = vmatprep.subr.mxu0 0.0
      %2888 = vmatpush1.msra.mxu0 0.0
      %2889 = vmatprep.subr.mxu0 0.0
      %2890 = vmatpush1.msra.mxu0 0.0
      %2891 = vmatprep.subr.mxu0 0.0
      %2892 = vmatpush1.msra.mxu0 0.0
      %2893 = vmatprep.subr.mxu0 0.0
      %2894 = vmatpush1.msra.mxu0 0.0
      %2895 = vmatprep.subr.mxu0 0.0
      %2896 = vmatpush1.msra.mxu0 0.0
      %2897 = vmatprep.subr.mxu0 0.0
      %2898 = vmatpush1.msra.mxu0 0.0
      %2899 = vmatprep.subr.mxu0 0.0
      %2900 = vmatpush1.msra.mxu0 0.0
      %2901 = vmatprep.subr.mxu0 0.0
      %2902 = vmatpush1.msra.mxu0 0.0
      %2903 = vmatprep.subr.mxu0 0.0
      %2904 = vmatpush1.msra.mxu0 0.0
      %2905 = vmatprep.subr.mxu0 0.0
      %2906 = vmatpush1.msra.mxu0 0.0
      %2907 = vmatprep.subr.mxu0 0.0
      %2908 = vmatpush1.msra.mxu0 0.0
      %2909 = vmatprep.subr.mxu0 0.0
      %2910 = vmatpush1.msra.mxu0 0.0
      %2911 = vmatprep.subr.mxu0 0.0
      %2912 = vmatpush1.msra.mxu0 0.0
      %2913 = vmatprep.subr.mxu0 0.0
      %2914 = vmatpush1.msra.mxu0 0.0
      %2915 = vmatprep.subr.mxu0 0.0
      %2916 = vmatpush1.msra.mxu0 0.0
      %2917 = vmatprep.subr.mxu0 0.0
      %2918 = vmatpush1.msra.mxu0 0.0
      %2919 = vmatprep.subr.mxu0 0.0
      %2920 = vmatpush1.msra.mxu0 0.0
      %2921 = vmatprep.subr.mxu0 0.0
      %2922 = vmatpush1.msra.mxu0 0.0
      %2923 = vmatprep.subr.mxu0 0.0
      %2924 = vmatpush1.msra.mxu0 0.0
      %2925 = vmatprep.subr.mxu0 0.0
      %2926 = vmatpush1.msra.mxu0 0.0
      %2927 = vmatprep.subr.mxu0 0.0
      %2928 = vmatpush1.msra.mxu0 0.0
      %2929 = vmatprep.subr.mxu0 0.0
      %2930 = vmatpush1.msra.mxu0 0.0
      %2931 = vmatprep.subr.mxu0 0.0
      %2932 = vmatpush1.msra.mxu0 0.0
      %2933 = vmatprep.subr.mxu0 0.0
      %2934 = vmatpush1.msra.mxu0 0.0
      %2935 = vmatprep.subr.mxu0 0.0
      %2936 = vmatpush1.msra.mxu0 0.0
      %2937 = vmatprep.subr.mxu0 0.0
      %2938 = vmatpush1.msra.mxu0 0.0
      %2939 = vmatprep.subr.mxu0 0.0
      %2940 = vmatpush1.msra.mxu0 0.0
      %2941 = vmatprep.subr.mxu0 0.0
      %2942 = vmatpush1.msra.mxu0 0.0
      %2943 = vmatprep.subr.mxu0 0.0
      %2944 = vmatpush1.msra.mxu0 0.0
      %2945 = vmatprep.subr.mxu0 0.0
      %2946 = vmatpush1.msra.mxu0 0.0
      %2947 = vmatprep.subr.mxu0 0.0
      %2948 = vmatpush1.msra.mxu0 0.0
      %2949 = vmatprep.mubr.f32.mxu0 0.0
      %2950 = vmatmul.mubr.f32.gmra.mrb[0].mxu0 %v2883
      %v2951 = vpop.f32.mrb[0].mxu0
      %v2952 = vadd.f32 0.0, %v2951
      %v2953 = vpop.f32.mrb[0].mxu0
      %v2954 = vadd.f32 0.0, %v2953
      %2955 = vdwg.mxu0
      %2956 = vmatprep.subr.mxu0 0.0
      %2957 = vmatpush1.msra.mxu0 %v2879
      %2958 = vmatprep.subr.mxu0 0.0
      %2959 = vmatpush1.msra.mxu0 0.0
      %2960 = vmatprep.subr.mxu0 0.0
      %2961 = vmatpush1.msra.mxu0 0.0
      %2962 = vmatprep.subr.mxu0 0.0
      %2963 = vmatpush1.msra.mxu0 0.0
      %2964 = vmatprep.subr.mxu0 0.0
      %2965 = vmatpush1.msra.mxu0 0.0
      %2966 = vmatprep.subr.mxu0 0.0
      %2967 = vmatpush1.msra.mxu0 0.0
      %2968 = vmatprep.subr.mxu0 0.0
      %2969 = vmatpush1.msra.mxu0 0.0
      %2970 = vmatprep.subr.mxu0 0.0
      %2971 = vmatpush1.msra.mxu0 0.0
      %2972 = vmatprep.subr.mxu0 0.0
      %2973 = vmatpush1.msra.mxu0 0.0
      %2974 = vmatprep.subr.mxu0 0.0
      %2975 = vmatpush1.msra.mxu0 0.0
      %2976 = vmatprep.subr.mxu0 0.0
      %2977 = vmatpush1.msra.mxu0 0.0
      %2978 = vmatprep.subr.mxu0 0.0
      %2979 = vmatpush1.msra.mxu0 0.0
      %2980 = vmatprep.subr.mxu0 0.0
      %2981 = vmatpush1.msra.mxu0 0.0
      %2982 = vmatprep.subr.mxu0 0.0
      %2983 = vmatpush1.msra.mxu0 0.0
      %2984 = vmatprep.subr.mxu0 0.0
      %2985 = vmatpush1.msra.mxu0 0.0
      %2986 = vmatprep.subr.mxu0 0.0
      %2987 = vmatpush1.msra.mxu0 0.0
      %2988 = vmatprep.subr.mxu0 0.0
      %2989 = vmatpush1.msra.mxu0 0.0
      %2990 = vmatprep.subr.mxu0 0.0
      %2991 = vmatpush1.msra.mxu0 0.0
      %2992 = vmatprep.subr.mxu0 0.0
      %2993 = vmatpush1.msra.mxu0 0.0
      %2994 = vmatprep.subr.mxu0 0.0
      %2995 = vmatpush1.msra.mxu0 0.0
      %2996 = vmatprep.subr.mxu0 0.0
      %2997 = vmatpush1.msra.mxu0 0.0
      %2998 = vmatprep.subr.mxu0 0.0
      %2999 = vmatpush1.msra.mxu0 0.0
      %3000 = vmatprep.subr.mxu0 0.0
      %3001 = vmatpush1.msra.mxu0 0.0
      %3002 = vmatprep.subr.mxu0 0.0
      %3003 = vmatpush1.msra.mxu0 0.0
      %3004 = vmatprep.subr.mxu0 0.0
      %3005 = vmatpush1.msra.mxu0 0.0
      %3006 = vmatprep.subr.mxu0 0.0
      %3007 = vmatpush1.msra.mxu0 0.0
      %3008 = vmatprep.subr.mxu0 0.0
      %3009 = vmatpush1.msra.mxu0 0.0
      %3010 = vmatprep.subr.mxu0 0.0
      %3011 = vmatpush1.msra.mxu0 0.0
      %3012 = vmatprep.subr.mxu0 0.0
      %3013 = vmatpush1.msra.mxu0 0.0
      %3014 = vmatprep.subr.mxu0 0.0
      %3015 = vmatpush1.msra.mxu0 0.0
      %3016 = vmatprep.subr.mxu0 0.0
      %3017 = vmatpush1.msra.mxu0 0.0
      %3018 = vmatprep.subr.mxu0 0.0
      %3019 = vmatpush1.msra.mxu0 0.0
      %3020 = vmatprep.mubr.f32.mxu0 0.0
      %3021 = vmatmul.mubr.f32.gmra.mrb[0].mxu0 %v2883
      %v3022 = vpop.f32.mrb[0].mxu0
      %v3023 = vadd.f32 0.0, %v3022
      %v3024 = vpop.f32.mrb[0].mxu0
      %3025 = vdwg.mxu0
      %v3026 = vadd.f32 %v2864, %v2952
      %v3027 = vadd.f32 %v2865, %v2954
      %v3028 = vadd.f32 %v2866, %v3023
      %3029 = vrot.lane.b32.xlu0 %v1734, 63
      %v3030 = vpop.permute.xlu0 %3029
      %3031 = vrot.lane.b32.xlu0 %v2535, 109
      %v3032 = vpop.permute.xlu0 %3031
      %3033 = vrot.lane.b32.xlu0 %v2536, 109
      %v3034 = vpop.permute.xlu0 %3033
      %3035 = vrot.lane.b32.xlu0 %v2537, 109
      %v3036 = vpop.permute.xlu0 %3035
      %3037 = vrot.lane.b32.xlu0 %v2538, 109
      %v3038 = vpop.permute.xlu0 %3037
      %v3039 = vsel %vm1556, %v3032, %v3034
      %v3040 = vsel %vm1556, %v3034, %v3036
      %v3041 = vsel %vm1556, %v3036, %v3038
      %v3045 = vsel %vm1760, %v3030, 0
      %3047 = vmatprep.subr.mxu0 %v3040
      %3048 = vmatpush1.msra.mxu0 %v3039
      %3049 = vmatprep.subr.mxu0 0.0
      %3050 = vmatpush1.msra.mxu0 0.0
      %3051 = vmatprep.subr.mxu0 0.0
      %3052 = vmatpush1.msra.mxu0 0.0
      %3053 = vmatprep.subr.mxu0 0.0
      %3054 = vmatpush1.msra.mxu0 0.0
      %3055 = vmatprep.subr.mxu0 0.0
      %3056 = vmatpush1.msra.mxu0 0.0
      %3057 = vmatprep.subr.mxu0 0.0
      %3058 = vmatpush1.msra.mxu0 0.0
      %3059 = vmatprep.subr.mxu0 0.0
      %3060 = vmatpush1.msra.mxu0 0.0
      %3061 = vmatprep.subr.mxu0 0.0
      %3062 = vmatpush1.msra.mxu0 0.0
      %3063 = vmatprep.subr.mxu0 0.0
      %3064 = vmatpush1.msra.mxu0 0.0
      %3065 = vmatprep.subr.mxu0 0.0
      %3066 = vmatpush1.msra.mxu0 0.0
      %3067 = vmatprep.subr.mxu0 0.0
      %3068 = vmatpush1.msra.mxu0 0.0
      %3069 = vmatprep.subr.mxu0 0.0
      %3070 = vmatpush1.msra.mxu0 0.0
      %3071 = vmatprep.subr.mxu0 0.0
      %3072 = vmatpush1.msra.mxu0 0.0
      %3073 = vmatprep.subr.mxu0 0.0
      %3074 = vmatpush1.msra.mxu0 0.0
      %3075 = vmatprep.subr.mxu0 0.0
      %3076 = vmatpush1.msra.mxu0 0.0
      %3077 = vmatprep.subr.mxu0 0.0
      %3078 = vmatpush1.msra.mxu0 0.0
      %3079 = vmatprep.subr.mxu0 0.0
      %3080 = vmatpush1.msra.mxu0 0.0
      %3081 = vmatprep.subr.mxu0 0.0
      %3082 = vmatpush1.msra.mxu0 0.0
      %3083 = vmatprep.subr.mxu0 0.0
      %3084 = vmatpush1.msra.mxu0 0.0
      %3085 = vmatprep.subr.mxu0 0.0
      %3086 = vmatpush1.msra.mxu0 0.0
      %3087 = vmatprep.subr.mxu0 0.0
      %3088 = vmatpush1.msra.mxu0 0.0
      %3089 = vmatprep.subr.mxu0 0.0
      %3090 = vmatpush1.msra.mxu0 0.0
      %3091 = vmatprep.subr.mxu0 0.0
      %3092 = vmatpush1.msra.mxu0 0.0
      %3093 = vmatprep.subr.mxu0 0.0
      %3094 = vmatpush1.msra.mxu0 0.0
      %3095 = vmatprep.subr.mxu0 0.0
      %3096 = vmatpush1.msra.mxu0 0.0
      %3097 = vmatprep.subr.mxu0 0.0
      %3098 = vmatpush1.msra.mxu0 0.0
      %3099 = vmatprep.subr.mxu0 0.0
      %3100 = vmatpush1.msra.mxu0 0.0
      %3101 = vmatprep.subr.mxu0 0.0
      %3102 = vmatpush1.msra.mxu0 0.0
      %3103 = vmatprep.subr.mxu0 0.0
      %3104 = vmatpush1.msra.mxu0 0.0
      %3105 = vmatprep.subr.mxu0 0.0
      %3106 = vmatpush1.msra.mxu0 0.0
      %3107 = vmatprep.subr.mxu0 0.0
      %3108 = vmatpush1.msra.mxu0 0.0
      %3109 = vmatprep.subr.mxu0 0.0
      %3110 = vmatpush1.msra.mxu0 0.0
      %3111 = vmatprep.mubr.f32.mxu0 0.0
      %3112 = vmatmul.mubr.f32.gmra.mrb[0].mxu0 %v3045
      %v3113 = vpop.f32.mrb[0].mxu0
      %v3114 = vadd.f32 0.0, %v3113
      %v3115 = vpop.f32.mrb[0].mxu0
      %v3116 = vadd.f32 0.0, %v3115
      %3117 = vdwg.mxu0
      %3118 = vmatprep.subr.mxu0 0.0
      %3119 = vmatpush1.msra.mxu0 %v3041
      %3120 = vmatprep.subr.mxu0 0.0
      %3121 = vmatpush1.msra.mxu0 0.0
      %3122 = vmatprep.subr.mxu0 0.0
      %3123 = vmatpush1.msra.mxu0 0.0
      %3124 = vmatprep.subr.mxu0 0.0
      %3125 = vmatpush1.msra.mxu0 0.0
      %3126 = vmatprep.subr.mxu0 0.0
      %3127 = vmatpush1.msra.mxu0 0.0
      %3128 = vmatprep.subr.mxu0 0.0
      %3129 = vmatpush1.msra.mxu0 0.0
      %3130 = vmatprep.subr.mxu0 0.0
      %3131 = vmatpush1.msra.mxu0 0.0
      %3132 = vmatprep.subr.mxu0 0.0
      %3133 = vmatpush1.msra.mxu0 0.0
      %3134 = vmatprep.subr.mxu0 0.0
      %3135 = vmatpush1.msra.mxu0 0.0
      %3136 = vmatprep.subr.mxu0 0.0
      %3137 = vmatpush1.msra.mxu0 0.0
      %3138 = vmatprep.subr.mxu0 0.0
      %3139 = vmatpush1.msra.mxu0 0.0
      %3140 = vmatprep.subr.mxu0 0.0
      %3141 = vmatpush1.msra.mxu0 0.0
      %3142 = vmatprep.subr.mxu0 0.0
      %3143 = vmatpush1.msra.mxu0 0.0
      %3144 = vmatprep.subr.mxu0 0.0
      %3145 = vmatpush1.msra.mxu0 0.0
      %3146 = vmatprep.subr.mxu0 0.0
      %3147 = vmatpush1.msra.mxu0 0.0
      %3148 = vmatprep.subr.mxu0 0.0
      %3149 = vmatpush1.msra.mxu0 0.0
      %3150 = vmatprep.subr.mxu0 0.0
      %3151 = vmatpush1.msra.mxu0 0.0
      %3152 = vmatprep.subr.mxu0 0.0
      %3153 = vmatpush1.msra.mxu0 0.0
      %3154 = vmatprep.subr.mxu0 0.0
      %3155 = vmatpush1.msra.mxu0 0.0
      %3156 = vmatprep.subr.mxu0 0.0
      %3157 = vmatpush1.msra.mxu0 0.0
      %3158 = vmatprep.subr.mxu0 0.0
      %3159 = vmatpush1.msra.mxu0 0.0
      %3160 = vmatprep.subr.mxu0 0.0
      %3161 = vmatpush1.msra.mxu0 0.0
      %3162 = vmatprep.subr.mxu0 0.0
      %3163 = vmatpush1.msra.mxu0 0.0
      %3164 = vmatprep.subr.mxu0 0.0
      %3165 = vmatpush1.msra.mxu0 0.0
      %3166 = vmatprep.subr.mxu0 0.0
      %3167 = vmatpush1.msra.mxu0 0.0
      %3168 = vmatprep.subr.mxu0 0.0
      %3169 = vmatpush1.msra.mxu0 0.0
      %3170 = vmatprep.subr.mxu0 0.0
      %3171 = vmatpush1.msra.mxu0 0.0
      %3172 = vmatprep.subr.mxu0 0.0
      %3173 = vmatpush1.msra.mxu0 0.0
      %3174 = vmatprep.subr.mxu0 0.0
      %3175 = vmatpush1.msra.mxu0 0.0
      %3176 = vmatprep.subr.mxu0 0.0
      %3177 = vmatpush1.msra.mxu0 0.0
      %3178 = vmatprep.subr.mxu0 0.0
      %3179 = vmatpush1.msra.mxu0 0.0
      %3180 = vmatprep.subr.mxu0 0.0
      %3181 = vmatpush1.msra.mxu0 0.0
      %3182 = vmatprep.mubr.f32.mxu0 0.0
      %3183 = vmatmul.mubr.f32.gmra.mrb[0].mxu0 %v3045
      %v3184 = vpop.f32.mrb[0].mxu0
      %v3185 = vadd.f32 0.0, %v3184
      %v3186 = vpop.f32.mrb[0].mxu0
      %3187 = vdwg.mxu0
      %v3188 = vadd.f32 %v3026, %v3114
      %v3189 = vadd.f32 %v3027, %v3116
      %v3190 = vadd.f32 %v3028, %v3185
      %3191 = vset.pattern.permute.xlu0 0
      %3192 = vperm.xlu0 %3191, %v1734
      %v3193 = vpop.permute.xlu0 %3192
      %v3195 = vadd.f32 %v3188, %v3193
      %v3196 = vadd.f32 %v3189, %v3193
      %v3197 = vadd.f32 %v3190, %v3193
      %vm3198 = vcmp.ge.f32.partialorder %v3195, 0.0
      %vm3199 = vcmp.ge.f32.partialorder %v3196, 0.0
      %vm3200 = vcmp.ge.f32.partialorder %v3197, 0.0
      %v3201 = vmul.f32 %v3195, 0.02
      %v3202 = vmul.f32 %v3196, 0.02
      %v3203 = vmul.f32 %v3197, 0.02
      %v3204 = vsel %vm3198, %v3195, %v3201
      %v3205 = vsel %vm3199, %v3196, %v3202
      %v3206 = vsel %vm3200, %v3197, %v3203
      %v3207 = vmul.f32 %v3204, %v204
      %v3208 = vmul.f32 %v3205, %v208
      %v3209 = vmul.f32 %v3206, %v212
      %3210 = vst [vmem:[#allocation2 + $0x8] sm:$0xff] %v3207
      %3211 = vst [vmem:[#allocation2 + $0x10] sm:$0xff] %v3208
      %3212 = vst [vmem:[#allocation2 + $0x18] sm:$0xff] %v3209
      %v3213 = vld [vmem:[%s184 + $0x10] sm:$0xff]
      %v3214 = vld [vmem:[#allocation2] sm:$0xff]
      %v3215 = vld [vmem:[#allocation2 + $0x8] sm:$0xff]
      %v3216 = vld [vmem:[#allocation2 + $0x10] sm:$0xff]
      %v3217 = vld [vmem:[#allocation2 + $0x18] sm:$0xff]
      %3219 = vrot.lane.b32.xlu0 %v3213, 119
      %v3220 = vpop.permute.xlu0 %3219
      %3225 = vrot.lane.b32.xlu0 %v3214, 18
      %v3226 = vpop.permute.xlu0 %3225
      %3227 = vrot.lane.b32.xlu0 %v3215, 18
      %v3228 = vpop.permute.xlu0 %3227
      %3229 = vrot.lane.b32.xlu0 %v3216, 18
      %v3230 = vpop.permute.xlu0 %3229
      %3231 = vrot.lane.b32.xlu0 %v3217, 18
      %v3232 = vpop.permute.xlu0 %3231
      %v3233 = vsel %vm236, %v3226, %v3228
      %v3234 = vsel %vm236, %v3228, %v3230
      %v3235 = vsel %vm236, %v3230, %v3232
      %v3239 = vsel %vm1760, %v3220, 0
      %3241 = vmatprep.subr.mxu0 %v3234
      %3242 = vmatpush1.msra.mxu0 %v3233
      %3243 = vmatprep.subr.mxu0 0.0
      %3244 = vmatpush1.msra.mxu0 0.0
      %3245 = vmatprep.subr.mxu0 0.0
      %3246 = vmatpush1.msra.mxu0 0.0
      %3247 = vmatprep.subr.mxu0 0.0
      %3248 = vmatpush1.msra.mxu0 0.0
      %3249 = vmatprep.subr.mxu0 0.0
      %3250 = vmatpush1.msra.mxu0 0.0
      %3251 = vmatprep.subr.mxu0 0.0
      %3252 = vmatpush1.msra.mxu0 0.0
      %3253 = vmatprep.subr.mxu0 0.0
      %3254 = vmatpush1.msra.mxu0 0.0
      %3255 = vmatprep.subr.mxu0 0.0
      %3256 = vmatpush1.msra.mxu0 0.0
      %3257 = vmatprep.subr.mxu0 0.0
      %3258 = vmatpush1.msra.mxu0 0.0
      %3259 = vmatprep.subr.mxu0 0.0
      %3260 = vmatpush1.msra.mxu0 0.0
      %3261 = vmatprep.subr.mxu0 0.0
      %3262 = vmatpush1.msra.mxu0 0.0
      %3263 = vmatprep.subr.mxu0 0.0
      %3264 = vmatpush1.msra.mxu0 0.0
      %3265 = vmatprep.subr.mxu0 0.0
      %3266 = vmatpush1.msra.mxu0 0.0
      %3267 = vmatprep.subr.mxu0 0.0
      %3268 = vmatpush1.msra.mxu0 0.0
      %3269 = vmatprep.subr.mxu0 0.0
      %3270 = vmatpush1.msra.mxu0 0.0
      %3271 = vmatprep.subr.mxu0 0.0
      %3272 = vmatpush1.msra.mxu0 0.0
      %3273 = vmatprep.subr.mxu0 0.0
      %3274 = vmatpush1.msra.mxu0 0.0
      %3275 = vmatprep.subr.mxu0 0.0
      %3276 = vmatpush1.msra.mxu0 0.0
      %3277 = vmatprep.subr.mxu0 0.0
      %3278 = vmatpush1.msra.mxu0 0.0
      %3279 = vmatprep.subr.mxu0 0.0
      %3280 = vmatpush1.msra.mxu0 0.0
      %3281 = vmatprep.subr.mxu0 0.0
      %3282 = vmatpush1.msra.mxu0 0.0
      %3283 = vmatprep.subr.mxu0 0.0
      %3284 = vmatpush1.msra.mxu0 0.0
      %3285 = vmatprep.subr.mxu0 0.0
      %3286 = vmatpush1.msra.mxu0 0.0
      %3287 = vmatprep.subr.mxu0 0.0
      %3288 = vmatpush1.msra.mxu0 0.0
      %3289 = vmatprep.subr.mxu0 0.0
      %3290 = vmatpush1.msra.mxu0 0.0
      %3291 = vmatprep.subr.mxu0 0.0
      %3292 = vmatpush1.msra.mxu0 0.0
      %3293 = vmatprep.subr.mxu0 0.0
      %3294 = vmatpush1.msra.mxu0 0.0
      %3295 = vmatprep.subr.mxu0 0.0
      %3296 = vmatpush1.msra.mxu0 0.0
      %3297 = vmatprep.subr.mxu0 0.0
      %3298 = vmatpush1.msra.mxu0 0.0
      %3299 = vmatprep.subr.mxu0 0.0
      %3300 = vmatpush1.msra.mxu0 0.0
      %3301 = vmatprep.subr.mxu0 0.0
      %3302 = vmatpush1.msra.mxu0 0.0
      %3303 = vmatprep.subr.mxu0 0.0
      %3304 = vmatpush1.msra.mxu0 0.0
      %3305 = vmatprep.mubr.f32.mxu0 0.0
      %3306 = vmatmul.mubr.f32.gmra.mrb[0].mxu0 %v3239
      %v3307 = vpop.f32.mrb[0].mxu0
      %v3308 = vadd.f32 0.0, %v3307
      %v3309 = vpop.f32.mrb[0].mxu0
      %v3310 = vadd.f32 0.0, %v3309
      %3311 = vdwg.mxu0
      %3312 = vmatprep.subr.mxu0 0.0
      %3313 = vmatpush1.msra.mxu0 %v3235
      %3314 = vmatprep.subr.mxu0 0.0
      %3315 = vmatpush1.msra.mxu0 0.0
      %3316 = vmatprep.subr.mxu0 0.0
      %3317 = vmatpush1.msra.mxu0 0.0
      %3318 = vmatprep.subr.mxu0 0.0
      %3319 = vmatpush1.msra.mxu0 0.0
      %3320 = vmatprep.subr.mxu0 0.0
      %3321 = vmatpush1.msra.mxu0 0.0
      %3322 = vmatprep.subr.mxu0 0.0
      %3323 = vmatpush1.msra.mxu0 0.0
      %3324 = vmatprep.subr.mxu0 0.0
      %3325 = vmatpush1.msra.mxu0 0.0
      %3326 = vmatprep.subr.mxu0 0.0
      %3327 = vmatpush1.msra.mxu0 0.0
      %3328 = vmatprep.subr.mxu0 0.0
      %3329 = vmatpush1.msra.mxu0 0.0
      %3330 = vmatprep.subr.mxu0 0.0
      %3331 = vmatpush1.msra.mxu0 0.0
      %3332 = vmatprep.subr.mxu0 0.0
      %3333 = vmatpush1.msra.mxu0 0.0
      %3334 = vmatprep.subr.mxu0 0.0
      %3335 = vmatpush1.msra.mxu0 0.0
      %3336 = vmatprep.subr.mxu0 0.0
      %3337 = vmatpush1.msra.mxu0 0.0
      %3338 = vmatprep.subr.mxu0 0.0
      %3339 = vmatpush1.msra.mxu0 0.0
      %3340 = vmatprep.subr.mxu0 0.0
      %3341 = vmatpush1.msra.mxu0 0.0
      %3342 = vmatprep.subr.mxu0 0.0
      %3343 = vmatpush1.msra.mxu0 0.0
      %3344 = vmatprep.subr.mxu0 0.0
      %3345 = vmatpush1.msra.mxu0 0.0
      %3346 = vmatprep.subr.mxu0 0.0
      %3347 = vmatpush1.msra.mxu0 0.0
      %3348 = vmatprep.subr.mxu0 0.0
      %3349 = vmatpush1.msra.mxu0 0.0
      %3350 = vmatprep.subr.mxu0 0.0
      %3351 = vmatpush1.msra.mxu0 0.0
      %3352 = vmatprep.subr.mxu0 0.0
      %3353 = vmatpush1.msra.mxu0 0.0
      %3354 = vmatprep.subr.mxu0 0.0
      %3355 = vmatpush1.msra.mxu0 0.0
      %3356 = vmatprep.subr.mxu0 0.0
      %3357 = vmatpush1.msra.mxu0 0.0
      %3358 = vmatprep.subr.mxu0 0.0
      %3359 = vmatpush1.msra.mxu0 0.0
      %3360 = vmatprep.subr.mxu0 0.0
      %3361 = vmatpush1.msra.mxu0 0.0
      %3362 = vmatprep.subr.mxu0 0.0
      %3363 = vmatpush1.msra.mxu0 0.0
      %3364 = vmatprep.subr.mxu0 0.0
      %3365 = vmatpush1.msra.mxu0 0.0
      %3366 = vmatprep.subr.mxu0 0.0
      %3367 = vmatpush1.msra.mxu0 0.0
      %3368 = vmatprep.subr.mxu0 0.0
      %3369 = vmatpush1.msra.mxu0 0.0
      %3370 = vmatprep.subr.mxu0 0.0
      %3371 = vmatpush1.msra.mxu0 0.0
      %3372 = vmatprep.subr.mxu0 0.0
      %3373 = vmatpush1.msra.mxu0 0.0
      %3374 = vmatprep.subr.mxu0 0.0
      %3375 = vmatpush1.msra.mxu0 0.0
      %3376 = vmatprep.mubr.f32.mxu0 0.0
      %3377 = vmatmul.mubr.f32.gmra.mrb[0].mxu0 %v3239
      %v3378 = vpop.f32.mrb[0].mxu0
      %v3379 = vadd.f32 0.0, %v3378
      %v3380 = vpop.f32.mrb[0].mxu0
      %3381 = vdwg.mxu0
      %3382 = vrot.lane.b32.xlu0 %v3213, 127
      %v3383 = vpop.permute.xlu0 %3382
      %3384 = vrot.lane.b32.xlu0 %v3214, 19
      %v3385 = vpop.permute.xlu0 %3384
      %3386 = vrot.lane.b32.xlu0 %v3215, 19
      %v3387 = vpop.permute.xlu0 %3386
      %3388 = vrot.lane.b32.xlu0 %v3216, 19
      %v3389 = vpop.permute.xlu0 %3388
      %3390 = vrot.lane.b32.xlu0 %v3217, 19
      %v3391 = vpop.permute.xlu0 %3390
      %v3392 = vsel %vm401, %v3385, %v3387
      %v3393 = vsel %vm401, %v3387, %v3389
      %v3394 = vsel %vm401, %v3389, %v3391
      %v3398 = vsel %vm1760, %v3383, 0
      %3400 = vmatprep.subr.mxu0 %v3393
      %3401 = vmatpush1.msra.mxu0 %v3392
      %3402 = vmatprep.subr.mxu0 0.0
      %3403 = vmatpush1.msra.mxu0 0.0
      %3404 = vmatprep.subr.mxu0 0.0
      %3405 = vmatpush1.msra.mxu0 0.0
      %3406 = vmatprep.subr.mxu0 0.0
      %3407 = vmatpush1.msra.mxu0 0.0
      %3408 = vmatprep.subr.mxu0 0.0
      %3409 = vmatpush1.msra.mxu0 0.0
      %3410 = vmatprep.subr.mxu0 0.0
      %3411 = vmatpush1.msra.mxu0 0.0
      %3412 = vmatprep.subr.mxu0 0.0
      %3413 = vmatpush1.msra.mxu0 0.0
      %3414 = vmatprep.subr.mxu0 0.0
      %3415 = vmatpush1.msra.mxu0 0.0
      %3416 = vmatprep.subr.mxu0 0.0
      %3417 = vmatpush1.msra.mxu0 0.0
      %3418 = vmatprep.subr.mxu0 0.0
      %3419 = vmatpush1.msra.mxu0 0.0
      %3420 = vmatprep.subr.mxu0 0.0
      %3421 = vmatpush1.msra.mxu0 0.0
      %3422 = vmatprep.subr.mxu0 0.0
      %3423 = vmatpush1.msra.mxu0 0.0
      %3424 = vmatprep.subr.mxu0 0.0
      %3425 = vmatpush1.msra.mxu0 0.0
      %3426 = vmatprep.subr.mxu0 0.0
      %3427 = vmatpush1.msra.mxu0 0.0
      %3428 = vmatprep.subr.mxu0 0.0
      %3429 = vmatpush1.msra.mxu0 0.0
      %3430 = vmatprep.subr.mxu0 0.0
      %3431 = vmatpush1.msra.mxu0 0.0
      %3432 = vmatprep.subr.mxu0 0.0
      %3433 = vmatpush1.msra.mxu0 0.0
      %3434 = vmatprep.subr.mxu0 0.0
      %3435 = vmatpush1.msra.mxu0 0.0
      %3436 = vmatprep.subr.mxu0 0.0
      %3437 = vmatpush1.msra.mxu0 0.0
      %3438 = vmatprep.subr.mxu0 0.0
      %3439 = vmatpush1.msra.mxu0 0.0
      %3440 = vmatprep.subr.mxu0 0.0
      %3441 = vmatpush1.msra.mxu0 0.0
      %3442 = vmatprep.subr.mxu0 0.0
      %3443 = vmatpush1.msra.mxu0 0.0
      %3444 = vmatprep.subr.mxu0 0.0
      %3445 = vmatpush1.msra.mxu0 0.0
      %3446 = vmatprep.subr.mxu0 0.0
      %3447 = vmatpush1.msra.mxu0 0.0
      %3448 = vmatprep.subr.mxu0 0.0
      %3449 = vmatpush1.msra.mxu0 0.0
      %3450 = vmatprep.subr.mxu0 0.0
      %3451 = vmatpush1.msra.mxu0 0.0
      %3452 = vmatprep.subr.mxu0 0.0
      %3453 = vmatpush1.msra.mxu0 0.0
      %3454 = vmatprep.subr.mxu0 0.0
      %3455 = vmatpush1.msra.mxu0 0.0
      %3456 = vmatprep.subr.mxu0 0.0
      %3457 = vmatpush1.msra.mxu0 0.0
      %3458 = vmatprep.subr.mxu0 0.0
      %3459 = vmatpush1.msra.mxu0 0.0
      %3460 = vmatprep.subr.mxu0 0.0
      %3461 = vmatpush1.msra.mxu0 0.0
      %3462 = vmatprep.subr.mxu0 0.0
      %3463 = vmatpush1.msra.mxu0 0.0
      %3464 = vmatprep.mubr.f32.mxu0 0.0
      %3465 = vmatmul.mubr.f32.gmra.mrb[0].mxu0 %v3398
      %v3466 = vpop.f32.mrb[0].mxu0
      %v3467 = vadd.f32 %v3308, %v3466
      %v3468 = vpop.f32.mrb[0].mxu0
      %v3469 = vadd.f32 %v3310, %v3468
      %3470 = vdwg.mxu0
      %3471 = vmatprep.subr.mxu0 0.0
      %3472 = vmatpush1.msra.mxu0 %v3394
      %3473 = vmatprep.subr.mxu0 0.0
      %3474 = vmatpush1.msra.mxu0 0.0
      %3475 = vmatprep.subr.mxu0 0.0
      %3476 = vmatpush1.msra.mxu0 0.0
      %3477 = vmatprep.subr.mxu0 0.0
      %3478 = vmatpush1.msra.mxu0 0.0
      %3479 = vmatprep.subr.mxu0 0.0
      %3480 = vmatpush1.msra.mxu0 0.0
      %3481 = vmatprep.subr.mxu0 0.0
      %3482 = vmatpush1.msra.mxu0 0.0
      %3483 = vmatprep.subr.mxu0 0.0
      %3484 = vmatpush1.msra.mxu0 0.0
      %3485 = vmatprep.subr.mxu0 0.0
      %3486 = vmatpush1.msra.mxu0 0.0
      %3487 = vmatprep.subr.mxu0 0.0
      %3488 = vmatpush1.msra.mxu0 0.0
      %3489 = vmatprep.subr.mxu0 0.0
      %3490 = vmatpush1.msra.mxu0 0.0
      %3491 = vmatprep.subr.mxu0 0.0
      %3492 = vmatpush1.msra.mxu0 0.0
      %3493 = vmatprep.subr.mxu0 0.0
      %3494 = vmatpush1.msra.mxu0 0.0
      %3495 = vmatprep.subr.mxu0 0.0
      %3496 = vmatpush1.msra.mxu0 0.0
      %3497 = vmatprep.subr.mxu0 0.0
      %3498 = vmatpush1.msra.mxu0 0.0
      %3499 = vmatprep.subr.mxu0 0.0
      %3500 = vmatpush1.msra.mxu0 0.0
      %3501 = vmatprep.subr.mxu0 0.0
      %3502 = vmatpush1.msra.mxu0 0.0
      %3503 = vmatprep.subr.mxu0 0.0
      %3504 = vmatpush1.msra.mxu0 0.0
      %3505 = vmatprep.subr.mxu0 0.0
      %3506 = vmatpush1.msra.mxu0 0.0
      %3507 = vmatprep.subr.mxu0 0.0
      %3508 = vmatpush1.msra.mxu0 0.0
      %3509 = vmatprep.subr.mxu0 0.0
      %3510 = vmatpush1.msra.mxu0 0.0
      %3511 = vmatprep.subr.mxu0 0.0
      %3512 = vmatpush1.msra.mxu0 0.0
      %3513 = vmatprep.subr.mxu0 0.0
      %3514 = vmatpush1.msra.mxu0 0.0
      %3515 = vmatprep.subr.mxu0 0.0
      %3516 = vmatpush1.msra.mxu0 0.0
      %3517 = vmatprep.subr.mxu0 0.0
      %3518 = vmatpush1.msra.mxu0 0.0
      %3519 = vmatprep.subr.mxu0 0.0
      %3520 = vmatpush1.msra.mxu0 0.0
      %3521 = vmatprep.subr.mxu0 0.0
      %3522 = vmatpush1.msra.mxu0 0.0
      %3523 = vmatprep.subr.mxu0 0.0
      %3524 = vmatpush1.msra.mxu0 0.0
      %3525 = vmatprep.subr.mxu0 0.0
      %3526 = vmatpush1.msra.mxu0 0.0
      %3527 = vmatprep.subr.mxu0 0.0
      %3528 = vmatpush1.msra.mxu0 0.0
      %3529 = vmatprep.subr.mxu0 0.0
      %3530 = vmatpush1.msra.mxu0 0.0
      %3531 = vmatprep.subr.mxu0 0.0
      %3532 = vmatpush1.msra.mxu0 0.0
      %3533 = vmatprep.subr.mxu0 0.0
      %3534 = vmatpush1.msra.mxu0 0.0
      %3535 = vmatprep.mubr.f32.mxu0 0.0
      %3536 = vmatmul.mubr.f32.gmra.mrb[0].mxu0 %v3398
      %v3537 = vpop.f32.mrb[0].mxu0
      %v3538 = vadd.f32 %v3379, %v3537
      %v3539 = vpop.f32.mrb[0].mxu0
      %3540 = vdwg.mxu0
      %3541 = vrot.lane.b32.xlu0 %v3213, 111
      %v3542 = vpop.permute.xlu0 %3541
      %3543 = vrot.lane.b32.xlu0 %v3214, 17
      %v3544 = vpop.permute.xlu0 %3543
      %3545 = vrot.lane.b32.xlu0 %v3215, 17
      %v3546 = vpop.permute.xlu0 %3545
      %3547 = vrot.lane.b32.xlu0 %v3216, 17
      %v3548 = vpop.permute.xlu0 %3547
      %3549 = vrot.lane.b32.xlu0 %v3217, 17
      %v3550 = vpop.permute.xlu0 %3549
      %v3551 = vsel %vm564, %v3544, %v3546
      %v3552 = vsel %vm564, %v3546, %v3548
      %v3553 = vsel %vm564, %v3548, %v3550
      %v3557 = vsel %vm1760, %v3542, 0
      %3559 = vmatprep.subr.mxu0 %v3552
      %3560 = vmatpush1.msra.mxu0 %v3551
      %3561 = vmatprep.subr.mxu0 0.0
      %3562 = vmatpush1.msra.mxu0 0.0
      %3563 = vmatprep.subr.mxu0 0.0
      %3564 = vmatpush1.msra.mxu0 0.0
      %3565 = vmatprep.subr.mxu0 0.0
      %3566 = vmatpush1.msra.mxu0 0.0
      %3567 = vmatprep.subr.mxu0 0.0
      %3568 = vmatpush1.msra.mxu0 0.0
      %3569 = vmatprep.subr.mxu0 0.0
      %3570 = vmatpush1.msra.mxu0 0.0
      %3571 = vmatprep.subr.mxu0 0.0
      %3572 = vmatpush1.msra.mxu0 0.0
      %3573 = vmatprep.subr.mxu0 0.0
      %3574 = vmatpush1.msra.mxu0 0.0
      %3575 = vmatprep.subr.mxu0 0.0
      %3576 = vmatpush1.msra.mxu0 0.0
      %3577 = vmatprep.subr.mxu0 0.0
      %3578 = vmatpush1.msra.mxu0 0.0
      %3579 = vmatprep.subr.mxu0 0.0
      %3580 = vmatpush1.msra.mxu0 0.0
      %3581 = vmatprep.subr.mxu0 0.0
      %3582 = vmatpush1.msra.mxu0 0.0
      %3583 = vmatprep.subr.mxu0 0.0
      %3584 = vmatpush1.msra.mxu0 0.0
      %3585 = vmatprep.subr.mxu0 0.0
      %3586 = vmatpush1.msra.mxu0 0.0
      %3587 = vmatprep.subr.mxu0 0.0
      %3588 = vmatpush1.msra.mxu0 0.0
      %3589 = vmatprep.subr.mxu0 0.0
      %3590 = vmatpush1.msra.mxu0 0.0
      %3591 = vmatprep.subr.mxu0 0.0
      %3592 = vmatpush1.msra.mxu0 0.0
      %3593 = vmatprep.subr.mxu0 0.0
      %3594 = vmatpush1.msra.mxu0 0.0
      %3595 = vmatprep.subr.mxu0 0.0
      %3596 = vmatpush1.msra.mxu0 0.0
      %3597 = vmatprep.subr.mxu0 0.0
      %3598 = vmatpush1.msra.mxu0 0.0
      %3599 = vmatprep.subr.mxu0 0.0
      %3600 = vmatpush1.msra.mxu0 0.0
      %3601 = vmatprep.subr.mxu0 0.0
      %3602 = vmatpush1.msra.mxu0 0.0
      %3603 = vmatprep.subr.mxu0 0.0
      %3604 = vmatpush1.msra.mxu0 0.0
      %3605 = vmatprep.subr.mxu0 0.0
      %3606 = vmatpush1.msra.mxu0 0.0
      %3607 = vmatprep.subr.mxu0 0.0
      %3608 = vmatpush1.msra.mxu0 0.0
      %3609 = vmatprep.subr.mxu0 0.0
      %3610 = vmatpush1.msra.mxu0 0.0
      %3611 = vmatprep.subr.mxu0 0.0
      %3612 = vmatpush1.msra.mxu0 0.0
      %3613 = vmatprep.subr.mxu0 0.0
      %3614 = vmatpush1.msra.mxu0 0.0
      %3615 = vmatprep.subr.mxu0 0.0
      %3616 = vmatpush1.msra.mxu0 0.0
      %3617 = vmatprep.subr.mxu0 0.0
      %3618 = vmatpush1.msra.mxu0 0.0
      %3619 = vmatprep.subr.mxu0 0.0
      %3620 = vmatpush1.msra.mxu0 0.0
      %3621 = vmatprep.subr.mxu0 0.0
      %3622 = vmatpush1.msra.mxu0 0.0
      %3623 = vmatprep.mubr.f32.mxu0 0.0
      %3624 = vmatmul.mubr.f32.gmra.mrb[0].mxu0 %v3557
      %v3625 = vpop.f32.mrb[0].mxu0
      %v3626 = vadd.f32 0.0, %v3625
      %v3627 = vpop.f32.mrb[0].mxu0
      %v3628 = vadd.f32 0.0, %v3627
      %3629 = vdwg.mxu0
      %3630 = vmatprep.subr.mxu0 0.0
      %3631 = vmatpush1.msra.mxu0 %v3553
      %3632 = vmatprep.subr.mxu0 0.0
      %3633 = vmatpush1.msra.mxu0 0.0
      %3634 = vmatprep.subr.mxu0 0.0
      %3635 = vmatpush1.msra.mxu0 0.0
      %3636 = vmatprep.subr.mxu0 0.0
      %3637 = vmatpush1.msra.mxu0 0.0
      %3638 = vmatprep.subr.mxu0 0.0
      %3639 = vmatpush1.msra.mxu0 0.0
      %3640 = vmatprep.subr.mxu0 0.0
      %3641 = vmatpush1.msra.mxu0 0.0
      %3642 = vmatprep.subr.mxu0 0.0
      %3643 = vmatpush1.msra.mxu0 0.0
      %3644 = vmatprep.subr.mxu0 0.0
      %3645 = vmatpush1.msra.mxu0 0.0
      %3646 = vmatprep.subr.mxu0 0.0
      %3647 = vmatpush1.msra.mxu0 0.0
      %3648 = vmatprep.subr.mxu0 0.0
      %3649 = vmatpush1.msra.mxu0 0.0
      %3650 = vmatprep.subr.mxu0 0.0
      %3651 = vmatpush1.msra.mxu0 0.0
      %3652 = vmatprep.subr.mxu0 0.0
      %3653 = vmatpush1.msra.mxu0 0.0
      %3654 = vmatprep.subr.mxu0 0.0
      %3655 = vmatpush1.msra.mxu0 0.0
      %3656 = vmatprep.subr.mxu0 0.0
      %3657 = vmatpush1.msra.mxu0 0.0
      %3658 = vmatprep.subr.mxu0 0.0
      %3659 = vmatpush1.msra.mxu0 0.0
      %3660 = vmatprep.subr.mxu0 0.0
      %3661 = vmatpush1.msra.mxu0 0.0
      %3662 = vmatprep.subr.mxu0 0.0
      %3663 = vmatpush1.msra.mxu0 0.0
      %3664 = vmatprep.subr.mxu0 0.0
      %3665 = vmatpush1.msra.mxu0 0.0
      %3666 = vmatprep.subr.mxu0 0.0
      %3667 = vmatpush1.msra.mxu0 0.0
      %3668 = vmatprep.subr.mxu0 0.0
      %3669 = vmatpush1.msra.mxu0 0.0
      %3670 = vmatprep.subr.mxu0 0.0
      %3671 = vmatpush1.msra.mxu0 0.0
      %3672 = vmatprep.subr.mxu0 0.0
      %3673 = vmatpush1.msra.mxu0 0.0
      %3674 = vmatprep.subr.mxu0 0.0
      %3675 = vmatpush1.msra.mxu0 0.0
      %3676 = vmatprep.subr.mxu0 0.0
      %3677 = vmatpush1.msra.mxu0 0.0
      %3678 = vmatprep.subr.mxu0 0.0
      %3679 = vmatpush1.msra.mxu0 0.0
      %3680 = vmatprep.subr.mxu0 0.0
      %3681 = vmatpush1.msra.mxu0 0.0
      %3682 = vmatprep.subr.mxu0 0.0
      %3683 = vmatpush1.msra.mxu0 0.0
      %3684 = vmatprep.subr.mxu0 0.0
      %3685 = vmatpush1.msra.mxu0 0.0
      %3686 = vmatprep.subr.mxu0 0.0
      %3687 = vmatpush1.msra.mxu0 0.0
      %3688 = vmatprep.subr.mxu0 0.0
      %3689 = vmatpush1.msra.mxu0 0.0
      %3690 = vmatprep.subr.mxu0 0.0
      %3691 = vmatpush1.msra.mxu0 0.0
      %3692 = vmatprep.subr.mxu0 0.0
      %3693 = vmatpush1.msra.mxu0 0.0
      %3694 = vmatprep.mubr.f32.mxu0 0.0
      %3695 = vmatmul.mubr.f32.gmra.mrb[0].mxu0 %v3557
      %v3696 = vpop.f32.mrb[0].mxu0
      %v3697 = vadd.f32 0.0, %v3696
      %v3698 = vpop.f32.mrb[0].mxu0
      %3699 = vdwg.mxu0
      %v3700 = vadd.f32 %v3467, %v3626
      %v3701 = vadd.f32 %v3469, %v3628
      %v3702 = vadd.f32 %v3538, %v3697
      %3703 = vrot.lane.b32.xlu0 %v3213, 103
      %v3704 = vpop.permute.xlu0 %3703
      %3705 = vrot.lane.b32.xlu0 %v3214, 1
      %v3706 = vpop.permute.xlu0 %3705
      %3707 = vrot.lane.b32.xlu0 %v3215, 1
      %v3708 = vpop.permute.xlu0 %3707
      %3709 = vrot.lane.b32.xlu0 %v3216, 1
      %v3710 = vpop.permute.xlu0 %3709
      %3711 = vrot.lane.b32.xlu0 %v3217, 1
      %v3712 = vpop.permute.xlu0 %3711
      %v3713 = vsel %vm730, %v3706, %v3708
      %v3714 = vsel %vm730, %v3708, %v3710
      %v3715 = vsel %vm730, %v3710, %v3712
      %v3719 = vsel %vm1760, %v3704, 0
      %3721 = vmatprep.subr.mxu0 %v3714
      %3722 = vmatpush1.msra.mxu0 %v3713
      %3723 = vmatprep.subr.mxu0 0.0
      %3724 = vmatpush1.msra.mxu0 0.0
      %3725 = vmatprep.subr.mxu0 0.0
      %3726 = vmatpush1.msra.mxu0 0.0
      %3727 = vmatprep.subr.mxu0 0.0
      %3728 = vmatpush1.msra.mxu0 0.0
      %3729 = vmatprep.subr.mxu0 0.0
      %3730 = vmatpush1.msra.mxu0 0.0
      %3731 = vmatprep.subr.mxu0 0.0
      %3732 = vmatpush1.msra.mxu0 0.0
      %3733 = vmatprep.subr.mxu0 0.0
      %3734 = vmatpush1.msra.mxu0 0.0
      %3735 = vmatprep.subr.mxu0 0.0
      %3736 = vmatpush1.msra.mxu0 0.0
      %3737 = vmatprep.subr.mxu0 0.0
      %3738 = vmatpush1.msra.mxu0 0.0
      %3739 = vmatprep.subr.mxu0 0.0
      %3740 = vmatpush1.msra.mxu0 0.0
      %3741 = vmatprep.subr.mxu0 0.0
      %3742 = vmatpush1.msra.mxu0 0.0
      %3743 = vmatprep.subr.mxu0 0.0
      %3744 = vmatpush1.msra.mxu0 0.0
      %3745 = vmatprep.subr.mxu0 0.0
      %3746 = vmatpush1.msra.mxu0 0.0
      %3747 = vmatprep.subr.mxu0 0.0
      %3748 = vmatpush1.msra.mxu0 0.0
      %3749 = vmatprep.subr.mxu0 0.0
      %3750 = vmatpush1.msra.mxu0 0.0
      %3751 = vmatprep.subr.mxu0 0.0
      %3752 = vmatpush1.msra.mxu0 0.0
      %3753 = vmatprep.subr.mxu0 0.0
      %3754 = vmatpush1.msra.mxu0 0.0
      %3755 = vmatprep.subr.mxu0 0.0
      %3756 = vmatpush1.msra.mxu0 0.0
      %3757 = vmatprep.subr.mxu0 0.0
      %3758 = vmatpush1.msra.mxu0 0.0
      %3759 = vmatprep.subr.mxu0 0.0
      %3760 = vmatpush1.msra.mxu0 0.0
      %3761 = vmatprep.subr.mxu0 0.0
      %3762 = vmatpush1.msra.mxu0 0.0
      %3763 = vmatprep.subr.mxu0 0.0
      %3764 = vmatpush1.msra.mxu0 0.0
      %3765 = vmatprep.subr.mxu0 0.0
      %3766 = vmatpush1.msra.mxu0 0.0
      %3767 = vmatprep.subr.mxu0 0.0
      %3768 = vmatpush1.msra.mxu0 0.0
      %3769 = vmatprep.subr.mxu0 0.0
      %3770 = vmatpush1.msra.mxu0 0.0
      %3771 = vmatprep.subr.mxu0 0.0
      %3772 = vmatpush1.msra.mxu0 0.0
      %3773 = vmatprep.subr.mxu0 0.0
      %3774 = vmatpush1.msra.mxu0 0.0
      %3775 = vmatprep.subr.mxu0 0.0
      %3776 = vmatpush1.msra.mxu0 0.0
      %3777 = vmatprep.subr.mxu0 0.0
      %3778 = vmatpush1.msra.mxu0 0.0
      %3779 = vmatprep.subr.mxu0 0.0
      %3780 = vmatpush1.msra.mxu0 0.0
      %3781 = vmatprep.subr.mxu0 0.0
      %3782 = vmatpush1.msra.mxu0 0.0
      %3783 = vmatprep.subr.mxu0 0.0
      %3784 = vmatpush1.msra.mxu0 0.0
      %3785 = vmatprep.mubr.f32.mxu0 0.0
      %3786 = vmatmul.mubr.f32.gmra.mrb[0].mxu0 %v3719
      %v3787 = vpop.f32.mrb[0].mxu0
      %v3788 = vadd.f32 0.0, %v3787
      %v3789 = vpop.f32.mrb[0].mxu0
      %v3790 = vadd.f32 0.0, %v3789
      %3791 = vdwg.mxu0
      %3792 = vmatprep.subr.mxu0 0.0
      %3793 = vmatpush1.msra.mxu0 %v3715
      %3794 = vmatprep.subr.mxu0 0.0
      %3795 = vmatpush1.msra.mxu0 0.0
      %3796 = vmatprep.subr.mxu0 0.0
      %3797 = vmatpush1.msra.mxu0 0.0
      %3798 = vmatprep.subr.mxu0 0.0
      %3799 = vmatpush1.msra.mxu0 0.0
      %3800 = vmatprep.subr.mxu0 0.0
      %3801 = vmatpush1.msra.mxu0 0.0
      %3802 = vmatprep.subr.mxu0 0.0
      %3803 = vmatpush1.msra.mxu0 0.0
      %3804 = vmatprep.subr.mxu0 0.0
      %3805 = vmatpush1.msra.mxu0 0.0
      %3806 = vmatprep.subr.mxu0 0.0
      %3807 = vmatpush1.msra.mxu0 0.0
      %3808 = vmatprep.subr.mxu0 0.0
      %3809 = vmatpush1.msra.mxu0 0.0
      %3810 = vmatprep.subr.mxu0 0.0
      %3811 = vmatpush1.msra.mxu0 0.0
      %3812 = vmatprep.subr.mxu0 0.0
      %3813 = vmatpush1.msra.mxu0 0.0
      %3814 = vmatprep.subr.mxu0 0.0
      %3815 = vmatpush1.msra.mxu0 0.0
      %3816 = vmatprep.subr.mxu0 0.0
      %3817 = vmatpush1.msra.mxu0 0.0
      %3818 = vmatprep.subr.mxu0 0.0
      %3819 = vmatpush1.msra.mxu0 0.0
      %3820 = vmatprep.subr.mxu0 0.0
      %3821 = vmatpush1.msra.mxu0 0.0
      %3822 = vmatprep.subr.mxu0 0.0
      %3823 = vmatpush1.msra.mxu0 0.0
      %3824 = vmatprep.subr.mxu0 0.0
      %3825 = vmatpush1.msra.mxu0 0.0
      %3826 = vmatprep.subr.mxu0 0.0
      %3827 = vmatpush1.msra.mxu0 0.0
      %3828 = vmatprep.subr.mxu0 0.0
      %3829 = vmatpush1.msra.mxu0 0.0
      %3830 = vmatprep.subr.mxu0 0.0
      %3831 = vmatpush1.msra.mxu0 0.0
      %3832 = vmatprep.subr.mxu0 0.0
      %3833 = vmatpush1.msra.mxu0 0.0
      %3834 = vmatprep.subr.mxu0 0.0
      %3835 = vmatpush1.msra.mxu0 0.0
      %3836 = vmatprep.subr.mxu0 0.0
      %3837 = vmatpush1.msra.mxu0 0.0
      %3838 = vmatprep.subr.mxu0 0.0
      %3839 = vmatpush1.msra.mxu0 0.0
      %3840 = vmatprep.subr.mxu0 0.0
      %3841 = vmatpush1.msra.mxu0 0.0
      %3842 = vmatprep.subr.mxu0 0.0
      %3843 = vmatpush1.msra.mxu0 0.0
      %3844 = vmatprep.subr.mxu0 0.0
      %3845 = vmatpush1.msra.mxu0 0.0
      %3846 = vmatprep.subr.mxu0 0.0
      %3847 = vmatpush1.msra.mxu0 0.0
      %3848 = vmatprep.subr.mxu0 0.0
      %3849 = vmatpush1.msra.mxu0 0.0
      %3850 = vmatprep.subr.mxu0 0.0
      %3851 = vmatpush1.msra.mxu0 0.0
      %3852 = vmatprep.subr.mxu0 0.0
      %3853 = vmatpush1.msra.mxu0 0.0
      %3854 = vmatprep.subr.mxu0 0.0
      %3855 = vmatpush1.msra.mxu0 0.0
      %3856 = vmatprep.mubr.f32.mxu0 0.0
      %3857 = vmatmul.mubr.f32.gmra.mrb[0].mxu0 %v3719
      %v3858 = vpop.f32.mrb[0].mxu0
      %v3859 = vadd.f32 0.0, %v3858
      %v3860 = vpop.f32.mrb[0].mxu0
      %3861 = vdwg.mxu0
      %v3862 = vadd.f32 %v3700, %v3788
      %v3863 = vadd.f32 %v3701, %v3790
      %v3864 = vadd.f32 %v3702, %v3859
      %3865 = vrot.lane.b32.xlu0 %v3213, 95
      %v3866 = vpop.permute.xlu0 %3865
      %v3867 = vsel %vm1760, %v3866, 0
      %3869 = vmatprep.subr.mxu0 %v3216
      %3870 = vmatpush1.msra.mxu0 %v3215
      %3871 = vmatprep.subr.mxu0 0.0
      %3872 = vmatpush1.msra.mxu0 0.0
      %3873 = vmatprep.subr.mxu0 0.0
      %3874 = vmatpush1.msra.mxu0 0.0
      %3875 = vmatprep.subr.mxu0 0.0
      %3876 = vmatpush1.msra.mxu0 0.0
      %3877 = vmatprep.subr.mxu0 0.0
      %3878 = vmatpush1.msra.mxu0 0.0
      %3879 = vmatprep.subr.mxu0 0.0
      %3880 = vmatpush1.msra.mxu0 0.0
      %3881 = vmatprep.subr.mxu0 0.0
      %3882 = vmatpush1.msra.mxu0 0.0
      %3883 = vmatprep.subr.mxu0 0.0
      %3884 = vmatpush1.msra.mxu0 0.0
      %3885 = vmatprep.subr.mxu0 0.0
      %3886 = vmatpush1.msra.mxu0 0.0
      %3887 = vmatprep.subr.mxu0 0.0
      %3888 = vmatpush1.msra.mxu0 0.0
      %3889 = vmatprep.subr.mxu0 0.0
      %3890 = vmatpush1.msra.mxu0 0.0
      %3891 = vmatprep.subr.mxu0 0.0
      %3892 = vmatpush1.msra.mxu0 0.0
      %3893 = vmatprep.subr.mxu0 0.0
      %3894 = vmatpush1.msra.mxu0 0.0
      %3895 = vmatprep.subr.mxu0 0.0
      %3896 = vmatpush1.msra.mxu0 0.0
      %3897 = vmatprep.subr.mxu0 0.0
      %3898 = vmatpush1.msra.mxu0 0.0
      %3899 = vmatprep.subr.mxu0 0.0
      %3900 = vmatpush1.msra.mxu0 0.0
      %3901 = vmatprep.subr.mxu0 0.0
      %3902 = vmatpush1.msra.mxu0 0.0
      %3903 = vmatprep.subr.mxu0 0.0
      %3904 = vmatpush1.msra.mxu0 0.0
      %3905 = vmatprep.subr.mxu0 0.0
      %3906 = vmatpush1.msra.mxu0 0.0
      %3907 = vmatprep.subr.mxu0 0.0
      %3908 = vmatpush1.msra.mxu0 0.0
      %3909 = vmatprep.subr.mxu0 0.0
      %3910 = vmatpush1.msra.mxu0 0.0
      %3911 = vmatprep.subr.mxu0 0.0
      %3912 = vmatpush1.msra.mxu0 0.0
      %3913 = vmatprep.subr.mxu0 0.0
      %3914 = vmatpush1.msra.mxu0 0.0
      %3915 = vmatprep.subr.mxu0 0.0
      %3916 = vmatpush1.msra.mxu0 0.0
      %3917 = vmatprep.subr.mxu0 0.0
      %3918 = vmatpush1.msra.mxu0 0.0
      %3919 = vmatprep.subr.mxu0 0.0
      %3920 = vmatpush1.msra.mxu0 0.0
      %3921 = vmatprep.subr.mxu0 0.0
      %3922 = vmatpush1.msra.mxu0 0.0
      %3923 = vmatprep.subr.mxu0 0.0
      %3924 = vmatpush1.msra.mxu0 0.0
      %3925 = vmatprep.subr.mxu0 0.0
      %3926 = vmatpush1.msra.mxu0 0.0
      %3927 = vmatprep.subr.mxu0 0.0
      %3928 = vmatpush1.msra.mxu0 0.0
      %3929 = vmatprep.subr.mxu0 0.0
      %3930 = vmatpush1.msra.mxu0 0.0
      %3931 = vmatprep.subr.mxu0 0.0
      %3932 = vmatpush1.msra.mxu0 0.0
      %3933 = vmatprep.mubr.f32.mxu0 0.0
      %3934 = vmatmul.mubr.f32.gmra.mrb[0].mxu0 %v3867
      %v3935 = vpop.f32.mrb[0].mxu0
      %v3936 = vadd.f32 0.0, %v3935
      %v3937 = vpop.f32.mrb[0].mxu0
      %v3938 = vadd.f32 0.0, %v3937
      %3939 = vdwg.mxu0
      %3940 = vmatprep.subr.mxu0 0.0
      %3941 = vmatpush1.msra.mxu0 %v3217
      %3942 = vmatprep.subr.mxu0 0.0
      %3943 = vmatpush1.msra.mxu0 0.0
      %3944 = vmatprep.subr.mxu0 0.0
      %3945 = vmatpush1.msra.mxu0 0.0
      %3946 = vmatprep.subr.mxu0 0.0
      %3947 = vmatpush1.msra.mxu0 0.0
      %3948 = vmatprep.subr.mxu0 0.0
      %3949 = vmatpush1.msra.mxu0 0.0
      %3950 = vmatprep.subr.mxu0 0.0
      %3951 = vmatpush1.msra.mxu0 0.0
      %3952 = vmatprep.subr.mxu0 0.0
      %3953 = vmatpush1.msra.mxu0 0.0
      %3954 = vmatprep.subr.mxu0 0.0
      %3955 = vmatpush1.msra.mxu0 0.0
      %3956 = vmatprep.subr.mxu0 0.0
      %3957 = vmatpush1.msra.mxu0 0.0
      %3958 = vmatprep.subr.mxu0 0.0
      %3959 = vmatpush1.msra.mxu0 0.0
      %3960 = vmatprep.subr.mxu0 0.0
      %3961 = vmatpush1.msra.mxu0 0.0
      %3962 = vmatprep.subr.mxu0 0.0
      %3963 = vmatpush1.msra.mxu0 0.0
      %3964 = vmatprep.subr.mxu0 0.0
      %3965 = vmatpush1.msra.mxu0 0.0
      %3966 = vmatprep.subr.mxu0 0.0
      %3967 = vmatpush1.msra.mxu0 0.0
      %3968 = vmatprep.subr.mxu0 0.0
      %3969 = vmatpush1.msra.mxu0 0.0
      %3970 = vmatprep.subr.mxu0 0.0
      %3971 = vmatpush1.msra.mxu0 0.0
      %3972 = vmatprep.subr.mxu0 0.0
      %3973 = vmatpush1.msra.mxu0 0.0
      %3974 = vmatprep.subr.mxu0 0.0
      %3975 = vmatpush1.msra.mxu0 0.0
      %3976 = vmatprep.subr.mxu0 0.0
      %3977 = vmatpush1.msra.mxu0 0.0
      %3978 = vmatprep.subr.mxu0 0.0
      %3979 = vmatpush1.msra.mxu0 0.0
      %3980 = vmatprep.subr.mxu0 0.0
      %3981 = vmatpush1.msra.mxu0 0.0
      %3982 = vmatprep.subr.mxu0 0.0
      %3983 = vmatpush1.msra.mxu0 0.0
      %3984 = vmatprep.subr.mxu0 0.0
      %3985 = vmatpush1.msra.mxu0 0.0
      %3986 = vmatprep.subr.mxu0 0.0
      %3987 = vmatpush1.msra.mxu0 0.0
      %3988 = vmatprep.subr.mxu0 0.0
      %3989 = vmatpush1.msra.mxu0 0.0
      %3990 = vmatprep.subr.mxu0 0.0
      %3991 = vmatpush1.msra.mxu0 0.0
      %3992 = vmatprep.subr.mxu0 0.0
      %3993 = vmatpush1.msra.mxu0 0.0
      %3994 = vmatprep.subr.mxu0 0.0
      %3995 = vmatpush1.msra.mxu0 0.0
      %3996 = vmatprep.subr.mxu0 0.0
      %3997 = vmatpush1.msra.mxu0 0.0
      %3998 = vmatprep.subr.mxu0 0.0
      %3999 = vmatpush1.msra.mxu0 0.0
      %4000 = vmatprep.subr.mxu0 0.0
      %4001 = vmatpush1.msra.mxu0 0.0
      %4002 = vmatprep.subr.mxu0 0.0
      %4003 = vmatpush1.msra.mxu0 0.0
      %4004 = vmatprep.mubr.f32.mxu0 0.0
      %4005 = vmatmul.mubr.f32.gmra.mrb[0].mxu0 %v3867
      %v4006 = vpop.f32.mrb[0].mxu0
      %v4007 = vadd.f32 0.0, %v4006
      %v4008 = vpop.f32.mrb[0].mxu0
      %4009 = vdwg.mxu0
      %v4010 = vadd.f32 %v3862, %v3936
      %v4011 = vadd.f32 %v3863, %v3938
      %v4012 = vadd.f32 %v3864, %v4007
      %v4013 = vld [vmem:[#allocation2 + $0x8] sm:$0xff]
      %v4014 = vld [vmem:[#allocation2 + $0x10] sm:$0xff]
      %v4015 = vld [vmem:[#allocation2 + $0x18] sm:$0xff]
      %v4016 = vld [vmem:[#allocation2 + $0x20] sm:$0xff]
      %4017 = vrot.lane.b32.xlu0 %v3213, 87
      %v4018 = vpop.permute.xlu0 %4017
      %4023 = vrot.lane.b32.xlu0 %v4013, 127
      %v4024 = vpop.permute.xlu0 %4023
      %4025 = vrot.lane.b32.xlu0 %v4014, 127
      %v4026 = vpop.permute.xlu0 %4025
      %4027 = vrot.lane.b32.xlu0 %v4015, 127
      %v4028 = vpop.permute.xlu0 %4027
      %4029 = vrot.lane.b32.xlu0 %v4016, 127
      %v4030 = vpop.permute.xlu0 %4029
      %v4031 = vsel %vm1058, %v4024, %v4026
      %v4032 = vsel %vm1058, %v4026, %v4028
      %v4033 = vsel %vm1058, %v4028, %v4030
      %v4037 = vsel %vm1760, %v4018, 0
      %4039 = vmatprep.subr.mxu0 %v4032
      %4040 = vmatpush1.msra.mxu0 %v4031
      %4041 = vmatprep.subr.mxu0 0.0
      %4042 = vmatpush1.msra.mxu0 0.0
      %4043 = vmatprep.subr.mxu0 0.0
      %4044 = vmatpush1.msra.mxu0 0.0
      %4045 = vmatprep.subr.mxu0 0.0
      %4046 = vmatpush1.msra.mxu0 0.0
      %4047 = vmatprep.subr.mxu0 0.0
      %4048 = vmatpush1.msra.mxu0 0.0
      %4049 = vmatprep.subr.mxu0 0.0
      %4050 = vmatpush1.msra.mxu0 0.0
      %4051 = vmatprep.subr.mxu0 0.0
      %4052 = vmatpush1.msra.mxu0 0.0
      %4053 = vmatprep.subr.mxu0 0.0
      %4054 = vmatpush1.msra.mxu0 0.0
      %4055 = vmatprep.subr.mxu0 0.0
      %4056 = vmatpush1.msra.mxu0 0.0
      %4057 = vmatprep.subr.mxu0 0.0
      %4058 = vmatpush1.msra.mxu0 0.0
      %4059 = vmatprep.subr.mxu0 0.0
      %4060 = vmatpush1.msra.mxu0 0.0
      %4061 = vmatprep.subr.mxu0 0.0
      %4062 = vmatpush1.msra.mxu0 0.0
      %4063 = vmatprep.subr.mxu0 0.0
      %4064 = vmatpush1.msra.mxu0 0.0
      %4065 = vmatprep.subr.mxu0 0.0
      %4066 = vmatpush1.msra.mxu0 0.0
      %4067 = vmatprep.subr.mxu0 0.0
      %4068 = vmatpush1.msra.mxu0 0.0
      %4069 = vmatprep.subr.mxu0 0.0
      %4070 = vmatpush1.msra.mxu0 0.0
      %4071 = vmatprep.subr.mxu0 0.0
      %4072 = vmatpush1.msra.mxu0 0.0
      %4073 = vmatprep.subr.mxu0 0.0
      %4074 = vmatpush1.msra.mxu0 0.0
      %4075 = vmatprep.subr.mxu0 0.0
      %4076 = vmatpush1.msra.mxu0 0.0
      %4077 = vmatprep.subr.mxu0 0.0
      %4078 = vmatpush1.msra.mxu0 0.0
      %4079 = vmatprep.subr.mxu0 0.0
      %4080 = vmatpush1.msra.mxu0 0.0
      %4081 = vmatprep.subr.mxu0 0.0
      %4082 = vmatpush1.msra.mxu0 0.0
      %4083 = vmatprep.subr.mxu0 0.0
      %4084 = vmatpush1.msra.mxu0 0.0
      %4085 = vmatprep.subr.mxu0 0.0
      %4086 = vmatpush1.msra.mxu0 0.0
      %4087 = vmatprep.subr.mxu0 0.0
      %4088 = vmatpush1.msra.mxu0 0.0
      %4089 = vmatprep.subr.mxu0 0.0
      %4090 = vmatpush1.msra.mxu0 0.0
      %4091 = vmatprep.subr.mxu0 0.0
      %4092 = vmatpush1.msra.mxu0 0.0
      %4093 = vmatprep.subr.mxu0 0.0
      %4094 = vmatpush1.msra.mxu0 0.0
      %4095 = vmatprep.subr.mxu0 0.0
      %4096 = vmatpush1.msra.mxu0 0.0
      %4097 = vmatprep.subr.mxu0 0.0
      %4098 = vmatpush1.msra.mxu0 0.0
      %4099 = vmatprep.subr.mxu0 0.0
      %4100 = vmatpush1.msra.mxu0 0.0
      %4101 = vmatprep.subr.mxu0 0.0
      %4102 = vmatpush1.msra.mxu0 0.0
      %4103 = vmatprep.mubr.f32.mxu0 0.0
      %4104 = vmatmul.mubr.f32.gmra.mrb[0].mxu0 %v4037
      %v4105 = vpop.f32.mrb[0].mxu0
      %v4106 = vadd.f32 0.0, %v4105
      %v4107 = vpop.f32.mrb[0].mxu0
      %v4108 = vadd.f32 0.0, %v4107
      %4109 = vdwg.mxu0
      %4110 = vmatprep.subr.mxu0 0.0
      %4111 = vmatpush1.msra.mxu0 %v4033
      %4112 = vmatprep.subr.mxu0 0.0
      %4113 = vmatpush1.msra.mxu0 0.0
      %4114 = vmatprep.subr.mxu0 0.0
      %4115 = vmatpush1.msra.mxu0 0.0
      %4116 = vmatprep.subr.mxu0 0.0
      %4117 = vmatpush1.msra.mxu0 0.0
      %4118 = vmatprep.subr.mxu0 0.0
      %4119 = vmatpush1.msra.mxu0 0.0
      %4120 = vmatprep.subr.mxu0 0.0
      %4121 = vmatpush1.msra.mxu0 0.0
      %4122 = vmatprep.subr.mxu0 0.0
      %4123 = vmatpush1.msra.mxu0 0.0
      %4124 = vmatprep.subr.mxu0 0.0
      %4125 = vmatpush1.msra.mxu0 0.0
      %4126 = vmatprep.subr.mxu0 0.0
      %4127 = vmatpush1.msra.mxu0 0.0
      %4128 = vmatprep.subr.mxu0 0.0
      %4129 = vmatpush1.msra.mxu0 0.0
      %4130 = vmatprep.subr.mxu0 0.0
      %4131 = vmatpush1.msra.mxu0 0.0
      %4132 = vmatprep.subr.mxu0 0.0
      %4133 = vmatpush1.msra.mxu0 0.0
      %4134 = vmatprep.subr.mxu0 0.0
      %4135 = vmatpush1.msra.mxu0 0.0
      %4136 = vmatprep.subr.mxu0 0.0
      %4137 = vmatpush1.msra.mxu0 0.0
      %4138 = vmatprep.subr.mxu0 0.0
      %4139 = vmatpush1.msra.mxu0 0.0
      %4140 = vmatprep.subr.mxu0 0.0
      %4141 = vmatpush1.msra.mxu0 0.0
      %4142 = vmatprep.subr.mxu0 0.0
      %4143 = vmatpush1.msra.mxu0 0.0
      %4144 = vmatprep.subr.mxu0 0.0
      %4145 = vmatpush1.msra.mxu0 0.0
      %4146 = vmatprep.subr.mxu0 0.0
      %4147 = vmatpush1.msra.mxu0 0.0
      %4148 = vmatprep.subr.mxu0 0.0
      %4149 = vmatpush1.msra.mxu0 0.0
      %4150 = vmatprep.subr.mxu0 0.0
      %4151 = vmatpush1.msra.mxu0 0.0
      %4152 = vmatprep.subr.mxu0 0.0
      %4153 = vmatpush1.msra.mxu0 0.0
      %4154 = vmatprep.subr.mxu0 0.0
      %4155 = vmatpush1.msra.mxu0 0.0
      %4156 = vmatprep.subr.mxu0 0.0
      %4157 = vmatpush1.msra.mxu0 0.0
      %4158 = vmatprep.subr.mxu0 0.0
      %4159 = vmatpush1.msra.mxu0 0.0
      %4160 = vmatprep.subr.mxu0 0.0
      %4161 = vmatpush1.msra.mxu0 0.0
      %4162 = vmatprep.subr.mxu0 0.0
      %4163 = vmatpush1.msra.mxu0 0.0
      %4164 = vmatprep.subr.mxu0 0.0
      %4165 = vmatpush1.msra.mxu0 0.0
      %4166 = vmatprep.subr.mxu0 0.0
      %4167 = vmatpush1.msra.mxu0 0.0
      %4168 = vmatprep.subr.mxu0 0.0
      %4169 = vmatpush1.msra.mxu0 0.0
      %4170 = vmatprep.subr.mxu0 0.0
      %4171 = vmatpush1.msra.mxu0 0.0
      %4172 = vmatprep.subr.mxu0 0.0
      %4173 = vmatpush1.msra.mxu0 0.0
      %4174 = vmatprep.mubr.f32.mxu0 0.0
      %4175 = vmatmul.mubr.f32.gmra.mrb[0].mxu0 %v4037
      %v4176 = vpop.f32.mrb[0].mxu0
      %v4177 = vadd.f32 0.0, %v4176
      %v4178 = vpop.f32.mrb[0].mxu0
      %4179 = vdwg.mxu0
      %v4180 = vadd.f32 %v4010, %v4106
      %v4181 = vadd.f32 %v4011, %v4108
      %v4182 = vadd.f32 %v4012, %v4177
      %4183 = vrot.lane.b32.xlu0 %v3213, 79
      %v4184 = vpop.permute.xlu0 %4183
      %4185 = vrot.lane.b32.xlu0 %v4013, 111
      %v4186 = vpop.permute.xlu0 %4185
      %4187 = vrot.lane.b32.xlu0 %v4014, 111
      %v4188 = vpop.permute.xlu0 %4187
      %4189 = vrot.lane.b32.xlu0 %v4015, 111
      %v4190 = vpop.permute.xlu0 %4189
      %4191 = vrot.lane.b32.xlu0 %v4016, 111
      %v4192 = vpop.permute.xlu0 %4191
      %v4193 = vsel %vm1224, %v4186, %v4188
      %v4194 = vsel %vm1224, %v4188, %v4190
      %v4195 = vsel %vm1224, %v4190, %v4192
      %v4199 = vsel %vm1760, %v4184, 0
      %4201 = vmatprep.subr.mxu0 %v4194
      %4202 = vmatpush1.msra.mxu0 %v4193
      %4203 = vmatprep.subr.mxu0 0.0
      %4204 = vmatpush1.msra.mxu0 0.0
      %4205 = vmatprep.subr.mxu0 0.0
      %4206 = vmatpush1.msra.mxu0 0.0
      %4207 = vmatprep.subr.mxu0 0.0
      %4208 = vmatpush1.msra.mxu0 0.0
      %4209 = vmatprep.subr.mxu0 0.0
      %4210 = vmatpush1.msra.mxu0 0.0
      %4211 = vmatprep.subr.mxu0 0.0
      %4212 = vmatpush1.msra.mxu0 0.0
      %4213 = vmatprep.subr.mxu0 0.0
      %4214 = vmatpush1.msra.mxu0 0.0
      %4215 = vmatprep.subr.mxu0 0.0
      %4216 = vmatpush1.msra.mxu0 0.0
      %4217 = vmatprep.subr.mxu0 0.0
      %4218 = vmatpush1.msra.mxu0 0.0
      %4219 = vmatprep.subr.mxu0 0.0
      %4220 = vmatpush1.msra.mxu0 0.0
      %4221 = vmatprep.subr.mxu0 0.0
      %4222 = vmatpush1.msra.mxu0 0.0
      %4223 = vmatprep.subr.mxu0 0.0
      %4224 = vmatpush1.msra.mxu0 0.0
      %4225 = vmatprep.subr.mxu0 0.0
      %4226 = vmatpush1.msra.mxu0 0.0
      %4227 = vmatprep.subr.mxu0 0.0
      %4228 = vmatpush1.msra.mxu0 0.0
      %4229 = vmatprep.subr.mxu0 0.0
      %4230 = vmatpush1.msra.mxu0 0.0
      %4231 = vmatprep.subr.mxu0 0.0
      %4232 = vmatpush1.msra.mxu0 0.0
      %4233 = vmatprep.subr.mxu0 0.0
      %4234 = vmatpush1.msra.mxu0 0.0
      %4235 = vmatprep.subr.mxu0 0.0
      %4236 = vmatpush1.msra.mxu0 0.0
      %4237 = vmatprep.subr.mxu0 0.0
      %4238 = vmatpush1.msra.mxu0 0.0
      %4239 = vmatprep.subr.mxu0 0.0
      %4240 = vmatpush1.msra.mxu0 0.0
      %4241 = vmatprep.subr.mxu0 0.0
      %4242 = vmatpush1.msra.mxu0 0.0
      %4243 = vmatprep.subr.mxu0 0.0
      %4244 = vmatpush1.msra.mxu0 0.0
      %4245 = vmatprep.subr.mxu0 0.0
      %4246 = vmatpush1.msra.mxu0 0.0
      %4247 = vmatprep.subr.mxu0 0.0
      %4248 = vmatpush1.msra.mxu0 0.0
      %4249 = vmatprep.subr.mxu0 0.0
      %4250 = vmatpush1.msra.mxu0 0.0
      %4251 = vmatprep.subr.mxu0 0.0
      %4252 = vmatpush1.msra.mxu0 0.0
      %4253 = vmatprep.subr.mxu0 0.0
      %4254 = vmatpush1.msra.mxu0 0.0
      %4255 = vmatprep.subr.mxu0 0.0
      %4256 = vmatpush1.msra.mxu0 0.0
      %4257 = vmatprep.subr.mxu0 0.0
      %4258 = vmatpush1.msra.mxu0 0.0
      %4259 = vmatprep.subr.mxu0 0.0
      %4260 = vmatpush1.msra.mxu0 0.0
      %4261 = vmatprep.subr.mxu0 0.0
      %4262 = vmatpush1.msra.mxu0 0.0
      %4263 = vmatprep.subr.mxu0 0.0
      %4264 = vmatpush1.msra.mxu0 0.0
      %4265 = vmatprep.mubr.f32.mxu0 0.0
      %4266 = vmatmul.mubr.f32.gmra.mrb[0].mxu0 %v4199
      %v4267 = vpop.f32.mrb[0].mxu0
      %v4268 = vadd.f32 0.0, %v4267
      %v4269 = vpop.f32.mrb[0].mxu0
      %v4270 = vadd.f32 0.0, %v4269
      %4271 = vdwg.mxu0
      %4272 = vmatprep.subr.mxu0 0.0
      %4273 = vmatpush1.msra.mxu0 %v4195
      %4274 = vmatprep.subr.mxu0 0.0
      %4275 = vmatpush1.msra.mxu0 0.0
      %4276 = vmatprep.subr.mxu0 0.0
      %4277 = vmatpush1.msra.mxu0 0.0
      %4278 = vmatprep.subr.mxu0 0.0
      %4279 = vmatpush1.msra.mxu0 0.0
      %4280 = vmatprep.subr.mxu0 0.0
      %4281 = vmatpush1.msra.mxu0 0.0
      %4282 = vmatprep.subr.mxu0 0.0
      %4283 = vmatpush1.msra.mxu0 0.0
      %4284 = vmatprep.subr.mxu0 0.0
      %4285 = vmatpush1.msra.mxu0 0.0
      %4286 = vmatprep.subr.mxu0 0.0
      %4287 = vmatpush1.msra.mxu0 0.0
      %4288 = vmatprep.subr.mxu0 0.0
      %4289 = vmatpush1.msra.mxu0 0.0
      %4290 = vmatprep.subr.mxu0 0.0
      %4291 = vmatpush1.msra.mxu0 0.0
      %4292 = vmatprep.subr.mxu0 0.0
      %4293 = vmatpush1.msra.mxu0 0.0
      %4294 = vmatprep.subr.mxu0 0.0
      %4295 = vmatpush1.msra.mxu0 0.0
      %4296 = vmatprep.subr.mxu0 0.0
      %4297 = vmatpush1.msra.mxu0 0.0
      %4298 = vmatprep.subr.mxu0 0.0
      %4299 = vmatpush1.msra.mxu0 0.0
      %4300 = vmatprep.subr.mxu0 0.0
      %4301 = vmatpush1.msra.mxu0 0.0
      %4302 = vmatprep.subr.mxu0 0.0
      %4303 = vmatpush1.msra.mxu0 0.0
      %4304 = vmatprep.subr.mxu0 0.0
      %4305 = vmatpush1.msra.mxu0 0.0
      %4306 = vmatprep.subr.mxu0 0.0
      %4307 = vmatpush1.msra.mxu0 0.0
      %4308 = vmatprep.subr.mxu0 0.0
      %4309 = vmatpush1.msra.mxu0 0.0
      %4310 = vmatprep.subr.mxu0 0.0
      %4311 = vmatpush1.msra.mxu0 0.0
      %4312 = vmatprep.subr.mxu0 0.0
      %4313 = vmatpush1.msra.mxu0 0.0
      %4314 = vmatprep.subr.mxu0 0.0
      %4315 = vmatpush1.msra.mxu0 0.0
      %4316 = vmatprep.subr.mxu0 0.0
      %4317 = vmatpush1.msra.mxu0 0.0
      %4318 = vmatprep.subr.mxu0 0.0
      %4319 = vmatpush1.msra.mxu0 0.0
      %4320 = vmatprep.subr.mxu0 0.0
      %4321 = vmatpush1.msra.mxu0 0.0
      %4322 = vmatprep.subr.mxu0 0.0
      %4323 = vmatpush1.msra.mxu0 0.0
      %4324 = vmatprep.subr.mxu0 0.0
      %4325 = vmatpush1.msra.mxu0 0.0
      %4326 = vmatprep.subr.mxu0 0.0
      %4327 = vmatpush1.msra.mxu0 0.0
      %4328 = vmatprep.subr.mxu0 0.0
      %4329 = vmatpush1.msra.mxu0 0.0
      %4330 = vmatprep.subr.mxu0 0.0
      %4331 = vmatpush1.msra.mxu0 0.0
      %4332 = vmatprep.subr.mxu0 0.0
      %4333 = vmatpush1.msra.mxu0 0.0
      %4334 = vmatprep.subr.mxu0 0.0
      %4335 = vmatpush1.msra.mxu0 0.0
      %4336 = vmatprep.mubr.f32.mxu0 0.0
      %4337 = vmatmul.mubr.f32.gmra.mrb[0].mxu0 %v4199
      %v4338 = vpop.f32.mrb[0].mxu0
      %v4339 = vadd.f32 0.0, %v4338
      %v4340 = vpop.f32.mrb[0].mxu0
      %4341 = vdwg.mxu0
      %v4342 = vadd.f32 %v4180, %v4268
      %v4343 = vadd.f32 %v4181, %v4270
      %v4344 = vadd.f32 %v4182, %v4339
      %4345 = vrot.lane.b32.xlu0 %v3213, 71
      %v4346 = vpop.permute.xlu0 %4345
      %4347 = vrot.lane.b32.xlu0 %v4013, 110
      %v4348 = vpop.permute.xlu0 %4347
      %4349 = vrot.lane.b32.xlu0 %v4014, 110
      %v4350 = vpop.permute.xlu0 %4349
      %4351 = vrot.lane.b32.xlu0 %v4015, 110
      %v4352 = vpop.permute.xlu0 %4351
      %4353 = vrot.lane.b32.xlu0 %v4016, 110
      %v4354 = vpop.permute.xlu0 %4353
      %v4355 = vsel %vm1390, %v4348, %v4350
      %v4356 = vsel %vm1390, %v4350, %v4352
      %v4357 = vsel %vm1390, %v4352, %v4354
      %v4361 = vsel %vm1760, %v4346, 0
      %4363 = vmatprep.subr.mxu0 %v4356
      %4364 = vmatpush1.msra.mxu0 %v4355
      %4365 = vmatprep.subr.mxu0 0.0
      %4366 = vmatpush1.msra.mxu0 0.0
      %4367 = vmatprep.subr.mxu0 0.0
      %4368 = vmatpush1.msra.mxu0 0.0
      %4369 = vmatprep.subr.mxu0 0.0
      %4370 = vmatpush1.msra.mxu0 0.0
      %4371 = vmatprep.subr.mxu0 0.0
      %4372 = vmatpush1.msra.mxu0 0.0
      %4373 = vmatprep.subr.mxu0 0.0
      %4374 = vmatpush1.msra.mxu0 0.0
      %4375 = vmatprep.subr.mxu0 0.0
      %4376 = vmatpush1.msra.mxu0 0.0
      %4377 = vmatprep.subr.mxu0 0.0
      %4378 = vmatpush1.msra.mxu0 0.0
      %4379 = vmatprep.subr.mxu0 0.0
      %4380 = vmatpush1.msra.mxu0 0.0
      %4381 = vmatprep.subr.mxu0 0.0
      %4382 = vmatpush1.msra.mxu0 0.0
      %4383 = vmatprep.subr.mxu0 0.0
      %4384 = vmatpush1.msra.mxu0 0.0
      %4385 = vmatprep.subr.mxu0 0.0
      %4386 = vmatpush1.msra.mxu0 0.0
      %4387 = vmatprep.subr.mxu0 0.0
      %4388 = vmatpush1.msra.mxu0 0.0
      %4389 = vmatprep.subr.mxu0 0.0
      %4390 = vmatpush1.msra.mxu0 0.0
      %4391 = vmatprep.subr.mxu0 0.0
      %4392 = vmatpush1.msra.mxu0 0.0
      %4393 = vmatprep.subr.mxu0 0.0
      %4394 = vmatpush1.msra.mxu0 0.0
      %4395 = vmatprep.subr.mxu0 0.0
      %4396 = vmatpush1.msra.mxu0 0.0
      %4397 = vmatprep.subr.mxu0 0.0
      %4398 = vmatpush1.msra.mxu0 0.0
      %4399 = vmatprep.subr.mxu0 0.0
      %4400 = vmatpush1.msra.mxu0 0.0
      %4401 = vmatprep.subr.mxu0 0.0
      %4402 = vmatpush1.msra.mxu0 0.0
      %4403 = vmatprep.subr.mxu0 0.0
      %4404 = vmatpush1.msra.mxu0 0.0
      %4405 = vmatprep.subr.mxu0 0.0
      %4406 = vmatpush1.msra.mxu0 0.0
      %4407 = vmatprep.subr.mxu0 0.0
      %4408 = vmatpush1.msra.mxu0 0.0
      %4409 = vmatprep.subr.mxu0 0.0
      %4410 = vmatpush1.msra.mxu0 0.0
      %4411 = vmatprep.subr.mxu0 0.0
      %4412 = vmatpush1.msra.mxu0 0.0
      %4413 = vmatprep.subr.mxu0 0.0
      %4414 = vmatpush1.msra.mxu0 0.0
      %4415 = vmatprep.subr.mxu0 0.0
      %4416 = vmatpush1.msra.mxu0 0.0
      %4417 = vmatprep.subr.mxu0 0.0
      %4418 = vmatpush1.msra.mxu0 0.0
      %4419 = vmatprep.subr.mxu0 0.0
      %4420 = vmatpush1.msra.mxu0 0.0
      %4421 = vmatprep.subr.mxu0 0.0
      %4422 = vmatpush1.msra.mxu0 0.0
      %4423 = vmatprep.subr.mxu0 0.0
      %4424 = vmatpush1.msra.mxu0 0.0
      %4425 = vmatprep.subr.mxu0 0.0
      %4426 = vmatpush1.msra.mxu0 0.0
      %4427 = vmatprep.mubr.f32.mxu0 0.0
      %4428 = vmatmul.mubr.f32.gmra.mrb[0].mxu0 %v4361
      %v4429 = vpop.f32.mrb[0].mxu0
      %v4430 = vadd.f32 0.0, %v4429
      %v4431 = vpop.f32.mrb[0].mxu0
      %v4432 = vadd.f32 0.0, %v4431
      %4433 = vdwg.mxu0
      %4434 = vmatprep.subr.mxu0 0.0
      %4435 = vmatpush1.msra.mxu0 %v4357
      %4436 = vmatprep.subr.mxu0 0.0
      %4437 = vmatpush1.msra.mxu0 0.0
      %4438 = vmatprep.subr.mxu0 0.0
      %4439 = vmatpush1.msra.mxu0 0.0
      %4440 = vmatprep.subr.mxu0 0.0
      %4441 = vmatpush1.msra.mxu0 0.0
      %4442 = vmatprep.subr.mxu0 0.0
      %4443 = vmatpush1.msra.mxu0 0.0
      %4444 = vmatprep.subr.mxu0 0.0
      %4445 = vmatpush1.msra.mxu0 0.0
      %4446 = vmatprep.subr.mxu0 0.0
      %4447 = vmatpush1.msra.mxu0 0.0
      %4448 = vmatprep.subr.mxu0 0.0
      %4449 = vmatpush1.msra.mxu0 0.0
      %4450 = vmatprep.subr.mxu0 0.0
      %4451 = vmatpush1.msra.mxu0 0.0
      %4452 = vmatprep.subr.mxu0 0.0
      %4453 = vmatpush1.msra.mxu0 0.0
      %4454 = vmatprep.subr.mxu0 0.0
      %4455 = vmatpush1.msra.mxu0 0.0
      %4456 = vmatprep.subr.mxu0 0.0
      %4457 = vmatpush1.msra.mxu0 0.0
      %4458 = vmatprep.subr.mxu0 0.0
      %4459 = vmatpush1.msra.mxu0 0.0
      %4460 = vmatprep.subr.mxu0 0.0
      %4461 = vmatpush1.msra.mxu0 0.0
      %4462 = vmatprep.subr.mxu0 0.0
      %4463 = vmatpush1.msra.mxu0 0.0
      %4464 = vmatprep.subr.mxu0 0.0
      %4465 = vmatpush1.msra.mxu0 0.0
      %4466 = vmatprep.subr.mxu0 0.0
      %4467 = vmatpush1.msra.mxu0 0.0
      %4468 = vmatprep.subr.mxu0 0.0
      %4469 = vmatpush1.msra.mxu0 0.0
      %4470 = vmatprep.subr.mxu0 0.0
      %4471 = vmatpush1.msra.mxu0 0.0
      %4472 = vmatprep.subr.mxu0 0.0
      %4473 = vmatpush1.msra.mxu0 0.0
      %4474 = vmatprep.subr.mxu0 0.0
      %4475 = vmatpush1.msra.mxu0 0.0
      %4476 = vmatprep.subr.mxu0 0.0
      %4477 = vmatpush1.msra.mxu0 0.0
      %4478 = vmatprep.subr.mxu0 0.0
      %4479 = vmatpush1.msra.mxu0 0.0
      %4480 = vmatprep.subr.mxu0 0.0
      %4481 = vmatpush1.msra.mxu0 0.0
      %4482 = vmatprep.subr.mxu0 0.0
      %4483 = vmatpush1.msra.mxu0 0.0
      %4484 = vmatprep.subr.mxu0 0.0
      %4485 = vmatpush1.msra.mxu0 0.0
      %4486 = vmatprep.subr.mxu0 0.0
      %4487 = vmatpush1.msra.mxu0 0.0
      %4488 = vmatprep.subr.mxu0 0.0
      %4489 = vmatpush1.msra.mxu0 0.0
      %4490 = vmatprep.subr.mxu0 0.0
      %4491 = vmatpush1.msra.mxu0 0.0
      %4492 = vmatprep.subr.mxu0 0.0
      %4493 = vmatpush1.msra.mxu0 0.0
      %4494 = vmatprep.subr.mxu0 0.0
      %4495 = vmatpush1.msra.mxu0 0.0
      %4496 = vmatprep.subr.mxu0 0.0
      %4497 = vmatpush1.msra.mxu0 0.0
      %4498 = vmatprep.mubr.f32.mxu0 0.0
      %4499 = vmatmul.mubr.f32.gmra.mrb[0].mxu0 %v4361
      %v4500 = vpop.f32.mrb[0].mxu0
      %v4501 = vadd.f32 0.0, %v4500
      %v4502 = vpop.f32.mrb[0].mxu0
      %4503 = vdwg.mxu0
      %v4504 = vadd.f32 %v4342, %v4430
      %v4505 = vadd.f32 %v4343, %v4432
      %v4506 = vadd.f32 %v4344, %v4501
      %4507 = vrot.lane.b32.xlu0 %v3213, 63
      %v4508 = vpop.permute.xlu0 %4507
      %4509 = vrot.lane.b32.xlu0 %v4013, 109
      %v4510 = vpop.permute.xlu0 %4509
      %4511 = vrot.lane.b32.xlu0 %v4014, 109
      %v4512 = vpop.permute.xlu0 %4511
      %4513 = vrot.lane.b32.xlu0 %v4015, 109
      %v4514 = vpop.permute.xlu0 %4513
      %4515 = vrot.lane.b32.xlu0 %v4016, 109
      %v4516 = vpop.permute.xlu0 %4515
      %v4517 = vsel %vm1556, %v4510, %v4512
      %v4518 = vsel %vm1556, %v4512, %v4514
      %v4519 = vsel %vm1556, %v4514, %v4516
      %v4523 = vsel %vm1760, %v4508, 0
      %4525 = vmatprep.subr.mxu0 %v4518
      %4526 = vmatpush1.msra.mxu0 %v4517
      %4527 = vmatprep.subr.mxu0 0.0
      %4528 = vmatpush1.msra.mxu0 0.0
      %4529 = vmatprep.subr.mxu0 0.0
      %4530 = vmatpush1.msra.mxu0 0.0
      %4531 = vmatprep.subr.mxu0 0.0
      %4532 = vmatpush1.msra.mxu0 0.0
      %4533 = vmatprep.subr.mxu0 0.0
      %4534 = vmatpush1.msra.mxu0 0.0
      %4535 = vmatprep.subr.mxu0 0.0
      %4536 = vmatpush1.msra.mxu0 0.0
      %4537 = vmatprep.subr.mxu0 0.0
      %4538 = vmatpush1.msra.mxu0 0.0
      %4539 = vmatprep.subr.mxu0 0.0
      %4540 = vmatpush1.msra.mxu0 0.0
      %4541 = vmatprep.subr.mxu0 0.0
      %4542 = vmatpush1.msra.mxu0 0.0
      %4543 = vmatprep.subr.mxu0 0.0
      %4544 = vmatpush1.msra.mxu0 0.0
      %4545 = vmatprep.subr.mxu0 0.0
      %4546 = vmatpush1.msra.mxu0 0.0
      %4547 = vmatprep.subr.mxu0 0.0
      %4548 = vmatpush1.msra.mxu0 0.0
      %4549 = vmatprep.subr.mxu0 0.0
      %4550 = vmatpush1.msra.mxu0 0.0
      %4551 = vmatprep.subr.mxu0 0.0
      %4552 = vmatpush1.msra.mxu0 0.0
      %4553 = vmatprep.subr.mxu0 0.0
      %4554 = vmatpush1.msra.mxu0 0.0
      %4555 = vmatprep.subr.mxu0 0.0
      %4556 = vmatpush1.msra.mxu0 0.0
      %4557 = vmatprep.subr.mxu0 0.0
      %4558 = vmatpush1.msra.mxu0 0.0
      %4559 = vmatprep.subr.mxu0 0.0
      %4560 = vmatpush1.msra.mxu0 0.0
      %4561 = vmatprep.subr.mxu0 0.0
      %4562 = vmatpush1.msra.mxu0 0.0
      %4563 = vmatprep.subr.mxu0 0.0
      %4564 = vmatpush1.msra.mxu0 0.0
      %4565 = vmatprep.subr.mxu0 0.0
      %4566 = vmatpush1.msra.mxu0 0.0
      %4567 = vmatprep.subr.mxu0 0.0
      %4568 = vmatpush1.msra.mxu0 0.0
      %4569 = vmatprep.subr.mxu0 0.0
      %4570 = vmatpush1.msra.mxu0 0.0
      %4571 = vmatprep.subr.mxu0 0.0
      %4572 = vmatpush1.msra.mxu0 0.0
      %4573 = vmatprep.subr.mxu0 0.0
      %4574 = vmatpush1.msra.mxu0 0.0
      %4575 = vmatprep.subr.mxu0 0.0
      %4576 = vmatpush1.msra.mxu0 0.0
      %4577 = vmatprep.subr.mxu0 0.0
      %4578 = vmatpush1.msra.mxu0 0.0
      %4579 = vmatprep.subr.mxu0 0.0
      %4580 = vmatpush1.msra.mxu0 0.0
      %4581 = vmatprep.subr.mxu0 0.0
      %4582 = vmatpush1.msra.mxu0 0.0
      %4583 = vmatprep.subr.mxu0 0.0
      %4584 = vmatpush1.msra.mxu0 0.0
      %4585 = vmatprep.subr.mxu0 0.0
      %4586 = vmatpush1.msra.mxu0 0.0
      %4587 = vmatprep.subr.mxu0 0.0
      %4588 = vmatpush1.msra.mxu0 0.0
      %4589 = vmatprep.mubr.f32.mxu0 0.0
      %4590 = vmatmul.mubr.f32.gmra.mrb[0].mxu0 %v4523
      %v4591 = vpop.f32.mrb[0].mxu0
      %v4592 = vadd.f32 0.0, %v4591
      %v4593 = vpop.f32.mrb[0].mxu0
      %v4594 = vadd.f32 0.0, %v4593
      %4595 = vdwg.mxu0
      %4596 = vmatprep.subr.mxu0 0.0
      %4597 = vmatpush1.msra.mxu0 %v4519
      %4598 = vmatprep.subr.mxu0 0.0
      %4599 = vmatpush1.msra.mxu0 0.0
      %4600 = vmatprep.subr.mxu0 0.0
      %4601 = vmatpush1.msra.mxu0 0.0
      %4602 = vmatprep.subr.mxu0 0.0
      %4603 = vmatpush1.msra.mxu0 0.0
      %4604 = vmatprep.subr.mxu0 0.0
      %4605 = vmatpush1.msra.mxu0 0.0
      %4606 = vmatprep.subr.mxu0 0.0
      %4607 = vmatpush1.msra.mxu0 0.0
      %4608 = vmatprep.subr.mxu0 0.0
      %4609 = vmatpush1.msra.mxu0 0.0
      %4610 = vmatprep.subr.mxu0 0.0
      %4611 = vmatpush1.msra.mxu0 0.0
      %4612 = vmatprep.subr.mxu0 0.0
      %4613 = vmatpush1.msra.mxu0 0.0
      %4614 = vmatprep.subr.mxu0 0.0
      %4615 = vmatpush1.msra.mxu0 0.0
      %4616 = vmatprep.subr.mxu0 0.0
      %4617 = vmatpush1.msra.mxu0 0.0
      %4618 = vmatprep.subr.mxu0 0.0
      %4619 = vmatpush1.msra.mxu0 0.0
      %4620 = vmatprep.subr.mxu0 0.0
      %4621 = vmatpush1.msra.mxu0 0.0
      %4622 = vmatprep.subr.mxu0 0.0
      %4623 = vmatpush1.msra.mxu0 0.0
      %4624 = vmatprep.subr.mxu0 0.0
      %4625 = vmatpush1.msra.mxu0 0.0
      %4626 = vmatprep.subr.mxu0 0.0
      %4627 = vmatpush1.msra.mxu0 0.0
      %4628 = vmatprep.subr.mxu0 0.0
      %4629 = vmatpush1.msra.mxu0 0.0
      %4630 = vmatprep.subr.mxu0 0.0
      %4631 = vmatpush1.msra.mxu0 0.0
      %4632 = vmatprep.subr.mxu0 0.0
      %4633 = vmatpush1.msra.mxu0 0.0
      %4634 = vmatprep.subr.mxu0 0.0
      %4635 = vmatpush1.msra.mxu0 0.0
      %4636 = vmatprep.subr.mxu0 0.0
      %4637 = vmatpush1.msra.mxu0 0.0
      %4638 = vmatprep.subr.mxu0 0.0
      %4639 = vmatpush1.msra.mxu0 0.0
      %4640 = vmatprep.subr.mxu0 0.0
      %4641 = vmatpush1.msra.mxu0 0.0
      %4642 = vmatprep.subr.mxu0 0.0
      %4643 = vmatpush1.msra.mxu0 0.0
      %4644 = vmatprep.subr.mxu0 0.0
      %4645 = vmatpush1.msra.mxu0 0.0
      %4646 = vmatprep.subr.mxu0 0.0
      %4647 = vmatpush1.msra.mxu0 0.0
      %4648 = vmatprep.subr.mxu0 0.0
      %4649 = vmatpush1.msra.mxu0 0.0
      %4650 = vmatprep.subr.mxu0 0.0
      %4651 = vmatpush1.msra.mxu0 0.0
      %4652 = vmatprep.subr.mxu0 0.0
      %4653 = vmatpush1.msra.mxu0 0.0
      %4654 = vmatprep.subr.mxu0 0.0
      %4655 = vmatpush1.msra.mxu0 0.0
      %4656 = vmatprep.subr.mxu0 0.0
      %4657 = vmatpush1.msra.mxu0 0.0
      %4658 = vmatprep.subr.mxu0 0.0
      %4659 = vmatpush1.msra.mxu0 0.0
      %4660 = vmatprep.mubr.f32.mxu0 0.0
      %4661 = vmatmul.mubr.f32.gmra.mrb[0].mxu0 %v4523
      %v4662 = vpop.f32.mrb[0].mxu0
      %v4663 = vadd.f32 0.0, %v4662
      %v4664 = vpop.f32.mrb[0].mxu0
      %4665 = vdwg.mxu0
      %v4666 = vadd.f32 %v4504, %v4592
      %v4667 = vadd.f32 %v4505, %v4594
      %v4668 = vadd.f32 %v4506, %v4663
      %4669 = vset.pattern.permute.xlu0 0
      %4670 = vperm.xlu0 %4669, %v3213
      %v4671 = vpop.permute.xlu0 %4670
      %v4673 = vadd.f32 %v4666, %v4671
      %v4674 = vadd.f32 %v4667, %v4671
      %v4675 = vadd.f32 %v4668, %v4671
      %vm4676 = vcmp.ge.f32.partialorder %v4673, 0.0
      %vm4677 = vcmp.ge.f32.partialorder %v4674, 0.0
      %vm4678 = vcmp.ge.f32.partialorder %v4675, 0.0
      %v4679 = vmul.f32 %v4673, 0.02
      %v4680 = vmul.f32 %v4674, 0.02
      %v4681 = vmul.f32 %v4675, 0.02
      %v4682 = vsel %vm4676, %v4673, %v4679
      %v4683 = vsel %vm4677, %v4674, %v4680
      %v4684 = vsel %vm4678, %v4675, %v4681
      %v4685 = vmul.f32 %v4682, %v204
      %v4686 = vmul.f32 %v4683, %v208
      %v4687 = vmul.f32 %v4684, %v212
      %4688 = vst [vmem:[#allocation2 + $0x8] sm:$0xff] %v4685
      %4689 = vst [vmem:[#allocation2 + $0x10] sm:$0xff] %v4686
      %4690 = vst [vmem:[#allocation2 + $0x18] sm:$0xff] %v4687
      %v4691 = vld [vmem:[%s184 + $0x18] sm:$0x1]
      %v4692 = vld [vmem:[#allocation2] sm:$0xff]
      %v4693 = vld [vmem:[#allocation2 + $0x8] sm:$0xff]
      %v4694 = vld [vmem:[#allocation2 + $0x10] sm:$0xff]
      %v4695 = vld [vmem:[#allocation2 + $0x18] sm:$0xff]
      %4697 = vrot.lane.b32.xlu0 %v4691, 119
      %v4698 = vpop.permute.xlu0 %4697
      %4703 = vrot.lane.b32.xlu0 %v4692, 18
      %v4704 = vpop.permute.xlu0 %4703
      %4705 = vrot.lane.b32.xlu0 %v4693, 18
      %v4706 = vpop.permute.xlu0 %4705
      %4707 = vrot.lane.b32.xlu0 %v4694, 18
      %v4708 = vpop.permute.xlu0 %4707
      %4709 = vrot.lane.b32.xlu0 %v4695, 18
      %v4710 = vpop.permute.xlu0 %4709
      %v4711 = vsel %vm236, %v4704, %v4706
      %v4712 = vsel %vm236, %v4706, %v4708
      %v4713 = vsel %vm236, %v4708, %v4710
      %v4717 = vsel %vm1760, %v4698, 0
      %4719 = vmatprep.subr.mxu0 %v4712
      %4720 = vmatpush1.msra.mxu0 %v4711
      %4721 = vmatprep.subr.mxu0 0.0
      %4722 = vmatpush1.msra.mxu0 0.0
      %4723 = vmatprep.subr.mxu0 0.0
      %4724 = vmatpush1.msra.mxu0 0.0
      %4725 = vmatprep.subr.mxu0 0.0
      %4726 = vmatpush1.msra.mxu0 0.0
      %4727 = vmatprep.subr.mxu0 0.0
      %4728 = vmatpush1.msra.mxu0 0.0
      %4729 = vmatprep.subr.mxu0 0.0
      %4730 = vmatpush1.msra.mxu0 0.0
      %4731 = vmatprep.subr.mxu0 0.0
      %4732 = vmatpush1.msra.mxu0 0.0
      %4733 = vmatprep.subr.mxu0 0.0
      %4734 = vmatpush1.msra.mxu0 0.0
      %4735 = vmatprep.subr.mxu0 0.0
      %4736 = vmatpush1.msra.mxu0 0.0
      %4737 = vmatprep.subr.mxu0 0.0
      %4738 = vmatpush1.msra.mxu0 0.0
      %4739 = vmatprep.subr.mxu0 0.0
      %4740 = vmatpush1.msra.mxu0 0.0
      %4741 = vmatprep.subr.mxu0 0.0
      %4742 = vmatpush1.msra.mxu0 0.0
      %4743 = vmatprep.subr.mxu0 0.0
      %4744 = vmatpush1.msra.mxu0 0.0
      %4745 = vmatprep.subr.mxu0 0.0
      %4746 = vmatpush1.msra.mxu0 0.0
      %4747 = vmatprep.subr.mxu0 0.0
      %4748 = vmatpush1.msra.mxu0 0.0
      %4749 = vmatprep.subr.mxu0 0.0
      %4750 = vmatpush1.msra.mxu0 0.0
      %4751 = vmatprep.subr.mxu0 0.0
      %4752 = vmatpush1.msra.mxu0 0.0
      %4753 = vmatprep.subr.mxu0 0.0
      %4754 = vmatpush1.msra.mxu0 0.0
      %4755 = vmatprep.subr.mxu0 0.0
      %4756 = vmatpush1.msra.mxu0 0.0
      %4757 = vmatprep.subr.mxu0 0.0
      %4758 = vmatpush1.msra.mxu0 0.0
      %4759 = vmatprep.subr.mxu0 0.0
      %4760 = vmatpush1.msra.mxu0 0.0
      %4761 = vmatprep.subr.mxu0 0.0
      %4762 = vmatpush1.msra.mxu0 0.0
      %4763 = vmatprep.subr.mxu0 0.0
      %4764 = vmatpush1.msra.mxu0 0.0
      %4765 = vmatprep.subr.mxu0 0.0
      %4766 = vmatpush1.msra.mxu0 0.0
      %4767 = vmatprep.subr.mxu0 0.0
      %4768 = vmatpush1.msra.mxu0 0.0
      %4769 = vmatprep.subr.mxu0 0.0
      %4770 = vmatpush1.msra.mxu0 0.0
      %4771 = vmatprep.subr.mxu0 0.0
      %4772 = vmatpush1.msra.mxu0 0.0
      %4773 = vmatprep.subr.mxu0 0.0
      %4774 = vmatpush1.msra.mxu0 0.0
      %4775 = vmatprep.subr.mxu0 0.0
      %4776 = vmatpush1.msra.mxu0 0.0
      %4777 = vmatprep.subr.mxu0 0.0
      %4778 = vmatpush1.msra.mxu0 0.0
      %4779 = vmatprep.subr.mxu0 0.0
      %4780 = vmatpush1.msra.mxu0 0.0
      %4781 = vmatprep.subr.mxu0 0.0
      %4782 = vmatpush1.msra.mxu0 0.0
      %4783 = vmatprep.mubr.f32.mxu0 0.0
      %4784 = vmatmul.mubr.f32.gmra.mrb[0].mxu0 %v4717
      %v4785 = vpop.f32.mrb[0].mxu0
      %v4786 = vadd.f32 0.0, %v4785
      %v4787 = vpop.f32.mrb[0].mxu0
      %v4788 = vadd.f32 0.0, %v4787
      %4789 = vdwg.mxu0
      %4790 = vmatprep.subr.mxu0 0.0
      %4791 = vmatpush1.msra.mxu0 %v4713
      %4792 = vmatprep.subr.mxu0 0.0
      %4793 = vmatpush1.msra.mxu0 0.0
      %4794 = vmatprep.subr.mxu0 0.0
      %4795 = vmatpush1.msra.mxu0 0.0
      %4796 = vmatprep.subr.mxu0 0.0
      %4797 = vmatpush1.msra.mxu0 0.0
      %4798 = vmatprep.subr.mxu0 0.0
      %4799 = vmatpush1.msra.mxu0 0.0
      %4800 = vmatprep.subr.mxu0 0.0
      %4801 = vmatpush1.msra.mxu0 0.0
      %4802 = vmatprep.subr.mxu0 0.0
      %4803 = vmatpush1.msra.mxu0 0.0
      %4804 = vmatprep.subr.mxu0 0.0
      %4805 = vmatpush1.msra.mxu0 0.0
      %4806 = vmatprep.subr.mxu0 0.0
      %4807 = vmatpush1.msra.mxu0 0.0
      %4808 = vmatprep.subr.mxu0 0.0
      %4809 = vmatpush1.msra.mxu0 0.0
      %4810 = vmatprep.subr.mxu0 0.0
      %4811 = vmatpush1.msra.mxu0 0.0
      %4812 = vmatprep.subr.mxu0 0.0
      %4813 = vmatpush1.msra.mxu0 0.0
      %4814 = vmatprep.subr.mxu0 0.0
      %4815 = vmatpush1.msra.mxu0 0.0
      %4816 = vmatprep.subr.mxu0 0.0
      %4817 = vmatpush1.msra.mxu0 0.0
      %4818 = vmatprep.subr.mxu0 0.0
      %4819 = vmatpush1.msra.mxu0 0.0
      %4820 = vmatprep.subr.mxu0 0.0
      %4821 = vmatpush1.msra.mxu0 0.0
      %4822 = vmatprep.subr.mxu0 0.0
      %4823 = vmatpush1.msra.mxu0 0.0
      %4824 = vmatprep.subr.mxu0 0.0
      %4825 = vmatpush1.msra.mxu0 0.0
      %4826 = vmatprep.subr.mxu0 0.0
      %4827 = vmatpush1.msra.mxu0 0.0
      %4828 = vmatprep.subr.mxu0 0.0
      %4829 = vmatpush1.msra.mxu0 0.0
      %4830 = vmatprep.subr.mxu0 0.0
      %4831 = vmatpush1.msra.mxu0 0.0
      %4832 = vmatprep.subr.mxu0 0.0
      %4833 = vmatpush1.msra.mxu0 0.0
      %4834 = vmatprep.subr.mxu0 0.0
      %4835 = vmatpush1.msra.mxu0 0.0
      %4836 = vmatprep.subr.mxu0 0.0
      %4837 = vmatpush1.msra.mxu0 0.0
      %4838 = vmatprep.subr.mxu0 0.0
      %4839 = vmatpush1.msra.mxu0 0.0
      %4840 = vmatprep.subr.mxu0 0.0
      %4841 = vmatpush1.msra.mxu0 0.0
      %4842 = vmatprep.subr.mxu0 0.0
      %4843 = vmatpush1.msra.mxu0 0.0
      %4844 = vmatprep.subr.mxu0 0.0
      %4845 = vmatpush1.msra.mxu0 0.0
      %4846 = vmatprep.subr.mxu0 0.0
      %4847 = vmatpush1.msra.mxu0 0.0
      %4848 = vmatprep.subr.mxu0 0.0
      %4849 = vmatpush1.msra.mxu0 0.0
      %4850 = vmatprep.subr.mxu0 0.0
      %4851 = vmatpush1.msra.mxu0 0.0
      %4852 = vmatprep.subr.mxu0 0.0
      %4853 = vmatpush1.msra.mxu0 0.0
      %4854 = vmatprep.mubr.f32.mxu0 0.0
      %4855 = vmatmul.mubr.f32.gmra.mrb[0].mxu0 %v4717
      %v4856 = vpop.f32.mrb[0].mxu0
      %v4857 = vadd.f32 0.0, %v4856
      %v4858 = vpop.f32.mrb[0].mxu0
      %4859 = vdwg.mxu0
      %4860 = vrot.lane.b32.xlu0 %v4691, 127
      %v4861 = vpop.permute.xlu0 %4860
      %4862 = vrot.lane.b32.xlu0 %v4692, 19
      %v4863 = vpop.permute.xlu0 %4862
      %4864 = vrot.lane.b32.xlu0 %v4693, 19
      %v4865 = vpop.permute.xlu0 %4864
      %4866 = vrot.lane.b32.xlu0 %v4694, 19
      %v4867 = vpop.permute.xlu0 %4866
      %4868 = vrot.lane.b32.xlu0 %v4695, 19
      %v4869 = vpop.permute.xlu0 %4868
      %v4870 = vsel %vm401, %v4863, %v4865
      %v4871 = vsel %vm401, %v4865, %v4867
      %v4872 = vsel %vm401, %v4867, %v4869
      %v4876 = vsel %vm1760, %v4861, 0
      %4878 = vmatprep.subr.mxu0 %v4871
      %4879 = vmatpush1.msra.mxu0 %v4870
      %4880 = vmatprep.subr.mxu0 0.0
      %4881 = vmatpush1.msra.mxu0 0.0
      %4882 = vmatprep.subr.mxu0 0.0
      %4883 = vmatpush1.msra.mxu0 0.0
      %4884 = vmatprep.subr.mxu0 0.0
      %4885 = vmatpush1.msra.mxu0 0.0
      %4886 = vmatprep.subr.mxu0 0.0
      %4887 = vmatpush1.msra.mxu0 0.0
      %4888 = vmatprep.subr.mxu0 0.0
      %4889 = vmatpush1.msra.mxu0 0.0
      %4890 = vmatprep.subr.mxu0 0.0
      %4891 = vmatpush1.msra.mxu0 0.0
      %4892 = vmatprep.subr.mxu0 0.0
      %4893 = vmatpush1.msra.mxu0 0.0
      %4894 = vmatprep.subr.mxu0 0.0
      %4895 = vmatpush1.msra.mxu0 0.0
      %4896 = vmatprep.subr.mxu0 0.0
      %4897 = vmatpush1.msra.mxu0 0.0
      %4898 = vmatprep.subr.mxu0 0.0
      %4899 = vmatpush1.msra.mxu0 0.0
      %4900 = vmatprep.subr.mxu0 0.0
      %4901 = vmatpush1.msra.mxu0 0.0
      %4902 = vmatprep.subr.mxu0 0.0
      %4903 = vmatpush1.msra.mxu0 0.0
      %4904 = vmatprep.subr.mxu0 0.0
      %4905 = vmatpush1.msra.mxu0 0.0
      %4906 = vmatprep.subr.mxu0 0.0
      %4907 = vmatpush1.msra.mxu0 0.0
      %4908 = vmatprep.subr.mxu0 0.0
      %4909 = vmatpush1.msra.mxu0 0.0
      %4910 = vmatprep.subr.mxu0 0.0
      %4911 = vmatpush1.msra.mxu0 0.0
      %4912 = vmatprep.subr.mxu0 0.0
      %4913 = vmatpush1.msra.mxu0 0.0
      %4914 = vmatprep.subr.mxu0 0.0
      %4915 = vmatpush1.msra.mxu0 0.0
      %4916 = vmatprep.subr.mxu0 0.0
      %4917 = vmatpush1.msra.mxu0 0.0
      %4918 = vmatprep.subr.mxu0 0.0
      %4919 = vmatpush1.msra.mxu0 0.0
      %4920 = vmatprep.subr.mxu0 0.0
      %4921 = vmatpush1.msra.mxu0 0.0
      %4922 = vmatprep.subr.mxu0 0.0
      %4923 = vmatpush1.msra.mxu0 0.0
      %4924 = vmatprep.subr.mxu0 0.0
      %4925 = vmatpush1.msra.mxu0 0.0
      %4926 = vmatprep.subr.mxu0 0.0
      %4927 = vmatpush1.msra.mxu0 0.0
      %4928 = vmatprep.subr.mxu0 0.0
      %4929 = vmatpush1.msra.mxu0 0.0
      %4930 = vmatprep.subr.mxu0 0.0
      %4931 = vmatpush1.msra.mxu0 0.0
      %4932 = vmatprep.subr.mxu0 0.0
      %4933 = vmatpush1.msra.mxu0 0.0
      %4934 = vmatprep.subr.mxu0 0.0
      %4935 = vmatpush1.msra.mxu0 0.0
      %4936 = vmatprep.subr.mxu0 0.0
      %4937 = vmatpush1.msra.mxu0 0.0
      %4938 = vmatprep.subr.mxu0 0.0
      %4939 = vmatpush1.msra.mxu0 0.0
      %4940 = vmatprep.subr.mxu0 0.0
      %4941 = vmatpush1.msra.mxu0 0.0
      %4942 = vmatprep.mubr.f32.mxu0 0.0
      %4943 = vmatmul.mubr.f32.gmra.mrb[0].mxu0 %v4876
      %v4944 = vpop.f32.mrb[0].mxu0
      %v4945 = vadd.f32 %v4786, %v4944
      %v4946 = vpop.f32.mrb[0].mxu0
      %v4947 = vadd.f32 %v4788, %v4946
      %4948 = vdwg.mxu0
      %4949 = vmatprep.subr.mxu0 0.0
      %4950 = vmatpush1.msra.mxu0 %v4872
      %4951 = vmatprep.subr.mxu0 0.0
      %4952 = vmatpush1.msra.mxu0 0.0
      %4953 = vmatprep.subr.mxu0 0.0
      %4954 = vmatpush1.msra.mxu0 0.0
      %4955 = vmatprep.subr.mxu0 0.0
      %4956 = vmatpush1.msra.mxu0 0.0
      %4957 = vmatprep.subr.mxu0 0.0
      %4958 = vmatpush1.msra.mxu0 0.0
      %4959 = vmatprep.subr.mxu0 0.0
      %4960 = vmatpush1.msra.mxu0 0.0
      %4961 = vmatprep.subr.mxu0 0.0
      %4962 = vmatpush1.msra.mxu0 0.0
      %4963 = vmatprep.subr.mxu0 0.0
      %4964 = vmatpush1.msra.mxu0 0.0
      %4965 = vmatprep.subr.mxu0 0.0
      %4966 = vmatpush1.msra.mxu0 0.0
      %4967 = vmatprep.subr.mxu0 0.0
      %4968 = vmatpush1.msra.mxu0 0.0
      %4969 = vmatprep.subr.mxu0 0.0
      %4970 = vmatpush1.msra.mxu0 0.0
      %4971 = vmatprep.subr.mxu0 0.0
      %4972 = vmatpush1.msra.mxu0 0.0
      %4973 = vmatprep.subr.mxu0 0.0
      %4974 = vmatpush1.msra.mxu0 0.0
      %4975 = vmatprep.subr.mxu0 0.0
      %4976 = vmatpush1.msra.mxu0 0.0
      %4977 = vmatprep.subr.mxu0 0.0
      %4978 = vmatpush1.msra.mxu0 0.0
      %4979 = vmatprep.subr.mxu0 0.0
      %4980 = vmatpush1.msra.mxu0 0.0
      %4981 = vmatprep.subr.mxu0 0.0
      %4982 = vmatpush1.msra.mxu0 0.0
      %4983 = vmatprep.subr.mxu0 0.0
      %4984 = vmatpush1.msra.mxu0 0.0
      %4985 = vmatprep.subr.mxu0 0.0
      %4986 = vmatpush1.msra.mxu0 0.0
      %4987 = vmatprep.subr.mxu0 0.0
      %4988 = vmatpush1.msra.mxu0 0.0
      %4989 = vmatprep.subr.mxu0 0.0
      %4990 = vmatpush1.msra.mxu0 0.0
      %4991 = vmatprep.subr.mxu0 0.0
      %4992 = vmatpush1.msra.mxu0 0.0
      %4993 = vmatprep.subr.mxu0 0.0
      %4994 = vmatpush1.msra.mxu0 0.0
      %4995 = vmatprep.subr.mxu0 0.0
      %4996 = vmatpush1.msra.mxu0 0.0
      %4997 = vmatprep.subr.mxu0 0.0
      %4998 = vmatpush1.msra.mxu0 0.0
      %4999 = vmatprep.subr.mxu0 0.0
      %5000 = vmatpush1.msra.mxu0 0.0
      %5001 = vmatprep.subr.mxu0 0.0
      %5002 = vmatpush1.msra.mxu0 0.0
      %5003 = vmatprep.subr.mxu0 0.0
      %5004 = vmatpush1.msra.mxu0 0.0
      %5005 = vmatprep.subr.mxu0 0.0
      %5006 = vmatpush1.msra.mxu0 0.0
      %5007 = vmatprep.subr.mxu0 0.0
      %5008 = vmatpush1.msra.mxu0 0.0
      %5009 = vmatprep.subr.mxu0 0.0
      %5010 = vmatpush1.msra.mxu0 0.0
      %5011 = vmatprep.subr.mxu0 0.0
      %5012 = vmatpush1.msra.mxu0 0.0
      %5013 = vmatprep.mubr.f32.mxu0 0.0
      %5014 = vmatmul.mubr.f32.gmra.mrb[0].mxu0 %v4876
      %v5015 = vpop.f32.mrb[0].mxu0
      %v5016 = vadd.f32 %v4857, %v5015
      %v5017 = vpop.f32.mrb[0].mxu0
      %5018 = vdwg.mxu0
      %5019 = vrot.lane.b32.xlu0 %v4691, 111
      %v5020 = vpop.permute.xlu0 %5019
      %5021 = vrot.lane.b32.xlu0 %v4692, 17
      %v5022 = vpop.permute.xlu0 %5021
      %5023 = vrot.lane.b32.xlu0 %v4693, 17
      %v5024 = vpop.permute.xlu0 %5023
      %5025 = vrot.lane.b32.xlu0 %v4694, 17
      %v5026 = vpop.permute.xlu0 %5025
      %5027 = vrot.lane.b32.xlu0 %v4695, 17
      %v5028 = vpop.permute.xlu0 %5027
      %v5029 = vsel %vm564, %v5022, %v5024
      %v5030 = vsel %vm564, %v5024, %v5026
      %v5031 = vsel %vm564, %v5026, %v5028
      %v5035 = vsel %vm1760, %v5020, 0
      %5037 = vmatprep.subr.mxu0 %v5030
      %5038 = vmatpush1.msra.mxu0 %v5029
      %5039 = vmatprep.subr.mxu0 0.0
      %5040 = vmatpush1.msra.mxu0 0.0
      %5041 = vmatprep.subr.mxu0 0.0
      %5042 = vmatpush1.msra.mxu0 0.0
      %5043 = vmatprep.subr.mxu0 0.0
      %5044 = vmatpush1.msra.mxu0 0.0
      %5045 = vmatprep.subr.mxu0 0.0
      %5046 = vmatpush1.msra.mxu0 0.0
      %5047 = vmatprep.subr.mxu0 0.0
      %5048 = vmatpush1.msra.mxu0 0.0
      %5049 = vmatprep.subr.mxu0 0.0
      %5050 = vmatpush1.msra.mxu0 0.0
      %5051 = vmatprep.subr.mxu0 0.0
      %5052 = vmatpush1.msra.mxu0 0.0
      %5053 = vmatprep.subr.mxu0 0.0
      %5054 = vmatpush1.msra.mxu0 0.0
      %5055 = vmatprep.subr.mxu0 0.0
      %5056 = vmatpush1.msra.mxu0 0.0
      %5057 = vmatprep.subr.mxu0 0.0
      %5058 = vmatpush1.msra.mxu0 0.0
      %5059 = vmatprep.subr.mxu0 0.0
      %5060 = vmatpush1.msra.mxu0 0.0
      %5061 = vmatprep.subr.mxu0 0.0
      %5062 = vmatpush1.msra.mxu0 0.0
      %5063 = vmatprep.subr.mxu0 0.0
      %5064 = vmatpush1.msra.mxu0 0.0
      %5065 = vmatprep.subr.mxu0 0.0
      %5066 = vmatpush1.msra.mxu0 0.0
      %5067 = vmatprep.subr.mxu0 0.0
      %5068 = vmatpush1.msra.mxu0 0.0
      %5069 = vmatprep.subr.mxu0 0.0
      %5070 = vmatpush1.msra.mxu0 0.0
      %5071 = vmatprep.subr.mxu0 0.0
      %5072 = vmatpush1.msra.mxu0 0.0
      %5073 = vmatprep.subr.mxu0 0.0
      %5074 = vmatpush1.msra.mxu0 0.0
      %5075 = vmatprep.subr.mxu0 0.0
      %5076 = vmatpush1.msra.mxu0 0.0
      %5077 = vmatprep.subr.mxu0 0.0
      %5078 = vmatpush1.msra.mxu0 0.0
      %5079 = vmatprep.subr.mxu0 0.0
      %5080 = vmatpush1.msra.mxu0 0.0
      %5081 = vmatprep.subr.mxu0 0.0
      %5082 = vmatpush1.msra.mxu0 0.0
      %5083 = vmatprep.subr.mxu0 0.0
      %5084 = vmatpush1.msra.mxu0 0.0
      %5085 = vmatprep.subr.mxu0 0.0
      %5086 = vmatpush1.msra.mxu0 0.0
      %5087 = vmatprep.subr.mxu0 0.0
      %5088 = vmatpush1.msra.mxu0 0.0
      %5089 = vmatprep.subr.mxu0 0.0
      %5090 = vmatpush1.msra.mxu0 0.0
      %5091 = vmatprep.subr.mxu0 0.0
      %5092 = vmatpush1.msra.mxu0 0.0
      %5093 = vmatprep.subr.mxu0 0.0
      %5094 = vmatpush1.msra.mxu0 0.0
      %5095 = vmatprep.subr.mxu0 0.0
      %5096 = vmatpush1.msra.mxu0 0.0
      %5097 = vmatprep.subr.mxu0 0.0
      %5098 = vmatpush1.msra.mxu0 0.0
      %5099 = vmatprep.subr.mxu0 0.0
      %5100 = vmatpush1.msra.mxu0 0.0
      %5101 = vmatprep.mubr.f32.mxu0 0.0
      %5102 = vmatmul.mubr.f32.gmra.mrb[0].mxu0 %v5035
      %v5103 = vpop.f32.mrb[0].mxu0
      %v5104 = vadd.f32 0.0, %v5103
      %v5105 = vpop.f32.mrb[0].mxu0
      %v5106 = vadd.f32 0.0, %v5105
      %5107 = vdwg.mxu0
      %5108 = vmatprep.subr.mxu0 0.0
      %5109 = vmatpush1.msra.mxu0 %v5031
      %5110 = vmatprep.subr.mxu0 0.0
      %5111 = vmatpush1.msra.mxu0 0.0
      %5112 = vmatprep.subr.mxu0 0.0
      %5113 = vmatpush1.msra.mxu0 0.0
      %5114 = vmatprep.subr.mxu0 0.0
      %5115 = vmatpush1.msra.mxu0 0.0
      %5116 = vmatprep.subr.mxu0 0.0
      %5117 = vmatpush1.msra.mxu0 0.0
      %5118 = vmatprep.subr.mxu0 0.0
      %5119 = vmatpush1.msra.mxu0 0.0
      %5120 = vmatprep.subr.mxu0 0.0
      %5121 = vmatpush1.msra.mxu0 0.0
      %5122 = vmatprep.subr.mxu0 0.0
      %5123 = vmatpush1.msra.mxu0 0.0
      %5124 = vmatprep.subr.mxu0 0.0
      %5125 = vmatpush1.msra.mxu0 0.0
      %5126 = vmatprep.subr.mxu0 0.0
      %5127 = vmatpush1.msra.mxu0 0.0
      %5128 = vmatprep.subr.mxu0 0.0
      %5129 = vmatpush1.msra.mxu0 0.0
      %5130 = vmatprep.subr.mxu0 0.0
      %5131 = vmatpush1.msra.mxu0 0.0
      %5132 = vmatprep.subr.mxu0 0.0
      %5133 = vmatpush1.msra.mxu0 0.0
      %5134 = vmatprep.subr.mxu0 0.0
      %5135 = vmatpush1.msra.mxu0 0.0
      %5136 = vmatprep.subr.mxu0 0.0
      %5137 = vmatpush1.msra.mxu0 0.0
      %5138 = vmatprep.subr.mxu0 0.0
      %5139 = vmatpush1.msra.mxu0 0.0
      %5140 = vmatprep.subr.mxu0 0.0
      %5141 = vmatpush1.msra.mxu0 0.0
      %5142 = vmatprep.subr.mxu0 0.0
      %5143 = vmatpush1.msra.mxu0 0.0
      %5144 = vmatprep.subr.mxu0 0.0
      %5145 = vmatpush1.msra.mxu0 0.0
      %5146 = vmatprep.subr.mxu0 0.0
      %5147 = vmatpush1.msra.mxu0 0.0
      %5148 = vmatprep.subr.mxu0 0.0
      %5149 = vmatpush1.msra.mxu0 0.0
      %5150 = vmatprep.subr.mxu0 0.0
      %5151 = vmatpush1.msra.mxu0 0.0
      %5152 = vmatprep.subr.mxu0 0.0
      %5153 = vmatpush1.msra.mxu0 0.0
      %5154 = vmatprep.subr.mxu0 0.0
      %5155 = vmatpush1.msra.mxu0 0.0
      %5156 = vmatprep.subr.mxu0 0.0
      %5157 = vmatpush1.msra.mxu0 0.0
      %5158 = vmatprep.subr.mxu0 0.0
      %5159 = vmatpush1.msra.mxu0 0.0
      %5160 = vmatprep.subr.mxu0 0.0
      %5161 = vmatpush1.msra.mxu0 0.0
      %5162 = vmatprep.subr.mxu0 0.0
      %5163 = vmatpush1.msra.mxu0 0.0
      %5164 = vmatprep.subr.mxu0 0.0
      %5165 = vmatpush1.msra.mxu0 0.0
      %5166 = vmatprep.subr.mxu0 0.0
      %5167 = vmatpush1.msra.mxu0 0.0
      %5168 = vmatprep.subr.mxu0 0.0
      %5169 = vmatpush1.msra.mxu0 0.0
      %5170 = vmatprep.subr.mxu0 0.0
      %5171 = vmatpush1.msra.mxu0 0.0
      %5172 = vmatprep.mubr.f32.mxu0 0.0
      %5173 = vmatmul.mubr.f32.gmra.mrb[0].mxu0 %v5035
      %v5174 = vpop.f32.mrb[0].mxu0
      %v5175 = vadd.f32 0.0, %v5174
      %v5176 = vpop.f32.mrb[0].mxu0
      %5177 = vdwg.mxu0
      %v5178 = vadd.f32 %v4945, %v5104
      %v5179 = vadd.f32 %v4947, %v5106
      %v5180 = vadd.f32 %v5016, %v5175
      %5181 = vrot.lane.b32.xlu0 %v4691, 103
      %v5182 = vpop.permute.xlu0 %5181
      %5183 = vrot.lane.b32.xlu0 %v4692, 1
      %v5184 = vpop.permute.xlu0 %5183
      %5185 = vrot.lane.b32.xlu0 %v4693, 1
      %v5186 = vpop.permute.xlu0 %5185
      %5187 = vrot.lane.b32.xlu0 %v4694, 1
      %v5188 = vpop.permute.xlu0 %5187
      %5189 = vrot.lane.b32.xlu0 %v4695, 1
      %v5190 = vpop.permute.xlu0 %5189
      %v5191 = vsel %vm730, %v5184, %v5186
      %v5192 = vsel %vm730, %v5186, %v5188
      %v5193 = vsel %vm730, %v5188, %v5190
      %v5197 = vsel %vm1760, %v5182, 0
      %5199 = vmatprep.subr.mxu0 %v5192
      %5200 = vmatpush1.msra.mxu0 %v5191
      %5201 = vmatprep.subr.mxu0 0.0
      %5202 = vmatpush1.msra.mxu0 0.0
      %5203 = vmatprep.subr.mxu0 0.0
      %5204 = vmatpush1.msra.mxu0 0.0
      %5205 = vmatprep.subr.mxu0 0.0
      %5206 = vmatpush1.msra.mxu0 0.0
      %5207 = vmatprep.subr.mxu0 0.0
      %5208 = vmatpush1.msra.mxu0 0.0
      %5209 = vmatprep.subr.mxu0 0.0
      %5210 = vmatpush1.msra.mxu0 0.0
      %5211 = vmatprep.subr.mxu0 0.0
      %5212 = vmatpush1.msra.mxu0 0.0
      %5213 = vmatprep.subr.mxu0 0.0
      %5214 = vmatpush1.msra.mxu0 0.0
      %5215 = vmatprep.subr.mxu0 0.0
      %5216 = vmatpush1.msra.mxu0 0.0
      %5217 = vmatprep.subr.mxu0 0.0
      %5218 = vmatpush1.msra.mxu0 0.0
      %5219 = vmatprep.subr.mxu0 0.0
      %5220 = vmatpush1.msra.mxu0 0.0
      %5221 = vmatprep.subr.mxu0 0.0
      %5222 = vmatpush1.msra.mxu0 0.0
      %5223 = vmatprep.subr.mxu0 0.0
      %5224 = vmatpush1.msra.mxu0 0.0
      %5225 = vmatprep.subr.mxu0 0.0
      %5226 = vmatpush1.msra.mxu0 0.0
      %5227 = vmatprep.subr.mxu0 0.0
      %5228 = vmatpush1.msra.mxu0 0.0
      %5229 = vmatprep.subr.mxu0 0.0
      %5230 = vmatpush1.msra.mxu0 0.0
      %5231 = vmatprep.subr.mxu0 0.0
      %5232 = vmatpush1.msra.mxu0 0.0
      %5233 = vmatprep.subr.mxu0 0.0
      %5234 = vmatpush1.msra.mxu0 0.0
      %5235 = vmatprep.subr.mxu0 0.0
      %5236 = vmatpush1.msra.mxu0 0.0
      %5237 = vmatprep.subr.mxu0 0.0
      %5238 = vmatpush1.msra.mxu0 0.0
      %5239 = vmatprep.subr.mxu0 0.0
      %5240 = vmatpush1.msra.mxu0 0.0
      %5241 = vmatprep.subr.mxu0 0.0
      %5242 = vmatpush1.msra.mxu0 0.0
      %5243 = vmatprep.subr.mxu0 0.0
      %5244 = vmatpush1.msra.mxu0 0.0
      %5245 = vmatprep.subr.mxu0 0.0
      %5246 = vmatpush1.msra.mxu0 0.0
      %5247 = vmatprep.subr.mxu0 0.0
      %5248 = vmatpush1.msra.mxu0 0.0
      %5249 = vmatprep.subr.mxu0 0.0
      %5250 = vmatpush1.msra.mxu0 0.0
      %5251 = vmatprep.subr.mxu0 0.0
      %5252 = vmatpush1.msra.mxu0 0.0
      %5253 = vmatprep.subr.mxu0 0.0
      %5254 = vmatpush1.msra.mxu0 0.0
      %5255 = vmatprep.subr.mxu0 0.0
      %5256 = vmatpush1.msra.mxu0 0.0
      %5257 = vmatprep.subr.mxu0 0.0
      %5258 = vmatpush1.msra.mxu0 0.0
      %5259 = vmatprep.subr.mxu0 0.0
      %5260 = vmatpush1.msra.mxu0 0.0
      %5261 = vmatprep.subr.mxu0 0.0
      %5262 = vmatpush1.msra.mxu0 0.0
      %5263 = vmatprep.mubr.f32.mxu0 0.0
      %5264 = vmatmul.mubr.f32.gmra.mrb[0].mxu0 %v5197
      %v5265 = vpop.f32.mrb[0].mxu0
      %v5266 = vadd.f32 0.0, %v5265
      %v5267 = vpop.f32.mrb[0].mxu0
      %v5268 = vadd.f32 0.0, %v5267
      %5269 = vdwg.mxu0
      %5270 = vmatprep.subr.mxu0 0.0
      %5271 = vmatpush1.msra.mxu0 %v5193
      %5272 = vmatprep.subr.mxu0 0.0
      %5273 = vmatpush1.msra.mxu0 0.0
      %5274 = vmatprep.subr.mxu0 0.0
      %5275 = vmatpush1.msra.mxu0 0.0
      %5276 = vmatprep.subr.mxu0 0.0
      %5277 = vmatpush1.msra.mxu0 0.0
      %5278 = vmatprep.subr.mxu0 0.0
      %5279 = vmatpush1.msra.mxu0 0.0
      %5280 = vmatprep.subr.mxu0 0.0
      %5281 = vmatpush1.msra.mxu0 0.0
      %5282 = vmatprep.subr.mxu0 0.0
      %5283 = vmatpush1.msra.mxu0 0.0
      %5284 = vmatprep.subr.mxu0 0.0
      %5285 = vmatpush1.msra.mxu0 0.0
      %5286 = vmatprep.subr.mxu0 0.0
      %5287 = vmatpush1.msra.mxu0 0.0
      %5288 = vmatprep.subr.mxu0 0.0
      %5289 = vmatpush1.msra.mxu0 0.0
      %5290 = vmatprep.subr.mxu0 0.0
      %5291 = vmatpush1.msra.mxu0 0.0
      %5292 = vmatprep.subr.mxu0 0.0
      %5293 = vmatpush1.msra.mxu0 0.0
      %5294 = vmatprep.subr.mxu0 0.0
      %5295 = vmatpush1.msra.mxu0 0.0
      %5296 = vmatprep.subr.mxu0 0.0
      %5297 = vmatpush1.msra.mxu0 0.0
      %5298 = vmatprep.subr.mxu0 0.0
      %5299 = vmatpush1.msra.mxu0 0.0
      %5300 = vmatprep.subr.mxu0 0.0
      %5301 = vmatpush1.msra.mxu0 0.0
      %5302 = vmatprep.subr.mxu0 0.0
      %5303 = vmatpush1.msra.mxu0 0.0
      %5304 = vmatprep.subr.mxu0 0.0
      %5305 = vmatpush1.msra.mxu0 0.0
      %5306 = vmatprep.subr.mxu0 0.0
      %5307 = vmatpush1.msra.mxu0 0.0
      %5308 = vmatprep.subr.mxu0 0.0
      %5309 = vmatpush1.msra.mxu0 0.0
      %5310 = vmatprep.subr.mxu0 0.0
      %5311 = vmatpush1.msra.mxu0 0.0
      %5312 = vmatprep.subr.mxu0 0.0
      %5313 = vmatpush1.msra.mxu0 0.0
      %5314 = vmatprep.subr.mxu0 0.0
      %5315 = vmatpush1.msra.mxu0 0.0
      %5316 = vmatprep.subr.mxu0 0.0
      %5317 = vmatpush1.msra.mxu0 0.0
      %5318 = vmatprep.subr.mxu0 0.0
      %5319 = vmatpush1.msra.mxu0 0.0
      %5320 = vmatprep.subr.mxu0 0.0
      %5321 = vmatpush1.msra.mxu0 0.0
      %5322 = vmatprep.subr.mxu0 0.0
      %5323 = vmatpush1.msra.mxu0 0.0
      %5324 = vmatprep.subr.mxu0 0.0
      %5325 = vmatpush1.msra.mxu0 0.0
      %5326 = vmatprep.subr.mxu0 0.0
      %5327 = vmatpush1.msra.mxu0 0.0
      %5328 = vmatprep.subr.mxu0 0.0
      %5329 = vmatpush1.msra.mxu0 0.0
      %5330 = vmatprep.subr.mxu0 0.0
      %5331 = vmatpush1.msra.mxu0 0.0
      %5332 = vmatprep.subr.mxu0 0.0
      %5333 = vmatpush1.msra.mxu0 0.0
      %5334 = vmatprep.mubr.f32.mxu0 0.0
      %5335 = vmatmul.mubr.f32.gmra.mrb[0].mxu0 %v5197
      %v5336 = vpop.f32.mrb[0].mxu0
      %v5337 = vadd.f32 0.0, %v5336
      %v5338 = vpop.f32.mrb[0].mxu0
      %5339 = vdwg.mxu0
      %v5340 = vadd.f32 %v5178, %v5266
      %v5341 = vadd.f32 %v5179, %v5268
      %v5342 = vadd.f32 %v5180, %v5337
      %5343 = vrot.lane.b32.xlu0 %v4691, 95
      %v5344 = vpop.permute.xlu0 %5343
      %v5345 = vsel %vm1760, %v5344, 0
      %5347 = vmatprep.subr.mxu0 %v4694
      %5348 = vmatpush1.msra.mxu0 %v4693
      %5349 = vmatprep.subr.mxu0 0.0
      %5350 = vmatpush1.msra.mxu0 0.0
      %5351 = vmatprep.subr.mxu0 0.0
      %5352 = vmatpush1.msra.mxu0 0.0
      %5353 = vmatprep.subr.mxu0 0.0
      %5354 = vmatpush1.msra.mxu0 0.0
      %5355 = vmatprep.subr.mxu0 0.0
      %5356 = vmatpush1.msra.mxu0 0.0
      %5357 = vmatprep.subr.mxu0 0.0
      %5358 = vmatpush1.msra.mxu0 0.0
      %5359 = vmatprep.subr.mxu0 0.0
      %5360 = vmatpush1.msra.mxu0 0.0
      %5361 = vmatprep.subr.mxu0 0.0
      %5362 = vmatpush1.msra.mxu0 0.0
      %5363 = vmatprep.subr.mxu0 0.0
      %5364 = vmatpush1.msra.mxu0 0.0
      %5365 = vmatprep.subr.mxu0 0.0
      %5366 = vmatpush1.msra.mxu0 0.0
      %5367 = vmatprep.subr.mxu0 0.0
      %5368 = vmatpush1.msra.mxu0 0.0
      %5369 = vmatprep.subr.mxu0 0.0
      %5370 = vmatpush1.msra.mxu0 0.0
      %5371 = vmatprep.subr.mxu0 0.0
      %5372 = vmatpush1.msra.mxu0 0.0
      %5373 = vmatprep.subr.mxu0 0.0
      %5374 = vmatpush1.msra.mxu0 0.0
      %5375 = vmatprep.subr.mxu0 0.0
      %5376 = vmatpush1.msra.mxu0 0.0
      %5377 = vmatprep.subr.mxu0 0.0
      %5378 = vmatpush1.msra.mxu0 0.0
      %5379 = vmatprep.subr.mxu0 0.0
      %5380 = vmatpush1.msra.mxu0 0.0
      %5381 = vmatprep.subr.mxu0 0.0
      %5382 = vmatpush1.msra.mxu0 0.0
      %5383 = vmatprep.subr.mxu0 0.0
      %5384 = vmatpush1.msra.mxu0 0.0
      %5385 = vmatprep.subr.mxu0 0.0
      %5386 = vmatpush1.msra.mxu0 0.0
      %5387 = vmatprep.subr.mxu0 0.0
      %5388 = vmatpush1.msra.mxu0 0.0
      %5389 = vmatprep.subr.mxu0 0.0
      %5390 = vmatpush1.msra.mxu0 0.0
      %5391 = vmatprep.subr.mxu0 0.0
      %5392 = vmatpush1.msra.mxu0 0.0
      %5393 = vmatprep.subr.mxu0 0.0
      %5394 = vmatpush1.msra.mxu0 0.0
      %5395 = vmatprep.subr.mxu0 0.0
      %5396 = vmatpush1.msra.mxu0 0.0
      %5397 = vmatprep.subr.mxu0 0.0
      %5398 = vmatpush1.msra.mxu0 0.0
      %5399 = vmatprep.subr.mxu0 0.0
      %5400 = vmatpush1.msra.mxu0 0.0
      %5401 = vmatprep.subr.mxu0 0.0
      %5402 = vmatpush1.msra.mxu0 0.0
      %5403 = vmatprep.subr.mxu0 0.0
      %5404 = vmatpush1.msra.mxu0 0.0
      %5405 = vmatprep.subr.mxu0 0.0
      %5406 = vmatpush1.msra.mxu0 0.0
      %5407 = vmatprep.subr.mxu0 0.0
      %5408 = vmatpush1.msra.mxu0 0.0
      %5409 = vmatprep.subr.mxu0 0.0
      %5410 = vmatpush1.msra.mxu0 0.0
      %5411 = vmatprep.mubr.f32.mxu0 0.0
      %5412 = vmatmul.mubr.f32.gmra.mrb[0].mxu0 %v5345
      %v5413 = vpop.f32.mrb[0].mxu0
      %v5414 = vadd.f32 0.0, %v5413
      %v5415 = vpop.f32.mrb[0].mxu0
      %v5416 = vadd.f32 0.0, %v5415
      %5417 = vdwg.mxu0
      %5418 = vmatprep.subr.mxu0 0.0
      %5419 = vmatpush1.msra.mxu0 %v4695
      %5420 = vmatprep.subr.mxu0 0.0
      %5421 = vmatpush1.msra.mxu0 0.0
      %5422 = vmatprep.subr.mxu0 0.0
      %5423 = vmatpush1.msra.mxu0 0.0
      %5424 = vmatprep.subr.mxu0 0.0
      %5425 = vmatpush1.msra.mxu0 0.0
      %5426 = vmatprep.subr.mxu0 0.0
      %5427 = vmatpush1.msra.mxu0 0.0
      %5428 = vmatprep.subr.mxu0 0.0
      %5429 = vmatpush1.msra.mxu0 0.0
      %5430 = vmatprep.subr.mxu0 0.0
      %5431 = vmatpush1.msra.mxu0 0.0
      %5432 = vmatprep.subr.mxu0 0.0
      %5433 = vmatpush1.msra.mxu0 0.0
      %5434 = vmatprep.subr.mxu0 0.0
      %5435 = vmatpush1.msra.mxu0 0.0
      %5436 = vmatprep.subr.mxu0 0.0
      %5437 = vmatpush1.msra.mxu0 0.0
      %5438 = vmatprep.subr.mxu0 0.0
      %5439 = vmatpush1.msra.mxu0 0.0
      %5440 = vmatprep.subr.mxu0 0.0
      %5441 = vmatpush1.msra.mxu0 0.0
      %5442 = vmatprep.subr.mxu0 0.0
      %5443 = vmatpush1.msra.mxu0 0.0
      %5444 = vmatprep.subr.mxu0 0.0
      %5445 = vmatpush1.msra.mxu0 0.0
      %5446 = vmatprep.subr.mxu0 0.0
      %5447 = vmatpush1.msra.mxu0 0.0
      %5448 = vmatprep.subr.mxu0 0.0
      %5449 = vmatpush1.msra.mxu0 0.0
      %5450 = vmatprep.subr.mxu0 0.0
      %5451 = vmatpush1.msra.mxu0 0.0
      %5452 = vmatprep.subr.mxu0 0.0
      %5453 = vmatpush1.msra.mxu0 0.0
      %5454 = vmatprep.subr.mxu0 0.0
      %5455 = vmatpush1.msra.mxu0 0.0
      %5456 = vmatprep.subr.mxu0 0.0
      %5457 = vmatpush1.msra.mxu0 0.0
      %5458 = vmatprep.subr.mxu0 0.0
      %5459 = vmatpush1.msra.mxu0 0.0
      %5460 = vmatprep.subr.mxu0 0.0
      %5461 = vmatpush1.msra.mxu0 0.0
      %5462 = vmatprep.subr.mxu0 0.0
      %5463 = vmatpush1.msra.mxu0 0.0
      %5464 = vmatprep.subr.mxu0 0.0
      %5465 = vmatpush1.msra.mxu0 0.0
      %5466 = vmatprep.subr.mxu0 0.0
      %5467 = vmatpush1.msra.mxu0 0.0
      %5468 = vmatprep.subr.mxu0 0.0
      %5469 = vmatpush1.msra.mxu0 0.0
      %5470 = vmatprep.subr.mxu0 0.0
      %5471 = vmatpush1.msra.mxu0 0.0
      %5472 = vmatprep.subr.mxu0 0.0
      %5473 = vmatpush1.msra.mxu0 0.0
      %5474 = vmatprep.subr.mxu0 0.0
      %5475 = vmatpush1.msra.mxu0 0.0
      %5476 = vmatprep.subr.mxu0 0.0
      %5477 = vmatpush1.msra.mxu0 0.0
      %5478 = vmatprep.subr.mxu0 0.0
      %5479 = vmatpush1.msra.mxu0 0.0
      %5480 = vmatprep.subr.mxu0 0.0
      %5481 = vmatpush1.msra.mxu0 0.0
      %5482 = vmatprep.mubr.f32.mxu0 0.0
      %5483 = vmatmul.mubr.f32.gmra.mrb[0].mxu0 %v5345
      %v5484 = vpop.f32.mrb[0].mxu0
      %v5485 = vadd.f32 0.0, %v5484
      %v5486 = vpop.f32.mrb[0].mxu0
      %5487 = vdwg.mxu0
      %v5488 = vadd.f32 %v5340, %v5414
      %v5489 = vadd.f32 %v5341, %v5416
      %v5490 = vadd.f32 %v5342, %v5485
      %v5491 = vld [vmem:[#allocation2 + $0x8] sm:$0xff]
      %v5492 = vld [vmem:[#allocation2 + $0x10] sm:$0xff]
      %v5493 = vld [vmem:[#allocation2 + $0x18] sm:$0xff]
      %v5494 = vld [vmem:[#allocation2 + $0x20] sm:$0xff]
      %5495 = vrot.lane.b32.xlu0 %v4691, 87
      %v5496 = vpop.permute.xlu0 %5495
      %5501 = vrot.lane.b32.xlu0 %v5491, 127
      %v5502 = vpop.permute.xlu0 %5501
      %5503 = vrot.lane.b32.xlu0 %v5492, 127
      %v5504 = vpop.permute.xlu0 %5503
      %5505 = vrot.lane.b32.xlu0 %v5493, 127
      %v5506 = vpop.permute.xlu0 %5505
      %5507 = vrot.lane.b32.xlu0 %v5494, 127
      %v5508 = vpop.permute.xlu0 %5507
      %v5509 = vsel %vm1058, %v5502, %v5504
      %v5510 = vsel %vm1058, %v5504, %v5506
      %v5511 = vsel %vm1058, %v5506, %v5508
      %v5515 = vsel %vm1760, %v5496, 0
      %5517 = vmatprep.subr.mxu0 %v5510
      %5518 = vmatpush1.msra.mxu0 %v5509
      %5519 = vmatprep.subr.mxu0 0.0
      %5520 = vmatpush1.msra.mxu0 0.0
      %5521 = vmatprep.subr.mxu0 0.0
      %5522 = vmatpush1.msra.mxu0 0.0
      %5523 = vmatprep.subr.mxu0 0.0
      %5524 = vmatpush1.msra.mxu0 0.0
      %5525 = vmatprep.subr.mxu0 0.0
      %5526 = vmatpush1.msra.mxu0 0.0
      %5527 = vmatprep.subr.mxu0 0.0
      %5528 = vmatpush1.msra.mxu0 0.0
      %5529 = vmatprep.subr.mxu0 0.0
      %5530 = vmatpush1.msra.mxu0 0.0
      %5531 = vmatprep.subr.mxu0 0.0
      %5532 = vmatpush1.msra.mxu0 0.0
      %5533 = vmatprep.subr.mxu0 0.0
      %5534 = vmatpush1.msra.mxu0 0.0
      %5535 = vmatprep.subr.mxu0 0.0
      %5536 = vmatpush1.msra.mxu0 0.0
      %5537 = vmatprep.subr.mxu0 0.0
      %5538 = vmatpush1.msra.mxu0 0.0
      %5539 = vmatprep.subr.mxu0 0.0
      %5540 = vmatpush1.msra.mxu0 0.0
      %5541 = vmatprep.subr.mxu0 0.0
      %5542 = vmatpush1.msra.mxu0 0.0
      %5543 = vmatprep.subr.mxu0 0.0
      %5544 = vmatpush1.msra.mxu0 0.0
      %5545 = vmatprep.subr.mxu0 0.0
      %5546 = vmatpush1.msra.mxu0 0.0
      %5547 = vmatprep.subr.mxu0 0.0
      %5548 = vmatpush1.msra.mxu0 0.0
      %5549 = vmatprep.subr.mxu0 0.0
      %5550 = vmatpush1.msra.mxu0 0.0
      %5551 = vmatprep.subr.mxu0 0.0
      %5552 = vmatpush1.msra.mxu0 0.0
      %5553 = vmatprep.subr.mxu0 0.0
      %5554 = vmatpush1.msra.mxu0 0.0
      %5555 = vmatprep.subr.mxu0 0.0
      %5556 = vmatpush1.msra.mxu0 0.0
      %5557 = vmatprep.subr.mxu0 0.0
      %5558 = vmatpush1.msra.mxu0 0.0
      %5559 = vmatprep.subr.mxu0 0.0
      %5560 = vmatpush1.msra.mxu0 0.0
      %5561 = vmatprep.subr.mxu0 0.0
      %5562 = vmatpush1.msra.mxu0 0.0
      %5563 = vmatprep.subr.mxu0 0.0
      %5564 = vmatpush1.msra.mxu0 0.0
      %5565 = vmatprep.subr.mxu0 0.0
      %5566 = vmatpush1.msra.mxu0 0.0
      %5567 = vmatprep.subr.mxu0 0.0
      %5568 = vmatpush1.msra.mxu0 0.0
      %5569 = vmatprep.subr.mxu0 0.0
      %5570 = vmatpush1.msra.mxu0 0.0
      %5571 = vmatprep.subr.mxu0 0.0
      %5572 = vmatpush1.msra.mxu0 0.0
      %5573 = vmatprep.subr.mxu0 0.0
      %5574 = vmatpush1.msra.mxu0 0.0
      %5575 = vmatprep.subr.mxu0 0.0
      %5576 = vmatpush1.msra.mxu0 0.0
      %5577 = vmatprep.subr.mxu0 0.0
      %5578 = vmatpush1.msra.mxu0 0.0
      %5579 = vmatprep.subr.mxu0 0.0
      %5580 = vmatpush1.msra.mxu0 0.0
      %5581 = vmatprep.mubr.f32.mxu0 0.0
      %5582 = vmatmul.mubr.f32.gmra.mrb[0].mxu0 %v5515
      %v5583 = vpop.f32.mrb[0].mxu0
      %v5584 = vadd.f32 0.0, %v5583
      %v5585 = vpop.f32.mrb[0].mxu0
      %v5586 = vadd.f32 0.0, %v5585
      %5587 = vdwg.mxu0
      %5588 = vmatprep.subr.mxu0 0.0
      %5589 = vmatpush1.msra.mxu0 %v5511
      %5590 = vmatprep.subr.mxu0 0.0
      %5591 = vmatpush1.msra.mxu0 0.0
      %5592 = vmatprep.subr.mxu0 0.0
      %5593 = vmatpush1.msra.mxu0 0.0
      %5594 = vmatprep.subr.mxu0 0.0
      %5595 = vmatpush1.msra.mxu0 0.0
      %5596 = vmatprep.subr.mxu0 0.0
      %5597 = vmatpush1.msra.mxu0 0.0
      %5598 = vmatprep.subr.mxu0 0.0
      %5599 = vmatpush1.msra.mxu0 0.0
      %5600 = vmatprep.subr.mxu0 0.0
      %5601 = vmatpush1.msra.mxu0 0.0
      %5602 = vmatprep.subr.mxu0 0.0
      %5603 = vmatpush1.msra.mxu0 0.0
      %5604 = vmatprep.subr.mxu0 0.0
      %5605 = vmatpush1.msra.mxu0 0.0
      %5606 = vmatprep.subr.mxu0 0.0
      %5607 = vmatpush1.msra.mxu0 0.0
      %5608 = vmatprep.subr.mxu0 0.0
      %5609 = vmatpush1.msra.mxu0 0.0
      %5610 = vmatprep.subr.mxu0 0.0
      %5611 = vmatpush1.msra.mxu0 0.0
      %5612 = vmatprep.subr.mxu0 0.0
      %5613 = vmatpush1.msra.mxu0 0.0
      %5614 = vmatprep.subr.mxu0 0.0
      %5615 = vmatpush1.msra.mxu0 0.0
      %5616 = vmatprep.subr.mxu0 0.0
      %5617 = vmatpush1.msra.mxu0 0.0
      %5618 = vmatprep.subr.mxu0 0.0
      %5619 = vmatpush1.msra.mxu0 0.0
      %5620 = vmatprep.subr.mxu0 0.0
      %5621 = vmatpush1.msra.mxu0 0.0
      %5622 = vmatprep.subr.mxu0 0.0
      %5623 = vmatpush1.msra.mxu0 0.0
      %5624 = vmatprep.subr.mxu0 0.0
      %5625 = vmatpush1.msra.mxu0 0.0
      %5626 = vmatprep.subr.mxu0 0.0
      %5627 = vmatpush1.msra.mxu0 0.0
      %5628 = vmatprep.subr.mxu0 0.0
      %5629 = vmatpush1.msra.mxu0 0.0
      %5630 = vmatprep.subr.mxu0 0.0
      %5631 = vmatpush1.msra.mxu0 0.0
      %5632 = vmatprep.subr.mxu0 0.0
      %5633 = vmatpush1.msra.mxu0 0.0
      %5634 = vmatprep.subr.mxu0 0.0
      %5635 = vmatpush1.msra.mxu0 0.0
      %5636 = vmatprep.subr.mxu0 0.0
      %5637 = vmatpush1.msra.mxu0 0.0
      %5638 = vmatprep.subr.mxu0 0.0
      %5639 = vmatpush1.msra.mxu0 0.0
      %5640 = vmatprep.subr.mxu0 0.0
      %5641 = vmatpush1.msra.mxu0 0.0
      %5642 = vmatprep.subr.mxu0 0.0
      %5643 = vmatpush1.msra.mxu0 0.0
      %5644 = vmatprep.subr.mxu0 0.0
      %5645 = vmatpush1.msra.mxu0 0.0
      %5646 = vmatprep.subr.mxu0 0.0
      %5647 = vmatpush1.msra.mxu0 0.0
      %5648 = vmatprep.subr.mxu0 0.0
      %5649 = vmatpush1.msra.mxu0 0.0
      %5650 = vmatprep.subr.mxu0 0.0
      %5651 = vmatpush1.msra.mxu0 0.0
      %5652 = vmatprep.mubr.f32.mxu0 0.0
      %5653 = vmatmul.mubr.f32.gmra.mrb[0].mxu0 %v5515
      %v5654 = vpop.f32.mrb[0].mxu0
      %v5655 = vadd.f32 0.0, %v5654
      %v5656 = vpop.f32.mrb[0].mxu0
      %5657 = vdwg.mxu0
      %v5658 = vadd.f32 %v5488, %v5584
      %v5659 = vadd.f32 %v5489, %v5586
      %v5660 = vadd.f32 %v5490, %v5655
      %5661 = vrot.lane.b32.xlu0 %v4691, 79
      %v5662 = vpop.permute.xlu0 %5661
      %5663 = vrot.lane.b32.xlu0 %v5491, 111
      %v5664 = vpop.permute.xlu0 %5663
      %5665 = vrot.lane.b32.xlu0 %v5492, 111
      %v5666 = vpop.permute.xlu0 %5665
      %5667 = vrot.lane.b32.xlu0 %v5493, 111
      %v5668 = vpop.permute.xlu0 %5667
      %5669 = vrot.lane.b32.xlu0 %v5494, 111
      %v5670 = vpop.permute.xlu0 %5669
      %v5671 = vsel %vm1224, %v5664, %v5666
      %v5672 = vsel %vm1224, %v5666, %v5668
      %v5673 = vsel %vm1224, %v5668, %v5670
      %v5677 = vsel %vm1760, %v5662, 0
      %5679 = vmatprep.subr.mxu0 %v5672
      %5680 = vmatpush1.msra.mxu0 %v5671
      %5681 = vmatprep.subr.mxu0 0.0
      %5682 = vmatpush1.msra.mxu0 0.0
      %5683 = vmatprep.subr.mxu0 0.0
      %5684 = vmatpush1.msra.mxu0 0.0
      %5685 = vmatprep.subr.mxu0 0.0
      %5686 = vmatpush1.msra.mxu0 0.0
      %5687 = vmatprep.subr.mxu0 0.0
      %5688 = vmatpush1.msra.mxu0 0.0
      %5689 = vmatprep.subr.mxu0 0.0
      %5690 = vmatpush1.msra.mxu0 0.0
      %5691 = vmatprep.subr.mxu0 0.0
      %5692 = vmatpush1.msra.mxu0 0.0
      %5693 = vmatprep.subr.mxu0 0.0
      %5694 = vmatpush1.msra.mxu0 0.0
      %5695 = vmatprep.subr.mxu0 0.0
      %5696 = vmatpush1.msra.mxu0 0.0
      %5697 = vmatprep.subr.mxu0 0.0
      %5698 = vmatpush1.msra.mxu0 0.0
      %5699 = vmatprep.subr.mxu0 0.0
      %5700 = vmatpush1.msra.mxu0 0.0
      %5701 = vmatprep.subr.mxu0 0.0
      %5702 = vmatpush1.msra.mxu0 0.0
      %5703 = vmatprep.subr.mxu0 0.0
      %5704 = vmatpush1.msra.mxu0 0.0
      %5705 = vmatprep.subr.mxu0 0.0
      %5706 = vmatpush1.msra.mxu0 0.0
      %5707 = vmatprep.subr.mxu0 0.0
      %5708 = vmatpush1.msra.mxu0 0.0
      %5709 = vmatprep.subr.mxu0 0.0
      %5710 = vmatpush1.msra.mxu0 0.0
      %5711 = vmatprep.subr.mxu0 0.0
      %5712 = vmatpush1.msra.mxu0 0.0
      %5713 = vmatprep.subr.mxu0 0.0
      %5714 = vmatpush1.msra.mxu0 0.0
      %5715 = vmatprep.subr.mxu0 0.0
      %5716 = vmatpush1.msra.mxu0 0.0
      %5717 = vmatprep.subr.mxu0 0.0
      %5718 = vmatpush1.msra.mxu0 0.0
      %5719 = vmatprep.subr.mxu0 0.0
      %5720 = vmatpush1.msra.mxu0 0.0
      %5721 = vmatprep.subr.mxu0 0.0
      %5722 = vmatpush1.msra.mxu0 0.0
      %5723 = vmatprep.subr.mxu0 0.0
      %5724 = vmatpush1.msra.mxu0 0.0
      %5725 = vmatprep.subr.mxu0 0.0
      %5726 = vmatpush1.msra.mxu0 0.0
      %5727 = vmatprep.subr.mxu0 0.0
      %5728 = vmatpush1.msra.mxu0 0.0
      %5729 = vmatprep.subr.mxu0 0.0
      %5730 = vmatpush1.msra.mxu0 0.0
      %5731 = vmatprep.subr.mxu0 0.0
      %5732 = vmatpush1.msra.mxu0 0.0
      %5733 = vmatprep.subr.mxu0 0.0
      %5734 = vmatpush1.msra.mxu0 0.0
      %5735 = vmatprep.subr.mxu0 0.0
      %5736 = vmatpush1.msra.mxu0 0.0
      %5737 = vmatprep.subr.mxu0 0.0
      %5738 = vmatpush1.msra.mxu0 0.0
      %5739 = vmatprep.subr.mxu0 0.0
      %5740 = vmatpush1.msra.mxu0 0.0
      %5741 = vmatprep.subr.mxu0 0.0
      %5742 = vmatpush1.msra.mxu0 0.0
      %5743 = vmatprep.mubr.f32.mxu0 0.0
      %5744 = vmatmul.mubr.f32.gmra.mrb[0].mxu0 %v5677
      %v5745 = vpop.f32.mrb[0].mxu0
      %v5746 = vadd.f32 0.0, %v5745
      %v5747 = vpop.f32.mrb[0].mxu0
      %v5748 = vadd.f32 0.0, %v5747
      %5749 = vdwg.mxu0
      %5750 = vmatprep.subr.mxu0 0.0
      %5751 = vmatpush1.msra.mxu0 %v5673
      %5752 = vmatprep.subr.mxu0 0.0
      %5753 = vmatpush1.msra.mxu0 0.0
      %5754 = vmatprep.subr.mxu0 0.0
      %5755 = vmatpush1.msra.mxu0 0.0
      %5756 = vmatprep.subr.mxu0 0.0
      %5757 = vmatpush1.msra.mxu0 0.0
      %5758 = vmatprep.subr.mxu0 0.0
      %5759 = vmatpush1.msra.mxu0 0.0
      %5760 = vmatprep.subr.mxu0 0.0
      %5761 = vmatpush1.msra.mxu0 0.0
      %5762 = vmatprep.subr.mxu0 0.0
      %5763 = vmatpush1.msra.mxu0 0.0
      %5764 = vmatprep.subr.mxu0 0.0
      %5765 = vmatpush1.msra.mxu0 0.0
      %5766 = vmatprep.subr.mxu0 0.0
      %5767 = vmatpush1.msra.mxu0 0.0
      %5768 = vmatprep.subr.mxu0 0.0
      %5769 = vmatpush1.msra.mxu0 0.0
      %5770 = vmatprep.subr.mxu0 0.0
      %5771 = vmatpush1.msra.mxu0 0.0
      %5772 = vmatprep.subr.mxu0 0.0
      %5773 = vmatpush1.msra.mxu0 0.0
      %5774 = vmatprep.subr.mxu0 0.0
      %5775 = vmatpush1.msra.mxu0 0.0
      %5776 = vmatprep.subr.mxu0 0.0
      %5777 = vmatpush1.msra.mxu0 0.0
      %5778 = vmatprep.subr.mxu0 0.0
      %5779 = vmatpush1.msra.mxu0 0.0
      %5780 = vmatprep.subr.mxu0 0.0
      %5781 = vmatpush1.msra.mxu0 0.0
      %5782 = vmatprep.subr.mxu0 0.0
      %5783 = vmatpush1.msra.mxu0 0.0
      %5784 = vmatprep.subr.mxu0 0.0
      %5785 = vmatpush1.msra.mxu0 0.0
      %5786 = vmatprep.subr.mxu0 0.0
      %5787 = vmatpush1.msra.mxu0 0.0
      %5788 = vmatprep.subr.mxu0 0.0
      %5789 = vmatpush1.msra.mxu0 0.0
      %5790 = vmatprep.subr.mxu0 0.0
      %5791 = vmatpush1.msra.mxu0 0.0
      %5792 = vmatprep.subr.mxu0 0.0
      %5793 = vmatpush1.msra.mxu0 0.0
      %5794 = vmatprep.subr.mxu0 0.0
      %5795 = vmatpush1.msra.mxu0 0.0
      %5796 = vmatprep.subr.mxu0 0.0
      %5797 = vmatpush1.msra.mxu0 0.0
      %5798 = vmatprep.subr.mxu0 0.0
      %5799 = vmatpush1.msra.mxu0 0.0
      %5800 = vmatprep.subr.mxu0 0.0
      %5801 = vmatpush1.msra.mxu0 0.0
      %5802 = vmatprep.subr.mxu0 0.0
      %5803 = vmatpush1.msra.mxu0 0.0
      %5804 = vmatprep.subr.mxu0 0.0
      %5805 = vmatpush1.msra.mxu0 0.0
      %5806 = vmatprep.subr.mxu0 0.0
      %5807 = vmatpush1.msra.mxu0 0.0
      %5808 = vmatprep.subr.mxu0 0.0
      %5809 = vmatpush1.msra.mxu0 0.0
      %5810 = vmatprep.subr.mxu0 0.0
      %5811 = vmatpush1.msra.mxu0 0.0
      %5812 = vmatprep.subr.mxu0 0.0
      %5813 = vmatpush1.msra.mxu0 0.0
      %5814 = vmatprep.mubr.f32.mxu0 0.0
      %5815 = vmatmul.mubr.f32.gmra.mrb[0].mxu0 %v5677
      %v5816 = vpop.f32.mrb[0].mxu0
      %v5817 = vadd.f32 0.0, %v5816
      %v5818 = vpop.f32.mrb[0].mxu0
      %5819 = vdwg.mxu0
      %v5820 = vadd.f32 %v5658, %v5746
      %v5821 = vadd.f32 %v5659, %v5748
      %v5822 = vadd.f32 %v5660, %v5817
      %5823 = vrot.lane.b32.xlu0 %v4691, 71
      %v5824 = vpop.permute.xlu0 %5823
      %5825 = vrot.lane.b32.xlu0 %v5491, 110
      %v5826 = vpop.permute.xlu0 %5825
      %5827 = vrot.lane.b32.xlu0 %v5492, 110
      %v5828 = vpop.permute.xlu0 %5827
      %5829 = vrot.lane.b32.xlu0 %v5493, 110
      %v5830 = vpop.permute.xlu0 %5829
      %5831 = vrot.lane.b32.xlu0 %v5494, 110
      %v5832 = vpop.permute.xlu0 %5831
      %v5833 = vsel %vm1390, %v5826, %v5828
      %v5834 = vsel %vm1390, %v5828, %v5830
      %v5835 = vsel %vm1390, %v5830, %v5832
      %v5839 = vsel %vm1760, %v5824, 0
      %5841 = vmatprep.subr.mxu0 %v5834
      %5842 = vmatpush1.msra.mxu0 %v5833
      %5843 = vmatprep.subr.mxu0 0.0
      %5844 = vmatpush1.msra.mxu0 0.0
      %5845 = vmatprep.subr.mxu0 0.0
      %5846 = vmatpush1.msra.mxu0 0.0
      %5847 = vmatprep.subr.mxu0 0.0
      %5848 = vmatpush1.msra.mxu0 0.0
      %5849 = vmatprep.subr.mxu0 0.0
      %5850 = vmatpush1.msra.mxu0 0.0
      %5851 = vmatprep.subr.mxu0 0.0
      %5852 = vmatpush1.msra.mxu0 0.0
      %5853 = vmatprep.subr.mxu0 0.0
      %5854 = vmatpush1.msra.mxu0 0.0
      %5855 = vmatprep.subr.mxu0 0.0
      %5856 = vmatpush1.msra.mxu0 0.0
      %5857 = vmatprep.subr.mxu0 0.0
      %5858 = vmatpush1.msra.mxu0 0.0
      %5859 = vmatprep.subr.mxu0 0.0
      %5860 = vmatpush1.msra.mxu0 0.0
      %5861 = vmatprep.subr.mxu0 0.0
      %5862 = vmatpush1.msra.mxu0 0.0
      %5863 = vmatprep.subr.mxu0 0.0
      %5864 = vmatpush1.msra.mxu0 0.0
      %5865 = vmatprep.subr.mxu0 0.0
      %5866 = vmatpush1.msra.mxu0 0.0
      %5867 = vmatprep.subr.mxu0 0.0
      %5868 = vmatpush1.msra.mxu0 0.0
      %5869 = vmatprep.subr.mxu0 0.0
      %5870 = vmatpush1.msra.mxu0 0.0
      %5871 = vmatprep.subr.mxu0 0.0
      %5872 = vmatpush1.msra.mxu0 0.0
      %5873 = vmatprep.subr.mxu0 0.0
      %5874 = vmatpush1.msra.mxu0 0.0
      %5875 = vmatprep.subr.mxu0 0.0
      %5876 = vmatpush1.msra.mxu0 0.0
      %5877 = vmatprep.subr.mxu0 0.0
      %5878 = vmatpush1.msra.mxu0 0.0
      %5879 = vmatprep.subr.mxu0 0.0
      %5880 = vmatpush1.msra.mxu0 0.0
      %5881 = vmatprep.subr.mxu0 0.0
      %5882 = vmatpush1.msra.mxu0 0.0
      %5883 = vmatprep.subr.mxu0 0.0
      %5884 = vmatpush1.msra.mxu0 0.0
      %5885 = vmatprep.subr.mxu0 0.0
      %5886 = vmatpush1.msra.mxu0 0.0
      %5887 = vmatprep.subr.mxu0 0.0
      %5888 = vmatpush1.msra.mxu0 0.0
      %5889 = vmatprep.subr.mxu0 0.0
      %5890 = vmatpush1.msra.mxu0 0.0
      %5891 = vmatprep.subr.mxu0 0.0
      %5892 = vmatpush1.msra.mxu0 0.0
      %5893 = vmatprep.subr.mxu0 0.0
      %5894 = vmatpush1.msra.mxu0 0.0
      %5895 = vmatprep.subr.mxu0 0.0
      %5896 = vmatpush1.msra.mxu0 0.0
      %5897 = vmatprep.subr.mxu0 0.0
      %5898 = vmatpush1.msra.mxu0 0.0
      %5899 = vmatprep.subr.mxu0 0.0
      %5900 = vmatpush1.msra.mxu0 0.0
      %5901 = vmatprep.subr.mxu0 0.0
      %5902 = vmatpush1.msra.mxu0 0.0
      %5903 = vmatprep.subr.mxu0 0.0
      %5904 = vmatpush1.msra.mxu0 0.0
      %5905 = vmatprep.mubr.f32.mxu0 0.0
      %5906 = vmatmul.mubr.f32.gmra.mrb[0].mxu0 %v5839
      %v5907 = vpop.f32.mrb[0].mxu0
      %v5908 = vadd.f32 0.0, %v5907
      %v5909 = vpop.f32.mrb[0].mxu0
      %v5910 = vadd.f32 0.0, %v5909
      %5911 = vdwg.mxu0
      %5912 = vmatprep.subr.mxu0 0.0
      %5913 = vmatpush1.msra.mxu0 %v5835
      %5914 = vmatprep.subr.mxu0 0.0
      %5915 = vmatpush1.msra.mxu0 0.0
      %5916 = vmatprep.subr.mxu0 0.0
      %5917 = vmatpush1.msra.mxu0 0.0
      %5918 = vmatprep.subr.mxu0 0.0
      %5919 = vmatpush1.msra.mxu0 0.0
      %5920 = vmatprep.subr.mxu0 0.0
      %5921 = vmatpush1.msra.mxu0 0.0
      %5922 = vmatprep.subr.mxu0 0.0
      %5923 = vmatpush1.msra.mxu0 0.0
      %5924 = vmatprep.subr.mxu0 0.0
      %5925 = vmatpush1.msra.mxu0 0.0
      %5926 = vmatprep.subr.mxu0 0.0
      %5927 = vmatpush1.msra.mxu0 0.0
      %5928 = vmatprep.subr.mxu0 0.0
      %5929 = vmatpush1.msra.mxu0 0.0
      %5930 = vmatprep.subr.mxu0 0.0
      %5931 = vmatpush1.msra.mxu0 0.0
      %5932 = vmatprep.subr.mxu0 0.0
      %5933 = vmatpush1.msra.mxu0 0.0
      %5934 = vmatprep.subr.mxu0 0.0
      %5935 = vmatpush1.msra.mxu0 0.0
      %5936 = vmatprep.subr.mxu0 0.0
      %5937 = vmatpush1.msra.mxu0 0.0
      %5938 = vmatprep.subr.mxu0 0.0
      %5939 = vmatpush1.msra.mxu0 0.0
      %5940 = vmatprep.subr.mxu0 0.0
      %5941 = vmatpush1.msra.mxu0 0.0
      %5942 = vmatprep.subr.mxu0 0.0
      %5943 = vmatpush1.msra.mxu0 0.0
      %5944 = vmatprep.subr.mxu0 0.0
      %5945 = vmatpush1.msra.mxu0 0.0
      %5946 = vmatprep.subr.mxu0 0.0
      %5947 = vmatpush1.msra.mxu0 0.0
      %5948 = vmatprep.subr.mxu0 0.0
      %5949 = vmatpush1.msra.mxu0 0.0
      %5950 = vmatprep.subr.mxu0 0.0
      %5951 = vmatpush1.msra.mxu0 0.0
      %5952 = vmatprep.subr.mxu0 0.0
      %5953 = vmatpush1.msra.mxu0 0.0
      %5954 = vmatprep.subr.mxu0 0.0
      %5955 = vmatpush1.msra.mxu0 0.0
      %5956 = vmatprep.subr.mxu0 0.0
      %5957 = vmatpush1.msra.mxu0 0.0
      %5958 = vmatprep.subr.mxu0 0.0
      %5959 = vmatpush1.msra.mxu0 0.0
      %5960 = vmatprep.subr.mxu0 0.0
      %5961 = vmatpush1.msra.mxu0 0.0
      %5962 = vmatprep.subr.mxu0 0.0
      %5963 = vmatpush1.msra.mxu0 0.0
      %5964 = vmatprep.subr.mxu0 0.0
      %5965 = vmatpush1.msra.mxu0 0.0
      %5966 = vmatprep.subr.mxu0 0.0
      %5967 = vmatpush1.msra.mxu0 0.0
      %5968 = vmatprep.subr.mxu0 0.0
      %5969 = vmatpush1.msra.mxu0 0.0
      %5970 = vmatprep.subr.mxu0 0.0
      %5971 = vmatpush1.msra.mxu0 0.0
      %5972 = vmatprep.subr.mxu0 0.0
      %5973 = vmatpush1.msra.mxu0 0.0
      %5974 = vmatprep.subr.mxu0 0.0
      %5975 = vmatpush1.msra.mxu0 0.0
      %5976 = vmatprep.mubr.f32.mxu0 0.0
      %5977 = vmatmul.mubr.f32.gmra.mrb[0].mxu0 %v5839
      %v5978 = vpop.f32.mrb[0].mxu0
      %v5979 = vadd.f32 0.0, %v5978
      %v5980 = vpop.f32.mrb[0].mxu0
      %5981 = vdwg.mxu0
      %v5982 = vadd.f32 %v5820, %v5908
      %v5983 = vadd.f32 %v5821, %v5910
      %v5984 = vadd.f32 %v5822, %v5979
      %5985 = vrot.lane.b32.xlu0 %v4691, 63
      %v5986 = vpop.permute.xlu0 %5985
      %5987 = vrot.lane.b32.xlu0 %v5491, 109
      %v5988 = vpop.permute.xlu0 %5987
      %5989 = vrot.lane.b32.xlu0 %v5492, 109
      %v5990 = vpop.permute.xlu0 %5989
      %5991 = vrot.lane.b32.xlu0 %v5493, 109
      %v5992 = vpop.permute.xlu0 %5991
      %5993 = vrot.lane.b32.xlu0 %v5494, 109
      %v5994 = vpop.permute.xlu0 %5993
      %v5995 = vsel %vm1556, %v5988, %v5990
      %v5996 = vsel %vm1556, %v5990, %v5992
      %v5997 = vsel %vm1556, %v5992, %v5994
      %v6001 = vsel %vm1760, %v5986, 0
      %6003 = vmatprep.subr.mxu0 %v5996
      %6004 = vmatpush1.msra.mxu0 %v5995
      %6005 = vmatprep.subr.mxu0 0.0
      %6006 = vmatpush1.msra.mxu0 0.0
      %6007 = vmatprep.subr.mxu0 0.0
      %6008 = vmatpush1.msra.mxu0 0.0
      %6009 = vmatprep.subr.mxu0 0.0
      %6010 = vmatpush1.msra.mxu0 0.0
      %6011 = vmatprep.subr.mxu0 0.0
      %6012 = vmatpush1.msra.mxu0 0.0
      %6013 = vmatprep.subr.mxu0 0.0
      %6014 = vmatpush1.msra.mxu0 0.0
      %6015 = vmatprep.subr.mxu0 0.0
      %6016 = vmatpush1.msra.mxu0 0.0
      %6017 = vmatprep.subr.mxu0 0.0
      %6018 = vmatpush1.msra.mxu0 0.0
      %6019 = vmatprep.subr.mxu0 0.0
      %6020 = vmatpush1.msra.mxu0 0.0
      %6021 = vmatprep.subr.mxu0 0.0
      %6022 = vmatpush1.msra.mxu0 0.0
      %6023 = vmatprep.subr.mxu0 0.0
      %6024 = vmatpush1.msra.mxu0 0.0
      %6025 = vmatprep.subr.mxu0 0.0
      %6026 = vmatpush1.msra.mxu0 0.0
      %6027 = vmatprep.subr.mxu0 0.0
      %6028 = vmatpush1.msra.mxu0 0.0
      %6029 = vmatprep.subr.mxu0 0.0
      %6030 = vmatpush1.msra.mxu0 0.0
      %6031 = vmatprep.subr.mxu0 0.0
      %6032 = vmatpush1.msra.mxu0 0.0
      %6033 = vmatprep.subr.mxu0 0.0
      %6034 = vmatpush1.msra.mxu0 0.0
      %6035 = vmatprep.subr.mxu0 0.0
      %6036 = vmatpush1.msra.mxu0 0.0
      %6037 = vmatprep.subr.mxu0 0.0
      %6038 = vmatpush1.msra.mxu0 0.0
      %6039 = vmatprep.subr.mxu0 0.0
      %6040 = vmatpush1.msra.mxu0 0.0
      %6041 = vmatprep.subr.mxu0 0.0
      %6042 = vmatpush1.msra.mxu0 0.0
      %6043 = vmatprep.subr.mxu0 0.0
      %6044 = vmatpush1.msra.mxu0 0.0
      %6045 = vmatprep.subr.mxu0 0.0
      %6046 = vmatpush1.msra.mxu0 0.0
      %6047 = vmatprep.subr.mxu0 0.0
      %6048 = vmatpush1.msra.mxu0 0.0
      %6049 = vmatprep.subr.mxu0 0.0
      %6050 = vmatpush1.msra.mxu0 0.0
      %6051 = vmatprep.subr.mxu0 0.0
      %6052 = vmatpush1.msra.mxu0 0.0
      %6053 = vmatprep.subr.mxu0 0.0
      %6054 = vmatpush1.msra.mxu0 0.0
      %6055 = vmatprep.subr.mxu0 0.0
      %6056 = vmatpush1.msra.mxu0 0.0
      %6057 = vmatprep.subr.mxu0 0.0
      %6058 = vmatpush1.msra.mxu0 0.0
      %6059 = vmatprep.subr.mxu0 0.0
      %6060 = vmatpush1.msra.mxu0 0.0
      %6061 = vmatprep.subr.mxu0 0.0
      %6062 = vmatpush1.msra.mxu0 0.0
      %6063 = vmatprep.subr.mxu0 0.0
      %6064 = vmatpush1.msra.mxu0 0.0
      %6065 = vmatprep.subr.mxu0 0.0
      %6066 = vmatpush1.msra.mxu0 0.0
      %6067 = vmatprep.mubr.f32.mxu0 0.0
      %6068 = vmatmul.mubr.f32.gmra.mrb[0].mxu0 %v6001
      %v6069 = vpop.f32.mrb[0].mxu0
      %v6070 = vadd.f32 0.0, %v6069
      %v6071 = vpop.f32.mrb[0].mxu0
      %v6072 = vadd.f32 0.0, %v6071
      %6073 = vdwg.mxu0
      %6074 = vmatprep.subr.mxu0 0.0
      %6075 = vmatpush1.msra.mxu0 %v5997
      %6076 = vmatprep.subr.mxu0 0.0
      %6077 = vmatpush1.msra.mxu0 0.0
      %6078 = vmatprep.subr.mxu0 0.0
      %6079 = vmatpush1.msra.mxu0 0.0
      %6080 = vmatprep.subr.mxu0 0.0
      %6081 = vmatpush1.msra.mxu0 0.0
      %6082 = vmatprep.subr.mxu0 0.0
      %6083 = vmatpush1.msra.mxu0 0.0
      %6084 = vmatprep.subr.mxu0 0.0
      %6085 = vmatpush1.msra.mxu0 0.0
      %6086 = vmatprep.subr.mxu0 0.0
      %6087 = vmatpush1.msra.mxu0 0.0
      %6088 = vmatprep.subr.mxu0 0.0
      %6089 = vmatpush1.msra.mxu0 0.0
      %6090 = vmatprep.subr.mxu0 0.0
      %6091 = vmatpush1.msra.mxu0 0.0
      %6092 = vmatprep.subr.mxu0 0.0
      %6093 = vmatpush1.msra.mxu0 0.0
      %6094 = vmatprep.subr.mxu0 0.0
      %6095 = vmatpush1.msra.mxu0 0.0
      %6096 = vmatprep.subr.mxu0 0.0
      %6097 = vmatpush1.msra.mxu0 0.0
      %6098 = vmatprep.subr.mxu0 0.0
      %6099 = vmatpush1.msra.mxu0 0.0
      %6100 = vmatprep.subr.mxu0 0.0
      %6101 = vmatpush1.msra.mxu0 0.0
      %6102 = vmatprep.subr.mxu0 0.0
      %6103 = vmatpush1.msra.mxu0 0.0
      %6104 = vmatprep.subr.mxu0 0.0
      %6105 = vmatpush1.msra.mxu0 0.0
      %6106 = vmatprep.subr.mxu0 0.0
      %6107 = vmatpush1.msra.mxu0 0.0
      %6108 = vmatprep.subr.mxu0 0.0
      %6109 = vmatpush1.msra.mxu0 0.0
      %6110 = vmatprep.subr.mxu0 0.0
      %6111 = vmatpush1.msra.mxu0 0.0
      %6112 = vmatprep.subr.mxu0 0.0
      %6113 = vmatpush1.msra.mxu0 0.0
      %6114 = vmatprep.subr.mxu0 0.0
      %6115 = vmatpush1.msra.mxu0 0.0
      %6116 = vmatprep.subr.mxu0 0.0
      %6117 = vmatpush1.msra.mxu0 0.0
      %6118 = vmatprep.subr.mxu0 0.0
      %6119 = vmatpush1.msra.mxu0 0.0
      %6120 = vmatprep.subr.mxu0 0.0
      %6121 = vmatpush1.msra.mxu0 0.0
      %6122 = vmatprep.subr.mxu0 0.0
      %6123 = vmatpush1.msra.mxu0 0.0
      %6124 = vmatprep.subr.mxu0 0.0
      %6125 = vmatpush1.msra.mxu0 0.0
      %6126 = vmatprep.subr.mxu0 0.0
      %6127 = vmatpush1.msra.mxu0 0.0
      %6128 = vmatprep.subr.mxu0 0.0
      %6129 = vmatpush1.msra.mxu0 0.0
      %6130 = vmatprep.subr.mxu0 0.0
      %6131 = vmatpush1.msra.mxu0 0.0
      %6132 = vmatprep.subr.mxu0 0.0
      %6133 = vmatpush1.msra.mxu0 0.0
      %6134 = vmatprep.subr.mxu0 0.0
      %6135 = vmatpush1.msra.mxu0 0.0
      %6136 = vmatprep.subr.mxu0 0.0
      %6137 = vmatpush1.msra.mxu0 0.0
      %6138 = vmatprep.mubr.f32.mxu0 0.0
      %6139 = vmatmul.mubr.f32.gmra.mrb[0].mxu0 %v6001
      %v6140 = vpop.f32.mrb[0].mxu0
      %v6141 = vadd.f32 0.0, %v6140
      %v6142 = vpop.f32.mrb[0].mxu0
      %6143 = vdwg.mxu0
      %v6144 = vadd.f32 %v5982, %v6070
      %v6145 = vadd.f32 %v5983, %v6072
      %v6146 = vadd.f32 %v5984, %v6141
      %6147 = vset.pattern.permute.xlu0 0
      %6148 = vperm.xlu0 %6147, %v4691
      %v6149 = vpop.permute.xlu0 %6148
      %v6151 = vadd.f32 %v6144, %v6149
      %v6152 = vadd.f32 %v6145, %v6149
      %v6153 = vadd.f32 %v6146, %v6149
      %v6157 = vcombine.low %v6151, %v6152
      %v6159 = vunpack.c.l.s4 1966171168
      %v6160 = vunpack.c.0.s8 %v6159
      %v6161 = vlaneseq
      %v6162 = vshrl.u32 %v6161, 7
      %v6163 = vsub.s32 %v6160, %v6162
      %v6164 = vrot.slane %v6157, %v6163
      %v6166 = vunpack.c.l.s4 1966171168
      %v6167 = vunpack.c.0.s8 %v6166
      %v6168 = vlaneseq
      %v6169 = vshrl.u32 %v6168, 7
      %v6170 = vsub.s32 %v6167, %v6169
      %v6171 = vrot.slane %v6153, %v6170
      %v6172 = vcombine.low %v6164, %v6171
      %v6174 = vunpack.c.l.s4 1966171168
      %v6175 = vunpack.c.0.s8 %v6174
      %v6176 = vlaneseq
      %v6177 = vshrl.u32 %v6176, 7
      %v6178 = vsub.s32 %v6175, %v6177
      %v6179 = vrot.slane %v6172, %v6178
      %v6181 = vlaneseq
      %vm6182 = vcmp.ge.s32.totalorder %v6181, 0
      %vm6183 = vcmp.lt.s32.totalorder %v6181, 384
      %vm6184 = vmand %vm6182, %vm6183
      %6185 = vst.msk [vmem:[%s188] sm:$0x7] %vm6184, %v6179
      %p6186 = scmp.lt.s32.totalorder %s14, 1
      %s6187 = scalar_select %p6186, %s14, 1
      %s6188 = smul.addr %s6187, 3
      %s6189 = scalar_lea.vmem %s3, %s6188
      // Predicated region
      $region33: #{discriminator_forward.1} parent=31 // pred_check
        %p6190 = pneg %p105
      $region34: #{discriminator_forward.1} parent=31 // pred_check_branch
        %6192 = sbr.rel (%p6190) target = $region36
      $region35: #{discriminator_forward.1} parent=31 // pred_region
        _
      $region36: #{discriminator_forward.1} parent=31 // pred_fallthru
        _
    $region32: #{discriminator_forward.1} parent=5 // pred_fallthru
      _
    %p6193 = scmp.le.s32.totalorder 2, %s9
    // Predicated region
    $region37: #{discriminator_forward.1} parent=5 // pred_check
      %p6194 = pneg %p6193
    $region38: #{discriminator_forward.1} parent=5 // pred_check_branch
      %6196 = sbr.rel (%p6194) target = $region40
    $region39: #{discriminator_forward.1} parent=5 // pred_region
      %s6197 = ssub.s32 %s9, 2
      // Predicated region
      $region41: #{discriminator_forward.1} parent=39 // pred_check
        %p6198 = pneg %p111
      $region42: #{discriminator_forward.1} parent=39 // pred_check_branch
        %6200 = sbr.rel (%p6198) target = $region44
      $region43: #{discriminator_forward.1} parent=39 // pred_region
        %p6201 = scmp.lt.s32.totalorder %s15, 1
        %s6202 = scalar_select %p6201, %s15, 1
        %s6203 = smul.addr %s6202, 3
        %s6204 = scalar_lea.vmem %s3, %s6203
      $region44: #{discriminator_forward.1} parent=39 // pred_fallthru
        _
    $region40: #{discriminator_forward.1} parent=5 // pred_fallthru
      _
  $region6: #{discriminator_forward.1} parent=0 // loop_footer
    %s13 = sadd.s32 1, %s9
  $region7: #{discriminator_forward.1} parent=0 // loop_footer_branch
    %8 = sbr.rel target = $region3
  $region8: #{discriminator_forward.1} parent=0 // loop_exit
    _

</llo_original>
